<compile_context>
chip_gen: v7x
topology: tpu7x:2x2x1
jax: 0.10.0
libtpu: 0.0.40
codegen_flags: <defaults>
</compile_context>

<pallas_src>
import functools

import jax
import jax.numpy as jnp
from jax.experimental import pallas as pl
from jax.experimental.pallas import tpu as pltpu


def _resnet_block_kernel(x_ref, w1_ref, w2_ref, o_ref, pad_ref, *,
                         eps, negative_slope, matmul_dtype):
    # x_ref  : (1, H, W, C)      input block (also the residual)
    # w1_ref : (3, 3, C, C)      conv1 weights [kh, kw, c_in, c_out]
    # w2_ref : (3, 3, C, C)      conv2 weights
    # o_ref  : (1, H, W, C)      output block
    # pad_ref: (H+2, W+2, C) f32 VMEM scratch, reused for both stages
    H, W, C = x_ref.shape[1], x_ref.shape[2], x_ref.shape[3]
    HW = H * W

    def reflect_pad(act):
        # act: (H, W, C) f32. Fill interior, then reflected cols, then rows
        # (rows are copied from already-filled padded rows so corners come out
        # right: pad[0,0] == act[1,1], etc.).
        pad_ref[1:H + 1, 1:W + 1, :] = act
        pad_ref[1:H + 1, 0:1, :] = act[:, 1:2, :]
        pad_ref[1:H + 1, W + 1:W + 2, :] = act[:, W - 2:W - 1, :]
        pad_ref[0:1, :, :] = pad_ref[2:3, :, :]
        pad_ref[H + 1:H + 2, :, :] = pad_ref[H - 1:H, :, :]

    def conv3x3_in_lrelu(w_ref):
        # 3x3 conv as 9 shifted-tap MXU matmuls, taps sliced straight from the
        # padded VMEM scratch (no up-front whole-tile materialisation).
        acc = jnp.zeros((HW, C), jnp.float32)
        for di in range(3):
            for dj in range(3):
                tap = pad_ref[di:di + H, dj:dj + W, :].reshape(HW, C)
                acc = acc + jnp.dot(tap.astype(matmul_dtype),
                                    w_ref[di, dj].astype(matmul_dtype),
                                    preferred_element_type=jnp.float32)
        # InstanceNorm2d (affine=False): one-pass per-channel stats over H*W.
        # (No bias add: a per-channel bias is cancelled by the mean subtraction.)
        inv_n = 1.0 / HW
        mean = jnp.sum(acc, axis=0, keepdims=True) * inv_n
        ex2 = jnp.sum(acc * acc, axis=0, keepdims=True) * inv_n
        var = jnp.maximum(ex2 - mean * mean, 0.0)
        y = (acc - mean) * jax.lax.rsqrt(var + eps)
        # LeakyReLU(negative_slope)
        return jnp.where(y >= 0, y, negative_slope * y)     # (HW, C) f32

    # Stage 1
    reflect_pad(x_ref[0].astype(jnp.float32))
    h = conv3x3_in_lrelu(w1_ref)                            # (HW, C)
    # Stage 2 (intermediate h never leaves VMEM)
    reflect_pad(h.reshape(H, W, C))
    y = conv3x3_in_lrelu(w2_ref)                            # (HW, C)
    # Residual add: re-read the input block (cheap VMEM load) instead of
    # keeping it live as a value across both conv stages.
    out = y.reshape(H, W, C) + x_ref[0].astype(jnp.float32)
    o_ref[0] = out.astype(o_ref.dtype)


def resnet_block(x_nchw, w1, b1, w2, b2, *, eps=1e-5, negative_slope=0.2,
                 matmul_dtype=jnp.float32):
    """ResnetBlock forward.

    x_nchw: (N, C, H, W); w*: (3, 3, C, C) [kh, kw, cin, cout]; b*: (C,).
    b1/b2 are accepted for API parity with Conv2d(bias=True) but unused:
    InstanceNorm2d(affine=False) subtracts the per-channel mean, which exactly
    cancels a per-channel conv bias, so the bias has no effect on the output.
    Set matmul_dtype=jnp.bfloat16 on v6e/v7x for 2x MXU rate (f32 accumulation).
    """
    del b1, b2
    N, C, H, W = x_nchw.shape
    assert H >= 2 and W >= 2, "reflection padding of 1 needs H, W >= 2"
    x = jnp.transpose(x_nchw, (0, 2, 3, 1))                 # NCHW -> NHWC

    kernel = functools.partial(_resnet_block_kernel, eps=eps,
                               negative_slope=negative_slope,
                               matmul_dtype=matmul_dtype)

    out = pl.pallas_call(
        kernel,
        out_shape=jax.ShapeDtypeStruct((N, H, W, C), x.dtype),
        grid=(N,),
        in_specs=[
            pl.BlockSpec((1, H, W, C), lambda n: (n, 0, 0, 0)),
            pl.BlockSpec((3, 3, C, C), lambda n: (0, 0, 0, 0)),
            pl.BlockSpec((3, 3, C, C), lambda n: (0, 0, 0, 0)),
        ],
        out_specs=pl.BlockSpec((1, H, W, C), lambda n: (n, 0, 0, 0)),
        scratch_shapes=[pltpu.VMEM((H + 2, W + 2, C), jnp.float32)],
        compiler_params=pltpu.CompilerParams(
            dimension_semantics=("parallel",),      # megacore / 2-TC split over N
            vmem_limit_bytes=64 * 1024 * 1024,      # above default scoped limit
        ),
    )(x, w1, w2)
    return jnp.transpose(out, (0, 3, 1, 2))                 # NHWC -> NCHW


def _reference(x, w1, b1, w2, b2):
    # Pure-JAX reference (NCHW, matches PyTorch semantics, bias included).
    def stage(inp, w, b):
        xp = jnp.pad(inp, ((0, 0), (0, 0), (1, 1), (1, 1)), mode="reflect")
        y = jax.lax.conv_general_dilated(
            xp, jnp.transpose(w, (3, 2, 0, 1)), window_strides=(1, 1),
            padding="VALID", dimension_numbers=("NCHW", "OIHW", "NCHW"))
        y = y + b[None, :, None, None]
        mean = jnp.mean(y, axis=(2, 3), keepdims=True)
        var = jnp.var(y, axis=(2, 3), keepdims=True)
        y = (y - mean) / jnp.sqrt(var + 1e-5)
        return jnp.where(y >= 0, y, 0.2 * y)

    h = stage(x, w1, b1)
    return stage(h, w2, b2) + x


if __name__ == "__main__":
    N, C, H, W = 2, 4, 16, 16
    key = jax.random.PRNGKey(0)
    kx, kw1, kb1, kw2, kb2 = jax.random.split(key, 5)

    x = jax.random.normal(kx, (N, C, H, W), dtype=jnp.float32)
    # Deterministic synthetic parameters (Conv2d(dim, dim, 3, bias=True) x2).
    w1 = jax.random.normal(kw1, (3, 3, C, C), dtype=jnp.float32) * 0.1
    b1 = jax.random.normal(kb1, (C,), dtype=jnp.float32) * 0.1
    w2 = jax.random.normal(kw2, (3, 3, C, C), dtype=jnp.float32) * 0.1
    b2 = jax.random.normal(kb2, (C,), dtype=jnp.float32) * 0.1

    out = jax.block_until_ready(resnet_block(x, w1, b1, w2, b2))

    ref = _reference(x, w1, b1, w2, b2)
    assert out.shape == (N, C, H, W)
    assert jnp.allclose(out, ref, atol=1e-3, rtol=1e-3), "mismatch vs reference"

    print("KERNEL_OK")
</pallas_src>

<mosaic_0001>
module attributes {stable_mosaic.version = 11 : i64} {
  func.func @_resnet_block_kernel(%arg0: i32, %arg1: memref<1x16x16x4xf32, #tpu.memory_space<vmem>>, %arg2: memref<3x3x4x4xf32, #tpu.memory_space<vmem>>, %arg3: memref<3x3x4x4xf32, #tpu.memory_space<vmem>>, %arg4: memref<1x16x16x4xf32, #tpu.memory_space<vmem>>, %arg5: memref<18x18x4xf32, #tpu.memory_space<vmem>>) attributes {dimension_semantics = [#tpu.dimension_semantics<parallel>], iteration_bounds = array<i64: 2>, scalar_prefetch = 0 : i64, scratch_operands = 1 : i64, tpu.core_type = #tpu.core_type<tc>, window_params = [{transform_indices = @transform_0, window_bounds = array<i64: 1, 16, 16, 4>}, {pipeline_mode = #tpu.pipeline_mode<synchronous>, transform_indices = @transform_1, window_bounds = array<i64: 3, 3, 4, 4>}, {pipeline_mode = #tpu.pipeline_mode<synchronous>, transform_indices = @transform_2, window_bounds = array<i64: 3, 3, 4, 4>}, {transform_indices = @transform_3, window_bounds = array<i64: 1, 16, 16, 4>}]} {
    %c0 = arith.constant 0 : index
    %c0_0 = arith.constant 0 : index
    %c0_1 = arith.constant 0 : index
    %c0_2 = arith.constant 0 : index
    %0 = vector.load %arg1[%c0, %c0_0, %c0_1, %c0_2] : memref<1x16x16x4xf32, #tpu.memory_space<vmem>>, vector<1x16x16x4xf32>
    %1 = vector.shape_cast %0 : vector<1x16x16x4xf32> to vector<16x16x4xf32>
    %c1 = arith.constant 1 : index
    %c1_3 = arith.constant 1 : index
    %c0_4 = arith.constant 0 : index
    %2 = vector.load %arg5[%c1, %c1_3, %c0_4] : memref<18x18x4xf32, #tpu.memory_space<vmem>>, vector<16x16x4xf32>
    tpu.vector_store %arg5[%c1, %c1_3, %c0_4], %1 {strides = array<i32>} : memref<18x18x4xf32, #tpu.memory_space<vmem>>, vector<16x16x4xf32>,
    %3 = vector.extract_strided_slice %1 {offsets = [0, 1, 0], sizes = [16, 1, 4], strides = [1, 1, 1]} : vector<16x16x4xf32> to vector<16x1x4xf32>
    %c1_5 = arith.constant 1 : index
    %c0_6 = arith.constant 0 : index
    %c0_7 = arith.constant 0 : index
    %4 = vector.load %arg5[%c1_5, %c0_6, %c0_7] : memref<18x18x4xf32, #tpu.memory_space<vmem>>, vector<16x1x4xf32>
    tpu.vector_store %arg5[%c1_5, %c0_6, %c0_7], %3 {strides = array<i32>} : memref<18x18x4xf32, #tpu.memory_space<vmem>>, vector<16x1x4xf32>,
    %5 = vector.extract_strided_slice %1 {offsets = [0, 14, 0], sizes = [16, 1, 4], strides = [1, 1, 1]} : vector<16x16x4xf32> to vector<16x1x4xf32>
    %c1_8 = arith.constant 1 : index
    %c17 = arith.constant 17 : index
    %c0_9 = arith.constant 0 : index
    %6 = vector.load %arg5[%c1_8, %c17, %c0_9] : memref<18x18x4xf32, #tpu.memory_space<vmem>>, vector<16x1x4xf32>
    tpu.vector_store %arg5[%c1_8, %c17, %c0_9], %5 {strides = array<i32>} : memref<18x18x4xf32, #tpu.memory_space<vmem>>, vector<16x1x4xf32>,
    %c2 = arith.constant 2 : index
    %c0_10 = arith.constant 0 : index
    %c0_11 = arith.constant 0 : index
    %7 = vector.load %arg5[%c2, %c0_10, %c0_11] : memref<18x18x4xf32, #tpu.memory_space<vmem>>, vector<1x18x4xf32>
    %c0_12 = arith.constant 0 : index
    %c0_13 = arith.constant 0 : index
    %c0_14 = arith.constant 0 : index
    %8 = vector.load %arg5[%c0_12, %c0_13, %c0_14] : memref<18x18x4xf32, #tpu.memory_space<vmem>>, vector<1x18x4xf32>
    tpu.vector_store %arg5[%c0_12, %c0_13, %c0_14], %7 {strides = array<i32>} : memref<18x18x4xf32, #tpu.memory_space<vmem>>, vector<1x18x4xf32>,
    %c15 = arith.constant 15 : index
    %c0_15 = arith.constant 0 : index
    %c0_16 = arith.constant 0 : index
    %9 = vector.load %arg5[%c15, %c0_15, %c0_16] : memref<18x18x4xf32, #tpu.memory_space<vmem>>, vector<1x18x4xf32>
    %c17_17 = arith.constant 17 : index
    %c0_18 = arith.constant 0 : index
    %c0_19 = arith.constant 0 : index
    %10 = vector.load %arg5[%c17_17, %c0_18, %c0_19] : memref<18x18x4xf32, #tpu.memory_space<vmem>>, vector<1x18x4xf32>
    tpu.vector_store %arg5[%c17_17, %c0_18, %c0_19], %9 {strides = array<i32>} : memref<18x18x4xf32, #tpu.memory_space<vmem>>, vector<1x18x4xf32>,
    %cst = arith.constant 0.000000e+00 : f32
    %11 = vector.broadcast %cst : f32 to vector<256x4xf32>
    %c0_20 = arith.constant 0 : index
    %c0_21 = arith.constant 0 : index
    %c0_22 = arith.constant 0 : index
    %12 = vector.load %arg5[%c0_20, %c0_21, %c0_22] : memref<18x18x4xf32, #tpu.memory_space<vmem>>, vector<16x16x4xf32>
    %13 = vector.shape_cast %12 : vector<16x16x4xf32> to vector<256x4xf32>
    %c0_23 = arith.constant 0 : index
    %c0_24 = arith.constant 0 : index
    %c0_25 = arith.constant 0 : index
    %c0_26 = arith.constant 0 : index
    %14 = vector.load %arg2[%c0_23, %c0_24, %c0_25, %c0_26] : memref<3x3x4x4xf32, #tpu.memory_space<vmem>>, vector<1x1x4x4xf32>
    %15 = vector.shape_cast %14 : vector<1x1x4x4xf32> to vector<4x4xf32>
    %cst_27 = arith.constant dense<0.000000e+00> : vector<256x4xf32>
    %16 = tpu.matmul %13, %15, %cst_27 {dimension_numbers = #tpu.dot_dimension_numbers<[1], [0], [0], [1], [0, 0, 1, 1], [], []>} : vector<256x4xf32>, vector<4x4xf32>, vector<256x4xf32> -> vector<256x4xf32>
    %17 = arith.addf %11, %16 : vector<256x4xf32>
    %c0_28 = arith.constant 0 : index
    %c1_29 = arith.constant 1 : index
    %c0_30 = arith.constant 0 : index
    %18 = vector.load %arg5[%c0_28, %c1_29, %c0_30] : memref<18x18x4xf32, #tpu.memory_space<vmem>>, vector<16x16x4xf32>
    %19 = vector.shape_cast %18 : vector<16x16x4xf32> to vector<256x4xf32>
    %c0_31 = arith.constant 0 : index
    %c1_32 = arith.constant 1 : index
    %c0_33 = arith.constant 0 : index
    %c0_34 = arith.constant 0 : index
    %20 = vector.load %arg2[%c0_31, %c1_32, %c0_33, %c0_34] : memref<3x3x4x4xf32, #tpu.memory_space<vmem>>, vector<1x1x4x4xf32>
    %21 = vector.shape_cast %20 : vector<1x1x4x4xf32> to vector<4x4xf32>
    %cst_35 = arith.constant dense<0.000000e+00> : vector<256x4xf32>
    %22 = tpu.matmul %19, %21, %cst_35 {dimension_numbers = #tpu.dot_dimension_numbers<[1], [0], [0], [1], [0, 0, 1, 1], [], []>} : vector<256x4xf32>, vector<4x4xf32>, vector<256x4xf32> -> vector<256x4xf32>
    %23 = arith.addf %17, %22 : vector<256x4xf32>
    %c0_36 = arith.constant 0 : index
    %c2_37 = arith.constant 2 : index
    %c0_38 = arith.constant 0 : index
    %24 = vector.load %arg5[%c0_36, %c2_37, %c0_38] : memref<18x18x4xf32, #tpu.memory_space<vmem>>, vector<16x16x4xf32>
    %25 = vector.shape_cast %24 : vector<16x16x4xf32> to vector<256x4xf32>
    %c0_39 = arith.constant 0 : index
    %c2_40 = arith.constant 2 : index
    %c0_41 = arith.constant 0 : index
    %c0_42 = arith.constant 0 : index
    %26 = vector.load %arg2[%c0_39, %c2_40, %c0_41, %c0_42] : memref<3x3x4x4xf32, #tpu.memory_space<vmem>>, vector<1x1x4x4xf32>
    %27 = vector.shape_cast %26 : vector<1x1x4x4xf32> to vector<4x4xf32>
    %cst_43 = arith.constant dense<0.000000e+00> : vector<256x4xf32>
    %28 = tpu.matmul %25, %27, %cst_43 {dimension_numbers = #tpu.dot_dimension_numbers<[1], [0], [0], [1], [0, 0, 1, 1], [], []>} : vector<256x4xf32>, vector<4x4xf32>, vector<256x4xf32> -> vector<256x4xf32>
    %29 = arith.addf %23, %28 : vector<256x4xf32>
    %c1_44 = arith.constant 1 : index
    %c0_45 = arith.constant 0 : index
    %c0_46 = arith.constant 0 : index
    %30 = vector.load %arg5[%c1_44, %c0_45, %c0_46] : memref<18x18x4xf32, #tpu.memory_space<vmem>>, vector<16x16x4xf32>
    %31 = vector.shape_cast %30 : vector<16x16x4xf32> to vector<256x4xf32>
    %c1_47 = arith.constant 1 : index
    %c0_48 = arith.constant 0 : index
    %c0_49 = arith.constant 0 : index
    %c0_50 = arith.constant 0 : index
    %32 = vector.load %arg2[%c1_47, %c0_48, %c0_49, %c0_50] : memref<3x3x4x4xf32, #tpu.memory_space<vmem>>, vector<1x1x4x4xf32>
    %33 = vector.shape_cast %32 : vector<1x1x4x4xf32> to vector<4x4xf32>
    %cst_51 = arith.constant dense<0.000000e+00> : vector<256x4xf32>
    %34 = tpu.matmul %31, %33, %cst_51 {dimension_numbers = #tpu.dot_dimension_numbers<[1], [0], [0], [1], [0, 0, 1, 1], [], []>} : vector<256x4xf32>, vector<4x4xf32>, vector<256x4xf32> -> vector<256x4xf32>
    %35 = arith.addf %29, %34 : vector<256x4xf32>
    %c1_52 = arith.constant 1 : index
    %c1_53 = arith.constant 1 : index
    %c0_54 = arith.constant 0 : index
    %36 = vector.load %arg5[%c1_52, %c1_53, %c0_54] : memref<18x18x4xf32, #tpu.memory_space<vmem>>, vector<16x16x4xf32>
    %37 = vector.shape_cast %36 : vector<16x16x4xf32> to vector<256x4xf32>
    %c1_55 = arith.constant 1 : index
    %c1_56 = arith.constant 1 : index
    %c0_57 = arith.constant 0 : index
    %c0_58 = arith.constant 0 : index
    %38 = vector.load %arg2[%c1_55, %c1_56, %c0_57, %c0_58] : memref<3x3x4x4xf32, #tpu.memory_space<vmem>>, vector<1x1x4x4xf32>
    %39 = vector.shape_cast %38 : vector<1x1x4x4xf32> to vector<4x4xf32>
    %cst_59 = arith.constant dense<0.000000e+00> : vector<256x4xf32>
    %40 = tpu.matmul %37, %39, %cst_59 {dimension_numbers = #tpu.dot_dimension_numbers<[1], [0], [0], [1], [0, 0, 1, 1], [], []>} : vector<256x4xf32>, vector<4x4xf32>, vector<256x4xf32> -> vector<256x4xf32>
    %41 = arith.addf %35, %40 : vector<256x4xf32>
    %c1_60 = arith.constant 1 : index
    %c2_61 = arith.constant 2 : index
    %c0_62 = arith.constant 0 : index
    %42 = vector.load %arg5[%c1_60, %c2_61, %c0_62] : memref<18x18x4xf32, #tpu.memory_space<vmem>>, vector<16x16x4xf32>
    %43 = vector.shape_cast %42 : vector<16x16x4xf32> to vector<256x4xf32>
    %c1_63 = arith.constant 1 : index
    %c2_64 = arith.constant 2 : index
    %c0_65 = arith.constant 0 : index
    %c0_66 = arith.constant 0 : index
    %44 = vector.load %arg2[%c1_63, %c2_64, %c0_65, %c0_66] : memref<3x3x4x4xf32, #tpu.memory_space<vmem>>, vector<1x1x4x4xf32>
    %45 = vector.shape_cast %44 : vector<1x1x4x4xf32> to vector<4x4xf32>
    %cst_67 = arith.constant dense<0.000000e+00> : vector<256x4xf32>
    %46 = tpu.matmul %43, %45, %cst_67 {dimension_numbers = #tpu.dot_dimension_numbers<[1], [0], [0], [1], [0, 0, 1, 1], [], []>} : vector<256x4xf32>, vector<4x4xf32>, vector<256x4xf32> -> vector<256x4xf32>
    %47 = arith.addf %41, %46 : vector<256x4xf32>
    %c2_68 = arith.constant 2 : index
    %c0_69 = arith.constant 0 : index
    %c0_70 = arith.constant 0 : index
    %48 = vector.load %arg5[%c2_68, %c0_69, %c0_70] : memref<18x18x4xf32, #tpu.memory_space<vmem>>, vector<16x16x4xf32>
    %49 = vector.shape_cast %48 : vector<16x16x4xf32> to vector<256x4xf32>
    %c2_71 = arith.constant 2 : index
    %c0_72 = arith.constant 0 : index
    %c0_73 = arith.constant 0 : index
    %c0_74 = arith.constant 0 : index
    %50 = vector.load %arg2[%c2_71, %c0_72, %c0_73, %c0_74] : memref<3x3x4x4xf32, #tpu.memory_space<vmem>>, vector<1x1x4x4xf32>
    %51 = vector.shape_cast %50 : vector<1x1x4x4xf32> to vector<4x4xf32>
    %cst_75 = arith.constant dense<0.000000e+00> : vector<256x4xf32>
    %52 = tpu.matmul %49, %51, %cst_75 {dimension_numbers = #tpu.dot_dimension_numbers<[1], [0], [0], [1], [0, 0, 1, 1], [], []>} : vector<256x4xf32>, vector<4x4xf32>, vector<256x4xf32> -> vector<256x4xf32>
    %53 = arith.addf %47, %52 : vector<256x4xf32>
    %c2_76 = arith.constant 2 : index
    %c1_77 = arith.constant 1 : index
    %c0_78 = arith.constant 0 : index
    %54 = vector.load %arg5[%c2_76, %c1_77, %c0_78] : memref<18x18x4xf32, #tpu.memory_space<vmem>>, vector<16x16x4xf32>
    %55 = vector.shape_cast %54 : vector<16x16x4xf32> to vector<256x4xf32>
    %c2_79 = arith.constant 2 : index
    %c1_80 = arith.constant 1 : index
    %c0_81 = arith.constant 0 : index
    %c0_82 = arith.constant 0 : index
    %56 = vector.load %arg2[%c2_79, %c1_80, %c0_81, %c0_82] : memref<3x3x4x4xf32, #tpu.memory_space<vmem>>, vector<1x1x4x4xf32>
    %57 = vector.shape_cast %56 : vector<1x1x4x4xf32> to vector<4x4xf32>
    %cst_83 = arith.constant dense<0.000000e+00> : vector<256x4xf32>
    %58 = tpu.matmul %55, %57, %cst_83 {dimension_numbers = #tpu.dot_dimension_numbers<[1], [0], [0], [1], [0, 0, 1, 1], [], []>} : vector<256x4xf32>, vector<4x4xf32>, vector<256x4xf32> -> vector<256x4xf32>
    %59 = arith.addf %53, %58 : vector<256x4xf32>
    %c2_84 = arith.constant 2 : index
    %c2_85 = arith.constant 2 : index
    %c0_86 = arith.constant 0 : index
    %60 = vector.load %arg5[%c2_84, %c2_85, %c0_86] : memref<18x18x4xf32, #tpu.memory_space<vmem>>, vector<16x16x4xf32>
    %61 = vector.shape_cast %60 : vector<16x16x4xf32> to vector<256x4xf32>
    %c2_87 = arith.constant 2 : index
    %c2_88 = arith.constant 2 : index
    %c0_89 = arith.constant 0 : index
    %c0_90 = arith.constant 0 : index
    %62 = vector.load %arg2[%c2_87, %c2_88, %c0_89, %c0_90] : memref<3x3x4x4xf32, #tpu.memory_space<vmem>>, vector<1x1x4x4xf32>
    %63 = vector.shape_cast %62 : vector<1x1x4x4xf32> to vector<4x4xf32>
    %cst_91 = arith.constant dense<0.000000e+00> : vector<256x4xf32>
    %64 = tpu.matmul %61, %63, %cst_91 {dimension_numbers = #tpu.dot_dimension_numbers<[1], [0], [0], [1], [0, 0, 1, 1], [], []>} : vector<256x4xf32>, vector<4x4xf32>, vector<256x4xf32> -> vector<256x4xf32>
    %65 = arith.addf %59, %64 : vector<256x4xf32>
    %cst_92 = arith.constant dense<0.000000e+00> : vector<4xf32>
    %66 = vector.multi_reduction <add>, %65, %cst_92 [0] : vector<256x4xf32> to vector<4xf32>
    %67 = vector.shape_cast %66 : vector<4xf32> to vector<1x4xf32>
    %cst_93 = arith.constant 3.906250e-03 : f32
    %68 = vector.broadcast %cst_93 : f32 to vector<1x4xf32>
    %69 = arith.mulf %67, %68 : vector<1x4xf32>
    %70 = arith.mulf %65, %65 : vector<256x4xf32>
    %cst_94 = arith.constant dense<0.000000e+00> : vector<4xf32>
    %71 = vector.multi_reduction <add>, %70, %cst_94 [0] : vector<256x4xf32> to vector<4xf32>
    %72 = vector.shape_cast %71 : vector<4xf32> to vector<1x4xf32>
    %cst_95 = arith.constant 3.906250e-03 : f32
    %73 = vector.broadcast %cst_95 : f32 to vector<1x4xf32>
    %74 = arith.mulf %72, %73 : vector<1x4xf32>
    %75 = arith.mulf %69, %69 : vector<1x4xf32>
    %76 = arith.subf %74, %75 : vector<1x4xf32>
    %cst_96 = arith.constant 0.000000e+00 : f32
    %77 = vector.broadcast %cst_96 : f32 to vector<1x4xf32>
    %78 = arith.maximumf %76, %77 : vector<1x4xf32>
    %79 = vector.broadcast %69 : vector<1x4xf32> to vector<256x4xf32>
    %80 = arith.subf %65, %79 : vector<256x4xf32>
    %cst_97 = arith.constant 9.99999974E-6 : f32
    %81 = vector.broadcast %cst_97 : f32 to vector<1x4xf32>
    %82 = arith.addf %78, %81 : vector<1x4xf32>
    %83 = math.rsqrt %82 : vector<1x4xf32>
    %84 = vector.broadcast %83 : vector<1x4xf32> to vector<256x4xf32>
    %85 = arith.mulf %80, %84 : vector<256x4xf32>
    %cst_98 = arith.constant 0.000000e+00 : f32
    %86 = vector.broadcast %cst_98 : f32 to vector<256x4xf32>
    %87 = arith.cmpf oge, %85, %86 : vector<256x4xf32>
    %cst_99 = arith.constant 2.000000e-01 : f32
    %88 = vector.broadcast %cst_99 : f32 to vector<256x4xf32>
    %89 = arith.mulf %88, %85 : vector<256x4xf32>
    %90 = arith.select %87, %85, %89 : vector<256x4xi1>, vector<256x4xf32>
    %91 = vector.shape_cast %90 : vector<256x4xf32> to vector<16x16x4xf32>
    %c1_100 = arith.constant 1 : index
    %c1_101 = arith.constant 1 : index
    %c0_102 = arith.constant 0 : index
    %92 = vector.load %arg5[%c1_100, %c1_101, %c0_102] : memref<18x18x4xf32, #tpu.memory_space<vmem>>, vector<16x16x4xf32>
    tpu.vector_store %arg5[%c1_100, %c1_101, %c0_102], %91 {strides = array<i32>} : memref<18x18x4xf32, #tpu.memory_space<vmem>>, vector<16x16x4xf32>,
    %93 = vector.extract_strided_slice %91 {offsets = [0, 1, 0], sizes = [16, 1, 4], strides = [1, 1, 1]} : vector<16x16x4xf32> to vector<16x1x4xf32>
    %c1_103 = arith.constant 1 : index
    %c0_104 = arith.constant 0 : index
    %c0_105 = arith.constant 0 : index
    %94 = vector.load %arg5[%c1_103, %c0_104, %c0_105] : memref<18x18x4xf32, #tpu.memory_space<vmem>>, vector<16x1x4xf32>
    tpu.vector_store %arg5[%c1_103, %c0_104, %c0_105], %93 {strides = array<i32>} : memref<18x18x4xf32, #tpu.memory_space<vmem>>, vector<16x1x4xf32>,
    %95 = vector.extract_strided_slice %91 {offsets = [0, 14, 0], sizes = [16, 1, 4], strides = [1, 1, 1]} : vector<16x16x4xf32> to vector<16x1x4xf32>
    %c1_106 = arith.constant 1 : index
    %c17_107 = arith.constant 17 : index
    %c0_108 = arith.constant 0 : index
    %96 = vector.load %arg5[%c1_106, %c17_107, %c0_108] : memref<18x18x4xf32, #tpu.memory_space<vmem>>, vector<16x1x4xf32>
    tpu.vector_store %arg5[%c1_106, %c17_107, %c0_108], %95 {strides = array<i32>} : memref<18x18x4xf32, #tpu.memory_space<vmem>>, vector<16x1x4xf32>,
    %c2_109 = arith.constant 2 : index
    %c0_110 = arith.constant 0 : index
    %c0_111 = arith.constant 0 : index
    %97 = vector.load %arg5[%c2_109, %c0_110, %c0_111] : memref<18x18x4xf32, #tpu.memory_space<vmem>>, vector<1x18x4xf32>
    %c0_112 = arith.constant 0 : index
    %c0_113 = arith.constant 0 : index
    %c0_114 = arith.constant 0 : index
    %98 = vector.load %arg5[%c0_112, %c0_113, %c0_114] : memref<18x18x4xf32, #tpu.memory_space<vmem>>, vector<1x18x4xf32>
    tpu.vector_store %arg5[%c0_112, %c0_113, %c0_114], %97 {strides = array<i32>} : memref<18x18x4xf32, #tpu.memory_space<vmem>>, vector<1x18x4xf32>,
    %c15_115 = arith.constant 15 : index
    %c0_116 = arith.constant 0 : index
    %c0_117 = arith.constant 0 : index
    %99 = vector.load %arg5[%c15_115, %c0_116, %c0_117] : memref<18x18x4xf32, #tpu.memory_space<vmem>>, vector<1x18x4xf32>
    %c17_118 = arith.constant 17 : index
    %c0_119 = arith.constant 0 : index
    %c0_120 = arith.constant 0 : index
    %100 = vector.load %arg5[%c17_118, %c0_119, %c0_120] : memref<18x18x4xf32, #tpu.memory_space<vmem>>, vector<1x18x4xf32>
    tpu.vector_store %arg5[%c17_118, %c0_119, %c0_120], %99 {strides = array<i32>} : memref<18x18x4xf32, #tpu.memory_space<vmem>>, vector<1x18x4xf32>,
    %cst_121 = arith.constant 0.000000e+00 : f32
    %101 = vector.broadcast %cst_121 : f32 to vector<256x4xf32>
    %c0_122 = arith.constant 0 : index
    %c0_123 = arith.constant 0 : index
    %c0_124 = arith.constant 0 : index
    %102 = vector.load %arg5[%c0_122, %c0_123, %c0_124] : memref<18x18x4xf32, #tpu.memory_space<vmem>>, vector<16x16x4xf32>
    %103 = vector.shape_cast %102 : vector<16x16x4xf32> to vector<256x4xf32>
    %c0_125 = arith.constant 0 : index
    %c0_126 = arith.constant 0 : index
    %c0_127 = arith.constant 0 : index
    %c0_128 = arith.constant 0 : index
    %104 = vector.load %arg3[%c0_125, %c0_126, %c0_127, %c0_128] : memref<3x3x4x4xf32, #tpu.memory_space<vmem>>, vector<1x1x4x4xf32>
    %105 = vector.shape_cast %104 : vector<1x1x4x4xf32> to vector<4x4xf32>
    %cst_129 = arith.constant dense<0.000000e+00> : vector<256x4xf32>
    %106 = tpu.matmul %103, %105, %cst_129 {dimension_numbers = #tpu.dot_dimension_numbers<[1], [0], [0], [1], [0, 0, 1, 1], [], []>} : vector<256x4xf32>, vector<4x4xf32>, vector<256x4xf32> -> vector<256x4xf32>
    %107 = arith.addf %101, %106 : vector<256x4xf32>
    %c0_130 = arith.constant 0 : index
    %c1_131 = arith.constant 1 : index
    %c0_132 = arith.constant 0 : index
    %108 = vector.load %arg5[%c0_130, %c1_131, %c0_132] : memref<18x18x4xf32, #tpu.memory_space<vmem>>, vector<16x16x4xf32>
    %109 = vector.shape_cast %108 : vector<16x16x4xf32> to vector<256x4xf32>
    %c0_133 = arith.constant 0 : index
    %c1_134 = arith.constant 1 : index
    %c0_135 = arith.constant 0 : index
    %c0_136 = arith.constant 0 : index
    %110 = vector.load %arg3[%c0_133, %c1_134, %c0_135, %c0_136] : memref<3x3x4x4xf32, #tpu.memory_space<vmem>>, vector<1x1x4x4xf32>
    %111 = vector.shape_cast %110 : vector<1x1x4x4xf32> to vector<4x4xf32>
    %cst_137 = arith.constant dense<0.000000e+00> : vector<256x4xf32>
    %112 = tpu.matmul %109, %111, %cst_137 {dimension_numbers = #tpu.dot_dimension_numbers<[1], [0], [0], [1], [0, 0, 1, 1], [], []>} : vector<256x4xf32>, vector<4x4xf32>, vector<256x4xf32> -> vector<256x4xf32>
    %113 = arith.addf %107, %112 : vector<256x4xf32>
    %c0_138 = arith.constant 0 : index
    %c2_139 = arith.constant 2 : index
    %c0_140 = arith.constant 0 : index
    %114 = vector.load %arg5[%c0_138, %c2_139, %c0_140] : memref<18x18x4xf32, #tpu.memory_space<vmem>>, vector<16x16x4xf32>
    %115 = vector.shape_cast %114 : vector<16x16x4xf32> to vector<256x4xf32>
    %c0_141 = arith.constant 0 : index
    %c2_142 = arith.constant 2 : index
    %c0_143 = arith.constant 0 : index
    %c0_144 = arith.constant 0 : index
    %116 = vector.load %arg3[%c0_141, %c2_142, %c0_143, %c0_144] : memref<3x3x4x4xf32, #tpu.memory_space<vmem>>, vector<1x1x4x4xf32>
    %117 = vector.shape_cast %116 : vector<1x1x4x4xf32> to vector<4x4xf32>
    %cst_145 = arith.constant dense<0.000000e+00> : vector<256x4xf32>
    %118 = tpu.matmul %115, %117, %cst_145 {dimension_numbers = #tpu.dot_dimension_numbers<[1], [0], [0], [1], [0, 0, 1, 1], [], []>} : vector<256x4xf32>, vector<4x4xf32>, vector<256x4xf32> -> vector<256x4xf32>
    %119 = arith.addf %113, %118 : vector<256x4xf32>
    %c1_146 = arith.constant 1 : index
    %c0_147 = arith.constant 0 : index
    %c0_148 = arith.constant 0 : index
    %120 = vector.load %arg5[%c1_146, %c0_147, %c0_148] : memref<18x18x4xf32, #tpu.memory_space<vmem>>, vector<16x16x4xf32>
    %121 = vector.shape_cast %120 : vector<16x16x4xf32> to vector<256x4xf32>
    %c1_149 = arith.constant 1 : index
    %c0_150 = arith.constant 0 : index
    %c0_151 = arith.constant 0 : index
    %c0_152 = arith.constant 0 : index
    %122 = vector.load %arg3[%c1_149, %c0_150, %c0_151, %c0_152] : memref<3x3x4x4xf32, #tpu.memory_space<vmem>>, vector<1x1x4x4xf32>
    %123 = vector.shape_cast %122 : vector<1x1x4x4xf32> to vector<4x4xf32>
    %cst_153 = arith.constant dense<0.000000e+00> : vector<256x4xf32>
    %124 = tpu.matmul %121, %123, %cst_153 {dimension_numbers = #tpu.dot_dimension_numbers<[1], [0], [0], [1], [0, 0, 1, 1], [], []>} : vector<256x4xf32>, vector<4x4xf32>, vector<256x4xf32> -> vector<256x4xf32>
    %125 = arith.addf %119, %124 : vector<256x4xf32>
    %c1_154 = arith.constant 1 : index
    %c1_155 = arith.constant 1 : index
    %c0_156 = arith.constant 0 : index
    %126 = vector.load %arg5[%c1_154, %c1_155, %c0_156] : memref<18x18x4xf32, #tpu.memory_space<vmem>>, vector<16x16x4xf32>
    %127 = vector.shape_cast %126 : vector<16x16x4xf32> to vector<256x4xf32>
    %c1_157 = arith.constant 1 : index
    %c1_158 = arith.constant 1 : index
    %c0_159 = arith.constant 0 : index
    %c0_160 = arith.constant 0 : index
    %128 = vector.load %arg3[%c1_157, %c1_158, %c0_159, %c0_160] : memref<3x3x4x4xf32, #tpu.memory_space<vmem>>, vector<1x1x4x4xf32>
    %129 = vector.shape_cast %128 : vector<1x1x4x4xf32> to vector<4x4xf32>
    %cst_161 = arith.constant dense<0.000000e+00> : vector<256x4xf32>
    %130 = tpu.matmul %127, %129, %cst_161 {dimension_numbers = #tpu.dot_dimension_numbers<[1], [0], [0], [1], [0, 0, 1, 1], [], []>} : vector<256x4xf32>, vector<4x4xf32>, vector<256x4xf32> -> vector<256x4xf32>
    %131 = arith.addf %125, %130 : vector<256x4xf32>
    %c1_162 = arith.constant 1 : index
    %c2_163 = arith.constant 2 : index
    %c0_164 = arith.constant 0 : index
    %132 = vector.load %arg5[%c1_162, %c2_163, %c0_164] : memref<18x18x4xf32, #tpu.memory_space<vmem>>, vector<16x16x4xf32>
    %133 = vector.shape_cast %132 : vector<16x16x4xf32> to vector<256x4xf32>
    %c1_165 = arith.constant 1 : index
    %c2_166 = arith.constant 2 : index
    %c0_167 = arith.constant 0 : index
    %c0_168 = arith.constant 0 : index
    %134 = vector.load %arg3[%c1_165, %c2_166, %c0_167, %c0_168] : memref<3x3x4x4xf32, #tpu.memory_space<vmem>>, vector<1x1x4x4xf32>
    %135 = vector.shape_cast %134 : vector<1x1x4x4xf32> to vector<4x4xf32>
    %cst_169 = arith.constant dense<0.000000e+00> : vector<256x4xf32>
    %136 = tpu.matmul %133, %135, %cst_169 {dimension_numbers = #tpu.dot_dimension_numbers<[1], [0], [0], [1], [0, 0, 1, 1], [], []>} : vector<256x4xf32>, vector<4x4xf32>, vector<256x4xf32> -> vector<256x4xf32>
    %137 = arith.addf %131, %136 : vector<256x4xf32>
    %c2_170 = arith.constant 2 : index
    %c0_171 = arith.constant 0 : index
    %c0_172 = arith.constant 0 : index
    %138 = vector.load %arg5[%c2_170, %c0_171, %c0_172] : memref<18x18x4xf32, #tpu.memory_space<vmem>>, vector<16x16x4xf32>
    %139 = vector.shape_cast %138 : vector<16x16x4xf32> to vector<256x4xf32>
    %c2_173 = arith.constant 2 : index
    %c0_174 = arith.constant 0 : index
    %c0_175 = arith.constant 0 : index
    %c0_176 = arith.constant 0 : index
    %140 = vector.load %arg3[%c2_173, %c0_174, %c0_175, %c0_176] : memref<3x3x4x4xf32, #tpu.memory_space<vmem>>, vector<1x1x4x4xf32>
    %141 = vector.shape_cast %140 : vector<1x1x4x4xf32> to vector<4x4xf32>
    %cst_177 = arith.constant dense<0.000000e+00> : vector<256x4xf32>
    %142 = tpu.matmul %139, %141, %cst_177 {dimension_numbers = #tpu.dot_dimension_numbers<[1], [0], [0], [1], [0, 0, 1, 1], [], []>} : vector<256x4xf32>, vector<4x4xf32>, vector<256x4xf32> -> vector<256x4xf32>
    %143 = arith.addf %137, %142 : vector<256x4xf32>
    %c2_178 = arith.constant 2 : index
    %c1_179 = arith.constant 1 : index
    %c0_180 = arith.constant 0 : index
    %144 = vector.load %arg5[%c2_178, %c1_179, %c0_180] : memref<18x18x4xf32, #tpu.memory_space<vmem>>, vector<16x16x4xf32>
    %145 = vector.shape_cast %144 : vector<16x16x4xf32> to vector<256x4xf32>
    %c2_181 = arith.constant 2 : index
    %c1_182 = arith.constant 1 : index
    %c0_183 = arith.constant 0 : index
    %c0_184 = arith.constant 0 : index
    %146 = vector.load %arg3[%c2_181, %c1_182, %c0_183, %c0_184] : memref<3x3x4x4xf32, #tpu.memory_space<vmem>>, vector<1x1x4x4xf32>
    %147 = vector.shape_cast %146 : vector<1x1x4x4xf32> to vector<4x4xf32>
    %cst_185 = arith.constant dense<0.000000e+00> : vector<256x4xf32>
    %148 = tpu.matmul %145, %147, %cst_185 {dimension_numbers = #tpu.dot_dimension_numbers<[1], [0], [0], [1], [0, 0, 1, 1], [], []>} : vector<256x4xf32>, vector<4x4xf32>, vector<256x4xf32> -> vector<256x4xf32>
    %149 = arith.addf %143, %148 : vector<256x4xf32>
    %c2_186 = arith.constant 2 : index
    %c2_187 = arith.constant 2 : index
    %c0_188 = arith.constant 0 : index
    %150 = vector.load %arg5[%c2_186, %c2_187, %c0_188] : memref<18x18x4xf32, #tpu.memory_space<vmem>>, vector<16x16x4xf32>
    %151 = vector.shape_cast %150 : vector<16x16x4xf32> to vector<256x4xf32>
    %c2_189 = arith.constant 2 : index
    %c2_190 = arith.constant 2 : index
    %c0_191 = arith.constant 0 : index
    %c0_192 = arith.constant 0 : index
    %152 = vector.load %arg3[%c2_189, %c2_190, %c0_191, %c0_192] : memref<3x3x4x4xf32, #tpu.memory_space<vmem>>, vector<1x1x4x4xf32>
    %153 = vector.shape_cast %152 : vector<1x1x4x4xf32> to vector<4x4xf32>
    %cst_193 = arith.constant dense<0.000000e+00> : vector<256x4xf32>
    %154 = tpu.matmul %151, %153, %cst_193 {dimension_numbers = #tpu.dot_dimension_numbers<[1], [0], [0], [1], [0, 0, 1, 1], [], []>} : vector<256x4xf32>, vector<4x4xf32>, vector<256x4xf32> -> vector<256x4xf32>
    %155 = arith.addf %149, %154 : vector<256x4xf32>
    %cst_194 = arith.constant dense<0.000000e+00> : vector<4xf32>
    %156 = vector.multi_reduction <add>, %155, %cst_194 [0] : vector<256x4xf32> to vector<4xf32>
    %157 = vector.shape_cast %156 : vector<4xf32> to vector<1x4xf32>
    %cst_195 = arith.constant 3.906250e-03 : f32
    %158 = vector.broadcast %cst_195 : f32 to vector<1x4xf32>
    %159 = arith.mulf %157, %158 : vector<1x4xf32>
    %160 = arith.mulf %155, %155 : vector<256x4xf32>
    %cst_196 = arith.constant dense<0.000000e+00> : vector<4xf32>
    %161 = vector.multi_reduction <add>, %160, %cst_196 [0] : vector<256x4xf32> to vector<4xf32>
    %162 = vector.shape_cast %161 : vector<4xf32> to vector<1x4xf32>
    %cst_197 = arith.constant 3.906250e-03 : f32
    %163 = vector.broadcast %cst_197 : f32 to vector<1x4xf32>
    %164 = arith.mulf %162, %163 : vector<1x4xf32>
    %165 = arith.mulf %159, %159 : vector<1x4xf32>
    %166 = arith.subf %164, %165 : vector<1x4xf32>
    %cst_198 = arith.constant 0.000000e+00 : f32
    %167 = vector.broadcast %cst_198 : f32 to vector<1x4xf32>
    %168 = arith.maximumf %166, %167 : vector<1x4xf32>
    %169 = vector.broadcast %159 : vector<1x4xf32> to vector<256x4xf32>
    %170 = arith.subf %155, %169 : vector<256x4xf32>
    %cst_199 = arith.constant 9.99999974E-6 : f32
    %171 = vector.broadcast %cst_199 : f32 to vector<1x4xf32>
    %172 = arith.addf %168, %171 : vector<1x4xf32>
    %173 = math.rsqrt %172 : vector<1x4xf32>
    %174 = vector.broadcast %173 : vector<1x4xf32> to vector<256x4xf32>
    %175 = arith.mulf %170, %174 : vector<256x4xf32>
    %cst_200 = arith.constant 0.000000e+00 : f32
    %176 = vector.broadcast %cst_200 : f32 to vector<256x4xf32>
    %177 = arith.cmpf oge, %175, %176 : vector<256x4xf32>
    %cst_201 = arith.constant 2.000000e-01 : f32
    %178 = vector.broadcast %cst_201 : f32 to vector<256x4xf32>
    %179 = arith.mulf %178, %175 : vector<256x4xf32>
    %180 = arith.select %177, %175, %179 : vector<256x4xi1>, vector<256x4xf32>
    %181 = vector.shape_cast %180 : vector<256x4xf32> to vector<16x16x4xf32>
    %c0_202 = arith.constant 0 : index
    %c0_203 = arith.constant 0 : index
    %c0_204 = arith.constant 0 : index
    %c0_205 = arith.constant 0 : index
    %182 = vector.load %arg1[%c0_202, %c0_203, %c0_204, %c0_205] : memref<1x16x16x4xf32, #tpu.memory_space<vmem>>, vector<1x16x16x4xf32>
    %183 = vector.shape_cast %182 : vector<1x16x16x4xf32> to vector<16x16x4xf32>
    %184 = arith.addf %181, %183 : vector<16x16x4xf32>
    %c0_206 = arith.constant 0 : index
    %c0_207 = arith.constant 0 : index
    %c0_208 = arith.constant 0 : index
    %c0_209 = arith.constant 0 : index
    %185 = vector.load %arg4[%c0_206, %c0_207, %c0_208, %c0_209] : memref<1x16x16x4xf32, #tpu.memory_space<vmem>>, vector<1x16x16x4xf32>
    %186 = vector.shape_cast %185 : vector<1x16x16x4xf32> to vector<16x16x4xf32>
    %187 = vector.shape_cast %184 : vector<16x16x4xf32> to vector<1x16x16x4xf32>
    tpu.vector_store %arg4[%c0_206, %c0_207, %c0_208, %c0_209], %187 {strides = array<i32>} : memref<1x16x16x4xf32, #tpu.memory_space<vmem>>, vector<1x16x16x4xf32>,
    return
  }
  func.func @transform_0(%arg0: i32) -> (i32, i32, i32, i32) {
    %c0_i32 = arith.constant 0 : i32
    %c0_i32_0 = arith.constant 0 : i32
    %c0_i32_1 = arith.constant 0 : i32
    %c0_i32_2 = arith.constant 0 : i32
    return %arg0, %c0_i32, %c0_i32_0, %c0_i32_1 : i32, i32, i32, i32
  }
  func.func @transform_1(%arg0: i32) -> (i32, i32, i32, i32) {
    %c0_i32 = arith.constant 0 : i32
    %c0_i32_0 = arith.constant 0 : i32
    %c0_i32_1 = arith.constant 0 : i32
    %c0_i32_2 = arith.constant 0 : i32
    %c0_i32_3 = arith.constant 0 : i32
    return %c0_i32, %c0_i32_0, %c0_i32_1, %c0_i32_2 : i32, i32, i32, i32
  }
  func.func @transform_2(%arg0: i32) -> (i32, i32, i32, i32) {
    %c0_i32 = arith.constant 0 : i32
    %c0_i32_0 = arith.constant 0 : i32
    %c0_i32_1 = arith.constant 0 : i32
    %c0_i32_2 = arith.constant 0 : i32
    %c0_i32_3 = arith.constant 0 : i32
    return %c0_i32, %c0_i32_0, %c0_i32_1, %c0_i32_2 : i32, i32, i32, i32
  }
  func.func @transform_3(%arg0: i32) -> (i32, i32, i32, i32) {
    %c0_i32 = arith.constant 0 : i32
    %c0_i32_0 = arith.constant 0 : i32
    %c0_i32_1 = arith.constant 0 : i32
    %c0_i32_2 = arith.constant 0 : i32
    return %arg0, %c0_i32, %c0_i32_0, %c0_i32_1 : i32, i32, i32, i32
  }
}

</mosaic_0001>

<llo_original>
// kernel: tpu_custom_call.1
$region0: #{tpu_custom_call.1}
  #allocation0 [shape = 'u32[]', space=smem, size = 0x4, offset = 0x4, fixed_abs, tag = 'smem constant byte address 0x4 - core index']
  #allocation1 [shape = 'u32[144,128]{1,0:T(1,128)}', space=vmem, size = 0x12000, scoped, tag = 'internal scratch']
  #allocation2 [shape = 'f32[18,18,4]{2,1,0:T(8,128)}', space=vmem, size = 0x36000, scoped, tag = 'scratch operand']
  %s0 = inlined_call_operand.hbm [shape: f32[2,16,16,4], index: 0, kind: input, shape index: {}]
  %s1 = inlined_call_operand.hbm [shape: f32[3,3,4,4], index: 1, kind: input, shape index: {}]
  %s2 = inlined_call_operand.hbm [shape: f32[3,3,4,4], index: 2, kind: input, shape index: {}]
  %s3 = inlined_call_operand.hbm [shape: f32[2,16,16,4], index: 3, kind: output, shape index: {}]
  %s4 = sld [smem:[#allocation0]]
  $region57: #{tpu_custom_call.1} parent=0
    _
  %s6 = ssub.s32 1, %s4
  %s7 = scalar_select 0, %s6, %s4
  $region1: #{tpu_custom_call.1} parent=0
    #allocation3 [shape = 'u8[262144]{0}', space=vmem, size = 0x40000, scoped, tag = 'input window, operand 0']
    #allocation4 [shape = 's32[2]{0}', space=sflag, size = 0x8, scoped, tag = 'scoped memory for tpu_custom_call.1']
    #allocation5 [shape = 's32[2]{0}', space=sflag, size = 0x8, scoped, tag = 'scoped memory for tpu_custom_call.1']
    #allocation6 [shape = 'u8[18432]{0}', space=vmem, size = 0x4800, scoped, tag = 'input window, operand 1, single buffered']
    #allocation7 [shape = 's32[1]{0}', space=sflag, size = 0x4, scoped, tag = 'scoped memory for tpu_custom_call.1']
    #allocation8 [shape = 'u8[18432]{0}', space=vmem, size = 0x4800, scoped, tag = 'input window, operand 2, single buffered']
    #allocation9 [shape = 'u8[262144]{0}', space=vmem, size = 0x40000, scoped, tag = 'output window, operand 0']
    %8 = vsyncpa [#allocation4], 0
    %s9 = scalar_lea.sflag [#allocation4], 1
    %10 = vsyncpa %s9, 0
    %11 = vsyncpa [#allocation7], 0
    %12 = vsyncpa [#allocation5], 0
    %s13 = scalar_lea.sflag [#allocation5], 1
    %14 = vsyncpa %s13, 0
    loop: start=0, step=1, limit=4
    $region2: #{tpu_custom_call.1} parent=1 // loop_pre_header
      _
    $region3: #{tpu_custom_call.1} parent=1 // loop_header
      %s16 = sphi 0, %s20
      %p17 = scmp.ge.s32.totalorder %s16, 4
      %s26 = sphi 0, %s28
      %s29 = sphi 0, %s26
      %s30 = sphi 0, %s29
      %s46 = sphi 0, %s30
      %s50 = sphi 0, %s50
      %s52 = sphi 0, %s50
      %s53 = sphi 0, %s52
      %s67 = sphi 0, %s53
      %s71 = sphi 0, %s71
      %s73 = sphi 0, %s71
      %s74 = sphi 0, %s73
      %s88 = sphi 0, %s74
      %s94 = sphi 0, %s96
      %s97 = sphi 0, %s94
      %s98 = sphi 0, %s97
      %s114 = sphi 0, %s98
    $region4: #{tpu_custom_call.1} parent=1 // loop_header_branch
      %19 = sbr.rel (%p17) target = $region8
    $region5: #{tpu_custom_call.1} parent=1 // loop_body
      %s21 = ssub.s32 %s16, 1
      %s22 = ssub.s32 %s16, 2
      %s23 = sadd.s32 %s16, 1
      %s24 = ssub.s32 %s16, %s23
      %p25 = scmp.eq.s32.totalorder %s24, 0
      %s27 = sadd.s32 %s26, 1
      %s28 = scalar_select %p25, %s26, %s27
      %p31 = pneg %p25
      %p32 = scmp.eq.s32.totalorder %s16, 1
      %p33 = por %p31, %p32
      %p34 = scmp.ne.s32.totalorder %s26, %s29
      %p35 = scmp.eq.s32.totalorder %s16, 0
      %p36 = por %p34, %p35
      %p37 = scmp.ne.s32.totalorder %s26, %s29
      %p38 = scmp.eq.s32.totalorder %s21, 1
      %p39 = por %p37, %p38
      %p40 = scmp.ne.s32.totalorder %s29, %s30
      %p41 = scmp.eq.s32.totalorder %s21, 0
      %p42 = por %p40, %p41
      %p43 = scmp.ne.s32.totalorder %s29, %s30
      %p44 = scmp.eq.s32.totalorder %s22, 1
      %p45 = por %p43, %p44
      %p47 = scmp.ne.s32.totalorder %s30, %s46
      %p48 = scmp.eq.s32.totalorder %s22, 0
      %p49 = por %p47, %p48
      %s51 = sadd.s32 %s50, 1
      %p54 = scmp.eq.s32.totalorder %s16, 1
      %p55 = scmp.ne.s32.totalorder %s50, %s52
      %p56 = scmp.eq.s32.totalorder %s16, 0
      %p57 = por %p55, %p56
      %p58 = scmp.ne.s32.totalorder %s50, %s52
      %p59 = scmp.eq.s32.totalorder %s21, 1
      %p60 = por %p58, %p59
      %p61 = scmp.ne.s32.totalorder %s52, %s53
      %p62 = scmp.eq.s32.totalorder %s21, 0
      %p63 = por %p61, %p62
      %p64 = scmp.ne.s32.totalorder %s52, %s53
      %p65 = scmp.eq.s32.totalorder %s22, 1
      %p66 = por %p64, %p65
      %p68 = scmp.ne.s32.totalorder %s53, %s67
      %p69 = scmp.eq.s32.totalorder %s22, 0
      %p70 = por %p68, %p69
      %s72 = sadd.s32 %s71, 1
      %p75 = scmp.eq.s32.totalorder %s16, 1
      %p76 = scmp.ne.s32.totalorder %s71, %s73
      %p77 = scmp.eq.s32.totalorder %s16, 0
      %p78 = por %p76, %p77
      %p79 = scmp.ne.s32.totalorder %s71, %s73
      %p80 = scmp.eq.s32.totalorder %s21, 1
      %p81 = por %p79, %p80
      %p82 = scmp.ne.s32.totalorder %s73, %s74
      %p83 = scmp.eq.s32.totalorder %s21, 0
      %p84 = por %p82, %p83
      %p85 = scmp.ne.s32.totalorder %s73, %s74
      %p86 = scmp.eq.s32.totalorder %s22, 1
      %p87 = por %p85, %p86
      %p89 = scmp.ne.s32.totalorder %s74, %s88
      %p90 = scmp.eq.s32.totalorder %s22, 0
      %p91 = por %p89, %p90
      %s92 = ssub.s32 %s16, %s23
      %p93 = scmp.eq.s32.totalorder %s92, 0
      %s95 = sadd.s32 %s94, 1
      %s96 = scalar_select %p93, %s94, %s95
      %p99 = pneg %p93
      %p100 = scmp.eq.s32.totalorder %s16, 1
      %p101 = por %p99, %p100
      %p102 = scmp.ne.s32.totalorder %s94, %s97
      %p103 = scmp.eq.s32.totalorder %s16, 0
      %p104 = por %p102, %p103
      %p105 = scmp.ne.s32.totalorder %s94, %s97
      %p106 = scmp.eq.s32.totalorder %s21, 1
      %p107 = por %p105, %p106
      %p108 = scmp.ne.s32.totalorder %s97, %s98
      %p109 = scmp.eq.s32.totalorder %s21, 0
      %p110 = por %p108, %p109
      %p111 = scmp.ne.s32.totalorder %s97, %s98
      %p112 = scmp.eq.s32.totalorder %s22, 1
      %p113 = por %p111, %p112
      %p115 = scmp.ne.s32.totalorder %s98, %s114
      %p116 = scmp.eq.s32.totalorder %s22, 0
      %p117 = por %p115, %p116
      %p118 = scmp.le.s32.totalorder 1, %s16
      %p119 = scmp.lt.s32.totalorder %s16, 3
      %p120 = pnand %p118, %p119
      %p121 = pneg %p120
      // Predicated region
      $region9: #{tpu_custom_call.1} parent=5 // pred_check
        _
      $region10: #{tpu_custom_call.1} parent=5 // pred_check_branch
        %123 = sbr.rel (%p120) target = $region12
      $region11: #{tpu_custom_call.1} parent=5 // pred_region
        %s124 = ssub.s32 %s16, 1
        // Predicated region
        $region13: #{tpu_custom_call.1} parent=11 // pred_check
          %p125 = pneg %p63
        $region14: #{tpu_custom_call.1} parent=11 // pred_check_branch
          %127 = sbr.rel (%p125) target = $region16
        $region15: #{tpu_custom_call.1} parent=11 // pred_region
          %s129 = ssub.s32 576, 576
          %130 = vsyncadd [#allocation7], %s129
          %s131 = sshll.u32 [#allocation6], 4
          %s132 = int_to_ptr.vmem [resolvable:$true] %s131
          %137 = dma.hbm_to_vmem [thread:$0]  %s1, 576, %s132, [#allocation7], 64, 64, 4
        $region16: #{tpu_custom_call.1} parent=11 // pred_fallthru
          _
        // Predicated region
        $region17: #{tpu_custom_call.1} parent=11 // pred_check
          %p138 = pneg %p84
        $region18: #{tpu_custom_call.1} parent=11 // pred_check_branch
          %140 = sbr.rel (%p138) target = $region20
        $region19: #{tpu_custom_call.1} parent=11 // pred_region
          %s142 = ssub.s32 576, 576
          %143 = vsyncadd [#allocation7], %s142
          %s144 = sshll.u32 [#allocation8], 4
          %s145 = int_to_ptr.vmem [resolvable:$true] %s144
          %150 = dma.hbm_to_vmem [thread:$0]  %s2, 576, %s145, [#allocation7], 64, 64, 4
        $region20: #{tpu_custom_call.1} parent=11 // pred_fallthru
          _
      $region12: #{tpu_custom_call.1} parent=5 // pred_fallthru
        _
      %p151 = scmp.lt.s32.totalorder %s16, 2
      // Predicated region
      $region21: #{tpu_custom_call.1} parent=5 // pred_check
        %p152 = pneg %p151
      $region22: #{tpu_custom_call.1} parent=5 // pred_check_branch
        %154 = sbr.rel (%p152) target = $region24
      $region23: #{tpu_custom_call.1} parent=5 // pred_region
        // Predicated region
        $region25: #{tpu_custom_call.1} parent=23 // pred_check
          %p155 = pneg %p36
        $region26: #{tpu_custom_call.1} parent=23 // pred_check_branch
          %157 = sbr.rel (%p155) target = $region28
        $region27: #{tpu_custom_call.1} parent=23 // pred_region
          %s158 = sand.u32 %s26, 1
          %s159 = scalar_lea.sflag [#allocation4], %s158
          %s160 = sand.u32 %s26, 1
          %s161 = smul.addr %s160, 256
          %s162 = scalar_lea.vmem [#allocation3], %s161
          %s164 = ssub.s32 4096, 4096
          %165 = vsyncadd %s159, %s164
          %s166 = smul.addr %s16, 32
          %s167 = smul.addr %s166, 128
          %s168 = scalar_lea.hbm %s0, %s167
          %s169 = sshll.u32 %s162, 4
          %s170 = int_to_ptr.vmem [resolvable:$true] %s169
          %175 = dma.hbm_to_vmem [thread:$0]  %s168, 4096, %s170, %s159, 128, 128, 8
        $region28: #{tpu_custom_call.1} parent=23 // pred_fallthru
          _
      $region24: #{tpu_custom_call.1} parent=5 // pred_fallthru
        _
      %p176 = scmp.le.s32.totalorder 1, %s16
      %p177 = scmp.lt.s32.totalorder %s16, 3
      %p178 = pnand %p176, %p177
      %p179 = pneg %p178
      // Predicated region
      $region29: #{tpu_custom_call.1} parent=5 // pred_check
        _
      $region30: #{tpu_custom_call.1} parent=5 // pred_check_branch
        %181 = sbr.rel (%p178) target = $region32
      $region31: #{tpu_custom_call.1} parent=5 // pred_region
        %s182 = ssub.s32 %s16, 1
        %s183 = sand.u32 %s29, 1
        %s184 = scalar_lea.sflag [#allocation4], %s183
        %s185 = sand.u32 %s29, 1
        %s186 = smul.addr %s185, 256
        %s187 = scalar_lea.vmem [#allocation3], %s186
        // Predicated region
        $region33: #{tpu_custom_call.1} parent=31 // pred_check
          %p188 = pneg %p42
        $region34: #{tpu_custom_call.1} parent=31 // pred_check_branch
          %190 = sbr.rel (%p188) target = $region36
        $region35: #{tpu_custom_call.1} parent=31 // pred_region
          %191 = dma.done %s184, 4096
        $region36: #{tpu_custom_call.1} parent=31 // pred_fallthru
          _
        // Predicated region
        $region37: #{tpu_custom_call.1} parent=31 // pred_check
          %p192 = pneg %p63
        $region38: #{tpu_custom_call.1} parent=31 // pred_check_branch
          %194 = sbr.rel (%p192) target = $region40
        $region39: #{tpu_custom_call.1} parent=31 // pred_region
          %195 = dma.done [#allocation7], 576
        $region40: #{tpu_custom_call.1} parent=31 // pred_fallthru
          _
        // Predicated region
        $region41: #{tpu_custom_call.1} parent=31 // pred_check
          %p196 = pneg %p84
        $region42: #{tpu_custom_call.1} parent=31 // pred_check_branch
          %198 = sbr.rel (%p196) target = $region44
        $region43: #{tpu_custom_call.1} parent=31 // pred_region
          %199 = dma.done [#allocation7], 576
        $region44: #{tpu_custom_call.1} parent=31 // pred_fallthru
          _
        %s200 = sand.u32 %s29, 1
        %s201 = scalar_lea.sflag [#allocation4], %s200
        %s202 = sand.u32 %s29, 1
        %s203 = smul.addr %s202, 256
        %s204 = scalar_lea.vmem [#allocation3], %s203
        %p205 = pneg %p42
        %p206 = pneg %p39
        %p207 = pneg %p63
        %p208 = pneg %p60
        %p209 = pneg %p84
        %p210 = pneg %p81
        %p211 = pneg %p110
        %p212 = pneg %p107
        %s213 = sand.u32 %s97, 1
        %s214 = scalar_lea.sflag [#allocation5], %s213
        %s215 = sand.u32 %s97, 1
        %s216 = smul.addr %s215, 256
        %s217 = scalar_lea.vmem [#allocation9], %s216
        %v218 = vld [vmem:[%s187] sm:$0xff]
        %v219 = vld [vmem:[%s187 + $0x8] sm:$0xff]
        %v220 = vld [vmem:[%s187 + $0x10] sm:$0xff]
        %v221 = vld [vmem:[%s187 + $0x18] sm:$0xff]
        %v222 = vld [vmem:[%s187 + $0x20] sm:$0xff]
        %v223 = vld [vmem:[%s187 + $0x28] sm:$0xff]
        %v224 = vld [vmem:[%s187 + $0x30] sm:$0xff]
        %v225 = vld [vmem:[%s187 + $0x38] sm:$0xff]
        %v226 = vld [vmem:[%s187 + $0x40] sm:$0xff]
        %v227 = vld [vmem:[%s187 + $0x48] sm:$0xff]
        %v228 = vld [vmem:[%s187 + $0x50] sm:$0xff]
        %v229 = vld [vmem:[%s187 + $0x58] sm:$0xff]
        %v230 = vld [vmem:[%s187 + $0x60] sm:$0xff]
        %v231 = vld [vmem:[%s187 + $0x68] sm:$0xff]
        %v232 = vld [vmem:[%s187 + $0x70] sm:$0xff]
        %v233 = vld [vmem:[%s187 + $0x78] sm:$0xff]
        %v234 = vld [vmem:[%s187 + $0x80] sm:$0xff]
        %v235 = vld [vmem:[%s187 + $0x88] sm:$0xff]
        %v236 = vld [vmem:[%s187 + $0x90] sm:$0xff]
        %v237 = vld [vmem:[%s187 + $0x98] sm:$0xff]
        %v238 = vld [vmem:[%s187 + $0xa0] sm:$0xff]
        %v239 = vld [vmem:[%s187 + $0xa8] sm:$0xff]
        %v240 = vld [vmem:[%s187 + $0xb0] sm:$0xff]
        %v241 = vld [vmem:[%s187 + $0xb8] sm:$0xff]
        %v242 = vld [vmem:[%s187 + $0xc0] sm:$0xff]
        %v243 = vld [vmem:[%s187 + $0xc8] sm:$0xff]
        %v244 = vld [vmem:[%s187 + $0xd0] sm:$0xff]
        %v245 = vld [vmem:[%s187 + $0xd8] sm:$0xff]
        %v246 = vld [vmem:[%s187 + $0xe0] sm:$0xff]
        %v247 = vld [vmem:[%s187 + $0xe8] sm:$0xff]
        %v248 = vld [vmem:[%s187 + $0xf0] sm:$0xff]
        %v249 = vld [vmem:[%s187 + $0xf8] sm:$0xff]
        %s250 = scalar_lea.vmem [#allocation2], 24
        %vm251 = vcmask 31744
        %252 = vst.msk [vmem:[%s250 + $0x1] sm:$0xff] %vm251, %v218
        %253 = vst.msk [vmem:[%s250 + $0x9] sm:$0xff] %vm251, %v219
        %254 = vst.msk [vmem:[%s250 + $0x19] sm:$0xff] %vm251, %v220
        %255 = vst.msk [vmem:[%s250 + $0x21] sm:$0xff] %vm251, %v221
        %256 = vst.msk [vmem:[%s250 + $0x31] sm:$0xff] %vm251, %v222
        %257 = vst.msk [vmem:[%s250 + $0x39] sm:$0xff] %vm251, %v223
        %258 = vst.msk [vmem:[%s250 + $0x49] sm:$0xff] %vm251, %v224
        %259 = vst.msk [vmem:[%s250 + $0x51] sm:$0xff] %vm251, %v225
        %260 = vst.msk [vmem:[%s250 + $0x61] sm:$0xff] %vm251, %v226
        %261 = vst.msk [vmem:[%s250 + $0x69] sm:$0xff] %vm251, %v227
        %262 = vst.msk [vmem:[%s250 + $0x79] sm:$0xff] %vm251, %v228
        %263 = vst.msk [vmem:[%s250 + $0x81] sm:$0xff] %vm251, %v229
        %264 = vst.msk [vmem:[%s250 + $0x91] sm:$0xff] %vm251, %v230
        %265 = vst.msk [vmem:[%s250 + $0x99] sm:$0xff] %vm251, %v231
        %266 = vst.msk [vmem:[%s250 + $0xa9] sm:$0xff] %vm251, %v232
        %267 = vst.msk [vmem:[%s250 + $0xb1] sm:$0xff] %vm251, %v233
        %268 = vst.msk [vmem:[%s250 + $0xc1] sm:$0xff] %vm251, %v234
        %269 = vst.msk [vmem:[%s250 + $0xc9] sm:$0xff] %vm251, %v235
        %270 = vst.msk [vmem:[%s250 + $0xd9] sm:$0xff] %vm251, %v236
        %271 = vst.msk [vmem:[%s250 + $0xe1] sm:$0xff] %vm251, %v237
        %272 = vst.msk [vmem:[%s250 + $0xf1] sm:$0xff] %vm251, %v238
        %273 = vst.msk [vmem:[%s250 + $0xf9] sm:$0xff] %vm251, %v239
        %274 = vst.msk [vmem:[%s250 + $0x109] sm:$0xff] %vm251, %v240
        %275 = vst.msk [vmem:[%s250 + $0x111] sm:$0xff] %vm251, %v241
        %276 = vst.msk [vmem:[%s250 + $0x121] sm:$0xff] %vm251, %v242
        %277 = vst.msk [vmem:[%s250 + $0x129] sm:$0xff] %vm251, %v243
        %278 = vst.msk [vmem:[%s250 + $0x139] sm:$0xff] %vm251, %v244
        %279 = vst.msk [vmem:[%s250 + $0x141] sm:$0xff] %vm251, %v245
        %280 = vst.msk [vmem:[%s250 + $0x151] sm:$0xff] %vm251, %v246
        %281 = vst.msk [vmem:[%s250 + $0x159] sm:$0xff] %vm251, %v247
        %282 = vst.msk [vmem:[%s250 + $0x169] sm:$0xff] %vm251, %v248
        %283 = vst.msk [vmem:[%s250 + $0x171] sm:$0xff] %vm251, %v249
        %vm284 = vcmask 25601
        %285 = vst.msk [vmem:[%s250 - $0x1] sm:$0x2] %vm284, %v218
        %286 = vst.msk [vmem:[%s250 + $0x17] sm:$0x2] %vm284, %v220
        %287 = vst.msk [vmem:[%s250 + $0x2f] sm:$0x2] %vm284, %v222
        %288 = vst.msk [vmem:[%s250 + $0x47] sm:$0x2] %vm284, %v224
        %289 = vst.msk [vmem:[%s250 + $0x5f] sm:$0x2] %vm284, %v226
        %290 = vst.msk [vmem:[%s250 + $0x77] sm:$0x2] %vm284, %v228
        %291 = vst.msk [vmem:[%s250 + $0x8f] sm:$0x2] %vm284, %v230
        %292 = vst.msk [vmem:[%s250 + $0xa7] sm:$0x2] %vm284, %v232
        %293 = vst.msk [vmem:[%s250 + $0xbf] sm:$0x2] %vm284, %v234
        %294 = vst.msk [vmem:[%s250 + $0xd7] sm:$0x2] %vm284, %v236
        %295 = vst.msk [vmem:[%s250 + $0xef] sm:$0x2] %vm284, %v238
        %296 = vst.msk [vmem:[%s250 + $0x107] sm:$0x2] %vm284, %v240
        %297 = vst.msk [vmem:[%s250 + $0x11f] sm:$0x2] %vm284, %v242
        %298 = vst.msk [vmem:[%s250 + $0x137] sm:$0x2] %vm284, %v244
        %299 = vst.msk [vmem:[%s250 + $0x14f] sm:$0x2] %vm284, %v246
        %300 = vst.msk [vmem:[%s250 + $0x167] sm:$0x2] %vm284, %v248
        %vm301 = vcmask 30726
        %302 = vst.msk [vmem:[%s250 + $0xb] sm:$0x40] %vm301, %v219
        %303 = vst.msk [vmem:[%s250 + $0x23] sm:$0x40] %vm301, %v221
        %304 = vst.msk [vmem:[%s250 + $0x3b] sm:$0x40] %vm301, %v223
        %305 = vst.msk [vmem:[%s250 + $0x53] sm:$0x40] %vm301, %v225
        %306 = vst.msk [vmem:[%s250 + $0x6b] sm:$0x40] %vm301, %v227
        %307 = vst.msk [vmem:[%s250 + $0x83] sm:$0x40] %vm301, %v229
        %308 = vst.msk [vmem:[%s250 + $0x9b] sm:$0x40] %vm301, %v231
        %309 = vst.msk [vmem:[%s250 + $0xb3] sm:$0x40] %vm301, %v233
        %310 = vst.msk [vmem:[%s250 + $0xcb] sm:$0x40] %vm301, %v235
        %311 = vst.msk [vmem:[%s250 + $0xe3] sm:$0x40] %vm301, %v237
        %312 = vst.msk [vmem:[%s250 + $0xfb] sm:$0x40] %vm301, %v239
        %313 = vst.msk [vmem:[%s250 + $0x113] sm:$0x40] %vm301, %v241
        %314 = vst.msk [vmem:[%s250 + $0x12b] sm:$0x40] %vm301, %v243
        %315 = vst.msk [vmem:[%s250 + $0x143] sm:$0x40] %vm301, %v245
        %316 = vst.msk [vmem:[%s250 + $0x15b] sm:$0x40] %vm301, %v247
        %317 = vst.msk [vmem:[%s250 + $0x173] sm:$0x40] %vm301, %v249
        %s318 = scalar_lea.vmem [#allocation2], 48
        %v319 = vld [vmem:[%s318] sm:$0xff]
        %v320 = vld [vmem:[%s318 + $0x8] sm:$0xff]
        %v321 = vld [vmem:[%s318 + $0x10] sm:$0x3]
        %322 = vst.msk [vmem:[#allocation2] sm:$0xff] %vm251, %v319
        %323 = vst.msk [vmem:[#allocation2 + $0x8] sm:$0xff] %vm251, %v320
        %vm324 = vcmask 25600
        %325 = vst.msk [vmem:[#allocation2 + $0x10] sm:$0x3] %vm324, %v321
        %s326 = scalar_lea.vmem [#allocation2], 360
        %v327 = vld [vmem:[%s326] sm:$0xff]
        %v328 = vld [vmem:[%s326 + $0x8] sm:$0xff]
        %v329 = vld [vmem:[%s326 + $0x10] sm:$0x3]
        %s330 = scalar_lea.vmem [#allocation2], 408
        %331 = vst.msk [vmem:[%s330] sm:$0xff] %vm251, %v327
        %332 = vst.msk [vmem:[%s330 + $0x8] sm:$0xff] %vm251, %v328
        %333 = vst.msk [vmem:[%s330 + $0x10] sm:$0x3] %vm324, %v329
        %v334 = vld [vmem:[#allocation2] sm:$0xff]
        %v335 = vld [vmem:[#allocation2 + $0x8] sm:$0xff]
        %v336 = vld [vmem:[#allocation2 + $0x18] sm:$0xff]
        %v337 = vld [vmem:[#allocation2 + $0x20] sm:$0xff]
        %v338 = vld [vmem:[#allocation2 + $0x30] sm:$0xff]
        %v339 = vld [vmem:[#allocation2 + $0x38] sm:$0xff]
        %v340 = vld [vmem:[#allocation2 + $0x48] sm:$0xff]
        %v341 = vld [vmem:[#allocation2 + $0x50] sm:$0xff]
        %v342 = vld [vmem:[#allocation2 + $0x60] sm:$0xff]
        %v343 = vld [vmem:[#allocation2 + $0x68] sm:$0xff]
        %v344 = vld [vmem:[#allocation2 + $0x78] sm:$0xff]
        %v345 = vld [vmem:[#allocation2 + $0x80] sm:$0xff]
        %v346 = vld [vmem:[#allocation2 + $0x90] sm:$0xff]
        %v347 = vld [vmem:[#allocation2 + $0x98] sm:$0xff]
        %v348 = vld [vmem:[#allocation2 + $0xa8] sm:$0xff]
        %v349 = vld [vmem:[#allocation2 + $0xb0] sm:$0xff]
        %v350 = vld [vmem:[#allocation2 + $0xc0] sm:$0xff]
        %v351 = vld [vmem:[#allocation2 + $0xc8] sm:$0xff]
        %v352 = vld [vmem:[#allocation2 + $0xd8] sm:$0xff]
        %v353 = vld [vmem:[#allocation2 + $0xe0] sm:$0xff]
        %v354 = vld [vmem:[#allocation2 + $0xf0] sm:$0xff]
        %v355 = vld [vmem:[#allocation2 + $0xf8] sm:$0xff]
        %v356 = vld [vmem:[#allocation2 + $0x108] sm:$0xff]
        %v357 = vld [vmem:[#allocation2 + $0x110] sm:$0xff]
        %v358 = vld [vmem:[#allocation2 + $0x120] sm:$0xff]
        %v359 = vld [vmem:[#allocation2 + $0x128] sm:$0xff]
        %v360 = vld [vmem:[#allocation2 + $0x138] sm:$0xff]
        %v361 = vld [vmem:[#allocation2 + $0x140] sm:$0xff]
        %v362 = vld [vmem:[#allocation2 + $0x150] sm:$0xff]
        %v363 = vld [vmem:[#allocation2 + $0x158] sm:$0xff]
        %v364 = vld [vmem:[#allocation2 + $0x168] sm:$0xff]
        %v365 = vld [vmem:[#allocation2 + $0x170] sm:$0xff]
        %v366 = vld [vmem:[#allocation6] sm:$0xf]
        %v367 = vld [vmem:[#allocation2 + $0x1] sm:$0xff]
        %v368 = vld [vmem:[#allocation2 + $0x9] sm:$0xff]
        %v369 = vld [vmem:[#allocation2 + $0x19] sm:$0xff]
        %v370 = vld [vmem:[#allocation2 + $0x21] sm:$0xff]
        %v371 = vld [vmem:[#allocation2 + $0x31] sm:$0xff]
        %v372 = vld [vmem:[#allocation2 + $0x39] sm:$0xff]
        %v373 = vld [vmem:[#allocation2 + $0x49] sm:$0xff]
        %v374 = vld [vmem:[#allocation2 + $0x51] sm:$0xff]
        %v375 = vld [vmem:[#allocation2 + $0x61] sm:$0xff]
        %v376 = vld [vmem:[#allocation2 + $0x69] sm:$0xff]
        %v377 = vld [vmem:[#allocation2 + $0x79] sm:$0xff]
        %v378 = vld [vmem:[#allocation2 + $0x81] sm:$0xff]
        %v379 = vld [vmem:[#allocation2 + $0x91] sm:$0xff]
        %v380 = vld [vmem:[#allocation2 + $0x99] sm:$0xff]
        %v381 = vld [vmem:[#allocation2 + $0xa9] sm:$0xff]
        %v382 = vld [vmem:[#allocation2 + $0xb1] sm:$0xff]
        %v383 = vld [vmem:[#allocation2 + $0xc1] sm:$0xff]
        %v384 = vld [vmem:[#allocation2 + $0xc9] sm:$0xff]
        %v385 = vld [vmem:[#allocation2 + $0xd9] sm:$0xff]
        %v386 = vld [vmem:[#allocation2 + $0xe1] sm:$0xff]
        %v387 = vld [vmem:[#allocation2 + $0xf1] sm:$0xff]
        %v388 = vld [vmem:[#allocation2 + $0xf9] sm:$0xff]
        %v389 = vld [vmem:[#allocation2 + $0x109] sm:$0xff]
        %v390 = vld [vmem:[#allocation2 + $0x111] sm:$0xff]
        %v391 = vld [vmem:[#allocation2 + $0x121] sm:$0xff]
        %v392 = vld [vmem:[#allocation2 + $0x129] sm:$0xff]
        %v393 = vld [vmem:[#allocation2 + $0x139] sm:$0xff]
        %v394 = vld [vmem:[#allocation2 + $0x141] sm:$0xff]
        %v395 = vld [vmem:[#allocation2 + $0x151] sm:$0xff]
        %v396 = vld [vmem:[#allocation2 + $0x159] sm:$0xff]
        %v397 = vld [vmem:[#allocation2 + $0x169] sm:$0xff]
        %v398 = vld [vmem:[#allocation2 + $0x171] sm:$0xff]
        %s399 = scalar_lea.vmem [#allocation6], 4
        %v400 = vld [vmem:[%s399] sm:$0xf]
        %v402 = vsel %vm251, %v367, 0
        %v405 = vsel %vm251, %v368, 0
        %v408 = vsel %vm251, %v369, 0
        %v411 = vsel %vm251, %v370, 0
        %v414 = vsel %vm251, %v371, 0
        %v417 = vsel %vm251, %v372, 0
        %v420 = vsel %vm251, %v373, 0
        %v423 = vsel %vm251, %v374, 0
        %v426 = vsel %vm251, %v375, 0
        %v429 = vsel %vm251, %v376, 0
        %v432 = vsel %vm251, %v377, 0
        %v435 = vsel %vm251, %v378, 0
        %v438 = vsel %vm251, %v379, 0
        %v441 = vsel %vm251, %v380, 0
        %v444 = vsel %vm251, %v381, 0
        %v447 = vsel %vm251, %v382, 0
        %v450 = vsel %vm251, %v383, 0
        %v453 = vsel %vm251, %v384, 0
        %v456 = vsel %vm251, %v385, 0
        %v459 = vsel %vm251, %v386, 0
        %v462 = vsel %vm251, %v387, 0
        %v465 = vsel %vm251, %v388, 0
        %v468 = vsel %vm251, %v389, 0
        %v471 = vsel %vm251, %v390, 0
        %v474 = vsel %vm251, %v391, 0
        %v477 = vsel %vm251, %v392, 0
        %v480 = vsel %vm251, %v393, 0
        %v483 = vsel %vm251, %v394, 0
        %v486 = vsel %vm251, %v395, 0
        %v489 = vsel %vm251, %v396, 0
        %v492 = vsel %vm251, %v397, 0
        %v495 = vsel %vm251, %v398, 0
        %vm497 = vcmask 1043456
        %v499 = vsel %vm497, %v400, 0
        %501 = vmatprep.subr.mxu0 0.0
        %502 = vmatpush1.msra.mxu0 %v499
        %503 = vmatprep.subr.mxu0 0.0
        %504 = vmatpush1.msra.mxu0 0.0
        %505 = vmatprep.subr.mxu0 0.0
        %506 = vmatpush1.msra.mxu0 0.0
        %507 = vmatprep.subr.mxu0 0.0
        %508 = vmatpush1.msra.mxu0 0.0
        %509 = vmatprep.subr.mxu0 0.0
        %510 = vmatpush1.msra.mxu0 0.0
        %511 = vmatprep.subr.mxu0 0.0
        %512 = vmatpush1.msra.mxu0 0.0
        %513 = vmatprep.subr.mxu0 0.0
        %514 = vmatpush1.msra.mxu0 0.0
        %515 = vmatprep.subr.mxu0 0.0
        %516 = vmatpush1.msra.mxu0 0.0
        %517 = vmatprep.subr.mxu0 0.0
        %518 = vmatpush1.msra.mxu0 0.0
        %519 = vmatprep.subr.mxu0 0.0
        %520 = vmatpush1.msra.mxu0 0.0
        %521 = vmatprep.subr.mxu0 0.0
        %522 = vmatpush1.msra.mxu0 0.0
        %523 = vmatprep.subr.mxu0 0.0
        %524 = vmatpush1.msra.mxu0 0.0
        %525 = vmatprep.subr.mxu0 0.0
        %526 = vmatpush1.msra.mxu0 0.0
        %527 = vmatprep.subr.mxu0 0.0
        %528 = vmatpush1.msra.mxu0 0.0
        %529 = vmatprep.subr.mxu0 0.0
        %530 = vmatpush1.msra.mxu0 0.0
        %531 = vmatprep.subr.mxu0 0.0
        %532 = vmatpush1.msra.mxu0 0.0
        %533 = vmatprep.subr.mxu0 0.0
        %534 = vmatpush1.msra.mxu0 0.0
        %535 = vmatprep.subr.mxu0 0.0
        %536 = vmatpush1.msra.mxu0 0.0
        %537 = vmatprep.subr.mxu0 0.0
        %538 = vmatpush1.msra.mxu0 0.0
        %539 = vmatprep.subr.mxu0 0.0
        %540 = vmatpush1.msra.mxu0 0.0
        %541 = vmatprep.subr.mxu0 0.0
        %542 = vmatpush1.msra.mxu0 0.0
        %543 = vmatprep.subr.mxu0 0.0
        %544 = vmatpush1.msra.mxu0 0.0
        %545 = vmatprep.subr.mxu0 0.0
        %546 = vmatpush1.msra.mxu0 0.0
        %547 = vmatprep.subr.mxu0 0.0
        %548 = vmatpush1.msra.mxu0 0.0
        %549 = vmatprep.subr.mxu0 0.0
        %550 = vmatpush1.msra.mxu0 0.0
        %551 = vmatprep.subr.mxu0 0.0
        %552 = vmatpush1.msra.mxu0 0.0
        %553 = vmatprep.subr.mxu0 0.0
        %554 = vmatpush1.msra.mxu0 0.0
        %555 = vmatprep.subr.mxu0 0.0
        %556 = vmatpush1.msra.mxu0 0.0
        %557 = vmatprep.subr.mxu0 0.0
        %558 = vmatpush1.msra.mxu0 0.0
        %559 = vmatprep.subr.mxu0 0.0
        %560 = vmatpush1.msra.mxu0 0.0
        %561 = vmatprep.subr.mxu0 0.0
        %562 = vmatpush1.msra.mxu0 0.0
        %563 = vmatprep.subr.mxu0 0.0
        %564 = vmatpush1.msra.mxu0 0.0
        %565 = vmatprep.mubr.f32.mxu0 0.0
        %566 = vmatmul.mubr.f32.gmra.mrb[0].mxu0 %v402
        %v567 = vpop.f32.mrb[0].mxu0
        %v568 = vadd.f32 0.0, %v567
        %v569 = vpop.f32.mrb[0].mxu0
        %570 = vmatprep.mubr.f32.mxu0 0.0
        %571 = vmatmul.mubr.f32.gmra.mrb[0].mxu0 %v405
        %v572 = vpop.f32.mrb[0].mxu0
        %v573 = vadd.f32 0.0, %v572
        %v574 = vpop.f32.mrb[0].mxu0
        %575 = vmatprep.mubr.f32.mxu0 0.0
        %576 = vmatmul.mubr.f32.gmra.mrb[0].mxu0 %v408
        %v577 = vpop.f32.mrb[0].mxu0
        %v578 = vadd.f32 0.0, %v577
        %v579 = vpop.f32.mrb[0].mxu0
        %580 = vmatprep.mubr.f32.mxu0 0.0
        %581 = vmatmul.mubr.f32.gmra.mrb[0].mxu0 %v411
        %v582 = vpop.f32.mrb[0].mxu0
        %v583 = vadd.f32 0.0, %v582
        %v584 = vpop.f32.mrb[0].mxu0
        %585 = vmatprep.mubr.f32.mxu0 0.0
        %586 = vmatmul.mubr.f32.gmra.mrb[0].mxu0 %v414
        %v587 = vpop.f32.mrb[0].mxu0
        %v588 = vadd.f32 0.0, %v587
        %v589 = vpop.f32.mrb[0].mxu0
        %590 = vmatprep.mubr.f32.mxu0 0.0
        %591 = vmatmul.mubr.f32.gmra.mrb[0].mxu0 %v417
        %v592 = vpop.f32.mrb[0].mxu0
        %v593 = vadd.f32 0.0, %v592
        %v594 = vpop.f32.mrb[0].mxu0
        %595 = vmatprep.mubr.f32.mxu0 0.0
        %596 = vmatmul.mubr.f32.gmra.mrb[0].mxu0 %v420
        %v597 = vpop.f32.mrb[0].mxu0
        %v598 = vadd.f32 0.0, %v597
        %v599 = vpop.f32.mrb[0].mxu0
        %600 = vmatprep.mubr.f32.mxu0 0.0
        %601 = vmatmul.mubr.f32.gmra.mrb[0].mxu0 %v423
        %v602 = vpop.f32.mrb[0].mxu0
        %v603 = vadd.f32 0.0, %v602
        %v604 = vpop.f32.mrb[0].mxu0
        %605 = vmatprep.mubr.f32.mxu0 0.0
        %606 = vmatmul.mubr.f32.gmra.mrb[0].mxu0 %v426
        %v607 = vpop.f32.mrb[0].mxu0
        %v608 = vadd.f32 0.0, %v607
        %v609 = vpop.f32.mrb[0].mxu0
        %610 = vmatprep.mubr.f32.mxu0 0.0
        %611 = vmatmul.mubr.f32.gmra.mrb[0].mxu0 %v429
        %v612 = vpop.f32.mrb[0].mxu0
        %v613 = vadd.f32 0.0, %v612
        %v614 = vpop.f32.mrb[0].mxu0
        %615 = vmatprep.mubr.f32.mxu0 0.0
        %616 = vmatmul.mubr.f32.gmra.mrb[0].mxu0 %v432
        %v617 = vpop.f32.mrb[0].mxu0
        %v618 = vadd.f32 0.0, %v617
        %v619 = vpop.f32.mrb[0].mxu0
        %620 = vmatprep.mubr.f32.mxu0 0.0
        %621 = vmatmul.mubr.f32.gmra.mrb[0].mxu0 %v435
        %v622 = vpop.f32.mrb[0].mxu0
        %v623 = vadd.f32 0.0, %v622
        %v624 = vpop.f32.mrb[0].mxu0
        %625 = vmatprep.mubr.f32.mxu0 0.0
        %626 = vmatmul.mubr.f32.gmra.mrb[0].mxu0 %v438
        %v627 = vpop.f32.mrb[0].mxu0
        %v628 = vadd.f32 0.0, %v627
        %v629 = vpop.f32.mrb[0].mxu0
        %630 = vmatprep.mubr.f32.mxu0 0.0
        %631 = vmatmul.mubr.f32.gmra.mrb[0].mxu0 %v441
        %v632 = vpop.f32.mrb[0].mxu0
        %v633 = vadd.f32 0.0, %v632
        %v634 = vpop.f32.mrb[0].mxu0
        %635 = vmatprep.mubr.f32.mxu0 0.0
        %636 = vmatmul.mubr.f32.gmra.mrb[0].mxu0 %v444
        %v637 = vpop.f32.mrb[0].mxu0
        %v638 = vadd.f32 0.0, %v637
        %v639 = vpop.f32.mrb[0].mxu0
        %640 = vmatprep.mubr.f32.mxu0 0.0
        %641 = vmatmul.mubr.f32.gmra.mrb[0].mxu0 %v447
        %v642 = vpop.f32.mrb[0].mxu0
        %v643 = vadd.f32 0.0, %v642
        %v644 = vpop.f32.mrb[0].mxu0
        %645 = vmatprep.mubr.f32.mxu0 0.0
        %646 = vmatmul.mubr.f32.gmra.mrb[0].mxu0 %v450
        %v647 = vpop.f32.mrb[0].mxu0
        %v648 = vadd.f32 0.0, %v647
        %v649 = vpop.f32.mrb[0].mxu0
        %650 = vmatprep.mubr.f32.mxu0 0.0
        %651 = vmatmul.mubr.f32.gmra.mrb[0].mxu0 %v453
        %v652 = vpop.f32.mrb[0].mxu0
        %v653 = vadd.f32 0.0, %v652
        %v654 = vpop.f32.mrb[0].mxu0
        %655 = vmatprep.mubr.f32.mxu0 0.0
        %656 = vmatmul.mubr.f32.gmra.mrb[0].mxu0 %v456
        %v657 = vpop.f32.mrb[0].mxu0
        %v658 = vadd.f32 0.0, %v657
        %v659 = vpop.f32.mrb[0].mxu0
        %660 = vmatprep.mubr.f32.mxu0 0.0
        %661 = vmatmul.mubr.f32.gmra.mrb[0].mxu0 %v459
        %v662 = vpop.f32.mrb[0].mxu0
        %v663 = vadd.f32 0.0, %v662
        %v664 = vpop.f32.mrb[0].mxu0
        %665 = vmatprep.mubr.f32.mxu0 0.0
        %666 = vmatmul.mubr.f32.gmra.mrb[0].mxu0 %v462
        %v667 = vpop.f32.mrb[0].mxu0
        %v668 = vadd.f32 0.0, %v667
        %v669 = vpop.f32.mrb[0].mxu0
        %670 = vmatprep.mubr.f32.mxu0 0.0
        %671 = vmatmul.mubr.f32.gmra.mrb[0].mxu0 %v465
        %v672 = vpop.f32.mrb[0].mxu0
        %v673 = vadd.f32 0.0, %v672
        %v674 = vpop.f32.mrb[0].mxu0
        %675 = vmatprep.mubr.f32.mxu0 0.0
        %676 = vmatmul.mubr.f32.gmra.mrb[0].mxu0 %v468
        %v677 = vpop.f32.mrb[0].mxu0
        %v678 = vadd.f32 0.0, %v677
        %v679 = vpop.f32.mrb[0].mxu0
        %680 = vmatprep.mubr.f32.mxu0 0.0
        %681 = vmatmul.mubr.f32.gmra.mrb[0].mxu0 %v471
        %v682 = vpop.f32.mrb[0].mxu0
        %v683 = vadd.f32 0.0, %v682
        %v684 = vpop.f32.mrb[0].mxu0
        %685 = vmatprep.mubr.f32.mxu0 0.0
        %686 = vmatmul.mubr.f32.gmra.mrb[0].mxu0 %v474
        %v687 = vpop.f32.mrb[0].mxu0
        %v688 = vadd.f32 0.0, %v687
        %v689 = vpop.f32.mrb[0].mxu0
        %690 = vmatprep.mubr.f32.mxu0 0.0
        %691 = vmatmul.mubr.f32.gmra.mrb[0].mxu0 %v477
        %v692 = vpop.f32.mrb[0].mxu0
        %v693 = vadd.f32 0.0, %v692
        %v694 = vpop.f32.mrb[0].mxu0
        %695 = vmatprep.mubr.f32.mxu0 0.0
        %696 = vmatmul.mubr.f32.gmra.mrb[0].mxu0 %v480
        %v697 = vpop.f32.mrb[0].mxu0
        %v698 = vadd.f32 0.0, %v697
        %v699 = vpop.f32.mrb[0].mxu0
        %700 = vmatprep.mubr.f32.mxu0 0.0
        %701 = vmatmul.mubr.f32.gmra.mrb[0].mxu0 %v483
        %v702 = vpop.f32.mrb[0].mxu0
        %v703 = vadd.f32 0.0, %v702
        %v704 = vpop.f32.mrb[0].mxu0
        %705 = vmatprep.mubr.f32.mxu0 0.0
        %706 = vmatmul.mubr.f32.gmra.mrb[0].mxu0 %v486
        %v707 = vpop.f32.mrb[0].mxu0
        %v708 = vadd.f32 0.0, %v707
        %v709 = vpop.f32.mrb[0].mxu0
        %710 = vmatprep.mubr.f32.mxu0 0.0
        %711 = vmatmul.mubr.f32.gmra.mrb[0].mxu0 %v489
        %v712 = vpop.f32.mrb[0].mxu0
        %v713 = vadd.f32 0.0, %v712
        %v714 = vpop.f32.mrb[0].mxu0
        %715 = vmatprep.mubr.f32.mxu0 0.0
        %716 = vmatmul.mubr.f32.gmra.mrb[0].mxu0 %v492
        %v717 = vpop.f32.mrb[0].mxu0
        %v718 = vadd.f32 0.0, %v717
        %v719 = vpop.f32.mrb[0].mxu0
        %720 = vmatprep.mubr.f32.mxu0 0.0
        %721 = vmatmul.mubr.f32.gmra.mrb[0].mxu0 %v495
        %v722 = vpop.f32.mrb[0].mxu0
        %v723 = vadd.f32 0.0, %v722
        %v724 = vpop.f32.mrb[0].mxu0
        %725 = vdwg.mxu0
        %v727 = vsel %vm251, %v334, 0
        %v730 = vsel %vm251, %v335, 0
        %v733 = vsel %vm251, %v336, 0
        %v736 = vsel %vm251, %v337, 0
        %v739 = vsel %vm251, %v338, 0
        %v742 = vsel %vm251, %v339, 0
        %v745 = vsel %vm251, %v340, 0
        %v748 = vsel %vm251, %v341, 0
        %v751 = vsel %vm251, %v342, 0
        %v754 = vsel %vm251, %v343, 0
        %v757 = vsel %vm251, %v344, 0
        %v760 = vsel %vm251, %v345, 0
        %v763 = vsel %vm251, %v346, 0
        %v766 = vsel %vm251, %v347, 0
        %v769 = vsel %vm251, %v348, 0
        %v772 = vsel %vm251, %v349, 0
        %v775 = vsel %vm251, %v350, 0
        %v778 = vsel %vm251, %v351, 0
        %v781 = vsel %vm251, %v352, 0
        %v784 = vsel %vm251, %v353, 0
        %v787 = vsel %vm251, %v354, 0
        %v790 = vsel %vm251, %v355, 0
        %v793 = vsel %vm251, %v356, 0
        %v796 = vsel %vm251, %v357, 0
        %v799 = vsel %vm251, %v358, 0
        %v802 = vsel %vm251, %v359, 0
        %v805 = vsel %vm251, %v360, 0
        %v808 = vsel %vm251, %v361, 0
        %v811 = vsel %vm251, %v362, 0
        %v814 = vsel %vm251, %v363, 0
        %v817 = vsel %vm251, %v364, 0
        %v820 = vsel %vm251, %v365, 0
        %v823 = vsel %vm497, %v366, 0
        %825 = vmatprep.subr.mxu0 0.0
        %826 = vmatpush1.msra.mxu0 %v823
        %827 = vmatprep.subr.mxu0 0.0
        %828 = vmatpush1.msra.mxu0 0.0
        %829 = vmatprep.subr.mxu0 0.0
        %830 = vmatpush1.msra.mxu0 0.0
        %831 = vmatprep.subr.mxu0 0.0
        %832 = vmatpush1.msra.mxu0 0.0
        %833 = vmatprep.subr.mxu0 0.0
        %834 = vmatpush1.msra.mxu0 0.0
        %835 = vmatprep.subr.mxu0 0.0
        %836 = vmatpush1.msra.mxu0 0.0
        %837 = vmatprep.subr.mxu0 0.0
        %838 = vmatpush1.msra.mxu0 0.0
        %839 = vmatprep.subr.mxu0 0.0
        %840 = vmatpush1.msra.mxu0 0.0
        %841 = vmatprep.subr.mxu0 0.0
        %842 = vmatpush1.msra.mxu0 0.0
        %843 = vmatprep.subr.mxu0 0.0
        %844 = vmatpush1.msra.mxu0 0.0
        %845 = vmatprep.subr.mxu0 0.0
        %846 = vmatpush1.msra.mxu0 0.0
        %847 = vmatprep.subr.mxu0 0.0
        %848 = vmatpush1.msra.mxu0 0.0
        %849 = vmatprep.subr.mxu0 0.0
        %850 = vmatpush1.msra.mxu0 0.0
        %851 = vmatprep.subr.mxu0 0.0
        %852 = vmatpush1.msra.mxu0 0.0
        %853 = vmatprep.subr.mxu0 0.0
        %854 = vmatpush1.msra.mxu0 0.0
        %855 = vmatprep.subr.mxu0 0.0
        %856 = vmatpush1.msra.mxu0 0.0
        %857 = vmatprep.subr.mxu0 0.0
        %858 = vmatpush1.msra.mxu0 0.0
        %859 = vmatprep.subr.mxu0 0.0
        %860 = vmatpush1.msra.mxu0 0.0
        %861 = vmatprep.subr.mxu0 0.0
        %862 = vmatpush1.msra.mxu0 0.0
        %863 = vmatprep.subr.mxu0 0.0
        %864 = vmatpush1.msra.mxu0 0.0
        %865 = vmatprep.subr.mxu0 0.0
        %866 = vmatpush1.msra.mxu0 0.0
        %867 = vmatprep.subr.mxu0 0.0
        %868 = vmatpush1.msra.mxu0 0.0
        %869 = vmatprep.subr.mxu0 0.0
        %870 = vmatpush1.msra.mxu0 0.0
        %871 = vmatprep.subr.mxu0 0.0
        %872 = vmatpush1.msra.mxu0 0.0
        %873 = vmatprep.subr.mxu0 0.0
        %874 = vmatpush1.msra.mxu0 0.0
        %875 = vmatprep.subr.mxu0 0.0
        %876 = vmatpush1.msra.mxu0 0.0
        %877 = vmatprep.subr.mxu0 0.0
        %878 = vmatpush1.msra.mxu0 0.0
        %879 = vmatprep.subr.mxu0 0.0
        %880 = vmatpush1.msra.mxu0 0.0
        %881 = vmatprep.subr.mxu0 0.0
        %882 = vmatpush1.msra.mxu0 0.0
        %883 = vmatprep.subr.mxu0 0.0
        %884 = vmatpush1.msra.mxu0 0.0
        %885 = vmatprep.subr.mxu0 0.0
        %886 = vmatpush1.msra.mxu0 0.0
        %887 = vmatprep.subr.mxu0 0.0
        %888 = vmatpush1.msra.mxu0 0.0
        %889 = vmatprep.mubr.f32.mxu0 0.0
        %890 = vmatmul.mubr.f32.gmra.mrb[0].mxu0 %v727
        %v891 = vpop.f32.mrb[0].mxu0
        %v892 = vadd.f32 %v568, %v891
        %v893 = vpop.f32.mrb[0].mxu0
        %894 = vmatprep.mubr.f32.mxu0 0.0
        %895 = vmatmul.mubr.f32.gmra.mrb[0].mxu0 %v730
        %v896 = vpop.f32.mrb[0].mxu0
        %v897 = vadd.f32 %v573, %v896
        %v898 = vpop.f32.mrb[0].mxu0
        %899 = vmatprep.mubr.f32.mxu0 0.0
        %900 = vmatmul.mubr.f32.gmra.mrb[0].mxu0 %v733
        %v901 = vpop.f32.mrb[0].mxu0
        %v902 = vadd.f32 %v578, %v901
        %v903 = vpop.f32.mrb[0].mxu0
        %904 = vmatprep.mubr.f32.mxu0 0.0
        %905 = vmatmul.mubr.f32.gmra.mrb[0].mxu0 %v736
        %v906 = vpop.f32.mrb[0].mxu0
        %v907 = vadd.f32 %v583, %v906
        %v908 = vpop.f32.mrb[0].mxu0
        %909 = vmatprep.mubr.f32.mxu0 0.0
        %910 = vmatmul.mubr.f32.gmra.mrb[0].mxu0 %v739
        %v911 = vpop.f32.mrb[0].mxu0
        %v912 = vadd.f32 %v588, %v911
        %v913 = vpop.f32.mrb[0].mxu0
        %914 = vmatprep.mubr.f32.mxu0 0.0
        %915 = vmatmul.mubr.f32.gmra.mrb[0].mxu0 %v742
        %v916 = vpop.f32.mrb[0].mxu0
        %v917 = vadd.f32 %v593, %v916
        %v918 = vpop.f32.mrb[0].mxu0
        %919 = vmatprep.mubr.f32.mxu0 0.0
        %920 = vmatmul.mubr.f32.gmra.mrb[0].mxu0 %v745
        %v921 = vpop.f32.mrb[0].mxu0
        %v922 = vadd.f32 %v598, %v921
        %v923 = vpop.f32.mrb[0].mxu0
        %924 = vmatprep.mubr.f32.mxu0 0.0
        %925 = vmatmul.mubr.f32.gmra.mrb[0].mxu0 %v748
        %v926 = vpop.f32.mrb[0].mxu0
        %v927 = vadd.f32 %v603, %v926
        %v928 = vpop.f32.mrb[0].mxu0
        %929 = vmatprep.mubr.f32.mxu0 0.0
        %930 = vmatmul.mubr.f32.gmra.mrb[0].mxu0 %v751
        %v931 = vpop.f32.mrb[0].mxu0
        %v932 = vadd.f32 %v608, %v931
        %v933 = vpop.f32.mrb[0].mxu0
        %934 = vmatprep.mubr.f32.mxu0 0.0
        %935 = vmatmul.mubr.f32.gmra.mrb[0].mxu0 %v754
        %v936 = vpop.f32.mrb[0].mxu0
        %v937 = vadd.f32 %v613, %v936
        %v938 = vpop.f32.mrb[0].mxu0
        %939 = vmatprep.mubr.f32.mxu0 0.0
        %940 = vmatmul.mubr.f32.gmra.mrb[0].mxu0 %v757
        %v941 = vpop.f32.mrb[0].mxu0
        %v942 = vadd.f32 %v618, %v941
        %v943 = vpop.f32.mrb[0].mxu0
        %944 = vmatprep.mubr.f32.mxu0 0.0
        %945 = vmatmul.mubr.f32.gmra.mrb[0].mxu0 %v760
        %v946 = vpop.f32.mrb[0].mxu0
        %v947 = vadd.f32 %v623, %v946
        %v948 = vpop.f32.mrb[0].mxu0
        %949 = vmatprep.mubr.f32.mxu0 0.0
        %950 = vmatmul.mubr.f32.gmra.mrb[0].mxu0 %v763
        %v951 = vpop.f32.mrb[0].mxu0
        %v952 = vadd.f32 %v628, %v951
        %v953 = vpop.f32.mrb[0].mxu0
        %954 = vmatprep.mubr.f32.mxu0 0.0
        %955 = vmatmul.mubr.f32.gmra.mrb[0].mxu0 %v766
        %v956 = vpop.f32.mrb[0].mxu0
        %v957 = vadd.f32 %v633, %v956
        %v958 = vpop.f32.mrb[0].mxu0
        %959 = vmatprep.mubr.f32.mxu0 0.0
        %960 = vmatmul.mubr.f32.gmra.mrb[0].mxu0 %v769
        %v961 = vpop.f32.mrb[0].mxu0
        %v962 = vadd.f32 %v638, %v961
        %v963 = vpop.f32.mrb[0].mxu0
        %964 = vmatprep.mubr.f32.mxu0 0.0
        %965 = vmatmul.mubr.f32.gmra.mrb[0].mxu0 %v772
        %v966 = vpop.f32.mrb[0].mxu0
        %v967 = vadd.f32 %v643, %v966
        %v968 = vpop.f32.mrb[0].mxu0
        %969 = vmatprep.mubr.f32.mxu0 0.0
        %970 = vmatmul.mubr.f32.gmra.mrb[0].mxu0 %v775
        %v971 = vpop.f32.mrb[0].mxu0
        %v972 = vadd.f32 %v648, %v971
        %v973 = vpop.f32.mrb[0].mxu0
        %974 = vmatprep.mubr.f32.mxu0 0.0
        %975 = vmatmul.mubr.f32.gmra.mrb[0].mxu0 %v778
        %v976 = vpop.f32.mrb[0].mxu0
        %v977 = vadd.f32 %v653, %v976
        %v978 = vpop.f32.mrb[0].mxu0
        %979 = vmatprep.mubr.f32.mxu0 0.0
        %980 = vmatmul.mubr.f32.gmra.mrb[0].mxu0 %v781
        %v981 = vpop.f32.mrb[0].mxu0
        %v982 = vadd.f32 %v658, %v981
        %v983 = vpop.f32.mrb[0].mxu0
        %984 = vmatprep.mubr.f32.mxu0 0.0
        %985 = vmatmul.mubr.f32.gmra.mrb[0].mxu0 %v784
        %v986 = vpop.f32.mrb[0].mxu0
        %v987 = vadd.f32 %v663, %v986
        %v988 = vpop.f32.mrb[0].mxu0
        %989 = vmatprep.mubr.f32.mxu0 0.0
        %990 = vmatmul.mubr.f32.gmra.mrb[0].mxu0 %v787
        %v991 = vpop.f32.mrb[0].mxu0
        %v992 = vadd.f32 %v668, %v991
        %v993 = vpop.f32.mrb[0].mxu0
        %994 = vmatprep.mubr.f32.mxu0 0.0
        %995 = vmatmul.mubr.f32.gmra.mrb[0].mxu0 %v790
        %v996 = vpop.f32.mrb[0].mxu0
        %v997 = vadd.f32 %v673, %v996
        %v998 = vpop.f32.mrb[0].mxu0
        %999 = vmatprep.mubr.f32.mxu0 0.0
        %1000 = vmatmul.mubr.f32.gmra.mrb[0].mxu0 %v793
        %v1001 = vpop.f32.mrb[0].mxu0
        %v1002 = vadd.f32 %v678, %v1001
        %v1003 = vpop.f32.mrb[0].mxu0
        %1004 = vmatprep.mubr.f32.mxu0 0.0
        %1005 = vmatmul.mubr.f32.gmra.mrb[0].mxu0 %v796
        %v1006 = vpop.f32.mrb[0].mxu0
        %v1007 = vadd.f32 %v683, %v1006
        %v1008 = vpop.f32.mrb[0].mxu0
        %1009 = vmatprep.mubr.f32.mxu0 0.0
        %1010 = vmatmul.mubr.f32.gmra.mrb[0].mxu0 %v799
        %v1011 = vpop.f32.mrb[0].mxu0
        %v1012 = vadd.f32 %v688, %v1011
        %v1013 = vpop.f32.mrb[0].mxu0
        %1014 = vmatprep.mubr.f32.mxu0 0.0
        %1015 = vmatmul.mubr.f32.gmra.mrb[0].mxu0 %v802
        %v1016 = vpop.f32.mrb[0].mxu0
        %v1017 = vadd.f32 %v693, %v1016
        %v1018 = vpop.f32.mrb[0].mxu0
        %1019 = vmatprep.mubr.f32.mxu0 0.0
        %1020 = vmatmul.mubr.f32.gmra.mrb[0].mxu0 %v805
        %v1021 = vpop.f32.mrb[0].mxu0
        %v1022 = vadd.f32 %v698, %v1021
        %v1023 = vpop.f32.mrb[0].mxu0
        %1024 = vmatprep.mubr.f32.mxu0 0.0
        %1025 = vmatmul.mubr.f32.gmra.mrb[0].mxu0 %v808
        %v1026 = vpop.f32.mrb[0].mxu0
        %v1027 = vadd.f32 %v703, %v1026
        %v1028 = vpop.f32.mrb[0].mxu0
        %1029 = vmatprep.mubr.f32.mxu0 0.0
        %1030 = vmatmul.mubr.f32.gmra.mrb[0].mxu0 %v811
        %v1031 = vpop.f32.mrb[0].mxu0
        %v1032 = vadd.f32 %v708, %v1031
        %v1033 = vpop.f32.mrb[0].mxu0
        %1034 = vmatprep.mubr.f32.mxu0 0.0
        %1035 = vmatmul.mubr.f32.gmra.mrb[0].mxu0 %v814
        %v1036 = vpop.f32.mrb[0].mxu0
        %v1037 = vadd.f32 %v713, %v1036
        %v1038 = vpop.f32.mrb[0].mxu0
        %1039 = vmatprep.mubr.f32.mxu0 0.0
        %1040 = vmatmul.mubr.f32.gmra.mrb[0].mxu0 %v817
        %v1041 = vpop.f32.mrb[0].mxu0
        %v1042 = vadd.f32 %v718, %v1041
        %v1043 = vpop.f32.mrb[0].mxu0
        %1044 = vmatprep.mubr.f32.mxu0 0.0
        %1045 = vmatmul.mubr.f32.gmra.mrb[0].mxu0 %v820
        %v1046 = vpop.f32.mrb[0].mxu0
        %v1047 = vadd.f32 %v723, %v1046
        %v1048 = vpop.f32.mrb[0].mxu0
        %1049 = vdwg.mxu0
        %v1050 = vld [vmem:[#allocation2 + $0x2] sm:$0xff]
        %v1051 = vld [vmem:[#allocation2 + $0xa] sm:$0xff]
        %v1052 = vld [vmem:[#allocation2 + $0x1a] sm:$0xff]
        %v1053 = vld [vmem:[#allocation2 + $0x22] sm:$0xff]
        %v1054 = vld [vmem:[#allocation2 + $0x32] sm:$0xff]
        %v1055 = vld [vmem:[#allocation2 + $0x3a] sm:$0xff]
        %v1056 = vld [vmem:[#allocation2 + $0x4a] sm:$0xff]
        %v1057 = vld [vmem:[#allocation2 + $0x52] sm:$0xff]
        %v1058 = vld [vmem:[#allocation2 + $0x62] sm:$0xff]
        %v1059 = vld [vmem:[#allocation2 + $0x6a] sm:$0xff]
        %v1060 = vld [vmem:[#allocation2 + $0x7a] sm:$0xff]
        %v1061 = vld [vmem:[#allocation2 + $0x82] sm:$0xff]
        %v1062 = vld [vmem:[#allocation2 + $0x92] sm:$0xff]
        %v1063 = vld [vmem:[#allocation2 + $0x9a] sm:$0xff]
        %v1064 = vld [vmem:[#allocation2 + $0xaa] sm:$0xff]
        %v1065 = vld [vmem:[#allocation2 + $0xb2] sm:$0xff]
        %v1066 = vld [vmem:[#allocation2 + $0xc2] sm:$0xff]
        %v1067 = vld [vmem:[#allocation2 + $0xca] sm:$0xff]
        %v1068 = vld [vmem:[#allocation2 + $0xda] sm:$0xff]
        %v1069 = vld [vmem:[#allocation2 + $0xe2] sm:$0xff]
        %v1070 = vld [vmem:[#allocation2 + $0xf2] sm:$0xff]
        %v1071 = vld [vmem:[#allocation2 + $0xfa] sm:$0xff]
        %v1072 = vld [vmem:[#allocation2 + $0x10a] sm:$0xff]
        %v1073 = vld [vmem:[#allocation2 + $0x112] sm:$0xff]
        %v1074 = vld [vmem:[#allocation2 + $0x122] sm:$0xff]
        %v1075 = vld [vmem:[#allocation2 + $0x12a] sm:$0xff]
        %v1076 = vld [vmem:[#allocation2 + $0x13a] sm:$0xff]
        %v1077 = vld [vmem:[#allocation2 + $0x142] sm:$0xff]
        %v1078 = vld [vmem:[#allocation2 + $0x152] sm:$0xff]
        %v1079 = vld [vmem:[#allocation2 + $0x15a] sm:$0xff]
        %v1080 = vld [vmem:[#allocation2 + $0x16a] sm:$0xff]
        %v1081 = vld [vmem:[#allocation2 + $0x172] sm:$0xff]
        %s1082 = scalar_lea.vmem [#allocation6], 8
        %v1083 = vld [vmem:[%s1082] sm:$0xf]
        %v1085 = vsel %vm251, %v1050, 0
        %v1088 = vsel %vm251, %v1051, 0
        %v1091 = vsel %vm251, %v1052, 0
        %v1094 = vsel %vm251, %v1053, 0
        %v1097 = vsel %vm251, %v1054, 0
        %v1100 = vsel %vm251, %v1055, 0
        %v1103 = vsel %vm251, %v1056, 0
        %v1106 = vsel %vm251, %v1057, 0
        %v1109 = vsel %vm251, %v1058, 0
        %v1112 = vsel %vm251, %v1059, 0
        %v1115 = vsel %vm251, %v1060, 0
        %v1118 = vsel %vm251, %v1061, 0
        %v1121 = vsel %vm251, %v1062, 0
        %v1124 = vsel %vm251, %v1063, 0
        %v1127 = vsel %vm251, %v1064, 0
        %v1130 = vsel %vm251, %v1065, 0
        %v1133 = vsel %vm251, %v1066, 0
        %v1136 = vsel %vm251, %v1067, 0
        %v1139 = vsel %vm251, %v1068, 0
        %v1142 = vsel %vm251, %v1069, 0
        %v1145 = vsel %vm251, %v1070, 0
        %v1148 = vsel %vm251, %v1071, 0
        %v1151 = vsel %vm251, %v1072, 0
        %v1154 = vsel %vm251, %v1073, 0
        %v1157 = vsel %vm251, %v1074, 0
        %v1160 = vsel %vm251, %v1075, 0
        %v1163 = vsel %vm251, %v1076, 0
        %v1166 = vsel %vm251, %v1077, 0
        %v1169 = vsel %vm251, %v1078, 0
        %v1172 = vsel %vm251, %v1079, 0
        %v1175 = vsel %vm251, %v1080, 0
        %v1178 = vsel %vm251, %v1081, 0
        %v1181 = vsel %vm497, %v1083, 0
        %1183 = vmatprep.subr.mxu0 0.0
        %1184 = vmatpush1.msra.mxu0 %v1181
        %1185 = vmatprep.subr.mxu0 0.0
        %1186 = vmatpush1.msra.mxu0 0.0
        %1187 = vmatprep.subr.mxu0 0.0
        %1188 = vmatpush1.msra.mxu0 0.0
        %1189 = vmatprep.subr.mxu0 0.0
        %1190 = vmatpush1.msra.mxu0 0.0
        %1191 = vmatprep.subr.mxu0 0.0
        %1192 = vmatpush1.msra.mxu0 0.0
        %1193 = vmatprep.subr.mxu0 0.0
        %1194 = vmatpush1.msra.mxu0 0.0
        %1195 = vmatprep.subr.mxu0 0.0
        %1196 = vmatpush1.msra.mxu0 0.0
        %1197 = vmatprep.subr.mxu0 0.0
        %1198 = vmatpush1.msra.mxu0 0.0
        %1199 = vmatprep.subr.mxu0 0.0
        %1200 = vmatpush1.msra.mxu0 0.0
        %1201 = vmatprep.subr.mxu0 0.0
        %1202 = vmatpush1.msra.mxu0 0.0
        %1203 = vmatprep.subr.mxu0 0.0
        %1204 = vmatpush1.msra.mxu0 0.0
        %1205 = vmatprep.subr.mxu0 0.0
        %1206 = vmatpush1.msra.mxu0 0.0
        %1207 = vmatprep.subr.mxu0 0.0
        %1208 = vmatpush1.msra.mxu0 0.0
        %1209 = vmatprep.subr.mxu0 0.0
        %1210 = vmatpush1.msra.mxu0 0.0
        %1211 = vmatprep.subr.mxu0 0.0
        %1212 = vmatpush1.msra.mxu0 0.0
        %1213 = vmatprep.subr.mxu0 0.0
        %1214 = vmatpush1.msra.mxu0 0.0
        %1215 = vmatprep.subr.mxu0 0.0
        %1216 = vmatpush1.msra.mxu0 0.0
        %1217 = vmatprep.subr.mxu0 0.0
        %1218 = vmatpush1.msra.mxu0 0.0
        %1219 = vmatprep.subr.mxu0 0.0
        %1220 = vmatpush1.msra.mxu0 0.0
        %1221 = vmatprep.subr.mxu0 0.0
        %1222 = vmatpush1.msra.mxu0 0.0
        %1223 = vmatprep.subr.mxu0 0.0
        %1224 = vmatpush1.msra.mxu0 0.0
        %1225 = vmatprep.subr.mxu0 0.0
        %1226 = vmatpush1.msra.mxu0 0.0
        %1227 = vmatprep.subr.mxu0 0.0
        %1228 = vmatpush1.msra.mxu0 0.0
        %1229 = vmatprep.subr.mxu0 0.0
        %1230 = vmatpush1.msra.mxu0 0.0
        %1231 = vmatprep.subr.mxu0 0.0
        %1232 = vmatpush1.msra.mxu0 0.0
        %1233 = vmatprep.subr.mxu0 0.0
        %1234 = vmatpush1.msra.mxu0 0.0
        %1235 = vmatprep.subr.mxu0 0.0
        %1236 = vmatpush1.msra.mxu0 0.0
        %1237 = vmatprep.subr.mxu0 0.0
        %1238 = vmatpush1.msra.mxu0 0.0
        %1239 = vmatprep.subr.mxu0 0.0
        %1240 = vmatpush1.msra.mxu0 0.0
        %1241 = vmatprep.subr.mxu0 0.0
        %1242 = vmatpush1.msra.mxu0 0.0
        %1243 = vmatprep.subr.mxu0 0.0
        %1244 = vmatpush1.msra.mxu0 0.0
        %1245 = vmatprep.subr.mxu0 0.0
        %1246 = vmatpush1.msra.mxu0 0.0
        %1247 = vmatprep.mubr.f32.mxu0 0.0
        %1248 = vmatmul.mubr.f32.gmra.mrb[0].mxu0 %v1085
        %v1249 = vpop.f32.mrb[0].mxu0
        %v1250 = vadd.f32 0.0, %v1249
        %v1251 = vpop.f32.mrb[0].mxu0
        %1252 = vmatprep.mubr.f32.mxu0 0.0
        %1253 = vmatmul.mubr.f32.gmra.mrb[0].mxu0 %v1088
        %v1254 = vpop.f32.mrb[0].mxu0
        %v1255 = vadd.f32 0.0, %v1254
        %v1256 = vpop.f32.mrb[0].mxu0
        %1257 = vmatprep.mubr.f32.mxu0 0.0
        %1258 = vmatmul.mubr.f32.gmra.mrb[0].mxu0 %v1091
        %v1259 = vpop.f32.mrb[0].mxu0
        %v1260 = vadd.f32 0.0, %v1259
        %v1261 = vpop.f32.mrb[0].mxu0
        %1262 = vmatprep.mubr.f32.mxu0 0.0
        %1263 = vmatmul.mubr.f32.gmra.mrb[0].mxu0 %v1094
        %v1264 = vpop.f32.mrb[0].mxu0
        %v1265 = vadd.f32 0.0, %v1264
        %v1266 = vpop.f32.mrb[0].mxu0
        %1267 = vmatprep.mubr.f32.mxu0 0.0
        %1268 = vmatmul.mubr.f32.gmra.mrb[0].mxu0 %v1097
        %v1269 = vpop.f32.mrb[0].mxu0
        %v1270 = vadd.f32 0.0, %v1269
        %v1271 = vpop.f32.mrb[0].mxu0
        %1272 = vmatprep.mubr.f32.mxu0 0.0
        %1273 = vmatmul.mubr.f32.gmra.mrb[0].mxu0 %v1100
        %v1274 = vpop.f32.mrb[0].mxu0
        %v1275 = vadd.f32 0.0, %v1274
        %v1276 = vpop.f32.mrb[0].mxu0
        %1277 = vmatprep.mubr.f32.mxu0 0.0
        %1278 = vmatmul.mubr.f32.gmra.mrb[0].mxu0 %v1103
        %v1279 = vpop.f32.mrb[0].mxu0
        %v1280 = vadd.f32 0.0, %v1279
        %v1281 = vpop.f32.mrb[0].mxu0
        %1282 = vmatprep.mubr.f32.mxu0 0.0
        %1283 = vmatmul.mubr.f32.gmra.mrb[0].mxu0 %v1106
        %v1284 = vpop.f32.mrb[0].mxu0
        %v1285 = vadd.f32 0.0, %v1284
        %v1286 = vpop.f32.mrb[0].mxu0
        %1287 = vmatprep.mubr.f32.mxu0 0.0
        %1288 = vmatmul.mubr.f32.gmra.mrb[0].mxu0 %v1109
        %v1289 = vpop.f32.mrb[0].mxu0
        %v1290 = vadd.f32 0.0, %v1289
        %v1291 = vpop.f32.mrb[0].mxu0
        %1292 = vmatprep.mubr.f32.mxu0 0.0
        %1293 = vmatmul.mubr.f32.gmra.mrb[0].mxu0 %v1112
        %v1294 = vpop.f32.mrb[0].mxu0
        %v1295 = vadd.f32 0.0, %v1294
        %v1296 = vpop.f32.mrb[0].mxu0
        %1297 = vmatprep.mubr.f32.mxu0 0.0
        %1298 = vmatmul.mubr.f32.gmra.mrb[0].mxu0 %v1115
        %v1299 = vpop.f32.mrb[0].mxu0
        %v1300 = vadd.f32 0.0, %v1299
        %v1301 = vpop.f32.mrb[0].mxu0
        %1302 = vmatprep.mubr.f32.mxu0 0.0
        %1303 = vmatmul.mubr.f32.gmra.mrb[0].mxu0 %v1118
        %v1304 = vpop.f32.mrb[0].mxu0
        %v1305 = vadd.f32 0.0, %v1304
        %v1306 = vpop.f32.mrb[0].mxu0
        %1307 = vmatprep.mubr.f32.mxu0 0.0
        %1308 = vmatmul.mubr.f32.gmra.mrb[0].mxu0 %v1121
        %v1309 = vpop.f32.mrb[0].mxu0
        %v1310 = vadd.f32 0.0, %v1309
        %v1311 = vpop.f32.mrb[0].mxu0
        %1312 = vmatprep.mubr.f32.mxu0 0.0
        %1313 = vmatmul.mubr.f32.gmra.mrb[0].mxu0 %v1124
        %v1314 = vpop.f32.mrb[0].mxu0
        %v1315 = vadd.f32 0.0, %v1314
        %v1316 = vpop.f32.mrb[0].mxu0
        %1317 = vmatprep.mubr.f32.mxu0 0.0
        %1318 = vmatmul.mubr.f32.gmra.mrb[0].mxu0 %v1127
        %v1319 = vpop.f32.mrb[0].mxu0
        %v1320 = vadd.f32 0.0, %v1319
        %v1321 = vpop.f32.mrb[0].mxu0
        %1322 = vmatprep.mubr.f32.mxu0 0.0
        %1323 = vmatmul.mubr.f32.gmra.mrb[0].mxu0 %v1130
        %v1324 = vpop.f32.mrb[0].mxu0
        %v1325 = vadd.f32 0.0, %v1324
        %v1326 = vpop.f32.mrb[0].mxu0
        %1327 = vmatprep.mubr.f32.mxu0 0.0
        %1328 = vmatmul.mubr.f32.gmra.mrb[0].mxu0 %v1133
        %v1329 = vpop.f32.mrb[0].mxu0
        %v1330 = vadd.f32 0.0, %v1329
        %v1331 = vpop.f32.mrb[0].mxu0
        %1332 = vmatprep.mubr.f32.mxu0 0.0
        %1333 = vmatmul.mubr.f32.gmra.mrb[0].mxu0 %v1136
        %v1334 = vpop.f32.mrb[0].mxu0
        %v1335 = vadd.f32 0.0, %v1334
        %v1336 = vpop.f32.mrb[0].mxu0
        %1337 = vmatprep.mubr.f32.mxu0 0.0
        %1338 = vmatmul.mubr.f32.gmra.mrb[0].mxu0 %v1139
        %v1339 = vpop.f32.mrb[0].mxu0
        %v1340 = vadd.f32 0.0, %v1339
        %v1341 = vpop.f32.mrb[0].mxu0
        %1342 = vmatprep.mubr.f32.mxu0 0.0
        %1343 = vmatmul.mubr.f32.gmra.mrb[0].mxu0 %v1142
        %v1344 = vpop.f32.mrb[0].mxu0
        %v1345 = vadd.f32 0.0, %v1344
        %v1346 = vpop.f32.mrb[0].mxu0
        %1347 = vmatprep.mubr.f32.mxu0 0.0
        %1348 = vmatmul.mubr.f32.gmra.mrb[0].mxu0 %v1145
        %v1349 = vpop.f32.mrb[0].mxu0
        %v1350 = vadd.f32 0.0, %v1349
        %v1351 = vpop.f32.mrb[0].mxu0
        %1352 = vmatprep.mubr.f32.mxu0 0.0
        %1353 = vmatmul.mubr.f32.gmra.mrb[0].mxu0 %v1148
        %v1354 = vpop.f32.mrb[0].mxu0
        %v1355 = vadd.f32 0.0, %v1354
        %v1356 = vpop.f32.mrb[0].mxu0
        %1357 = vmatprep.mubr.f32.mxu0 0.0
        %1358 = vmatmul.mubr.f32.gmra.mrb[0].mxu0 %v1151
        %v1359 = vpop.f32.mrb[0].mxu0
        %v1360 = vadd.f32 0.0, %v1359
        %v1361 = vpop.f32.mrb[0].mxu0
        %1362 = vmatprep.mubr.f32.mxu0 0.0
        %1363 = vmatmul.mubr.f32.gmra.mrb[0].mxu0 %v1154
        %v1364 = vpop.f32.mrb[0].mxu0
        %v1365 = vadd.f32 0.0, %v1364
        %v1366 = vpop.f32.mrb[0].mxu0
        %1367 = vmatprep.mubr.f32.mxu0 0.0
        %1368 = vmatmul.mubr.f32.gmra.mrb[0].mxu0 %v1157
        %v1369 = vpop.f32.mrb[0].mxu0
        %v1370 = vadd.f32 0.0, %v1369
        %v1371 = vpop.f32.mrb[0].mxu0
        %1372 = vmatprep.mubr.f32.mxu0 0.0
        %1373 = vmatmul.mubr.f32.gmra.mrb[0].mxu0 %v1160
        %v1374 = vpop.f32.mrb[0].mxu0
        %v1375 = vadd.f32 0.0, %v1374
        %v1376 = vpop.f32.mrb[0].mxu0
        %1377 = vmatprep.mubr.f32.mxu0 0.0
        %1378 = vmatmul.mubr.f32.gmra.mrb[0].mxu0 %v1163
        %v1379 = vpop.f32.mrb[0].mxu0
        %v1380 = vadd.f32 0.0, %v1379
        %v1381 = vpop.f32.mrb[0].mxu0
        %1382 = vmatprep.mubr.f32.mxu0 0.0
        %1383 = vmatmul.mubr.f32.gmra.mrb[0].mxu0 %v1166
        %v1384 = vpop.f32.mrb[0].mxu0
        %v1385 = vadd.f32 0.0, %v1384
        %v1386 = vpop.f32.mrb[0].mxu0
        %1387 = vmatprep.mubr.f32.mxu0 0.0
        %1388 = vmatmul.mubr.f32.gmra.mrb[0].mxu0 %v1169
        %v1389 = vpop.f32.mrb[0].mxu0
        %v1390 = vadd.f32 0.0, %v1389
        %v1391 = vpop.f32.mrb[0].mxu0
        %1392 = vmatprep.mubr.f32.mxu0 0.0
        %1393 = vmatmul.mubr.f32.gmra.mrb[0].mxu0 %v1172
        %v1394 = vpop.f32.mrb[0].mxu0
        %v1395 = vadd.f32 0.0, %v1394
        %v1396 = vpop.f32.mrb[0].mxu0
        %1397 = vmatprep.mubr.f32.mxu0 0.0
        %1398 = vmatmul.mubr.f32.gmra.mrb[0].mxu0 %v1175
        %v1399 = vpop.f32.mrb[0].mxu0
        %v1400 = vadd.f32 0.0, %v1399
        %v1401 = vpop.f32.mrb[0].mxu0
        %1402 = vmatprep.mubr.f32.mxu0 0.0
        %1403 = vmatmul.mubr.f32.gmra.mrb[0].mxu0 %v1178
        %v1404 = vpop.f32.mrb[0].mxu0
        %v1405 = vadd.f32 0.0, %v1404
        %v1406 = vpop.f32.mrb[0].mxu0
        %1407 = vdwg.mxu0
        %v1408 = vadd.f32 %v892, %v1250
        %v1409 = vadd.f32 %v897, %v1255
        %v1410 = vadd.f32 %v902, %v1260
        %v1411 = vadd.f32 %v907, %v1265
        %v1412 = vadd.f32 %v912, %v1270
        %v1413 = vadd.f32 %v917, %v1275
        %v1414 = vadd.f32 %v922, %v1280
        %v1415 = vadd.f32 %v927, %v1285
        %v1416 = vadd.f32 %v932, %v1290
        %v1417 = vadd.f32 %v937, %v1295
        %v1418 = vadd.f32 %v942, %v1300
        %v1419 = vadd.f32 %v947, %v1305
        %v1420 = vadd.f32 %v952, %v1310
        %v1421 = vadd.f32 %v957, %v1315
        %v1422 = vadd.f32 %v962, %v1320
        %v1423 = vadd.f32 %v967, %v1325
        %v1424 = vadd.f32 %v972, %v1330
        %v1425 = vadd.f32 %v977, %v1335
        %v1426 = vadd.f32 %v982, %v1340
        %v1427 = vadd.f32 %v987, %v1345
        %v1428 = vadd.f32 %v992, %v1350
        %v1429 = vadd.f32 %v997, %v1355
        %v1430 = vadd.f32 %v1002, %v1360
        %v1431 = vadd.f32 %v1007, %v1365
        %v1432 = vadd.f32 %v1012, %v1370
        %v1433 = vadd.f32 %v1017, %v1375
        %v1434 = vadd.f32 %v1022, %v1380
        %v1435 = vadd.f32 %v1027, %v1385
        %v1436 = vadd.f32 %v1032, %v1390
        %v1437 = vadd.f32 %v1037, %v1395
        %v1438 = vadd.f32 %v1042, %v1400
        %v1439 = vadd.f32 %v1047, %v1405
        %v1440 = vld [vmem:[%s250] sm:$0xff]
        %v1441 = vld [vmem:[%s250 + $0x8] sm:$0xff]
        %v1442 = vld [vmem:[%s250 + $0x18] sm:$0xff]
        %v1443 = vld [vmem:[%s250 + $0x20] sm:$0xff]
        %v1444 = vld [vmem:[%s250 + $0x30] sm:$0xff]
        %v1445 = vld [vmem:[%s250 + $0x38] sm:$0xff]
        %v1446 = vld [vmem:[%s250 + $0x48] sm:$0xff]
        %v1447 = vld [vmem:[%s250 + $0x50] sm:$0xff]
        %v1448 = vld [vmem:[%s250 + $0x60] sm:$0xff]
        %v1449 = vld [vmem:[%s250 + $0x68] sm:$0xff]
        %v1450 = vld [vmem:[%s250 + $0x78] sm:$0xff]
        %v1451 = vld [vmem:[%s250 + $0x80] sm:$0xff]
        %v1452 = vld [vmem:[%s250 + $0x90] sm:$0xff]
        %v1453 = vld [vmem:[%s250 + $0x98] sm:$0xff]
        %v1454 = vld [vmem:[%s250 + $0xa8] sm:$0xff]
        %v1455 = vld [vmem:[%s250 + $0xb0] sm:$0xff]
        %v1456 = vld [vmem:[%s250 + $0xc0] sm:$0xff]
        %v1457 = vld [vmem:[%s250 + $0xc8] sm:$0xff]
        %v1458 = vld [vmem:[%s250 + $0xd8] sm:$0xff]
        %v1459 = vld [vmem:[%s250 + $0xe0] sm:$0xff]
        %v1460 = vld [vmem:[%s250 + $0xf0] sm:$0xff]
        %v1461 = vld [vmem:[%s250 + $0xf8] sm:$0xff]
        %v1462 = vld [vmem:[%s250 + $0x108] sm:$0xff]
        %v1463 = vld [vmem:[%s250 + $0x110] sm:$0xff]
        %v1464 = vld [vmem:[%s250 + $0x120] sm:$0xff]
        %v1465 = vld [vmem:[%s250 + $0x128] sm:$0xff]
        %v1466 = vld [vmem:[%s250 + $0x138] sm:$0xff]
        %v1467 = vld [vmem:[%s250 + $0x140] sm:$0xff]
        %v1468 = vld [vmem:[%s250 + $0x150] sm:$0xff]
        %v1469 = vld [vmem:[%s250 + $0x158] sm:$0xff]
        %v1470 = vld [vmem:[%s250 + $0x168] sm:$0xff]
        %v1471 = vld [vmem:[%s250 + $0x170] sm:$0xff]
        %s1472 = scalar_lea.vmem [#allocation6], 12
        %v1473 = vld [vmem:[%s1472] sm:$0xf]
        %v1475 = vsel %vm251, %v1440, 0
        %v1478 = vsel %vm251, %v1441, 0
        %v1481 = vsel %vm251, %v1442, 0
        %v1484 = vsel %vm251, %v1443, 0
        %v1487 = vsel %vm251, %v1444, 0
        %v1490 = vsel %vm251, %v1445, 0
        %v1493 = vsel %vm251, %v1446, 0
        %v1496 = vsel %vm251, %v1447, 0
        %v1499 = vsel %vm251, %v1448, 0
        %v1502 = vsel %vm251, %v1449, 0
        %v1505 = vsel %vm251, %v1450, 0
        %v1508 = vsel %vm251, %v1451, 0
        %v1511 = vsel %vm251, %v1452, 0
        %v1514 = vsel %vm251, %v1453, 0
        %v1517 = vsel %vm251, %v1454, 0
        %v1520 = vsel %vm251, %v1455, 0
        %v1523 = vsel %vm251, %v1456, 0
        %v1526 = vsel %vm251, %v1457, 0
        %v1529 = vsel %vm251, %v1458, 0
        %v1532 = vsel %vm251, %v1459, 0
        %v1535 = vsel %vm251, %v1460, 0
        %v1538 = vsel %vm251, %v1461, 0
        %v1541 = vsel %vm251, %v1462, 0
        %v1544 = vsel %vm251, %v1463, 0
        %v1547 = vsel %vm251, %v1464, 0
        %v1550 = vsel %vm251, %v1465, 0
        %v1553 = vsel %vm251, %v1466, 0
        %v1556 = vsel %vm251, %v1467, 0
        %v1559 = vsel %vm251, %v1468, 0
        %v1562 = vsel %vm251, %v1469, 0
        %v1565 = vsel %vm251, %v1470, 0
        %v1568 = vsel %vm251, %v1471, 0
        %v1571 = vsel %vm497, %v1473, 0
        %1573 = vmatprep.subr.mxu0 0.0
        %1574 = vmatpush1.msra.mxu0 %v1571
        %1575 = vmatprep.subr.mxu0 0.0
        %1576 = vmatpush1.msra.mxu0 0.0
        %1577 = vmatprep.subr.mxu0 0.0
        %1578 = vmatpush1.msra.mxu0 0.0
        %1579 = vmatprep.subr.mxu0 0.0
        %1580 = vmatpush1.msra.mxu0 0.0
        %1581 = vmatprep.subr.mxu0 0.0
        %1582 = vmatpush1.msra.mxu0 0.0
        %1583 = vmatprep.subr.mxu0 0.0
        %1584 = vmatpush1.msra.mxu0 0.0
        %1585 = vmatprep.subr.mxu0 0.0
        %1586 = vmatpush1.msra.mxu0 0.0
        %1587 = vmatprep.subr.mxu0 0.0
        %1588 = vmatpush1.msra.mxu0 0.0
        %1589 = vmatprep.subr.mxu0 0.0
        %1590 = vmatpush1.msra.mxu0 0.0
        %1591 = vmatprep.subr.mxu0 0.0
        %1592 = vmatpush1.msra.mxu0 0.0
        %1593 = vmatprep.subr.mxu0 0.0
        %1594 = vmatpush1.msra.mxu0 0.0
        %1595 = vmatprep.subr.mxu0 0.0
        %1596 = vmatpush1.msra.mxu0 0.0
        %1597 = vmatprep.subr.mxu0 0.0
        %1598 = vmatpush1.msra.mxu0 0.0
        %1599 = vmatprep.subr.mxu0 0.0
        %1600 = vmatpush1.msra.mxu0 0.0
        %1601 = vmatprep.subr.mxu0 0.0
        %1602 = vmatpush1.msra.mxu0 0.0
        %1603 = vmatprep.subr.mxu0 0.0
        %1604 = vmatpush1.msra.mxu0 0.0
        %1605 = vmatprep.subr.mxu0 0.0
        %1606 = vmatpush1.msra.mxu0 0.0
        %1607 = vmatprep.subr.mxu0 0.0
        %1608 = vmatpush1.msra.mxu0 0.0
        %1609 = vmatprep.subr.mxu0 0.0
        %1610 = vmatpush1.msra.mxu0 0.0
        %1611 = vmatprep.subr.mxu0 0.0
        %1612 = vmatpush1.msra.mxu0 0.0
        %1613 = vmatprep.subr.mxu0 0.0
        %1614 = vmatpush1.msra.mxu0 0.0
        %1615 = vmatprep.subr.mxu0 0.0
        %1616 = vmatpush1.msra.mxu0 0.0
        %1617 = vmatprep.subr.mxu0 0.0
        %1618 = vmatpush1.msra.mxu0 0.0
        %1619 = vmatprep.subr.mxu0 0.0
        %1620 = vmatpush1.msra.mxu0 0.0
        %1621 = vmatprep.subr.mxu0 0.0
        %1622 = vmatpush1.msra.mxu0 0.0
        %1623 = vmatprep.subr.mxu0 0.0
        %1624 = vmatpush1.msra.mxu0 0.0
        %1625 = vmatprep.subr.mxu0 0.0
        %1626 = vmatpush1.msra.mxu0 0.0
        %1627 = vmatprep.subr.mxu0 0.0
        %1628 = vmatpush1.msra.mxu0 0.0
        %1629 = vmatprep.subr.mxu0 0.0
        %1630 = vmatpush1.msra.mxu0 0.0
        %1631 = vmatprep.subr.mxu0 0.0
        %1632 = vmatpush1.msra.mxu0 0.0
        %1633 = vmatprep.subr.mxu0 0.0
        %1634 = vmatpush1.msra.mxu0 0.0
        %1635 = vmatprep.subr.mxu0 0.0
        %1636 = vmatpush1.msra.mxu0 0.0
        %1637 = vmatprep.mubr.f32.mxu0 0.0
        %1638 = vmatmul.mubr.f32.gmra.mrb[0].mxu0 %v1475
        %v1639 = vpop.f32.mrb[0].mxu0
        %v1640 = vadd.f32 0.0, %v1639
        %v1641 = vpop.f32.mrb[0].mxu0
        %1642 = vmatprep.mubr.f32.mxu0 0.0
        %1643 = vmatmul.mubr.f32.gmra.mrb[0].mxu0 %v1478
        %v1644 = vpop.f32.mrb[0].mxu0
        %v1645 = vadd.f32 0.0, %v1644
        %v1646 = vpop.f32.mrb[0].mxu0
        %1647 = vmatprep.mubr.f32.mxu0 0.0
        %1648 = vmatmul.mubr.f32.gmra.mrb[0].mxu0 %v1481
        %v1649 = vpop.f32.mrb[0].mxu0
        %v1650 = vadd.f32 0.0, %v1649
        %v1651 = vpop.f32.mrb[0].mxu0
        %1652 = vmatprep.mubr.f32.mxu0 0.0
        %1653 = vmatmul.mubr.f32.gmra.mrb[0].mxu0 %v1484
        %v1654 = vpop.f32.mrb[0].mxu0
        %v1655 = vadd.f32 0.0, %v1654
        %v1656 = vpop.f32.mrb[0].mxu0
        %1657 = vmatprep.mubr.f32.mxu0 0.0
        %1658 = vmatmul.mubr.f32.gmra.mrb[0].mxu0 %v1487
        %v1659 = vpop.f32.mrb[0].mxu0
        %v1660 = vadd.f32 0.0, %v1659
        %v1661 = vpop.f32.mrb[0].mxu0
        %1662 = vmatprep.mubr.f32.mxu0 0.0
        %1663 = vmatmul.mubr.f32.gmra.mrb[0].mxu0 %v1490
        %v1664 = vpop.f32.mrb[0].mxu0
        %v1665 = vadd.f32 0.0, %v1664
        %v1666 = vpop.f32.mrb[0].mxu0
        %1667 = vmatprep.mubr.f32.mxu0 0.0
        %1668 = vmatmul.mubr.f32.gmra.mrb[0].mxu0 %v1493
        %v1669 = vpop.f32.mrb[0].mxu0
        %v1670 = vadd.f32 0.0, %v1669
        %v1671 = vpop.f32.mrb[0].mxu0
        %1672 = vmatprep.mubr.f32.mxu0 0.0
        %1673 = vmatmul.mubr.f32.gmra.mrb[0].mxu0 %v1496
        %v1674 = vpop.f32.mrb[0].mxu0
        %v1675 = vadd.f32 0.0, %v1674
        %v1676 = vpop.f32.mrb[0].mxu0
        %1677 = vmatprep.mubr.f32.mxu0 0.0
        %1678 = vmatmul.mubr.f32.gmra.mrb[0].mxu0 %v1499
        %v1679 = vpop.f32.mrb[0].mxu0
        %v1680 = vadd.f32 0.0, %v1679
        %v1681 = vpop.f32.mrb[0].mxu0
        %1682 = vmatprep.mubr.f32.mxu0 0.0
        %1683 = vmatmul.mubr.f32.gmra.mrb[0].mxu0 %v1502
        %v1684 = vpop.f32.mrb[0].mxu0
        %v1685 = vadd.f32 0.0, %v1684
        %v1686 = vpop.f32.mrb[0].mxu0
        %1687 = vmatprep.mubr.f32.mxu0 0.0
        %1688 = vmatmul.mubr.f32.gmra.mrb[0].mxu0 %v1505
        %v1689 = vpop.f32.mrb[0].mxu0
        %v1690 = vadd.f32 0.0, %v1689
        %v1691 = vpop.f32.mrb[0].mxu0
        %1692 = vmatprep.mubr.f32.mxu0 0.0
        %1693 = vmatmul.mubr.f32.gmra.mrb[0].mxu0 %v1508
        %v1694 = vpop.f32.mrb[0].mxu0
        %v1695 = vadd.f32 0.0, %v1694
        %v1696 = vpop.f32.mrb[0].mxu0
        %1697 = vmatprep.mubr.f32.mxu0 0.0
        %1698 = vmatmul.mubr.f32.gmra.mrb[0].mxu0 %v1511
        %v1699 = vpop.f32.mrb[0].mxu0
        %v1700 = vadd.f32 0.0, %v1699
        %v1701 = vpop.f32.mrb[0].mxu0
        %1702 = vmatprep.mubr.f32.mxu0 0.0
        %1703 = vmatmul.mubr.f32.gmra.mrb[0].mxu0 %v1514
        %v1704 = vpop.f32.mrb[0].mxu0
        %v1705 = vadd.f32 0.0, %v1704
        %v1706 = vpop.f32.mrb[0].mxu0
        %1707 = vmatprep.mubr.f32.mxu0 0.0
        %1708 = vmatmul.mubr.f32.gmra.mrb[0].mxu0 %v1517
        %v1709 = vpop.f32.mrb[0].mxu0
        %v1710 = vadd.f32 0.0, %v1709
        %v1711 = vpop.f32.mrb[0].mxu0
        %1712 = vmatprep.mubr.f32.mxu0 0.0
        %1713 = vmatmul.mubr.f32.gmra.mrb[0].mxu0 %v1520
        %v1714 = vpop.f32.mrb[0].mxu0
        %v1715 = vadd.f32 0.0, %v1714
        %v1716 = vpop.f32.mrb[0].mxu0
        %1717 = vmatprep.mubr.f32.mxu0 0.0
        %1718 = vmatmul.mubr.f32.gmra.mrb[0].mxu0 %v1523
        %v1719 = vpop.f32.mrb[0].mxu0
        %v1720 = vadd.f32 0.0, %v1719
        %v1721 = vpop.f32.mrb[0].mxu0
        %1722 = vmatprep.mubr.f32.mxu0 0.0
        %1723 = vmatmul.mubr.f32.gmra.mrb[0].mxu0 %v1526
        %v1724 = vpop.f32.mrb[0].mxu0
        %v1725 = vadd.f32 0.0, %v1724
        %v1726 = vpop.f32.mrb[0].mxu0
        %1727 = vmatprep.mubr.f32.mxu0 0.0
        %1728 = vmatmul.mubr.f32.gmra.mrb[0].mxu0 %v1529
        %v1729 = vpop.f32.mrb[0].mxu0
        %v1730 = vadd.f32 0.0, %v1729
        %v1731 = vpop.f32.mrb[0].mxu0
        %1732 = vmatprep.mubr.f32.mxu0 0.0
        %1733 = vmatmul.mubr.f32.gmra.mrb[0].mxu0 %v1532
        %v1734 = vpop.f32.mrb[0].mxu0
        %v1735 = vadd.f32 0.0, %v1734
        %v1736 = vpop.f32.mrb[0].mxu0
        %1737 = vmatprep.mubr.f32.mxu0 0.0
        %1738 = vmatmul.mubr.f32.gmra.mrb[0].mxu0 %v1535
        %v1739 = vpop.f32.mrb[0].mxu0
        %v1740 = vadd.f32 0.0, %v1739
        %v1741 = vpop.f32.mrb[0].mxu0
        %1742 = vmatprep.mubr.f32.mxu0 0.0
        %1743 = vmatmul.mubr.f32.gmra.mrb[0].mxu0 %v1538
        %v1744 = vpop.f32.mrb[0].mxu0
        %v1745 = vadd.f32 0.0, %v1744
        %v1746 = vpop.f32.mrb[0].mxu0
        %1747 = vmatprep.mubr.f32.mxu0 0.0
        %1748 = vmatmul.mubr.f32.gmra.mrb[0].mxu0 %v1541
        %v1749 = vpop.f32.mrb[0].mxu0
        %v1750 = vadd.f32 0.0, %v1749
        %v1751 = vpop.f32.mrb[0].mxu0
        %1752 = vmatprep.mubr.f32.mxu0 0.0
        %1753 = vmatmul.mubr.f32.gmra.mrb[0].mxu0 %v1544
        %v1754 = vpop.f32.mrb[0].mxu0
        %v1755 = vadd.f32 0.0, %v1754
        %v1756 = vpop.f32.mrb[0].mxu0
        %1757 = vmatprep.mubr.f32.mxu0 0.0
        %1758 = vmatmul.mubr.f32.gmra.mrb[0].mxu0 %v1547
        %v1759 = vpop.f32.mrb[0].mxu0
        %v1760 = vadd.f32 0.0, %v1759
        %v1761 = vpop.f32.mrb[0].mxu0
        %1762 = vmatprep.mubr.f32.mxu0 0.0
        %1763 = vmatmul.mubr.f32.gmra.mrb[0].mxu0 %v1550
        %v1764 = vpop.f32.mrb[0].mxu0
        %v1765 = vadd.f32 0.0, %v1764
        %v1766 = vpop.f32.mrb[0].mxu0
        %1767 = vmatprep.mubr.f32.mxu0 0.0
        %1768 = vmatmul.mubr.f32.gmra.mrb[0].mxu0 %v1553
        %v1769 = vpop.f32.mrb[0].mxu0
        %v1770 = vadd.f32 0.0, %v1769
        %v1771 = vpop.f32.mrb[0].mxu0
        %1772 = vmatprep.mubr.f32.mxu0 0.0
        %1773 = vmatmul.mubr.f32.gmra.mrb[0].mxu0 %v1556
        %v1774 = vpop.f32.mrb[0].mxu0
        %v1775 = vadd.f32 0.0, %v1774
        %v1776 = vpop.f32.mrb[0].mxu0
        %1777 = vmatprep.mubr.f32.mxu0 0.0
        %1778 = vmatmul.mubr.f32.gmra.mrb[0].mxu0 %v1559
        %v1779 = vpop.f32.mrb[0].mxu0
        %v1780 = vadd.f32 0.0, %v1779
        %v1781 = vpop.f32.mrb[0].mxu0
        %1782 = vmatprep.mubr.f32.mxu0 0.0
        %1783 = vmatmul.mubr.f32.gmra.mrb[0].mxu0 %v1562
        %v1784 = vpop.f32.mrb[0].mxu0
        %v1785 = vadd.f32 0.0, %v1784
        %v1786 = vpop.f32.mrb[0].mxu0
        %1787 = vmatprep.mubr.f32.mxu0 0.0
        %1788 = vmatmul.mubr.f32.gmra.mrb[0].mxu0 %v1565
        %v1789 = vpop.f32.mrb[0].mxu0
        %v1790 = vadd.f32 0.0, %v1789
        %v1791 = vpop.f32.mrb[0].mxu0
        %1792 = vmatprep.mubr.f32.mxu0 0.0
        %1793 = vmatmul.mubr.f32.gmra.mrb[0].mxu0 %v1568
        %v1794 = vpop.f32.mrb[0].mxu0
        %v1795 = vadd.f32 0.0, %v1794
        %v1796 = vpop.f32.mrb[0].mxu0
        %1797 = vdwg.mxu0
        %v1798 = vadd.f32 %v1408, %v1640
        %v1799 = vadd.f32 %v1409, %v1645
        %v1800 = vadd.f32 %v1410, %v1650
        %v1801 = vadd.f32 %v1411, %v1655
        %v1802 = vadd.f32 %v1412, %v1660
        %v1803 = vadd.f32 %v1413, %v1665
        %v1804 = vadd.f32 %v1414, %v1670
        %v1805 = vadd.f32 %v1415, %v1675
        %v1806 = vadd.f32 %v1416, %v1680
        %v1807 = vadd.f32 %v1417, %v1685
        %v1808 = vadd.f32 %v1418, %v1690
        %v1809 = vadd.f32 %v1419, %v1695
        %v1810 = vadd.f32 %v1420, %v1700
        %v1811 = vadd.f32 %v1421, %v1705
        %v1812 = vadd.f32 %v1422, %v1710
        %v1813 = vadd.f32 %v1423, %v1715
        %v1814 = vadd.f32 %v1424, %v1720
        %v1815 = vadd.f32 %v1425, %v1725
        %v1816 = vadd.f32 %v1426, %v1730
        %v1817 = vadd.f32 %v1427, %v1735
        %v1818 = vadd.f32 %v1428, %v1740
        %v1819 = vadd.f32 %v1429, %v1745
        %v1820 = vadd.f32 %v1430, %v1750
        %v1821 = vadd.f32 %v1431, %v1755
        %v1822 = vadd.f32 %v1432, %v1760
        %v1823 = vadd.f32 %v1433, %v1765
        %v1824 = vadd.f32 %v1434, %v1770
        %v1825 = vadd.f32 %v1435, %v1775
        %v1826 = vadd.f32 %v1436, %v1780
        %v1827 = vadd.f32 %v1437, %v1785
        %v1828 = vadd.f32 %v1438, %v1790
        %v1829 = vadd.f32 %v1439, %v1795
        %v1830 = vld [vmem:[%s250 + $0x1] sm:$0xff]
        %v1831 = vld [vmem:[%s250 + $0x9] sm:$0xff]
        %v1832 = vld [vmem:[%s250 + $0x19] sm:$0xff]
        %v1833 = vld [vmem:[%s250 + $0x21] sm:$0xff]
        %v1834 = vld [vmem:[%s250 + $0x31] sm:$0xff]
        %v1835 = vld [vmem:[%s250 + $0x39] sm:$0xff]
        %v1836 = vld [vmem:[%s250 + $0x49] sm:$0xff]
        %v1837 = vld [vmem:[%s250 + $0x51] sm:$0xff]
        %v1838 = vld [vmem:[%s250 + $0x61] sm:$0xff]
        %v1839 = vld [vmem:[%s250 + $0x69] sm:$0xff]
        %v1840 = vld [vmem:[%s250 + $0x79] sm:$0xff]
        %v1841 = vld [vmem:[%s250 + $0x81] sm:$0xff]
        %v1842 = vld [vmem:[%s250 + $0x91] sm:$0xff]
        %v1843 = vld [vmem:[%s250 + $0x99] sm:$0xff]
        %v1844 = vld [vmem:[%s250 + $0xa9] sm:$0xff]
        %v1845 = vld [vmem:[%s250 + $0xb1] sm:$0xff]
        %v1846 = vld [vmem:[%s250 + $0xc1] sm:$0xff]
        %v1847 = vld [vmem:[%s250 + $0xc9] sm:$0xff]
        %v1848 = vld [vmem:[%s250 + $0xd9] sm:$0xff]
        %v1849 = vld [vmem:[%s250 + $0xe1] sm:$0xff]
        %v1850 = vld [vmem:[%s250 + $0xf1] sm:$0xff]
        %v1851 = vld [vmem:[%s250 + $0xf9] sm:$0xff]
        %v1852 = vld [vmem:[%s250 + $0x109] sm:$0xff]
        %v1853 = vld [vmem:[%s250 + $0x111] sm:$0xff]
        %v1854 = vld [vmem:[%s250 + $0x121] sm:$0xff]
        %v1855 = vld [vmem:[%s250 + $0x129] sm:$0xff]
        %v1856 = vld [vmem:[%s250 + $0x139] sm:$0xff]
        %v1857 = vld [vmem:[%s250 + $0x141] sm:$0xff]
        %v1858 = vld [vmem:[%s250 + $0x151] sm:$0xff]
        %v1859 = vld [vmem:[%s250 + $0x159] sm:$0xff]
        %v1860 = vld [vmem:[%s250 + $0x169] sm:$0xff]
        %v1861 = vld [vmem:[%s250 + $0x171] sm:$0xff]
        %s1862 = scalar_lea.vmem [#allocation6], 16
        %v1863 = vld [vmem:[%s1862] sm:$0xf]
        %v1865 = vsel %vm251, %v1830, 0
        %v1868 = vsel %vm251, %v1831, 0
        %v1871 = vsel %vm251, %v1832, 0
        %v1874 = vsel %vm251, %v1833, 0
        %v1877 = vsel %vm251, %v1834, 0
        %v1880 = vsel %vm251, %v1835, 0
        %v1883 = vsel %vm251, %v1836, 0
        %v1886 = vsel %vm251, %v1837, 0
        %v1889 = vsel %vm251, %v1838, 0
        %v1892 = vsel %vm251, %v1839, 0
        %v1895 = vsel %vm251, %v1840, 0
        %v1898 = vsel %vm251, %v1841, 0
        %v1901 = vsel %vm251, %v1842, 0
        %v1904 = vsel %vm251, %v1843, 0
        %v1907 = vsel %vm251, %v1844, 0
        %v1910 = vsel %vm251, %v1845, 0
        %v1913 = vsel %vm251, %v1846, 0
        %v1916 = vsel %vm251, %v1847, 0
        %v1919 = vsel %vm251, %v1848, 0
        %v1922 = vsel %vm251, %v1849, 0
        %v1925 = vsel %vm251, %v1850, 0
        %v1928 = vsel %vm251, %v1851, 0
        %v1931 = vsel %vm251, %v1852, 0
        %v1934 = vsel %vm251, %v1853, 0
        %v1937 = vsel %vm251, %v1854, 0
        %v1940 = vsel %vm251, %v1855, 0
        %v1943 = vsel %vm251, %v1856, 0
        %v1946 = vsel %vm251, %v1857, 0
        %v1949 = vsel %vm251, %v1858, 0
        %v1952 = vsel %vm251, %v1859, 0
        %v1955 = vsel %vm251, %v1860, 0
        %v1958 = vsel %vm251, %v1861, 0
        %v1961 = vsel %vm497, %v1863, 0
        %1963 = vmatprep.subr.mxu0 0.0
        %1964 = vmatpush1.msra.mxu0 %v1961
        %1965 = vmatprep.subr.mxu0 0.0
        %1966 = vmatpush1.msra.mxu0 0.0
        %1967 = vmatprep.subr.mxu0 0.0
        %1968 = vmatpush1.msra.mxu0 0.0
        %1969 = vmatprep.subr.mxu0 0.0
        %1970 = vmatpush1.msra.mxu0 0.0
        %1971 = vmatprep.subr.mxu0 0.0
        %1972 = vmatpush1.msra.mxu0 0.0
        %1973 = vmatprep.subr.mxu0 0.0
        %1974 = vmatpush1.msra.mxu0 0.0
        %1975 = vmatprep.subr.mxu0 0.0
        %1976 = vmatpush1.msra.mxu0 0.0
        %1977 = vmatprep.subr.mxu0 0.0
        %1978 = vmatpush1.msra.mxu0 0.0
        %1979 = vmatprep.subr.mxu0 0.0
        %1980 = vmatpush1.msra.mxu0 0.0
        %1981 = vmatprep.subr.mxu0 0.0
        %1982 = vmatpush1.msra.mxu0 0.0
        %1983 = vmatprep.subr.mxu0 0.0
        %1984 = vmatpush1.msra.mxu0 0.0
        %1985 = vmatprep.subr.mxu0 0.0
        %1986 = vmatpush1.msra.mxu0 0.0
        %1987 = vmatprep.subr.mxu0 0.0
        %1988 = vmatpush1.msra.mxu0 0.0
        %1989 = vmatprep.subr.mxu0 0.0
        %1990 = vmatpush1.msra.mxu0 0.0
        %1991 = vmatprep.subr.mxu0 0.0
        %1992 = vmatpush1.msra.mxu0 0.0
        %1993 = vmatprep.subr.mxu0 0.0
        %1994 = vmatpush1.msra.mxu0 0.0
        %1995 = vmatprep.subr.mxu0 0.0
        %1996 = vmatpush1.msra.mxu0 0.0
        %1997 = vmatprep.subr.mxu0 0.0
        %1998 = vmatpush1.msra.mxu0 0.0
        %1999 = vmatprep.subr.mxu0 0.0
        %2000 = vmatpush1.msra.mxu0 0.0
        %2001 = vmatprep.subr.mxu0 0.0
        %2002 = vmatpush1.msra.mxu0 0.0
        %2003 = vmatprep.subr.mxu0 0.0
        %2004 = vmatpush1.msra.mxu0 0.0
        %2005 = vmatprep.subr.mxu0 0.0
        %2006 = vmatpush1.msra.mxu0 0.0
        %2007 = vmatprep.subr.mxu0 0.0
        %2008 = vmatpush1.msra.mxu0 0.0
        %2009 = vmatprep.subr.mxu0 0.0
        %2010 = vmatpush1.msra.mxu0 0.0
        %2011 = vmatprep.subr.mxu0 0.0
        %2012 = vmatpush1.msra.mxu0 0.0
        %2013 = vmatprep.subr.mxu0 0.0
        %2014 = vmatpush1.msra.mxu0 0.0
        %2015 = vmatprep.subr.mxu0 0.0
        %2016 = vmatpush1.msra.mxu0 0.0
        %2017 = vmatprep.subr.mxu0 0.0
        %2018 = vmatpush1.msra.mxu0 0.0
        %2019 = vmatprep.subr.mxu0 0.0
        %2020 = vmatpush1.msra.mxu0 0.0
        %2021 = vmatprep.subr.mxu0 0.0
        %2022 = vmatpush1.msra.mxu0 0.0
        %2023 = vmatprep.subr.mxu0 0.0
        %2024 = vmatpush1.msra.mxu0 0.0
        %2025 = vmatprep.subr.mxu0 0.0
        %2026 = vmatpush1.msra.mxu0 0.0
        %2027 = vmatprep.mubr.f32.mxu0 0.0
        %2028 = vmatmul.mubr.f32.gmra.mrb[0].mxu0 %v1865
        %v2029 = vpop.f32.mrb[0].mxu0
        %v2030 = vadd.f32 0.0, %v2029
        %v2031 = vpop.f32.mrb[0].mxu0
        %2032 = vmatprep.mubr.f32.mxu0 0.0
        %2033 = vmatmul.mubr.f32.gmra.mrb[0].mxu0 %v1868
        %v2034 = vpop.f32.mrb[0].mxu0
        %v2035 = vadd.f32 0.0, %v2034
        %v2036 = vpop.f32.mrb[0].mxu0
        %2037 = vmatprep.mubr.f32.mxu0 0.0
        %2038 = vmatmul.mubr.f32.gmra.mrb[0].mxu0 %v1871
        %v2039 = vpop.f32.mrb[0].mxu0
        %v2040 = vadd.f32 0.0, %v2039
        %v2041 = vpop.f32.mrb[0].mxu0
        %2042 = vmatprep.mubr.f32.mxu0 0.0
        %2043 = vmatmul.mubr.f32.gmra.mrb[0].mxu0 %v1874
        %v2044 = vpop.f32.mrb[0].mxu0
        %v2045 = vadd.f32 0.0, %v2044
        %v2046 = vpop.f32.mrb[0].mxu0
        %2047 = vmatprep.mubr.f32.mxu0 0.0
        %2048 = vmatmul.mubr.f32.gmra.mrb[0].mxu0 %v1877
        %v2049 = vpop.f32.mrb[0].mxu0
        %v2050 = vadd.f32 0.0, %v2049
        %v2051 = vpop.f32.mrb[0].mxu0
        %2052 = vmatprep.mubr.f32.mxu0 0.0
        %2053 = vmatmul.mubr.f32.gmra.mrb[0].mxu0 %v1880
        %v2054 = vpop.f32.mrb[0].mxu0
        %v2055 = vadd.f32 0.0, %v2054
        %v2056 = vpop.f32.mrb[0].mxu0
        %2057 = vmatprep.mubr.f32.mxu0 0.0
        %2058 = vmatmul.mubr.f32.gmra.mrb[0].mxu0 %v1883
        %v2059 = vpop.f32.mrb[0].mxu0
        %v2060 = vadd.f32 0.0, %v2059
        %v2061 = vpop.f32.mrb[0].mxu0
        %2062 = vmatprep.mubr.f32.mxu0 0.0
        %2063 = vmatmul.mubr.f32.gmra.mrb[0].mxu0 %v1886
        %v2064 = vpop.f32.mrb[0].mxu0
        %v2065 = vadd.f32 0.0, %v2064
        %v2066 = vpop.f32.mrb[0].mxu0
        %2067 = vmatprep.mubr.f32.mxu0 0.0
        %2068 = vmatmul.mubr.f32.gmra.mrb[0].mxu0 %v1889
        %v2069 = vpop.f32.mrb[0].mxu0
        %v2070 = vadd.f32 0.0, %v2069
        %v2071 = vpop.f32.mrb[0].mxu0
        %2072 = vmatprep.mubr.f32.mxu0 0.0
        %2073 = vmatmul.mubr.f32.gmra.mrb[0].mxu0 %v1892
        %v2074 = vpop.f32.mrb[0].mxu0
        %v2075 = vadd.f32 0.0, %v2074
        %v2076 = vpop.f32.mrb[0].mxu0
        %2077 = vmatprep.mubr.f32.mxu0 0.0
        %2078 = vmatmul.mubr.f32.gmra.mrb[0].mxu0 %v1895
        %v2079 = vpop.f32.mrb[0].mxu0
        %v2080 = vadd.f32 0.0, %v2079
        %v2081 = vpop.f32.mrb[0].mxu0
        %2082 = vmatprep.mubr.f32.mxu0 0.0
        %2083 = vmatmul.mubr.f32.gmra.mrb[0].mxu0 %v1898
        %v2084 = vpop.f32.mrb[0].mxu0
        %v2085 = vadd.f32 0.0, %v2084
        %v2086 = vpop.f32.mrb[0].mxu0
        %2087 = vmatprep.mubr.f32.mxu0 0.0
        %2088 = vmatmul.mubr.f32.gmra.mrb[0].mxu0 %v1901
        %v2089 = vpop.f32.mrb[0].mxu0
        %v2090 = vadd.f32 0.0, %v2089
        %v2091 = vpop.f32.mrb[0].mxu0
        %2092 = vmatprep.mubr.f32.mxu0 0.0
        %2093 = vmatmul.mubr.f32.gmra.mrb[0].mxu0 %v1904
        %v2094 = vpop.f32.mrb[0].mxu0
        %v2095 = vadd.f32 0.0, %v2094
        %v2096 = vpop.f32.mrb[0].mxu0
        %2097 = vmatprep.mubr.f32.mxu0 0.0
        %2098 = vmatmul.mubr.f32.gmra.mrb[0].mxu0 %v1907
        %v2099 = vpop.f32.mrb[0].mxu0
        %v2100 = vadd.f32 0.0, %v2099
        %v2101 = vpop.f32.mrb[0].mxu0
        %2102 = vmatprep.mubr.f32.mxu0 0.0
        %2103 = vmatmul.mubr.f32.gmra.mrb[0].mxu0 %v1910
        %v2104 = vpop.f32.mrb[0].mxu0
        %v2105 = vadd.f32 0.0, %v2104
        %v2106 = vpop.f32.mrb[0].mxu0
        %2107 = vmatprep.mubr.f32.mxu0 0.0
        %2108 = vmatmul.mubr.f32.gmra.mrb[0].mxu0 %v1913
        %v2109 = vpop.f32.mrb[0].mxu0
        %v2110 = vadd.f32 0.0, %v2109
        %v2111 = vpop.f32.mrb[0].mxu0
        %2112 = vmatprep.mubr.f32.mxu0 0.0
        %2113 = vmatmul.mubr.f32.gmra.mrb[0].mxu0 %v1916
        %v2114 = vpop.f32.mrb[0].mxu0
        %v2115 = vadd.f32 0.0, %v2114
        %v2116 = vpop.f32.mrb[0].mxu0
        %2117 = vmatprep.mubr.f32.mxu0 0.0
        %2118 = vmatmul.mubr.f32.gmra.mrb[0].mxu0 %v1919
        %v2119 = vpop.f32.mrb[0].mxu0
        %v2120 = vadd.f32 0.0, %v2119
        %v2121 = vpop.f32.mrb[0].mxu0
        %2122 = vmatprep.mubr.f32.mxu0 0.0
        %2123 = vmatmul.mubr.f32.gmra.mrb[0].mxu0 %v1922
        %v2124 = vpop.f32.mrb[0].mxu0
        %v2125 = vadd.f32 0.0, %v2124
        %v2126 = vpop.f32.mrb[0].mxu0
        %2127 = vmatprep.mubr.f32.mxu0 0.0
        %2128 = vmatmul.mubr.f32.gmra.mrb[0].mxu0 %v1925
        %v2129 = vpop.f32.mrb[0].mxu0
        %v2130 = vadd.f32 0.0, %v2129
        %v2131 = vpop.f32.mrb[0].mxu0
        %2132 = vmatprep.mubr.f32.mxu0 0.0
        %2133 = vmatmul.mubr.f32.gmra.mrb[0].mxu0 %v1928
        %v2134 = vpop.f32.mrb[0].mxu0
        %v2135 = vadd.f32 0.0, %v2134
        %v2136 = vpop.f32.mrb[0].mxu0
        %2137 = vmatprep.mubr.f32.mxu0 0.0
        %2138 = vmatmul.mubr.f32.gmra.mrb[0].mxu0 %v1931
        %v2139 = vpop.f32.mrb[0].mxu0
        %v2140 = vadd.f32 0.0, %v2139
        %v2141 = vpop.f32.mrb[0].mxu0
        %2142 = vmatprep.mubr.f32.mxu0 0.0
        %2143 = vmatmul.mubr.f32.gmra.mrb[0].mxu0 %v1934
        %v2144 = vpop.f32.mrb[0].mxu0
        %v2145 = vadd.f32 0.0, %v2144
        %v2146 = vpop.f32.mrb[0].mxu0
        %2147 = vmatprep.mubr.f32.mxu0 0.0
        %2148 = vmatmul.mubr.f32.gmra.mrb[0].mxu0 %v1937
        %v2149 = vpop.f32.mrb[0].mxu0
        %v2150 = vadd.f32 0.0, %v2149
        %v2151 = vpop.f32.mrb[0].mxu0
        %2152 = vmatprep.mubr.f32.mxu0 0.0
        %2153 = vmatmul.mubr.f32.gmra.mrb[0].mxu0 %v1940
        %v2154 = vpop.f32.mrb[0].mxu0
        %v2155 = vadd.f32 0.0, %v2154
        %v2156 = vpop.f32.mrb[0].mxu0
        %2157 = vmatprep.mubr.f32.mxu0 0.0
        %2158 = vmatmul.mubr.f32.gmra.mrb[0].mxu0 %v1943
        %v2159 = vpop.f32.mrb[0].mxu0
        %v2160 = vadd.f32 0.0, %v2159
        %v2161 = vpop.f32.mrb[0].mxu0
        %2162 = vmatprep.mubr.f32.mxu0 0.0
        %2163 = vmatmul.mubr.f32.gmra.mrb[0].mxu0 %v1946
        %v2164 = vpop.f32.mrb[0].mxu0
        %v2165 = vadd.f32 0.0, %v2164
        %v2166 = vpop.f32.mrb[0].mxu0
        %2167 = vmatprep.mubr.f32.mxu0 0.0
        %2168 = vmatmul.mubr.f32.gmra.mrb[0].mxu0 %v1949
        %v2169 = vpop.f32.mrb[0].mxu0
        %v2170 = vadd.f32 0.0, %v2169
        %v2171 = vpop.f32.mrb[0].mxu0
        %2172 = vmatprep.mubr.f32.mxu0 0.0
        %2173 = vmatmul.mubr.f32.gmra.mrb[0].mxu0 %v1952
        %v2174 = vpop.f32.mrb[0].mxu0
        %v2175 = vadd.f32 0.0, %v2174
        %v2176 = vpop.f32.mrb[0].mxu0
        %2177 = vmatprep.mubr.f32.mxu0 0.0
        %2178 = vmatmul.mubr.f32.gmra.mrb[0].mxu0 %v1955
        %v2179 = vpop.f32.mrb[0].mxu0
        %v2180 = vadd.f32 0.0, %v2179
        %v2181 = vpop.f32.mrb[0].mxu0
        %2182 = vmatprep.mubr.f32.mxu0 0.0
        %2183 = vmatmul.mubr.f32.gmra.mrb[0].mxu0 %v1958
        %v2184 = vpop.f32.mrb[0].mxu0
        %v2185 = vadd.f32 0.0, %v2184
        %v2186 = vpop.f32.mrb[0].mxu0
        %2187 = vdwg.mxu0
        %v2188 = vadd.f32 %v1798, %v2030
        %v2189 = vadd.f32 %v1799, %v2035
        %v2190 = vadd.f32 %v1800, %v2040
        %v2191 = vadd.f32 %v1801, %v2045
        %v2192 = vadd.f32 %v1802, %v2050
        %v2193 = vadd.f32 %v1803, %v2055
        %v2194 = vadd.f32 %v1804, %v2060
        %v2195 = vadd.f32 %v1805, %v2065
        %v2196 = vadd.f32 %v1806, %v2070
        %v2197 = vadd.f32 %v1807, %v2075
        %v2198 = vadd.f32 %v1808, %v2080
        %v2199 = vadd.f32 %v1809, %v2085
        %v2200 = vadd.f32 %v1810, %v2090
        %v2201 = vadd.f32 %v1811, %v2095
        %v2202 = vadd.f32 %v1812, %v2100
        %v2203 = vadd.f32 %v1813, %v2105
        %v2204 = vadd.f32 %v1814, %v2110
        %v2205 = vadd.f32 %v1815, %v2115
        %v2206 = vadd.f32 %v1816, %v2120
        %v2207 = vadd.f32 %v1817, %v2125
        %v2208 = vadd.f32 %v1818, %v2130
        %v2209 = vadd.f32 %v1819, %v2135
        %v2210 = vadd.f32 %v1820, %v2140
        %v2211 = vadd.f32 %v1821, %v2145
        %v2212 = vadd.f32 %v1822, %v2150
        %v2213 = vadd.f32 %v1823, %v2155
        %v2214 = vadd.f32 %v1824, %v2160
        %v2215 = vadd.f32 %v1825, %v2165
        %v2216 = vadd.f32 %v1826, %v2170
        %v2217 = vadd.f32 %v1827, %v2175
        %v2218 = vadd.f32 %v1828, %v2180
        %v2219 = vadd.f32 %v1829, %v2185
        %v2220 = vld [vmem:[%s250 + $0x2] sm:$0xff]
        %v2221 = vld [vmem:[%s250 + $0xa] sm:$0xff]
        %v2222 = vld [vmem:[%s250 + $0x1a] sm:$0xff]
        %v2223 = vld [vmem:[%s250 + $0x22] sm:$0xff]
        %v2224 = vld [vmem:[%s250 + $0x32] sm:$0xff]
        %v2225 = vld [vmem:[%s250 + $0x3a] sm:$0xff]
        %v2226 = vld [vmem:[%s250 + $0x4a] sm:$0xff]
        %v2227 = vld [vmem:[%s250 + $0x52] sm:$0xff]
        %v2228 = vld [vmem:[%s250 + $0x62] sm:$0xff]
        %v2229 = vld [vmem:[%s250 + $0x6a] sm:$0xff]
        %v2230 = vld [vmem:[%s250 + $0x7a] sm:$0xff]
        %v2231 = vld [vmem:[%s250 + $0x82] sm:$0xff]
        %v2232 = vld [vmem:[%s250 + $0x92] sm:$0xff]
        %v2233 = vld [vmem:[%s250 + $0x9a] sm:$0xff]
        %v2234 = vld [vmem:[%s250 + $0xaa] sm:$0xff]
        %v2235 = vld [vmem:[%s250 + $0xb2] sm:$0xff]
        %v2236 = vld [vmem:[%s250 + $0xc2] sm:$0xff]
        %v2237 = vld [vmem:[%s250 + $0xca] sm:$0xff]
        %v2238 = vld [vmem:[%s250 + $0xda] sm:$0xff]
        %v2239 = vld [vmem:[%s250 + $0xe2] sm:$0xff]
        %v2240 = vld [vmem:[%s250 + $0xf2] sm:$0xff]
        %v2241 = vld [vmem:[%s250 + $0xfa] sm:$0xff]
        %v2242 = vld [vmem:[%s250 + $0x10a] sm:$0xff]
        %v2243 = vld [vmem:[%s250 + $0x112] sm:$0xff]
        %v2244 = vld [vmem:[%s250 + $0x122] sm:$0xff]
        %v2245 = vld [vmem:[%s250 + $0x12a] sm:$0xff]
        %v2246 = vld [vmem:[%s250 + $0x13a] sm:$0xff]
        %v2247 = vld [vmem:[%s250 + $0x142] sm:$0xff]
        %v2248 = vld [vmem:[%s250 + $0x152] sm:$0xff]
        %v2249 = vld [vmem:[%s250 + $0x15a] sm:$0xff]
        %v2250 = vld [vmem:[%s250 + $0x16a] sm:$0xff]
        %v2251 = vld [vmem:[%s250 + $0x172] sm:$0xff]
        %s2252 = scalar_lea.vmem [#allocation6], 20
        %v2253 = vld [vmem:[%s2252] sm:$0xf]
        %v2255 = vsel %vm251, %v2220, 0
        %v2258 = vsel %vm251, %v2221, 0
        %v2261 = vsel %vm251, %v2222, 0
        %v2264 = vsel %vm251, %v2223, 0
        %v2267 = vsel %vm251, %v2224, 0
        %v2270 = vsel %vm251, %v2225, 0
        %v2273 = vsel %vm251, %v2226, 0
        %v2276 = vsel %vm251, %v2227, 0
        %v2279 = vsel %vm251, %v2228, 0
        %v2282 = vsel %vm251, %v2229, 0
        %v2285 = vsel %vm251, %v2230, 0
        %v2288 = vsel %vm251, %v2231, 0
        %v2291 = vsel %vm251, %v2232, 0
        %v2294 = vsel %vm251, %v2233, 0
        %v2297 = vsel %vm251, %v2234, 0
        %v2300 = vsel %vm251, %v2235, 0
        %v2303 = vsel %vm251, %v2236, 0
        %v2306 = vsel %vm251, %v2237, 0
        %v2309 = vsel %vm251, %v2238, 0
        %v2312 = vsel %vm251, %v2239, 0
        %v2315 = vsel %vm251, %v2240, 0
        %v2318 = vsel %vm251, %v2241, 0
        %v2321 = vsel %vm251, %v2242, 0
        %v2324 = vsel %vm251, %v2243, 0
        %v2327 = vsel %vm251, %v2244, 0
        %v2330 = vsel %vm251, %v2245, 0
        %v2333 = vsel %vm251, %v2246, 0
        %v2336 = vsel %vm251, %v2247, 0
        %v2339 = vsel %vm251, %v2248, 0
        %v2342 = vsel %vm251, %v2249, 0
        %v2345 = vsel %vm251, %v2250, 0
        %v2348 = vsel %vm251, %v2251, 0
        %v2351 = vsel %vm497, %v2253, 0
        %2353 = vmatprep.subr.mxu0 0.0
        %2354 = vmatpush1.msra.mxu0 %v2351
        %2355 = vmatprep.subr.mxu0 0.0
        %2356 = vmatpush1.msra.mxu0 0.0
        %2357 = vmatprep.subr.mxu0 0.0
        %2358 = vmatpush1.msra.mxu0 0.0
        %2359 = vmatprep.subr.mxu0 0.0
        %2360 = vmatpush1.msra.mxu0 0.0
        %2361 = vmatprep.subr.mxu0 0.0
        %2362 = vmatpush1.msra.mxu0 0.0
        %2363 = vmatprep.subr.mxu0 0.0
        %2364 = vmatpush1.msra.mxu0 0.0
        %2365 = vmatprep.subr.mxu0 0.0
        %2366 = vmatpush1.msra.mxu0 0.0
        %2367 = vmatprep.subr.mxu0 0.0
        %2368 = vmatpush1.msra.mxu0 0.0
        %2369 = vmatprep.subr.mxu0 0.0
        %2370 = vmatpush1.msra.mxu0 0.0
        %2371 = vmatprep.subr.mxu0 0.0
        %2372 = vmatpush1.msra.mxu0 0.0
        %2373 = vmatprep.subr.mxu0 0.0
        %2374 = vmatpush1.msra.mxu0 0.0
        %2375 = vmatprep.subr.mxu0 0.0
        %2376 = vmatpush1.msra.mxu0 0.0
        %2377 = vmatprep.subr.mxu0 0.0
        %2378 = vmatpush1.msra.mxu0 0.0
        %2379 = vmatprep.subr.mxu0 0.0
        %2380 = vmatpush1.msra.mxu0 0.0
        %2381 = vmatprep.subr.mxu0 0.0
        %2382 = vmatpush1.msra.mxu0 0.0
        %2383 = vmatprep.subr.mxu0 0.0
        %2384 = vmatpush1.msra.mxu0 0.0
        %2385 = vmatprep.subr.mxu0 0.0
        %2386 = vmatpush1.msra.mxu0 0.0
        %2387 = vmatprep.subr.mxu0 0.0
        %2388 = vmatpush1.msra.mxu0 0.0
        %2389 = vmatprep.subr.mxu0 0.0
        %2390 = vmatpush1.msra.mxu0 0.0
        %2391 = vmatprep.subr.mxu0 0.0
        %2392 = vmatpush1.msra.mxu0 0.0
        %2393 = vmatprep.subr.mxu0 0.0
        %2394 = vmatpush1.msra.mxu0 0.0
        %2395 = vmatprep.subr.mxu0 0.0
        %2396 = vmatpush1.msra.mxu0 0.0
        %2397 = vmatprep.subr.mxu0 0.0
        %2398 = vmatpush1.msra.mxu0 0.0
        %2399 = vmatprep.subr.mxu0 0.0
        %2400 = vmatpush1.msra.mxu0 0.0
        %2401 = vmatprep.subr.mxu0 0.0
        %2402 = vmatpush1.msra.mxu0 0.0
        %2403 = vmatprep.subr.mxu0 0.0
        %2404 = vmatpush1.msra.mxu0 0.0
        %2405 = vmatprep.subr.mxu0 0.0
        %2406 = vmatpush1.msra.mxu0 0.0
        %2407 = vmatprep.subr.mxu0 0.0
        %2408 = vmatpush1.msra.mxu0 0.0
        %2409 = vmatprep.subr.mxu0 0.0
        %2410 = vmatpush1.msra.mxu0 0.0
        %2411 = vmatprep.subr.mxu0 0.0
        %2412 = vmatpush1.msra.mxu0 0.0
        %2413 = vmatprep.subr.mxu0 0.0
        %2414 = vmatpush1.msra.mxu0 0.0
        %2415 = vmatprep.subr.mxu0 0.0
        %2416 = vmatpush1.msra.mxu0 0.0
        %2417 = vmatprep.mubr.f32.mxu0 0.0
        %2418 = vmatmul.mubr.f32.gmra.mrb[0].mxu0 %v2255
        %v2419 = vpop.f32.mrb[0].mxu0
        %v2420 = vadd.f32 0.0, %v2419
        %v2421 = vpop.f32.mrb[0].mxu0
        %2422 = vmatprep.mubr.f32.mxu0 0.0
        %2423 = vmatmul.mubr.f32.gmra.mrb[0].mxu0 %v2258
        %v2424 = vpop.f32.mrb[0].mxu0
        %v2425 = vadd.f32 0.0, %v2424
        %v2426 = vpop.f32.mrb[0].mxu0
        %2427 = vmatprep.mubr.f32.mxu0 0.0
        %2428 = vmatmul.mubr.f32.gmra.mrb[0].mxu0 %v2261
        %v2429 = vpop.f32.mrb[0].mxu0
        %v2430 = vadd.f32 0.0, %v2429
        %v2431 = vpop.f32.mrb[0].mxu0
        %2432 = vmatprep.mubr.f32.mxu0 0.0
        %2433 = vmatmul.mubr.f32.gmra.mrb[0].mxu0 %v2264
        %v2434 = vpop.f32.mrb[0].mxu0
        %v2435 = vadd.f32 0.0, %v2434
        %v2436 = vpop.f32.mrb[0].mxu0
        %2437 = vmatprep.mubr.f32.mxu0 0.0
        %2438 = vmatmul.mubr.f32.gmra.mrb[0].mxu0 %v2267
        %v2439 = vpop.f32.mrb[0].mxu0
        %v2440 = vadd.f32 0.0, %v2439
        %v2441 = vpop.f32.mrb[0].mxu0
        %2442 = vmatprep.mubr.f32.mxu0 0.0
        %2443 = vmatmul.mubr.f32.gmra.mrb[0].mxu0 %v2270
        %v2444 = vpop.f32.mrb[0].mxu0
        %v2445 = vadd.f32 0.0, %v2444
        %v2446 = vpop.f32.mrb[0].mxu0
        %2447 = vmatprep.mubr.f32.mxu0 0.0
        %2448 = vmatmul.mubr.f32.gmra.mrb[0].mxu0 %v2273
        %v2449 = vpop.f32.mrb[0].mxu0
        %v2450 = vadd.f32 0.0, %v2449
        %v2451 = vpop.f32.mrb[0].mxu0
        %2452 = vmatprep.mubr.f32.mxu0 0.0
        %2453 = vmatmul.mubr.f32.gmra.mrb[0].mxu0 %v2276
        %v2454 = vpop.f32.mrb[0].mxu0
        %v2455 = vadd.f32 0.0, %v2454
        %v2456 = vpop.f32.mrb[0].mxu0
        %2457 = vmatprep.mubr.f32.mxu0 0.0
        %2458 = vmatmul.mubr.f32.gmra.mrb[0].mxu0 %v2279
        %v2459 = vpop.f32.mrb[0].mxu0
        %v2460 = vadd.f32 0.0, %v2459
        %v2461 = vpop.f32.mrb[0].mxu0
        %2462 = vmatprep.mubr.f32.mxu0 0.0
        %2463 = vmatmul.mubr.f32.gmra.mrb[0].mxu0 %v2282
        %v2464 = vpop.f32.mrb[0].mxu0
        %v2465 = vadd.f32 0.0, %v2464
        %v2466 = vpop.f32.mrb[0].mxu0
        %2467 = vmatprep.mubr.f32.mxu0 0.0
        %2468 = vmatmul.mubr.f32.gmra.mrb[0].mxu0 %v2285
        %v2469 = vpop.f32.mrb[0].mxu0
        %v2470 = vadd.f32 0.0, %v2469
        %v2471 = vpop.f32.mrb[0].mxu0
        %2472 = vmatprep.mubr.f32.mxu0 0.0
        %2473 = vmatmul.mubr.f32.gmra.mrb[0].mxu0 %v2288
        %v2474 = vpop.f32.mrb[0].mxu0
        %v2475 = vadd.f32 0.0, %v2474
        %v2476 = vpop.f32.mrb[0].mxu0
        %2477 = vmatprep.mubr.f32.mxu0 0.0
        %2478 = vmatmul.mubr.f32.gmra.mrb[0].mxu0 %v2291
        %v2479 = vpop.f32.mrb[0].mxu0
        %v2480 = vadd.f32 0.0, %v2479
        %v2481 = vpop.f32.mrb[0].mxu0
        %2482 = vmatprep.mubr.f32.mxu0 0.0
        %2483 = vmatmul.mubr.f32.gmra.mrb[0].mxu0 %v2294
        %v2484 = vpop.f32.mrb[0].mxu0
        %v2485 = vadd.f32 0.0, %v2484
        %v2486 = vpop.f32.mrb[0].mxu0
        %2487 = vmatprep.mubr.f32.mxu0 0.0
        %2488 = vmatmul.mubr.f32.gmra.mrb[0].mxu0 %v2297
        %v2489 = vpop.f32.mrb[0].mxu0
        %v2490 = vadd.f32 0.0, %v2489
        %v2491 = vpop.f32.mrb[0].mxu0
        %2492 = vmatprep.mubr.f32.mxu0 0.0
        %2493 = vmatmul.mubr.f32.gmra.mrb[0].mxu0 %v2300
        %v2494 = vpop.f32.mrb[0].mxu0
        %v2495 = vadd.f32 0.0, %v2494
        %v2496 = vpop.f32.mrb[0].mxu0
        %2497 = vmatprep.mubr.f32.mxu0 0.0
        %2498 = vmatmul.mubr.f32.gmra.mrb[0].mxu0 %v2303
        %v2499 = vpop.f32.mrb[0].mxu0
        %v2500 = vadd.f32 0.0, %v2499
        %v2501 = vpop.f32.mrb[0].mxu0
        %2502 = vmatprep.mubr.f32.mxu0 0.0
        %2503 = vmatmul.mubr.f32.gmra.mrb[0].mxu0 %v2306
        %v2504 = vpop.f32.mrb[0].mxu0
        %v2505 = vadd.f32 0.0, %v2504
        %v2506 = vpop.f32.mrb[0].mxu0
        %2507 = vmatprep.mubr.f32.mxu0 0.0
        %2508 = vmatmul.mubr.f32.gmra.mrb[0].mxu0 %v2309
        %v2509 = vpop.f32.mrb[0].mxu0
        %v2510 = vadd.f32 0.0, %v2509
        %v2511 = vpop.f32.mrb[0].mxu0
        %2512 = vmatprep.mubr.f32.mxu0 0.0
        %2513 = vmatmul.mubr.f32.gmra.mrb[0].mxu0 %v2312
        %v2514 = vpop.f32.mrb[0].mxu0
        %v2515 = vadd.f32 0.0, %v2514
        %v2516 = vpop.f32.mrb[0].mxu0
        %2517 = vmatprep.mubr.f32.mxu0 0.0
        %2518 = vmatmul.mubr.f32.gmra.mrb[0].mxu0 %v2315
        %v2519 = vpop.f32.mrb[0].mxu0
        %v2520 = vadd.f32 0.0, %v2519
        %v2521 = vpop.f32.mrb[0].mxu0
        %2522 = vmatprep.mubr.f32.mxu0 0.0
        %2523 = vmatmul.mubr.f32.gmra.mrb[0].mxu0 %v2318
        %v2524 = vpop.f32.mrb[0].mxu0
        %v2525 = vadd.f32 0.0, %v2524
        %v2526 = vpop.f32.mrb[0].mxu0
        %2527 = vmatprep.mubr.f32.mxu0 0.0
        %2528 = vmatmul.mubr.f32.gmra.mrb[0].mxu0 %v2321
        %v2529 = vpop.f32.mrb[0].mxu0
        %v2530 = vadd.f32 0.0, %v2529
        %v2531 = vpop.f32.mrb[0].mxu0
        %2532 = vmatprep.mubr.f32.mxu0 0.0
        %2533 = vmatmul.mubr.f32.gmra.mrb[0].mxu0 %v2324
        %v2534 = vpop.f32.mrb[0].mxu0
        %v2535 = vadd.f32 0.0, %v2534
        %v2536 = vpop.f32.mrb[0].mxu0
        %2537 = vmatprep.mubr.f32.mxu0 0.0
        %2538 = vmatmul.mubr.f32.gmra.mrb[0].mxu0 %v2327
        %v2539 = vpop.f32.mrb[0].mxu0
        %v2540 = vadd.f32 0.0, %v2539
        %v2541 = vpop.f32.mrb[0].mxu0
        %2542 = vmatprep.mubr.f32.mxu0 0.0
        %2543 = vmatmul.mubr.f32.gmra.mrb[0].mxu0 %v2330
        %v2544 = vpop.f32.mrb[0].mxu0
        %v2545 = vadd.f32 0.0, %v2544
        %v2546 = vpop.f32.mrb[0].mxu0
        %2547 = vmatprep.mubr.f32.mxu0 0.0
        %2548 = vmatmul.mubr.f32.gmra.mrb[0].mxu0 %v2333
        %v2549 = vpop.f32.mrb[0].mxu0
        %v2550 = vadd.f32 0.0, %v2549
        %v2551 = vpop.f32.mrb[0].mxu0
        %2552 = vmatprep.mubr.f32.mxu0 0.0
        %2553 = vmatmul.mubr.f32.gmra.mrb[0].mxu0 %v2336
        %v2554 = vpop.f32.mrb[0].mxu0
        %v2555 = vadd.f32 0.0, %v2554
        %v2556 = vpop.f32.mrb[0].mxu0
        %2557 = vmatprep.mubr.f32.mxu0 0.0
        %2558 = vmatmul.mubr.f32.gmra.mrb[0].mxu0 %v2339
        %v2559 = vpop.f32.mrb[0].mxu0
        %v2560 = vadd.f32 0.0, %v2559
        %v2561 = vpop.f32.mrb[0].mxu0
        %2562 = vmatprep.mubr.f32.mxu0 0.0
        %2563 = vmatmul.mubr.f32.gmra.mrb[0].mxu0 %v2342
        %v2564 = vpop.f32.mrb[0].mxu0
        %v2565 = vadd.f32 0.0, %v2564
        %v2566 = vpop.f32.mrb[0].mxu0
        %2567 = vmatprep.mubr.f32.mxu0 0.0
        %2568 = vmatmul.mubr.f32.gmra.mrb[0].mxu0 %v2345
        %v2569 = vpop.f32.mrb[0].mxu0
        %v2570 = vadd.f32 0.0, %v2569
        %v2571 = vpop.f32.mrb[0].mxu0
        %2572 = vmatprep.mubr.f32.mxu0 0.0
        %2573 = vmatmul.mubr.f32.gmra.mrb[0].mxu0 %v2348
        %v2574 = vpop.f32.mrb[0].mxu0
        %v2575 = vadd.f32 0.0, %v2574
        %v2576 = vpop.f32.mrb[0].mxu0
        %2577 = vdwg.mxu0
        %v2578 = vadd.f32 %v2188, %v2420
        %v2579 = vadd.f32 %v2189, %v2425
        %v2580 = vadd.f32 %v2190, %v2430
        %v2581 = vadd.f32 %v2191, %v2435
        %v2582 = vadd.f32 %v2192, %v2440
        %v2583 = vadd.f32 %v2193, %v2445
        %v2584 = vadd.f32 %v2194, %v2450
        %v2585 = vadd.f32 %v2195, %v2455
        %v2586 = vadd.f32 %v2196, %v2460
        %v2587 = vadd.f32 %v2197, %v2465
        %v2588 = vadd.f32 %v2198, %v2470
        %v2589 = vadd.f32 %v2199, %v2475
        %v2590 = vadd.f32 %v2200, %v2480
        %v2591 = vadd.f32 %v2201, %v2485
        %v2592 = vadd.f32 %v2202, %v2490
        %v2593 = vadd.f32 %v2203, %v2495
        %v2594 = vadd.f32 %v2204, %v2500
        %v2595 = vadd.f32 %v2205, %v2505
        %v2596 = vadd.f32 %v2206, %v2510
        %v2597 = vadd.f32 %v2207, %v2515
        %v2598 = vadd.f32 %v2208, %v2520
        %v2599 = vadd.f32 %v2209, %v2525
        %v2600 = vadd.f32 %v2210, %v2530
        %v2601 = vadd.f32 %v2211, %v2535
        %v2602 = vadd.f32 %v2212, %v2540
        %v2603 = vadd.f32 %v2213, %v2545
        %v2604 = vadd.f32 %v2214, %v2550
        %v2605 = vadd.f32 %v2215, %v2555
        %v2606 = vadd.f32 %v2216, %v2560
        %v2607 = vadd.f32 %v2217, %v2565
        %v2608 = vadd.f32 %v2218, %v2570
        %v2609 = vadd.f32 %v2219, %v2575
        %v2610 = vld [vmem:[%s318] sm:$0xff]
        %v2611 = vld [vmem:[%s318 + $0x8] sm:$0xff]
        %v2612 = vld [vmem:[%s318 + $0x18] sm:$0xff]
        %v2613 = vld [vmem:[%s318 + $0x20] sm:$0xff]
        %v2614 = vld [vmem:[%s318 + $0x30] sm:$0xff]
        %v2615 = vld [vmem:[%s318 + $0x38] sm:$0xff]
        %v2616 = vld [vmem:[%s318 + $0x48] sm:$0xff]
        %v2617 = vld [vmem:[%s318 + $0x50] sm:$0xff]
        %v2618 = vld [vmem:[%s318 + $0x60] sm:$0xff]
        %v2619 = vld [vmem:[%s318 + $0x68] sm:$0xff]
        %v2620 = vld [vmem:[%s318 + $0x78] sm:$0xff]
        %v2621 = vld [vmem:[%s318 + $0x80] sm:$0xff]
        %v2622 = vld [vmem:[%s318 + $0x90] sm:$0xff]
        %v2623 = vld [vmem:[%s318 + $0x98] sm:$0xff]
        %v2624 = vld [vmem:[%s318 + $0xa8] sm:$0xff]
        %v2625 = vld [vmem:[%s318 + $0xb0] sm:$0xff]
        %v2626 = vld [vmem:[%s318 + $0xc0] sm:$0xff]
        %v2627 = vld [vmem:[%s318 + $0xc8] sm:$0xff]
        %v2628 = vld [vmem:[%s318 + $0xd8] sm:$0xff]
        %v2629 = vld [vmem:[%s318 + $0xe0] sm:$0xff]
        %v2630 = vld [vmem:[%s318 + $0xf0] sm:$0xff]
        %v2631 = vld [vmem:[%s318 + $0xf8] sm:$0xff]
        %v2632 = vld [vmem:[%s318 + $0x108] sm:$0xff]
        %v2633 = vld [vmem:[%s318 + $0x110] sm:$0xff]
        %v2634 = vld [vmem:[%s318 + $0x120] sm:$0xff]
        %v2635 = vld [vmem:[%s318 + $0x128] sm:$0xff]
        %v2636 = vld [vmem:[%s318 + $0x138] sm:$0xff]
        %v2637 = vld [vmem:[%s318 + $0x140] sm:$0xff]
        %v2638 = vld [vmem:[%s318 + $0x150] sm:$0xff]
        %v2639 = vld [vmem:[%s318 + $0x158] sm:$0xff]
        %v2640 = vld [vmem:[%s318 + $0x168] sm:$0xff]
        %v2641 = vld [vmem:[%s318 + $0x170] sm:$0xff]
        %s2642 = scalar_lea.vmem [#allocation6], 24
        %v2643 = vld [vmem:[%s2642] sm:$0xf]
        %v2645 = vsel %vm251, %v2610, 0
        %v2648 = vsel %vm251, %v2611, 0
        %v2651 = vsel %vm251, %v2612, 0
        %v2654 = vsel %vm251, %v2613, 0
        %v2657 = vsel %vm251, %v2614, 0
        %v2660 = vsel %vm251, %v2615, 0
        %v2663 = vsel %vm251, %v2616, 0
        %v2666 = vsel %vm251, %v2617, 0
        %v2669 = vsel %vm251, %v2618, 0
        %v2672 = vsel %vm251, %v2619, 0
        %v2675 = vsel %vm251, %v2620, 0
        %v2678 = vsel %vm251, %v2621, 0
        %v2681 = vsel %vm251, %v2622, 0
        %v2684 = vsel %vm251, %v2623, 0
        %v2687 = vsel %vm251, %v2624, 0
        %v2690 = vsel %vm251, %v2625, 0
        %v2693 = vsel %vm251, %v2626, 0
        %v2696 = vsel %vm251, %v2627, 0
        %v2699 = vsel %vm251, %v2628, 0
        %v2702 = vsel %vm251, %v2629, 0
        %v2705 = vsel %vm251, %v2630, 0
        %v2708 = vsel %vm251, %v2631, 0
        %v2711 = vsel %vm251, %v2632, 0
        %v2714 = vsel %vm251, %v2633, 0
        %v2717 = vsel %vm251, %v2634, 0
        %v2720 = vsel %vm251, %v2635, 0
        %v2723 = vsel %vm251, %v2636, 0
        %v2726 = vsel %vm251, %v2637, 0
        %v2729 = vsel %vm251, %v2638, 0
        %v2732 = vsel %vm251, %v2639, 0
        %v2735 = vsel %vm251, %v2640, 0
        %v2738 = vsel %vm251, %v2641, 0
        %v2741 = vsel %vm497, %v2643, 0
        %2743 = vmatprep.subr.mxu0 0.0
        %2744 = vmatpush1.msra.mxu0 %v2741
        %2745 = vmatprep.subr.mxu0 0.0
        %2746 = vmatpush1.msra.mxu0 0.0
        %2747 = vmatprep.subr.mxu0 0.0
        %2748 = vmatpush1.msra.mxu0 0.0
        %2749 = vmatprep.subr.mxu0 0.0
        %2750 = vmatpush1.msra.mxu0 0.0
        %2751 = vmatprep.subr.mxu0 0.0
        %2752 = vmatpush1.msra.mxu0 0.0
        %2753 = vmatprep.subr.mxu0 0.0
        %2754 = vmatpush1.msra.mxu0 0.0
        %2755 = vmatprep.subr.mxu0 0.0
        %2756 = vmatpush1.msra.mxu0 0.0
        %2757 = vmatprep.subr.mxu0 0.0
        %2758 = vmatpush1.msra.mxu0 0.0
        %2759 = vmatprep.subr.mxu0 0.0
        %2760 = vmatpush1.msra.mxu0 0.0
        %2761 = vmatprep.subr.mxu0 0.0
        %2762 = vmatpush1.msra.mxu0 0.0
        %2763 = vmatprep.subr.mxu0 0.0
        %2764 = vmatpush1.msra.mxu0 0.0
        %2765 = vmatprep.subr.mxu0 0.0
        %2766 = vmatpush1.msra.mxu0 0.0
        %2767 = vmatprep.subr.mxu0 0.0
        %2768 = vmatpush1.msra.mxu0 0.0
        %2769 = vmatprep.subr.mxu0 0.0
        %2770 = vmatpush1.msra.mxu0 0.0
        %2771 = vmatprep.subr.mxu0 0.0
        %2772 = vmatpush1.msra.mxu0 0.0
        %2773 = vmatprep.subr.mxu0 0.0
        %2774 = vmatpush1.msra.mxu0 0.0
        %2775 = vmatprep.subr.mxu0 0.0
        %2776 = vmatpush1.msra.mxu0 0.0
        %2777 = vmatprep.subr.mxu0 0.0
        %2778 = vmatpush1.msra.mxu0 0.0
        %2779 = vmatprep.subr.mxu0 0.0
        %2780 = vmatpush1.msra.mxu0 0.0
        %2781 = vmatprep.subr.mxu0 0.0
        %2782 = vmatpush1.msra.mxu0 0.0
        %2783 = vmatprep.subr.mxu0 0.0
        %2784 = vmatpush1.msra.mxu0 0.0
        %2785 = vmatprep.subr.mxu0 0.0
        %2786 = vmatpush1.msra.mxu0 0.0
        %2787 = vmatprep.subr.mxu0 0.0
        %2788 = vmatpush1.msra.mxu0 0.0
        %2789 = vmatprep.subr.mxu0 0.0
        %2790 = vmatpush1.msra.mxu0 0.0
        %2791 = vmatprep.subr.mxu0 0.0
        %2792 = vmatpush1.msra.mxu0 0.0
        %2793 = vmatprep.subr.mxu0 0.0
        %2794 = vmatpush1.msra.mxu0 0.0
        %2795 = vmatprep.subr.mxu0 0.0
        %2796 = vmatpush1.msra.mxu0 0.0
        %2797 = vmatprep.subr.mxu0 0.0
        %2798 = vmatpush1.msra.mxu0 0.0
        %2799 = vmatprep.subr.mxu0 0.0
        %2800 = vmatpush1.msra.mxu0 0.0
        %2801 = vmatprep.subr.mxu0 0.0
        %2802 = vmatpush1.msra.mxu0 0.0
        %2803 = vmatprep.subr.mxu0 0.0
        %2804 = vmatpush1.msra.mxu0 0.0
        %2805 = vmatprep.subr.mxu0 0.0
        %2806 = vmatpush1.msra.mxu0 0.0
        %2807 = vmatprep.mubr.f32.mxu0 0.0
        %2808 = vmatmul.mubr.f32.gmra.mrb[0].mxu0 %v2645
        %v2809 = vpop.f32.mrb[0].mxu0
        %v2810 = vadd.f32 0.0, %v2809
        %v2811 = vpop.f32.mrb[0].mxu0
        %2812 = vmatprep.mubr.f32.mxu0 0.0
        %2813 = vmatmul.mubr.f32.gmra.mrb[0].mxu0 %v2648
        %v2814 = vpop.f32.mrb[0].mxu0
        %v2815 = vadd.f32 0.0, %v2814
        %v2816 = vpop.f32.mrb[0].mxu0
        %2817 = vmatprep.mubr.f32.mxu0 0.0
        %2818 = vmatmul.mubr.f32.gmra.mrb[0].mxu0 %v2651
        %v2819 = vpop.f32.mrb[0].mxu0
        %v2820 = vadd.f32 0.0, %v2819
        %v2821 = vpop.f32.mrb[0].mxu0
        %2822 = vmatprep.mubr.f32.mxu0 0.0
        %2823 = vmatmul.mubr.f32.gmra.mrb[0].mxu0 %v2654
        %v2824 = vpop.f32.mrb[0].mxu0
        %v2825 = vadd.f32 0.0, %v2824
        %v2826 = vpop.f32.mrb[0].mxu0
        %2827 = vmatprep.mubr.f32.mxu0 0.0
        %2828 = vmatmul.mubr.f32.gmra.mrb[0].mxu0 %v2657
        %v2829 = vpop.f32.mrb[0].mxu0
        %v2830 = vadd.f32 0.0, %v2829
        %v2831 = vpop.f32.mrb[0].mxu0
        %2832 = vmatprep.mubr.f32.mxu0 0.0
        %2833 = vmatmul.mubr.f32.gmra.mrb[0].mxu0 %v2660
        %v2834 = vpop.f32.mrb[0].mxu0
        %v2835 = vadd.f32 0.0, %v2834
        %v2836 = vpop.f32.mrb[0].mxu0
        %2837 = vmatprep.mubr.f32.mxu0 0.0
        %2838 = vmatmul.mubr.f32.gmra.mrb[0].mxu0 %v2663
        %v2839 = vpop.f32.mrb[0].mxu0
        %v2840 = vadd.f32 0.0, %v2839
        %v2841 = vpop.f32.mrb[0].mxu0
        %2842 = vmatprep.mubr.f32.mxu0 0.0
        %2843 = vmatmul.mubr.f32.gmra.mrb[0].mxu0 %v2666
        %v2844 = vpop.f32.mrb[0].mxu0
        %v2845 = vadd.f32 0.0, %v2844
        %v2846 = vpop.f32.mrb[0].mxu0
        %2847 = vmatprep.mubr.f32.mxu0 0.0
        %2848 = vmatmul.mubr.f32.gmra.mrb[0].mxu0 %v2669
        %v2849 = vpop.f32.mrb[0].mxu0
        %v2850 = vadd.f32 0.0, %v2849
        %v2851 = vpop.f32.mrb[0].mxu0
        %2852 = vmatprep.mubr.f32.mxu0 0.0
        %2853 = vmatmul.mubr.f32.gmra.mrb[0].mxu0 %v2672
        %v2854 = vpop.f32.mrb[0].mxu0
        %v2855 = vadd.f32 0.0, %v2854
        %v2856 = vpop.f32.mrb[0].mxu0
        %2857 = vmatprep.mubr.f32.mxu0 0.0
        %2858 = vmatmul.mubr.f32.gmra.mrb[0].mxu0 %v2675
        %v2859 = vpop.f32.mrb[0].mxu0
        %v2860 = vadd.f32 0.0, %v2859
        %v2861 = vpop.f32.mrb[0].mxu0
        %2862 = vmatprep.mubr.f32.mxu0 0.0
        %2863 = vmatmul.mubr.f32.gmra.mrb[0].mxu0 %v2678
        %v2864 = vpop.f32.mrb[0].mxu0
        %v2865 = vadd.f32 0.0, %v2864
        %v2866 = vpop.f32.mrb[0].mxu0
        %2867 = vmatprep.mubr.f32.mxu0 0.0
        %2868 = vmatmul.mubr.f32.gmra.mrb[0].mxu0 %v2681
        %v2869 = vpop.f32.mrb[0].mxu0
        %v2870 = vadd.f32 0.0, %v2869
        %v2871 = vpop.f32.mrb[0].mxu0
        %2872 = vmatprep.mubr.f32.mxu0 0.0
        %2873 = vmatmul.mubr.f32.gmra.mrb[0].mxu0 %v2684
        %v2874 = vpop.f32.mrb[0].mxu0
        %v2875 = vadd.f32 0.0, %v2874
        %v2876 = vpop.f32.mrb[0].mxu0
        %2877 = vmatprep.mubr.f32.mxu0 0.0
        %2878 = vmatmul.mubr.f32.gmra.mrb[0].mxu0 %v2687
        %v2879 = vpop.f32.mrb[0].mxu0
        %v2880 = vadd.f32 0.0, %v2879
        %v2881 = vpop.f32.mrb[0].mxu0
        %2882 = vmatprep.mubr.f32.mxu0 0.0
        %2883 = vmatmul.mubr.f32.gmra.mrb[0].mxu0 %v2690
        %v2884 = vpop.f32.mrb[0].mxu0
        %v2885 = vadd.f32 0.0, %v2884
        %v2886 = vpop.f32.mrb[0].mxu0
        %2887 = vmatprep.mubr.f32.mxu0 0.0
        %2888 = vmatmul.mubr.f32.gmra.mrb[0].mxu0 %v2693
        %v2889 = vpop.f32.mrb[0].mxu0
        %v2890 = vadd.f32 0.0, %v2889
        %v2891 = vpop.f32.mrb[0].mxu0
        %2892 = vmatprep.mubr.f32.mxu0 0.0
        %2893 = vmatmul.mubr.f32.gmra.mrb[0].mxu0 %v2696
        %v2894 = vpop.f32.mrb[0].mxu0
        %v2895 = vadd.f32 0.0, %v2894
        %v2896 = vpop.f32.mrb[0].mxu0
        %2897 = vmatprep.mubr.f32.mxu0 0.0
        %2898 = vmatmul.mubr.f32.gmra.mrb[0].mxu0 %v2699
        %v2899 = vpop.f32.mrb[0].mxu0
        %v2900 = vadd.f32 0.0, %v2899
        %v2901 = vpop.f32.mrb[0].mxu0
        %2902 = vmatprep.mubr.f32.mxu0 0.0
        %2903 = vmatmul.mubr.f32.gmra.mrb[0].mxu0 %v2702
        %v2904 = vpop.f32.mrb[0].mxu0
        %v2905 = vadd.f32 0.0, %v2904
        %v2906 = vpop.f32.mrb[0].mxu0
        %2907 = vmatprep.mubr.f32.mxu0 0.0
        %2908 = vmatmul.mubr.f32.gmra.mrb[0].mxu0 %v2705
        %v2909 = vpop.f32.mrb[0].mxu0
        %v2910 = vadd.f32 0.0, %v2909
        %v2911 = vpop.f32.mrb[0].mxu0
        %2912 = vmatprep.mubr.f32.mxu0 0.0
        %2913 = vmatmul.mubr.f32.gmra.mrb[0].mxu0 %v2708
        %v2914 = vpop.f32.mrb[0].mxu0
        %v2915 = vadd.f32 0.0, %v2914
        %v2916 = vpop.f32.mrb[0].mxu0
        %2917 = vmatprep.mubr.f32.mxu0 0.0
        %2918 = vmatmul.mubr.f32.gmra.mrb[0].mxu0 %v2711
        %v2919 = vpop.f32.mrb[0].mxu0
        %v2920 = vadd.f32 0.0, %v2919
        %v2921 = vpop.f32.mrb[0].mxu0
        %2922 = vmatprep.mubr.f32.mxu0 0.0
        %2923 = vmatmul.mubr.f32.gmra.mrb[0].mxu0 %v2714
        %v2924 = vpop.f32.mrb[0].mxu0
        %v2925 = vadd.f32 0.0, %v2924
        %v2926 = vpop.f32.mrb[0].mxu0
        %2927 = vmatprep.mubr.f32.mxu0 0.0
        %2928 = vmatmul.mubr.f32.gmra.mrb[0].mxu0 %v2717
        %v2929 = vpop.f32.mrb[0].mxu0
        %v2930 = vadd.f32 0.0, %v2929
        %v2931 = vpop.f32.mrb[0].mxu0
        %2932 = vmatprep.mubr.f32.mxu0 0.0
        %2933 = vmatmul.mubr.f32.gmra.mrb[0].mxu0 %v2720
        %v2934 = vpop.f32.mrb[0].mxu0
        %v2935 = vadd.f32 0.0, %v2934
        %v2936 = vpop.f32.mrb[0].mxu0
        %2937 = vmatprep.mubr.f32.mxu0 0.0
        %2938 = vmatmul.mubr.f32.gmra.mrb[0].mxu0 %v2723
        %v2939 = vpop.f32.mrb[0].mxu0
        %v2940 = vadd.f32 0.0, %v2939
        %v2941 = vpop.f32.mrb[0].mxu0
        %2942 = vmatprep.mubr.f32.mxu0 0.0
        %2943 = vmatmul.mubr.f32.gmra.mrb[0].mxu0 %v2726
        %v2944 = vpop.f32.mrb[0].mxu0
        %v2945 = vadd.f32 0.0, %v2944
        %v2946 = vpop.f32.mrb[0].mxu0
        %2947 = vmatprep.mubr.f32.mxu0 0.0
        %2948 = vmatmul.mubr.f32.gmra.mrb[0].mxu0 %v2729
        %v2949 = vpop.f32.mrb[0].mxu0
        %v2950 = vadd.f32 0.0, %v2949
        %v2951 = vpop.f32.mrb[0].mxu0
        %2952 = vmatprep.mubr.f32.mxu0 0.0
        %2953 = vmatmul.mubr.f32.gmra.mrb[0].mxu0 %v2732
        %v2954 = vpop.f32.mrb[0].mxu0
        %v2955 = vadd.f32 0.0, %v2954
        %v2956 = vpop.f32.mrb[0].mxu0
        %2957 = vmatprep.mubr.f32.mxu0 0.0
        %2958 = vmatmul.mubr.f32.gmra.mrb[0].mxu0 %v2735
        %v2959 = vpop.f32.mrb[0].mxu0
        %v2960 = vadd.f32 0.0, %v2959
        %v2961 = vpop.f32.mrb[0].mxu0
        %2962 = vmatprep.mubr.f32.mxu0 0.0
        %2963 = vmatmul.mubr.f32.gmra.mrb[0].mxu0 %v2738
        %v2964 = vpop.f32.mrb[0].mxu0
        %v2965 = vadd.f32 0.0, %v2964
        %v2966 = vpop.f32.mrb[0].mxu0
        %2967 = vdwg.mxu0
        %v2968 = vadd.f32 %v2578, %v2810
        %v2969 = vadd.f32 %v2579, %v2815
        %v2970 = vadd.f32 %v2580, %v2820
        %v2971 = vadd.f32 %v2581, %v2825
        %v2972 = vadd.f32 %v2582, %v2830
        %v2973 = vadd.f32 %v2583, %v2835
        %v2974 = vadd.f32 %v2584, %v2840
        %v2975 = vadd.f32 %v2585, %v2845
        %v2976 = vadd.f32 %v2586, %v2850
        %v2977 = vadd.f32 %v2587, %v2855
        %v2978 = vadd.f32 %v2588, %v2860
        %v2979 = vadd.f32 %v2589, %v2865
        %v2980 = vadd.f32 %v2590, %v2870
        %v2981 = vadd.f32 %v2591, %v2875
        %v2982 = vadd.f32 %v2592, %v2880
        %v2983 = vadd.f32 %v2593, %v2885
        %v2984 = vadd.f32 %v2594, %v2890
        %v2985 = vadd.f32 %v2595, %v2895
        %v2986 = vadd.f32 %v2596, %v2900
        %v2987 = vadd.f32 %v2597, %v2905
        %v2988 = vadd.f32 %v2598, %v2910
        %v2989 = vadd.f32 %v2599, %v2915
        %v2990 = vadd.f32 %v2600, %v2920
        %v2991 = vadd.f32 %v2601, %v2925
        %v2992 = vadd.f32 %v2602, %v2930
        %v2993 = vadd.f32 %v2603, %v2935
        %v2994 = vadd.f32 %v2604, %v2940
        %v2995 = vadd.f32 %v2605, %v2945
        %v2996 = vadd.f32 %v2606, %v2950
        %v2997 = vadd.f32 %v2607, %v2955
        %v2998 = vadd.f32 %v2608, %v2960
        %v2999 = vadd.f32 %v2609, %v2965
        %v3000 = vld [vmem:[%s318 + $0x1] sm:$0xff]
        %v3001 = vld [vmem:[%s318 + $0x9] sm:$0xff]
        %v3002 = vld [vmem:[%s318 + $0x19] sm:$0xff]
        %v3003 = vld [vmem:[%s318 + $0x21] sm:$0xff]
        %v3004 = vld [vmem:[%s318 + $0x31] sm:$0xff]
        %v3005 = vld [vmem:[%s318 + $0x39] sm:$0xff]
        %v3006 = vld [vmem:[%s318 + $0x49] sm:$0xff]
        %v3007 = vld [vmem:[%s318 + $0x51] sm:$0xff]
        %v3008 = vld [vmem:[%s318 + $0x61] sm:$0xff]
        %v3009 = vld [vmem:[%s318 + $0x69] sm:$0xff]
        %v3010 = vld [vmem:[%s318 + $0x79] sm:$0xff]
        %v3011 = vld [vmem:[%s318 + $0x81] sm:$0xff]
        %v3012 = vld [vmem:[%s318 + $0x91] sm:$0xff]
        %v3013 = vld [vmem:[%s318 + $0x99] sm:$0xff]
        %v3014 = vld [vmem:[%s318 + $0xa9] sm:$0xff]
        %v3015 = vld [vmem:[%s318 + $0xb1] sm:$0xff]
        %v3016 = vld [vmem:[%s318 + $0xc1] sm:$0xff]
        %v3017 = vld [vmem:[%s318 + $0xc9] sm:$0xff]
        %v3018 = vld [vmem:[%s318 + $0xd9] sm:$0xff]
        %v3019 = vld [vmem:[%s318 + $0xe1] sm:$0xff]
        %v3020 = vld [vmem:[%s318 + $0xf1] sm:$0xff]
        %v3021 = vld [vmem:[%s318 + $0xf9] sm:$0xff]
        %v3022 = vld [vmem:[%s318 + $0x109] sm:$0xff]
        %v3023 = vld [vmem:[%s318 + $0x111] sm:$0xff]
        %v3024 = vld [vmem:[%s318 + $0x121] sm:$0xff]
        %v3025 = vld [vmem:[%s318 + $0x129] sm:$0xff]
        %v3026 = vld [vmem:[%s318 + $0x139] sm:$0xff]
        %v3027 = vld [vmem:[%s318 + $0x141] sm:$0xff]
        %v3028 = vld [vmem:[%s318 + $0x151] sm:$0xff]
        %v3029 = vld [vmem:[%s318 + $0x159] sm:$0xff]
        %v3030 = vld [vmem:[%s318 + $0x169] sm:$0xff]
        %v3031 = vld [vmem:[%s318 + $0x171] sm:$0xff]
        %s3032 = scalar_lea.vmem [#allocation6], 28
        %v3033 = vld [vmem:[%s3032] sm:$0xf]
        %v3035 = vsel %vm251, %v3000, 0
        %v3038 = vsel %vm251, %v3001, 0
        %v3041 = vsel %vm251, %v3002, 0
        %v3044 = vsel %vm251, %v3003, 0
        %v3047 = vsel %vm251, %v3004, 0
        %v3050 = vsel %vm251, %v3005, 0
        %v3053 = vsel %vm251, %v3006, 0
        %v3056 = vsel %vm251, %v3007, 0
        %v3059 = vsel %vm251, %v3008, 0
        %v3062 = vsel %vm251, %v3009, 0
        %v3065 = vsel %vm251, %v3010, 0
        %v3068 = vsel %vm251, %v3011, 0
        %v3071 = vsel %vm251, %v3012, 0
        %v3074 = vsel %vm251, %v3013, 0
        %v3077 = vsel %vm251, %v3014, 0
        %v3080 = vsel %vm251, %v3015, 0
        %v3083 = vsel %vm251, %v3016, 0
        %v3086 = vsel %vm251, %v3017, 0
        %v3089 = vsel %vm251, %v3018, 0
        %v3092 = vsel %vm251, %v3019, 0
        %v3095 = vsel %vm251, %v3020, 0
        %v3098 = vsel %vm251, %v3021, 0
        %v3101 = vsel %vm251, %v3022, 0
        %v3104 = vsel %vm251, %v3023, 0
        %v3107 = vsel %vm251, %v3024, 0
        %v3110 = vsel %vm251, %v3025, 0
        %v3113 = vsel %vm251, %v3026, 0
        %v3116 = vsel %vm251, %v3027, 0
        %v3119 = vsel %vm251, %v3028, 0
        %v3122 = vsel %vm251, %v3029, 0
        %v3125 = vsel %vm251, %v3030, 0
        %v3128 = vsel %vm251, %v3031, 0
        %v3131 = vsel %vm497, %v3033, 0
        %3133 = vmatprep.subr.mxu0 0.0
        %3134 = vmatpush1.msra.mxu0 %v3131
        %3135 = vmatprep.subr.mxu0 0.0
        %3136 = vmatpush1.msra.mxu0 0.0
        %3137 = vmatprep.subr.mxu0 0.0
        %3138 = vmatpush1.msra.mxu0 0.0
        %3139 = vmatprep.subr.mxu0 0.0
        %3140 = vmatpush1.msra.mxu0 0.0
        %3141 = vmatprep.subr.mxu0 0.0
        %3142 = vmatpush1.msra.mxu0 0.0
        %3143 = vmatprep.subr.mxu0 0.0
        %3144 = vmatpush1.msra.mxu0 0.0
        %3145 = vmatprep.subr.mxu0 0.0
        %3146 = vmatpush1.msra.mxu0 0.0
        %3147 = vmatprep.subr.mxu0 0.0
        %3148 = vmatpush1.msra.mxu0 0.0
        %3149 = vmatprep.subr.mxu0 0.0
        %3150 = vmatpush1.msra.mxu0 0.0
        %3151 = vmatprep.subr.mxu0 0.0
        %3152 = vmatpush1.msra.mxu0 0.0
        %3153 = vmatprep.subr.mxu0 0.0
        %3154 = vmatpush1.msra.mxu0 0.0
        %3155 = vmatprep.subr.mxu0 0.0
        %3156 = vmatpush1.msra.mxu0 0.0
        %3157 = vmatprep.subr.mxu0 0.0
        %3158 = vmatpush1.msra.mxu0 0.0
        %3159 = vmatprep.subr.mxu0 0.0
        %3160 = vmatpush1.msra.mxu0 0.0
        %3161 = vmatprep.subr.mxu0 0.0
        %3162 = vmatpush1.msra.mxu0 0.0
        %3163 = vmatprep.subr.mxu0 0.0
        %3164 = vmatpush1.msra.mxu0 0.0
        %3165 = vmatprep.subr.mxu0 0.0
        %3166 = vmatpush1.msra.mxu0 0.0
        %3167 = vmatprep.subr.mxu0 0.0
        %3168 = vmatpush1.msra.mxu0 0.0
        %3169 = vmatprep.subr.mxu0 0.0
        %3170 = vmatpush1.msra.mxu0 0.0
        %3171 = vmatprep.subr.mxu0 0.0
        %3172 = vmatpush1.msra.mxu0 0.0
        %3173 = vmatprep.subr.mxu0 0.0
        %3174 = vmatpush1.msra.mxu0 0.0
        %3175 = vmatprep.subr.mxu0 0.0
        %3176 = vmatpush1.msra.mxu0 0.0
        %3177 = vmatprep.subr.mxu0 0.0
        %3178 = vmatpush1.msra.mxu0 0.0
        %3179 = vmatprep.subr.mxu0 0.0
        %3180 = vmatpush1.msra.mxu0 0.0
        %3181 = vmatprep.subr.mxu0 0.0
        %3182 = vmatpush1.msra.mxu0 0.0
        %3183 = vmatprep.subr.mxu0 0.0
        %3184 = vmatpush1.msra.mxu0 0.0
        %3185 = vmatprep.subr.mxu0 0.0
        %3186 = vmatpush1.msra.mxu0 0.0
        %3187 = vmatprep.subr.mxu0 0.0
        %3188 = vmatpush1.msra.mxu0 0.0
        %3189 = vmatprep.subr.mxu0 0.0
        %3190 = vmatpush1.msra.mxu0 0.0
        %3191 = vmatprep.subr.mxu0 0.0
        %3192 = vmatpush1.msra.mxu0 0.0
        %3193 = vmatprep.subr.mxu0 0.0
        %3194 = vmatpush1.msra.mxu0 0.0
        %3195 = vmatprep.subr.mxu0 0.0
        %3196 = vmatpush1.msra.mxu0 0.0
        %3197 = vmatprep.mubr.f32.mxu0 0.0
        %3198 = vmatmul.mubr.f32.gmra.mrb[0].mxu0 %v3035
        %v3199 = vpop.f32.mrb[0].mxu0
        %v3200 = vadd.f32 0.0, %v3199
        %v3201 = vpop.f32.mrb[0].mxu0
        %3202 = vmatprep.mubr.f32.mxu0 0.0
        %3203 = vmatmul.mubr.f32.gmra.mrb[0].mxu0 %v3038
        %v3204 = vpop.f32.mrb[0].mxu0
        %v3205 = vadd.f32 0.0, %v3204
        %v3206 = vpop.f32.mrb[0].mxu0
        %3207 = vmatprep.mubr.f32.mxu0 0.0
        %3208 = vmatmul.mubr.f32.gmra.mrb[0].mxu0 %v3041
        %v3209 = vpop.f32.mrb[0].mxu0
        %v3210 = vadd.f32 0.0, %v3209
        %v3211 = vpop.f32.mrb[0].mxu0
        %3212 = vmatprep.mubr.f32.mxu0 0.0
        %3213 = vmatmul.mubr.f32.gmra.mrb[0].mxu0 %v3044
        %v3214 = vpop.f32.mrb[0].mxu0
        %v3215 = vadd.f32 0.0, %v3214
        %v3216 = vpop.f32.mrb[0].mxu0
        %3217 = vmatprep.mubr.f32.mxu0 0.0
        %3218 = vmatmul.mubr.f32.gmra.mrb[0].mxu0 %v3047
        %v3219 = vpop.f32.mrb[0].mxu0
        %v3220 = vadd.f32 0.0, %v3219
        %v3221 = vpop.f32.mrb[0].mxu0
        %3222 = vmatprep.mubr.f32.mxu0 0.0
        %3223 = vmatmul.mubr.f32.gmra.mrb[0].mxu0 %v3050
        %v3224 = vpop.f32.mrb[0].mxu0
        %v3225 = vadd.f32 0.0, %v3224
        %v3226 = vpop.f32.mrb[0].mxu0
        %3227 = vmatprep.mubr.f32.mxu0 0.0
        %3228 = vmatmul.mubr.f32.gmra.mrb[0].mxu0 %v3053
        %v3229 = vpop.f32.mrb[0].mxu0
        %v3230 = vadd.f32 0.0, %v3229
        %v3231 = vpop.f32.mrb[0].mxu0
        %3232 = vmatprep.mubr.f32.mxu0 0.0
        %3233 = vmatmul.mubr.f32.gmra.mrb[0].mxu0 %v3056
        %v3234 = vpop.f32.mrb[0].mxu0
        %v3235 = vadd.f32 0.0, %v3234
        %v3236 = vpop.f32.mrb[0].mxu0
        %3237 = vmatprep.mubr.f32.mxu0 0.0
        %3238 = vmatmul.mubr.f32.gmra.mrb[0].mxu0 %v3059
        %v3239 = vpop.f32.mrb[0].mxu0
        %v3240 = vadd.f32 0.0, %v3239
        %v3241 = vpop.f32.mrb[0].mxu0
        %3242 = vmatprep.mubr.f32.mxu0 0.0
        %3243 = vmatmul.mubr.f32.gmra.mrb[0].mxu0 %v3062
        %v3244 = vpop.f32.mrb[0].mxu0
        %v3245 = vadd.f32 0.0, %v3244
        %v3246 = vpop.f32.mrb[0].mxu0
        %3247 = vmatprep.mubr.f32.mxu0 0.0
        %3248 = vmatmul.mubr.f32.gmra.mrb[0].mxu0 %v3065
        %v3249 = vpop.f32.mrb[0].mxu0
        %v3250 = vadd.f32 0.0, %v3249
        %v3251 = vpop.f32.mrb[0].mxu0
        %3252 = vmatprep.mubr.f32.mxu0 0.0
        %3253 = vmatmul.mubr.f32.gmra.mrb[0].mxu0 %v3068
        %v3254 = vpop.f32.mrb[0].mxu0
        %v3255 = vadd.f32 0.0, %v3254
        %v3256 = vpop.f32.mrb[0].mxu0
        %3257 = vmatprep.mubr.f32.mxu0 0.0
        %3258 = vmatmul.mubr.f32.gmra.mrb[0].mxu0 %v3071
        %v3259 = vpop.f32.mrb[0].mxu0
        %v3260 = vadd.f32 0.0, %v3259
        %v3261 = vpop.f32.mrb[0].mxu0
        %3262 = vmatprep.mubr.f32.mxu0 0.0
        %3263 = vmatmul.mubr.f32.gmra.mrb[0].mxu0 %v3074
        %v3264 = vpop.f32.mrb[0].mxu0
        %v3265 = vadd.f32 0.0, %v3264
        %v3266 = vpop.f32.mrb[0].mxu0
        %3267 = vmatprep.mubr.f32.mxu0 0.0
        %3268 = vmatmul.mubr.f32.gmra.mrb[0].mxu0 %v3077
        %v3269 = vpop.f32.mrb[0].mxu0
        %v3270 = vadd.f32 0.0, %v3269
        %v3271 = vpop.f32.mrb[0].mxu0
        %3272 = vmatprep.mubr.f32.mxu0 0.0
        %3273 = vmatmul.mubr.f32.gmra.mrb[0].mxu0 %v3080
        %v3274 = vpop.f32.mrb[0].mxu0
        %v3275 = vadd.f32 0.0, %v3274
        %v3276 = vpop.f32.mrb[0].mxu0
        %3277 = vmatprep.mubr.f32.mxu0 0.0
        %3278 = vmatmul.mubr.f32.gmra.mrb[0].mxu0 %v3083
        %v3279 = vpop.f32.mrb[0].mxu0
        %v3280 = vadd.f32 0.0, %v3279
        %v3281 = vpop.f32.mrb[0].mxu0
        %3282 = vmatprep.mubr.f32.mxu0 0.0
        %3283 = vmatmul.mubr.f32.gmra.mrb[0].mxu0 %v3086
        %v3284 = vpop.f32.mrb[0].mxu0
        %v3285 = vadd.f32 0.0, %v3284
        %v3286 = vpop.f32.mrb[0].mxu0
        %3287 = vmatprep.mubr.f32.mxu0 0.0
        %3288 = vmatmul.mubr.f32.gmra.mrb[0].mxu0 %v3089
        %v3289 = vpop.f32.mrb[0].mxu0
        %v3290 = vadd.f32 0.0, %v3289
        %v3291 = vpop.f32.mrb[0].mxu0
        %3292 = vmatprep.mubr.f32.mxu0 0.0
        %3293 = vmatmul.mubr.f32.gmra.mrb[0].mxu0 %v3092
        %v3294 = vpop.f32.mrb[0].mxu0
        %v3295 = vadd.f32 0.0, %v3294
        %v3296 = vpop.f32.mrb[0].mxu0
        %3297 = vmatprep.mubr.f32.mxu0 0.0
        %3298 = vmatmul.mubr.f32.gmra.mrb[0].mxu0 %v3095
        %v3299 = vpop.f32.mrb[0].mxu0
        %v3300 = vadd.f32 0.0, %v3299
        %v3301 = vpop.f32.mrb[0].mxu0
        %3302 = vmatprep.mubr.f32.mxu0 0.0
        %3303 = vmatmul.mubr.f32.gmra.mrb[0].mxu0 %v3098
        %v3304 = vpop.f32.mrb[0].mxu0
        %v3305 = vadd.f32 0.0, %v3304
        %v3306 = vpop.f32.mrb[0].mxu0
        %3307 = vmatprep.mubr.f32.mxu0 0.0
        %3308 = vmatmul.mubr.f32.gmra.mrb[0].mxu0 %v3101
        %v3309 = vpop.f32.mrb[0].mxu0
        %v3310 = vadd.f32 0.0, %v3309
        %v3311 = vpop.f32.mrb[0].mxu0
        %3312 = vmatprep.mubr.f32.mxu0 0.0
        %3313 = vmatmul.mubr.f32.gmra.mrb[0].mxu0 %v3104
        %v3314 = vpop.f32.mrb[0].mxu0
        %v3315 = vadd.f32 0.0, %v3314
        %v3316 = vpop.f32.mrb[0].mxu0
        %3317 = vmatprep.mubr.f32.mxu0 0.0
        %3318 = vmatmul.mubr.f32.gmra.mrb[0].mxu0 %v3107
        %v3319 = vpop.f32.mrb[0].mxu0
        %v3320 = vadd.f32 0.0, %v3319
        %v3321 = vpop.f32.mrb[0].mxu0
        %3322 = vmatprep.mubr.f32.mxu0 0.0
        %3323 = vmatmul.mubr.f32.gmra.mrb[0].mxu0 %v3110
        %v3324 = vpop.f32.mrb[0].mxu0
        %v3325 = vadd.f32 0.0, %v3324
        %v3326 = vpop.f32.mrb[0].mxu0
        %3327 = vmatprep.mubr.f32.mxu0 0.0
        %3328 = vmatmul.mubr.f32.gmra.mrb[0].mxu0 %v3113
        %v3329 = vpop.f32.mrb[0].mxu0
        %v3330 = vadd.f32 0.0, %v3329
        %v3331 = vpop.f32.mrb[0].mxu0
        %3332 = vmatprep.mubr.f32.mxu0 0.0
        %3333 = vmatmul.mubr.f32.gmra.mrb[0].mxu0 %v3116
        %v3334 = vpop.f32.mrb[0].mxu0
        %v3335 = vadd.f32 0.0, %v3334
        %v3336 = vpop.f32.mrb[0].mxu0
        %3337 = vmatprep.mubr.f32.mxu0 0.0
        %3338 = vmatmul.mubr.f32.gmra.mrb[0].mxu0 %v3119
        %v3339 = vpop.f32.mrb[0].mxu0
        %v3340 = vadd.f32 0.0, %v3339
        %v3341 = vpop.f32.mrb[0].mxu0
        %3342 = vmatprep.mubr.f32.mxu0 0.0
        %3343 = vmatmul.mubr.f32.gmra.mrb[0].mxu0 %v3122
        %v3344 = vpop.f32.mrb[0].mxu0
        %v3345 = vadd.f32 0.0, %v3344
        %v3346 = vpop.f32.mrb[0].mxu0
        %3347 = vmatprep.mubr.f32.mxu0 0.0
        %3348 = vmatmul.mubr.f32.gmra.mrb[0].mxu0 %v3125
        %v3349 = vpop.f32.mrb[0].mxu0
        %v3350 = vadd.f32 0.0, %v3349
        %v3351 = vpop.f32.mrb[0].mxu0
        %3352 = vmatprep.mubr.f32.mxu0 0.0
        %3353 = vmatmul.mubr.f32.gmra.mrb[0].mxu0 %v3128
        %v3354 = vpop.f32.mrb[0].mxu0
        %v3355 = vadd.f32 0.0, %v3354
        %v3356 = vpop.f32.mrb[0].mxu0
        %3357 = vdwg.mxu0
        %v3358 = vadd.f32 %v2968, %v3200
        %v3359 = vadd.f32 %v2969, %v3205
        %v3360 = vadd.f32 %v2970, %v3210
        %v3361 = vadd.f32 %v2971, %v3215
        %v3362 = vadd.f32 %v2972, %v3220
        %v3363 = vadd.f32 %v2973, %v3225
        %v3364 = vadd.f32 %v2974, %v3230
        %v3365 = vadd.f32 %v2975, %v3235
        %v3366 = vadd.f32 %v2976, %v3240
        %v3367 = vadd.f32 %v2977, %v3245
        %v3368 = vadd.f32 %v2978, %v3250
        %v3369 = vadd.f32 %v2979, %v3255
        %v3370 = vadd.f32 %v2980, %v3260
        %v3371 = vadd.f32 %v2981, %v3265
        %v3372 = vadd.f32 %v2982, %v3270
        %v3373 = vadd.f32 %v2983, %v3275
        %v3374 = vadd.f32 %v2984, %v3280
        %v3375 = vadd.f32 %v2985, %v3285
        %v3376 = vadd.f32 %v2986, %v3290
        %v3377 = vadd.f32 %v2987, %v3295
        %v3378 = vadd.f32 %v2988, %v3300
        %v3379 = vadd.f32 %v2989, %v3305
        %v3380 = vadd.f32 %v2990, %v3310
        %v3381 = vadd.f32 %v2991, %v3315
        %v3382 = vadd.f32 %v2992, %v3320
        %v3383 = vadd.f32 %v2993, %v3325
        %v3384 = vadd.f32 %v2994, %v3330
        %v3385 = vadd.f32 %v2995, %v3335
        %v3386 = vadd.f32 %v2996, %v3340
        %v3387 = vadd.f32 %v2997, %v3345
        %v3388 = vadd.f32 %v2998, %v3350
        %v3389 = vadd.f32 %v2999, %v3355
        %v3390 = vld [vmem:[%s318 + $0x2] sm:$0xff]
        %v3391 = vld [vmem:[%s318 + $0xa] sm:$0xff]
        %v3392 = vld [vmem:[%s318 + $0x1a] sm:$0xff]
        %v3393 = vld [vmem:[%s318 + $0x22] sm:$0xff]
        %v3394 = vld [vmem:[%s318 + $0x32] sm:$0xff]
        %v3395 = vld [vmem:[%s318 + $0x3a] sm:$0xff]
        %v3396 = vld [vmem:[%s318 + $0x4a] sm:$0xff]
        %v3397 = vld [vmem:[%s318 + $0x52] sm:$0xff]
        %v3398 = vld [vmem:[%s318 + $0x62] sm:$0xff]
        %v3399 = vld [vmem:[%s318 + $0x6a] sm:$0xff]
        %v3400 = vld [vmem:[%s318 + $0x7a] sm:$0xff]
        %v3401 = vld [vmem:[%s318 + $0x82] sm:$0xff]
        %v3402 = vld [vmem:[%s318 + $0x92] sm:$0xff]
        %v3403 = vld [vmem:[%s318 + $0x9a] sm:$0xff]
        %v3404 = vld [vmem:[%s318 + $0xaa] sm:$0xff]
        %v3405 = vld [vmem:[%s318 + $0xb2] sm:$0xff]
        %v3406 = vld [vmem:[%s318 + $0xc2] sm:$0xff]
        %v3407 = vld [vmem:[%s318 + $0xca] sm:$0xff]
        %v3408 = vld [vmem:[%s318 + $0xda] sm:$0xff]
        %v3409 = vld [vmem:[%s318 + $0xe2] sm:$0xff]
        %v3410 = vld [vmem:[%s318 + $0xf2] sm:$0xff]
        %v3411 = vld [vmem:[%s318 + $0xfa] sm:$0xff]
        %v3412 = vld [vmem:[%s318 + $0x10a] sm:$0xff]
        %v3413 = vld [vmem:[%s318 + $0x112] sm:$0xff]
        %v3414 = vld [vmem:[%s318 + $0x122] sm:$0xff]
        %v3415 = vld [vmem:[%s318 + $0x12a] sm:$0xff]
        %v3416 = vld [vmem:[%s318 + $0x13a] sm:$0xff]
        %v3417 = vld [vmem:[%s318 + $0x142] sm:$0xff]
        %v3418 = vld [vmem:[%s318 + $0x152] sm:$0xff]
        %v3419 = vld [vmem:[%s318 + $0x15a] sm:$0xff]
        %v3420 = vld [vmem:[%s318 + $0x16a] sm:$0xff]
        %v3421 = vld [vmem:[%s318 + $0x172] sm:$0xff]
        %s3422 = scalar_lea.vmem [#allocation6], 32
        %v3423 = vld [vmem:[%s3422] sm:$0xf]
        %v3425 = vsel %vm251, %v3390, 0
        %v3428 = vsel %vm251, %v3391, 0
        %v3431 = vsel %vm251, %v3392, 0
        %v3434 = vsel %vm251, %v3393, 0
        %v3437 = vsel %vm251, %v3394, 0
        %v3440 = vsel %vm251, %v3395, 0
        %v3443 = vsel %vm251, %v3396, 0
        %v3446 = vsel %vm251, %v3397, 0
        %v3449 = vsel %vm251, %v3398, 0
        %v3452 = vsel %vm251, %v3399, 0
        %v3455 = vsel %vm251, %v3400, 0
        %v3458 = vsel %vm251, %v3401, 0
        %v3461 = vsel %vm251, %v3402, 0
        %v3464 = vsel %vm251, %v3403, 0
        %v3467 = vsel %vm251, %v3404, 0
        %v3470 = vsel %vm251, %v3405, 0
        %v3473 = vsel %vm251, %v3406, 0
        %v3476 = vsel %vm251, %v3407, 0
        %v3479 = vsel %vm251, %v3408, 0
        %v3482 = vsel %vm251, %v3409, 0
        %v3485 = vsel %vm251, %v3410, 0
        %v3488 = vsel %vm251, %v3411, 0
        %v3491 = vsel %vm251, %v3412, 0
        %v3494 = vsel %vm251, %v3413, 0
        %v3497 = vsel %vm251, %v3414, 0
        %v3500 = vsel %vm251, %v3415, 0
        %v3503 = vsel %vm251, %v3416, 0
        %v3506 = vsel %vm251, %v3417, 0
        %v3509 = vsel %vm251, %v3418, 0
        %v3512 = vsel %vm251, %v3419, 0
        %v3515 = vsel %vm251, %v3420, 0
        %v3518 = vsel %vm251, %v3421, 0
        %v3521 = vsel %vm497, %v3423, 0
        %3523 = vmatprep.subr.mxu0 0.0
        %3524 = vmatpush1.msra.mxu0 %v3521
        %3525 = vmatprep.subr.mxu0 0.0
        %3526 = vmatpush1.msra.mxu0 0.0
        %3527 = vmatprep.subr.mxu0 0.0
        %3528 = vmatpush1.msra.mxu0 0.0
        %3529 = vmatprep.subr.mxu0 0.0
        %3530 = vmatpush1.msra.mxu0 0.0
        %3531 = vmatprep.subr.mxu0 0.0
        %3532 = vmatpush1.msra.mxu0 0.0
        %3533 = vmatprep.subr.mxu0 0.0
        %3534 = vmatpush1.msra.mxu0 0.0
        %3535 = vmatprep.subr.mxu0 0.0
        %3536 = vmatpush1.msra.mxu0 0.0
        %3537 = vmatprep.subr.mxu0 0.0
        %3538 = vmatpush1.msra.mxu0 0.0
        %3539 = vmatprep.subr.mxu0 0.0
        %3540 = vmatpush1.msra.mxu0 0.0
        %3541 = vmatprep.subr.mxu0 0.0
        %3542 = vmatpush1.msra.mxu0 0.0
        %3543 = vmatprep.subr.mxu0 0.0
        %3544 = vmatpush1.msra.mxu0 0.0
        %3545 = vmatprep.subr.mxu0 0.0
        %3546 = vmatpush1.msra.mxu0 0.0
        %3547 = vmatprep.subr.mxu0 0.0
        %3548 = vmatpush1.msra.mxu0 0.0
        %3549 = vmatprep.subr.mxu0 0.0
        %3550 = vmatpush1.msra.mxu0 0.0
        %3551 = vmatprep.subr.mxu0 0.0
        %3552 = vmatpush1.msra.mxu0 0.0
        %3553 = vmatprep.subr.mxu0 0.0
        %3554 = vmatpush1.msra.mxu0 0.0
        %3555 = vmatprep.subr.mxu0 0.0
        %3556 = vmatpush1.msra.mxu0 0.0
        %3557 = vmatprep.subr.mxu0 0.0
        %3558 = vmatpush1.msra.mxu0 0.0
        %3559 = vmatprep.subr.mxu0 0.0
        %3560 = vmatpush1.msra.mxu0 0.0
        %3561 = vmatprep.subr.mxu0 0.0
        %3562 = vmatpush1.msra.mxu0 0.0
        %3563 = vmatprep.subr.mxu0 0.0
        %3564 = vmatpush1.msra.mxu0 0.0
        %3565 = vmatprep.subr.mxu0 0.0
        %3566 = vmatpush1.msra.mxu0 0.0
        %3567 = vmatprep.subr.mxu0 0.0
        %3568 = vmatpush1.msra.mxu0 0.0
        %3569 = vmatprep.subr.mxu0 0.0
        %3570 = vmatpush1.msra.mxu0 0.0
        %3571 = vmatprep.subr.mxu0 0.0
        %3572 = vmatpush1.msra.mxu0 0.0
        %3573 = vmatprep.subr.mxu0 0.0
        %3574 = vmatpush1.msra.mxu0 0.0
        %3575 = vmatprep.subr.mxu0 0.0
        %3576 = vmatpush1.msra.mxu0 0.0
        %3577 = vmatprep.subr.mxu0 0.0
        %3578 = vmatpush1.msra.mxu0 0.0
        %3579 = vmatprep.subr.mxu0 0.0
        %3580 = vmatpush1.msra.mxu0 0.0
        %3581 = vmatprep.subr.mxu0 0.0
        %3582 = vmatpush1.msra.mxu0 0.0
        %3583 = vmatprep.subr.mxu0 0.0
        %3584 = vmatpush1.msra.mxu0 0.0
        %3585 = vmatprep.subr.mxu0 0.0
        %3586 = vmatpush1.msra.mxu0 0.0
        %3587 = vmatprep.mubr.f32.mxu0 0.0
        %3588 = vmatmul.mubr.f32.gmra.mrb[0].mxu0 %v3425
        %v3589 = vpop.f32.mrb[0].mxu0
        %v3590 = vadd.f32 0.0, %v3589
        %v3591 = vpop.f32.mrb[0].mxu0
        %3592 = vmatprep.mubr.f32.mxu0 0.0
        %3593 = vmatmul.mubr.f32.gmra.mrb[0].mxu0 %v3428
        %v3594 = vpop.f32.mrb[0].mxu0
        %v3595 = vadd.f32 0.0, %v3594
        %v3596 = vpop.f32.mrb[0].mxu0
        %3597 = vmatprep.mubr.f32.mxu0 0.0
        %3598 = vmatmul.mubr.f32.gmra.mrb[0].mxu0 %v3431
        %v3599 = vpop.f32.mrb[0].mxu0
        %v3600 = vadd.f32 0.0, %v3599
        %v3601 = vpop.f32.mrb[0].mxu0
        %3602 = vmatprep.mubr.f32.mxu0 0.0
        %3603 = vmatmul.mubr.f32.gmra.mrb[0].mxu0 %v3434
        %v3604 = vpop.f32.mrb[0].mxu0
        %v3605 = vadd.f32 0.0, %v3604
        %v3606 = vpop.f32.mrb[0].mxu0
        %3607 = vmatprep.mubr.f32.mxu0 0.0
        %3608 = vmatmul.mubr.f32.gmra.mrb[0].mxu0 %v3437
        %v3609 = vpop.f32.mrb[0].mxu0
        %v3610 = vadd.f32 0.0, %v3609
        %v3611 = vpop.f32.mrb[0].mxu0
        %3612 = vmatprep.mubr.f32.mxu0 0.0
        %3613 = vmatmul.mubr.f32.gmra.mrb[0].mxu0 %v3440
        %v3614 = vpop.f32.mrb[0].mxu0
        %v3615 = vadd.f32 0.0, %v3614
        %v3616 = vpop.f32.mrb[0].mxu0
        %3617 = vmatprep.mubr.f32.mxu0 0.0
        %3618 = vmatmul.mubr.f32.gmra.mrb[0].mxu0 %v3443
        %v3619 = vpop.f32.mrb[0].mxu0
        %v3620 = vadd.f32 0.0, %v3619
        %v3621 = vpop.f32.mrb[0].mxu0
        %3622 = vmatprep.mubr.f32.mxu0 0.0
        %3623 = vmatmul.mubr.f32.gmra.mrb[0].mxu0 %v3446
        %v3624 = vpop.f32.mrb[0].mxu0
        %v3625 = vadd.f32 0.0, %v3624
        %v3626 = vpop.f32.mrb[0].mxu0
        %3627 = vmatprep.mubr.f32.mxu0 0.0
        %3628 = vmatmul.mubr.f32.gmra.mrb[0].mxu0 %v3449
        %v3629 = vpop.f32.mrb[0].mxu0
        %v3630 = vadd.f32 0.0, %v3629
        %v3631 = vpop.f32.mrb[0].mxu0
        %3632 = vmatprep.mubr.f32.mxu0 0.0
        %3633 = vmatmul.mubr.f32.gmra.mrb[0].mxu0 %v3452
        %v3634 = vpop.f32.mrb[0].mxu0
        %v3635 = vadd.f32 0.0, %v3634
        %v3636 = vpop.f32.mrb[0].mxu0
        %3637 = vmatprep.mubr.f32.mxu0 0.0
        %3638 = vmatmul.mubr.f32.gmra.mrb[0].mxu0 %v3455
        %v3639 = vpop.f32.mrb[0].mxu0
        %v3640 = vadd.f32 0.0, %v3639
        %v3641 = vpop.f32.mrb[0].mxu0
        %3642 = vmatprep.mubr.f32.mxu0 0.0
        %3643 = vmatmul.mubr.f32.gmra.mrb[0].mxu0 %v3458
        %v3644 = vpop.f32.mrb[0].mxu0
        %v3645 = vadd.f32 0.0, %v3644
        %v3646 = vpop.f32.mrb[0].mxu0
        %3647 = vmatprep.mubr.f32.mxu0 0.0
        %3648 = vmatmul.mubr.f32.gmra.mrb[0].mxu0 %v3461
        %v3649 = vpop.f32.mrb[0].mxu0
        %v3650 = vadd.f32 0.0, %v3649
        %v3651 = vpop.f32.mrb[0].mxu0
        %3652 = vmatprep.mubr.f32.mxu0 0.0
        %3653 = vmatmul.mubr.f32.gmra.mrb[0].mxu0 %v3464
        %v3654 = vpop.f32.mrb[0].mxu0
        %v3655 = vadd.f32 0.0, %v3654
        %v3656 = vpop.f32.mrb[0].mxu0
        %3657 = vmatprep.mubr.f32.mxu0 0.0
        %3658 = vmatmul.mubr.f32.gmra.mrb[0].mxu0 %v3467
        %v3659 = vpop.f32.mrb[0].mxu0
        %v3660 = vadd.f32 0.0, %v3659
        %v3661 = vpop.f32.mrb[0].mxu0
        %3662 = vmatprep.mubr.f32.mxu0 0.0
        %3663 = vmatmul.mubr.f32.gmra.mrb[0].mxu0 %v3470
        %v3664 = vpop.f32.mrb[0].mxu0
        %v3665 = vadd.f32 0.0, %v3664
        %v3666 = vpop.f32.mrb[0].mxu0
        %3667 = vmatprep.mubr.f32.mxu0 0.0
        %3668 = vmatmul.mubr.f32.gmra.mrb[0].mxu0 %v3473
        %v3669 = vpop.f32.mrb[0].mxu0
        %v3670 = vadd.f32 0.0, %v3669
        %v3671 = vpop.f32.mrb[0].mxu0
        %3672 = vmatprep.mubr.f32.mxu0 0.0
        %3673 = vmatmul.mubr.f32.gmra.mrb[0].mxu0 %v3476
        %v3674 = vpop.f32.mrb[0].mxu0
        %v3675 = vadd.f32 0.0, %v3674
        %v3676 = vpop.f32.mrb[0].mxu0
        %3677 = vmatprep.mubr.f32.mxu0 0.0
        %3678 = vmatmul.mubr.f32.gmra.mrb[0].mxu0 %v3479
        %v3679 = vpop.f32.mrb[0].mxu0
        %v3680 = vadd.f32 0.0, %v3679
        %v3681 = vpop.f32.mrb[0].mxu0
        %3682 = vmatprep.mubr.f32.mxu0 0.0
        %3683 = vmatmul.mubr.f32.gmra.mrb[0].mxu0 %v3482
        %v3684 = vpop.f32.mrb[0].mxu0
        %v3685 = vadd.f32 0.0, %v3684
        %v3686 = vpop.f32.mrb[0].mxu0
        %3687 = vmatprep.mubr.f32.mxu0 0.0
        %3688 = vmatmul.mubr.f32.gmra.mrb[0].mxu0 %v3485
        %v3689 = vpop.f32.mrb[0].mxu0
        %v3690 = vadd.f32 0.0, %v3689
        %v3691 = vpop.f32.mrb[0].mxu0
        %3692 = vmatprep.mubr.f32.mxu0 0.0
        %3693 = vmatmul.mubr.f32.gmra.mrb[0].mxu0 %v3488
        %v3694 = vpop.f32.mrb[0].mxu0
        %v3695 = vadd.f32 0.0, %v3694
        %v3696 = vpop.f32.mrb[0].mxu0
        %3697 = vmatprep.mubr.f32.mxu0 0.0
        %3698 = vmatmul.mubr.f32.gmra.mrb[0].mxu0 %v3491
        %v3699 = vpop.f32.mrb[0].mxu0
        %v3700 = vadd.f32 0.0, %v3699
        %v3701 = vpop.f32.mrb[0].mxu0
        %3702 = vmatprep.mubr.f32.mxu0 0.0
        %3703 = vmatmul.mubr.f32.gmra.mrb[0].mxu0 %v3494
        %v3704 = vpop.f32.mrb[0].mxu0
        %v3705 = vadd.f32 0.0, %v3704
        %v3706 = vpop.f32.mrb[0].mxu0
        %3707 = vmatprep.mubr.f32.mxu0 0.0
        %3708 = vmatmul.mubr.f32.gmra.mrb[0].mxu0 %v3497
        %v3709 = vpop.f32.mrb[0].mxu0
        %v3710 = vadd.f32 0.0, %v3709
        %v3711 = vpop.f32.mrb[0].mxu0
        %3712 = vmatprep.mubr.f32.mxu0 0.0
        %3713 = vmatmul.mubr.f32.gmra.mrb[0].mxu0 %v3500
        %v3714 = vpop.f32.mrb[0].mxu0
        %v3715 = vadd.f32 0.0, %v3714
        %v3716 = vpop.f32.mrb[0].mxu0
        %3717 = vmatprep.mubr.f32.mxu0 0.0
        %3718 = vmatmul.mubr.f32.gmra.mrb[0].mxu0 %v3503
        %v3719 = vpop.f32.mrb[0].mxu0
        %v3720 = vadd.f32 0.0, %v3719
        %v3721 = vpop.f32.mrb[0].mxu0
        %3722 = vmatprep.mubr.f32.mxu0 0.0
        %3723 = vmatmul.mubr.f32.gmra.mrb[0].mxu0 %v3506
        %v3724 = vpop.f32.mrb[0].mxu0
        %v3725 = vadd.f32 0.0, %v3724
        %v3726 = vpop.f32.mrb[0].mxu0
        %3727 = vmatprep.mubr.f32.mxu0 0.0
        %3728 = vmatmul.mubr.f32.gmra.mrb[0].mxu0 %v3509
        %v3729 = vpop.f32.mrb[0].mxu0
        %v3730 = vadd.f32 0.0, %v3729
        %v3731 = vpop.f32.mrb[0].mxu0
        %3732 = vmatprep.mubr.f32.mxu0 0.0
        %3733 = vmatmul.mubr.f32.gmra.mrb[0].mxu0 %v3512
        %v3734 = vpop.f32.mrb[0].mxu0
        %v3735 = vadd.f32 0.0, %v3734
        %v3736 = vpop.f32.mrb[0].mxu0
        %3737 = vmatprep.mubr.f32.mxu0 0.0
        %3738 = vmatmul.mubr.f32.gmra.mrb[0].mxu0 %v3515
        %v3739 = vpop.f32.mrb[0].mxu0
        %v3740 = vadd.f32 0.0, %v3739
        %v3741 = vpop.f32.mrb[0].mxu0
        %3742 = vmatprep.mubr.f32.mxu0 0.0
        %3743 = vmatmul.mubr.f32.gmra.mrb[0].mxu0 %v3518
        %v3744 = vpop.f32.mrb[0].mxu0
        %v3745 = vadd.f32 0.0, %v3744
        %v3746 = vpop.f32.mrb[0].mxu0
        %3747 = vdwg.mxu0
        %v3748 = vadd.f32 %v3358, %v3590
        %v3749 = vadd.f32 %v3359, %v3595
        %v3750 = vadd.f32 %v3360, %v3600
        %v3751 = vadd.f32 %v3361, %v3605
        %v3752 = vadd.f32 %v3362, %v3610
        %v3753 = vadd.f32 %v3363, %v3615
        %v3754 = vadd.f32 %v3364, %v3620
        %v3755 = vadd.f32 %v3365, %v3625
        %v3756 = vadd.f32 %v3366, %v3630
        %v3757 = vadd.f32 %v3367, %v3635
        %v3758 = vadd.f32 %v3368, %v3640
        %v3759 = vadd.f32 %v3369, %v3645
        %v3760 = vadd.f32 %v3370, %v3650
        %v3761 = vadd.f32 %v3371, %v3655
        %v3762 = vadd.f32 %v3372, %v3660
        %v3763 = vadd.f32 %v3373, %v3665
        %v3764 = vadd.f32 %v3374, %v3670
        %v3765 = vadd.f32 %v3375, %v3675
        %v3766 = vadd.f32 %v3376, %v3680
        %v3767 = vadd.f32 %v3377, %v3685
        %v3768 = vadd.f32 %v3378, %v3690
        %v3769 = vadd.f32 %v3379, %v3695
        %v3770 = vadd.f32 %v3380, %v3700
        %v3771 = vadd.f32 %v3381, %v3705
        %v3772 = vadd.f32 %v3382, %v3710
        %v3773 = vadd.f32 %v3383, %v3715
        %v3774 = vadd.f32 %v3384, %v3720
        %v3775 = vadd.f32 %v3385, %v3725
        %v3776 = vadd.f32 %v3386, %v3730
        %v3777 = vadd.f32 %v3387, %v3735
        %v3778 = vadd.f32 %v3388, %v3740
        %v3779 = vadd.f32 %v3389, %v3745
        %v3780 = vsel %vm251, %v3748, 0.0
        %v3781 = vsel %vm251, %v3749, 0.0
        %v3782 = vadd.f32 %v3780, %v3781
        %v3783 = vsel %vm251, %v3750, 0.0
        %v3784 = vadd.f32 %v3782, %v3783
        %v3785 = vsel %vm251, %v3751, 0.0
        %v3786 = vadd.f32 %v3784, %v3785
        %v3787 = vsel %vm251, %v3752, 0.0
        %v3788 = vadd.f32 %v3786, %v3787
        %v3789 = vsel %vm251, %v3753, 0.0
        %v3790 = vadd.f32 %v3788, %v3789
        %v3791 = vsel %vm251, %v3754, 0.0
        %v3792 = vadd.f32 %v3790, %v3791
        %v3793 = vsel %vm251, %v3755, 0.0
        %v3794 = vadd.f32 %v3792, %v3793
        %v3795 = vsel %vm251, %v3756, 0.0
        %v3796 = vadd.f32 %v3794, %v3795
        %v3797 = vsel %vm251, %v3757, 0.0
        %v3798 = vadd.f32 %v3796, %v3797
        %v3799 = vsel %vm251, %v3758, 0.0
        %v3800 = vadd.f32 %v3798, %v3799
        %v3801 = vsel %vm251, %v3759, 0.0
        %v3802 = vadd.f32 %v3800, %v3801
        %v3803 = vsel %vm251, %v3760, 0.0
        %v3804 = vadd.f32 %v3802, %v3803
        %v3805 = vsel %vm251, %v3761, 0.0
        %v3806 = vadd.f32 %v3804, %v3805
        %v3807 = vsel %vm251, %v3762, 0.0
        %v3808 = vadd.f32 %v3806, %v3807
        %v3809 = vsel %vm251, %v3763, 0.0
        %v3810 = vadd.f32 %v3808, %v3809
        %v3811 = vsel %vm251, %v3764, 0.0
        %v3812 = vadd.f32 %v3810, %v3811
        %v3813 = vsel %vm251, %v3765, 0.0
        %v3814 = vadd.f32 %v3812, %v3813
        %v3815 = vsel %vm251, %v3766, 0.0
        %v3816 = vadd.f32 %v3814, %v3815
        %v3817 = vsel %vm251, %v3767, 0.0
        %v3818 = vadd.f32 %v3816, %v3817
        %v3819 = vsel %vm251, %v3768, 0.0
        %v3820 = vadd.f32 %v3818, %v3819
        %v3821 = vsel %vm251, %v3769, 0.0
        %v3822 = vadd.f32 %v3820, %v3821
        %v3823 = vsel %vm251, %v3770, 0.0
        %v3824 = vadd.f32 %v3822, %v3823
        %v3825 = vsel %vm251, %v3771, 0.0
        %v3826 = vadd.f32 %v3824, %v3825
        %v3827 = vsel %vm251, %v3772, 0.0
        %v3828 = vadd.f32 %v3826, %v3827
        %v3829 = vsel %vm251, %v3773, 0.0
        %v3830 = vadd.f32 %v3828, %v3829
        %v3831 = vsel %vm251, %v3774, 0.0
        %v3832 = vadd.f32 %v3830, %v3831
        %v3833 = vsel %vm251, %v3775, 0.0
        %v3834 = vadd.f32 %v3832, %v3833
        %v3835 = vsel %vm251, %v3776, 0.0
        %v3836 = vadd.f32 %v3834, %v3835
        %v3837 = vsel %vm251, %v3777, 0.0
        %v3838 = vadd.f32 %v3836, %v3837
        %v3839 = vsel %vm251, %v3778, 0.0
        %v3840 = vadd.f32 %v3838, %v3839
        %v3841 = vsel %vm251, %v3779, 0.0
        %v3842 = vadd.f32 %v3840, %v3841
        %v3843 = vrot.slane %v3842, 4
        %v3844 = vadd.f32 %v3842, %v3843
        %v3845 = vrot.slane %v3844, 2
        %v3846 = vadd.f32 %v3844, %v3845
        %v3847 = vrot.slane %v3846, 1
        %v3848 = vadd.f32 %v3846, %v3847
        %v3849 = vmul.f32 %v3848, 0.00390625
        %v3850 = vmul.f32 %v3748, %v3748
        %v3851 = vmul.f32 %v3749, %v3749
        %v3852 = vmul.f32 %v3750, %v3750
        %v3853 = vmul.f32 %v3751, %v3751
        %v3854 = vmul.f32 %v3752, %v3752
        %v3855 = vmul.f32 %v3753, %v3753
        %v3856 = vmul.f32 %v3754, %v3754
        %v3857 = vmul.f32 %v3755, %v3755
        %v3858 = vmul.f32 %v3756, %v3756
        %v3859 = vmul.f32 %v3757, %v3757
        %v3860 = vmul.f32 %v3758, %v3758
        %v3861 = vmul.f32 %v3759, %v3759
        %v3862 = vmul.f32 %v3760, %v3760
        %v3863 = vmul.f32 %v3761, %v3761
        %v3864 = vmul.f32 %v3762, %v3762
        %v3865 = vmul.f32 %v3763, %v3763
        %v3866 = vmul.f32 %v3764, %v3764
        %v3867 = vmul.f32 %v3765, %v3765
        %v3868 = vmul.f32 %v3766, %v3766
        %v3869 = vmul.f32 %v3767, %v3767
        %v3870 = vmul.f32 %v3768, %v3768
        %v3871 = vmul.f32 %v3769, %v3769
        %v3872 = vmul.f32 %v3770, %v3770
        %v3873 = vmul.f32 %v3771, %v3771
        %v3874 = vmul.f32 %v3772, %v3772
        %v3875 = vmul.f32 %v3773, %v3773
        %v3876 = vmul.f32 %v3774, %v3774
        %v3877 = vmul.f32 %v3775, %v3775
        %v3878 = vmul.f32 %v3776, %v3776
        %v3879 = vmul.f32 %v3777, %v3777
        %v3880 = vmul.f32 %v3778, %v3778
        %v3881 = vmul.f32 %v3779, %v3779
        %v3882 = vsel %vm251, %v3850, 0.0
        %v3883 = vsel %vm251, %v3851, 0.0
        %v3884 = vadd.f32 %v3882, %v3883
        %v3885 = vsel %vm251, %v3852, 0.0
        %v3886 = vadd.f32 %v3884, %v3885
        %v3887 = vsel %vm251, %v3853, 0.0
        %v3888 = vadd.f32 %v3886, %v3887
        %v3889 = vsel %vm251, %v3854, 0.0
        %v3890 = vadd.f32 %v3888, %v3889
        %v3891 = vsel %vm251, %v3855, 0.0
        %v3892 = vadd.f32 %v3890, %v3891
        %v3893 = vsel %vm251, %v3856, 0.0
        %v3894 = vadd.f32 %v3892, %v3893
        %v3895 = vsel %vm251, %v3857, 0.0
        %v3896 = vadd.f32 %v3894, %v3895
        %v3897 = vsel %vm251, %v3858, 0.0
        %v3898 = vadd.f32 %v3896, %v3897
        %v3899 = vsel %vm251, %v3859, 0.0
        %v3900 = vadd.f32 %v3898, %v3899
        %v3901 = vsel %vm251, %v3860, 0.0
        %v3902 = vadd.f32 %v3900, %v3901
        %v3903 = vsel %vm251, %v3861, 0.0
        %v3904 = vadd.f32 %v3902, %v3903
        %v3905 = vsel %vm251, %v3862, 0.0
        %v3906 = vadd.f32 %v3904, %v3905
        %v3907 = vsel %vm251, %v3863, 0.0
        %v3908 = vadd.f32 %v3906, %v3907
        %v3909 = vsel %vm251, %v3864, 0.0
        %v3910 = vadd.f32 %v3908, %v3909
        %v3911 = vsel %vm251, %v3865, 0.0
        %v3912 = vadd.f32 %v3910, %v3911
        %v3913 = vsel %vm251, %v3866, 0.0
        %v3914 = vadd.f32 %v3912, %v3913
        %v3915 = vsel %vm251, %v3867, 0.0
        %v3916 = vadd.f32 %v3914, %v3915
        %v3917 = vsel %vm251, %v3868, 0.0
        %v3918 = vadd.f32 %v3916, %v3917
        %v3919 = vsel %vm251, %v3869, 0.0
        %v3920 = vadd.f32 %v3918, %v3919
        %v3921 = vsel %vm251, %v3870, 0.0
        %v3922 = vadd.f32 %v3920, %v3921
        %v3923 = vsel %vm251, %v3871, 0.0
        %v3924 = vadd.f32 %v3922, %v3923
        %v3925 = vsel %vm251, %v3872, 0.0
        %v3926 = vadd.f32 %v3924, %v3925
        %v3927 = vsel %vm251, %v3873, 0.0
        %v3928 = vadd.f32 %v3926, %v3927
        %v3929 = vsel %vm251, %v3874, 0.0
        %v3930 = vadd.f32 %v3928, %v3929
        %v3931 = vsel %vm251, %v3875, 0.0
        %v3932 = vadd.f32 %v3930, %v3931
        %v3933 = vsel %vm251, %v3876, 0.0
        %v3934 = vadd.f32 %v3932, %v3933
        %v3935 = vsel %vm251, %v3877, 0.0
        %v3936 = vadd.f32 %v3934, %v3935
        %v3937 = vsel %vm251, %v3878, 0.0
        %v3938 = vadd.f32 %v3936, %v3937
        %v3939 = vsel %vm251, %v3879, 0.0
        %v3940 = vadd.f32 %v3938, %v3939
        %v3941 = vsel %vm251, %v3880, 0.0
        %v3942 = vadd.f32 %v3940, %v3941
        %v3943 = vsel %vm251, %v3881, 0.0
        %v3944 = vadd.f32 %v3942, %v3943
        %v3945 = vrot.slane %v3944, 4
        %v3946 = vadd.f32 %v3944, %v3945
        %v3947 = vrot.slane %v3946, 2
        %v3948 = vadd.f32 %v3946, %v3947
        %v3949 = vrot.slane %v3948, 1
        %v3950 = vadd.f32 %v3948, %v3949
        %v3951 = vmul.f32 %v3950, 0.00390625
        %v3952 = vmul.f32 %v3849, %v3849
        %v3953 = vsub.f32 %v3951, %v3952
        %v3954 = vmax.f32 %v3953, 0.0
        %v3955 = vsub.f32 %v3748, %v3849
        %v3956 = vsub.f32 %v3749, %v3849
        %v3957 = vsub.f32 %v3750, %v3849
        %v3958 = vsub.f32 %v3751, %v3849
        %v3959 = vsub.f32 %v3752, %v3849
        %v3960 = vsub.f32 %v3753, %v3849
        %v3961 = vsub.f32 %v3754, %v3849
        %v3962 = vsub.f32 %v3755, %v3849
        %v3963 = vsub.f32 %v3756, %v3849
        %v3964 = vsub.f32 %v3757, %v3849
        %v3965 = vsub.f32 %v3758, %v3849
        %v3966 = vsub.f32 %v3759, %v3849
        %v3967 = vsub.f32 %v3760, %v3849
        %v3968 = vsub.f32 %v3761, %v3849
        %v3969 = vsub.f32 %v3762, %v3849
        %v3970 = vsub.f32 %v3763, %v3849
        %v3971 = vsub.f32 %v3764, %v3849
        %v3972 = vsub.f32 %v3765, %v3849
        %v3973 = vsub.f32 %v3766, %v3849
        %v3974 = vsub.f32 %v3767, %v3849
        %v3975 = vsub.f32 %v3768, %v3849
        %v3976 = vsub.f32 %v3769, %v3849
        %v3977 = vsub.f32 %v3770, %v3849
        %v3978 = vsub.f32 %v3771, %v3849
        %v3979 = vsub.f32 %v3772, %v3849
        %v3980 = vsub.f32 %v3773, %v3849
        %v3981 = vsub.f32 %v3774, %v3849
        %v3982 = vsub.f32 %v3775, %v3849
        %v3983 = vsub.f32 %v3776, %v3849
        %v3984 = vsub.f32 %v3777, %v3849
        %v3985 = vsub.f32 %v3778, %v3849
        %v3986 = vsub.f32 %v3779, %v3849
        %v3987 = vadd.f32 %v3954, 1e-05
        %v3988 = vrsqrt.pop %v3987
        %v3989 = vmul.f32 %v3955, %v3988
        %v3990 = vmul.f32 %v3956, %v3988
        %v3991 = vmul.f32 %v3957, %v3988
        %v3992 = vmul.f32 %v3958, %v3988
        %v3993 = vmul.f32 %v3959, %v3988
        %v3994 = vmul.f32 %v3960, %v3988
        %v3995 = vmul.f32 %v3961, %v3988
        %v3996 = vmul.f32 %v3962, %v3988
        %v3997 = vmul.f32 %v3963, %v3988
        %v3998 = vmul.f32 %v3964, %v3988
        %v3999 = vmul.f32 %v3965, %v3988
        %v4000 = vmul.f32 %v3966, %v3988
        %v4001 = vmul.f32 %v3967, %v3988
        %v4002 = vmul.f32 %v3968, %v3988
        %v4003 = vmul.f32 %v3969, %v3988
        %v4004 = vmul.f32 %v3970, %v3988
        %v4005 = vmul.f32 %v3971, %v3988
        %v4006 = vmul.f32 %v3972, %v3988
        %v4007 = vmul.f32 %v3973, %v3988
        %v4008 = vmul.f32 %v3974, %v3988
        %v4009 = vmul.f32 %v3975, %v3988
        %v4010 = vmul.f32 %v3976, %v3988
        %v4011 = vmul.f32 %v3977, %v3988
        %v4012 = vmul.f32 %v3978, %v3988
        %v4013 = vmul.f32 %v3979, %v3988
        %v4014 = vmul.f32 %v3980, %v3988
        %v4015 = vmul.f32 %v3981, %v3988
        %v4016 = vmul.f32 %v3982, %v3988
        %v4017 = vmul.f32 %v3983, %v3988
        %v4018 = vmul.f32 %v3984, %v3988
        %v4019 = vmul.f32 %v3985, %v3988
        %v4020 = vmul.f32 %v3986, %v3988
        %vm4021 = vcmp.ge.f32.partialorder %v3989, 0.0
        %vm4022 = vcmp.ge.f32.partialorder %v3990, 0.0
        %vm4023 = vcmp.ge.f32.partialorder %v3991, 0.0
        %vm4024 = vcmp.ge.f32.partialorder %v3992, 0.0
        %vm4025 = vcmp.ge.f32.partialorder %v3993, 0.0
        %vm4026 = vcmp.ge.f32.partialorder %v3994, 0.0
        %vm4027 = vcmp.ge.f32.partialorder %v3995, 0.0
        %vm4028 = vcmp.ge.f32.partialorder %v3996, 0.0
        %vm4029 = vcmp.ge.f32.partialorder %v3997, 0.0
        %vm4030 = vcmp.ge.f32.partialorder %v3998, 0.0
        %vm4031 = vcmp.ge.f32.partialorder %v3999, 0.0
        %vm4032 = vcmp.ge.f32.partialorder %v4000, 0.0
        %vm4033 = vcmp.ge.f32.partialorder %v4001, 0.0
        %vm4034 = vcmp.ge.f32.partialorder %v4002, 0.0
        %vm4035 = vcmp.ge.f32.partialorder %v4003, 0.0
        %vm4036 = vcmp.ge.f32.partialorder %v4004, 0.0
        %vm4037 = vcmp.ge.f32.partialorder %v4005, 0.0
        %vm4038 = vcmp.ge.f32.partialorder %v4006, 0.0
        %vm4039 = vcmp.ge.f32.partialorder %v4007, 0.0
        %vm4040 = vcmp.ge.f32.partialorder %v4008, 0.0
        %vm4041 = vcmp.ge.f32.partialorder %v4009, 0.0
        %vm4042 = vcmp.ge.f32.partialorder %v4010, 0.0
        %vm4043 = vcmp.ge.f32.partialorder %v4011, 0.0
        %vm4044 = vcmp.ge.f32.partialorder %v4012, 0.0
        %vm4045 = vcmp.ge.f32.partialorder %v4013, 0.0
        %vm4046 = vcmp.ge.f32.partialorder %v4014, 0.0
        %vm4047 = vcmp.ge.f32.partialorder %v4015, 0.0
        %vm4048 = vcmp.ge.f32.partialorder %v4016, 0.0
        %vm4049 = vcmp.ge.f32.partialorder %v4017, 0.0
        %vm4050 = vcmp.ge.f32.partialorder %v4018, 0.0
        %vm4051 = vcmp.ge.f32.partialorder %v4019, 0.0
        %vm4052 = vcmp.ge.f32.partialorder %v4020, 0.0
        %v4053 = vmul.f32 %v3989, 0.2
        %v4054 = vmul.f32 %v3990, 0.2
        %v4055 = vmul.f32 %v3991, 0.2
        %v4056 = vmul.f32 %v3992, 0.2
        %v4057 = vmul.f32 %v3993, 0.2
        %v4058 = vmul.f32 %v3994, 0.2
        %v4059 = vmul.f32 %v3995, 0.2
        %v4060 = vmul.f32 %v3996, 0.2
        %v4061 = vmul.f32 %v3997, 0.2
        %v4062 = vmul.f32 %v3998, 0.2
        %v4063 = vmul.f32 %v3999, 0.2
        %v4064 = vmul.f32 %v4000, 0.2
        %v4065 = vmul.f32 %v4001, 0.2
        %v4066 = vmul.f32 %v4002, 0.2
        %v4067 = vmul.f32 %v4003, 0.2
        %v4068 = vmul.f32 %v4004, 0.2
        %v4069 = vmul.f32 %v4005, 0.2
        %v4070 = vmul.f32 %v4006, 0.2
        %v4071 = vmul.f32 %v4007, 0.2
        %v4072 = vmul.f32 %v4008, 0.2
        %v4073 = vmul.f32 %v4009, 0.2
        %v4074 = vmul.f32 %v4010, 0.2
        %v4075 = vmul.f32 %v4011, 0.2
        %v4076 = vmul.f32 %v4012, 0.2
        %v4077 = vmul.f32 %v4013, 0.2
        %v4078 = vmul.f32 %v4014, 0.2
        %v4079 = vmul.f32 %v4015, 0.2
        %v4080 = vmul.f32 %v4016, 0.2
        %v4081 = vmul.f32 %v4017, 0.2
        %v4082 = vmul.f32 %v4018, 0.2
        %v4083 = vmul.f32 %v4019, 0.2
        %v4084 = vmul.f32 %v4020, 0.2
        %v4085 = vsel %vm4021, %v3989, %v4053
        %v4086 = vsel %vm4022, %v3990, %v4054
        %v4087 = vsel %vm4023, %v3991, %v4055
        %v4088 = vsel %vm4024, %v3992, %v4056
        %v4089 = vsel %vm4025, %v3993, %v4057
        %v4090 = vsel %vm4026, %v3994, %v4058
        %v4091 = vsel %vm4027, %v3995, %v4059
        %v4092 = vsel %vm4028, %v3996, %v4060
        %v4093 = vsel %vm4029, %v3997, %v4061
        %v4094 = vsel %vm4030, %v3998, %v4062
        %v4095 = vsel %vm4031, %v3999, %v4063
        %v4096 = vsel %vm4032, %v4000, %v4064
        %v4097 = vsel %vm4033, %v4001, %v4065
        %v4098 = vsel %vm4034, %v4002, %v4066
        %v4099 = vsel %vm4035, %v4003, %v4067
        %v4100 = vsel %vm4036, %v4004, %v4068
        %v4101 = vsel %vm4037, %v4005, %v4069
        %v4102 = vsel %vm4038, %v4006, %v4070
        %v4103 = vsel %vm4039, %v4007, %v4071
        %v4104 = vsel %vm4040, %v4008, %v4072
        %v4105 = vsel %vm4041, %v4009, %v4073
        %v4106 = vsel %vm4042, %v4010, %v4074
        %v4107 = vsel %vm4043, %v4011, %v4075
        %v4108 = vsel %vm4044, %v4012, %v4076
        %v4109 = vsel %vm4045, %v4013, %v4077
        %v4110 = vsel %vm4046, %v4014, %v4078
        %v4111 = vsel %vm4047, %v4015, %v4079
        %v4112 = vsel %vm4048, %v4016, %v4080
        %v4113 = vsel %vm4049, %v4017, %v4081
        %v4114 = vsel %vm4050, %v4018, %v4082
        %v4115 = vsel %vm4051, %v4019, %v4083
        %v4116 = vsel %vm4052, %v4020, %v4084
        %4117 = vst.msk [vmem:[%s250 + $0x1] sm:$0xff] %vm251, %v4085
        %4118 = vst.msk [vmem:[%s250 + $0x9] sm:$0xff] %vm251, %v4086
        %4119 = vst.msk [vmem:[%s250 + $0x19] sm:$0xff] %vm251, %v4087
        %4120 = vst.msk [vmem:[%s250 + $0x21] sm:$0xff] %vm251, %v4088
        %4121 = vst.msk [vmem:[%s250 + $0x31] sm:$0xff] %vm251, %v4089
        %4122 = vst.msk [vmem:[%s250 + $0x39] sm:$0xff] %vm251, %v4090
        %4123 = vst.msk [vmem:[%s250 + $0x49] sm:$0xff] %vm251, %v4091
        %4124 = vst.msk [vmem:[%s250 + $0x51] sm:$0xff] %vm251, %v4092
        %4125 = vst.msk [vmem:[%s250 + $0x61] sm:$0xff] %vm251, %v4093
        %4126 = vst.msk [vmem:[%s250 + $0x69] sm:$0xff] %vm251, %v4094
        %4127 = vst.msk [vmem:[%s250 + $0x79] sm:$0xff] %vm251, %v4095
        %4128 = vst.msk [vmem:[%s250 + $0x81] sm:$0xff] %vm251, %v4096
        %4129 = vst.msk [vmem:[%s250 + $0x91] sm:$0xff] %vm251, %v4097
        %4130 = vst.msk [vmem:[%s250 + $0x99] sm:$0xff] %vm251, %v4098
        %4131 = vst.msk [vmem:[%s250 + $0xa9] sm:$0xff] %vm251, %v4099
        %4132 = vst.msk [vmem:[%s250 + $0xb1] sm:$0xff] %vm251, %v4100
        %4133 = vst.msk [vmem:[%s250 + $0xc1] sm:$0xff] %vm251, %v4101
        %4134 = vst.msk [vmem:[%s250 + $0xc9] sm:$0xff] %vm251, %v4102
        %4135 = vst.msk [vmem:[%s250 + $0xd9] sm:$0xff] %vm251, %v4103
        %4136 = vst.msk [vmem:[%s250 + $0xe1] sm:$0xff] %vm251, %v4104
        %4137 = vst.msk [vmem:[%s250 + $0xf1] sm:$0xff] %vm251, %v4105
        %4138 = vst.msk [vmem:[%s250 + $0xf9] sm:$0xff] %vm251, %v4106
        %4139 = vst.msk [vmem:[%s250 + $0x109] sm:$0xff] %vm251, %v4107
        %4140 = vst.msk [vmem:[%s250 + $0x111] sm:$0xff] %vm251, %v4108
        %4141 = vst.msk [vmem:[%s250 + $0x121] sm:$0xff] %vm251, %v4109
        %4142 = vst.msk [vmem:[%s250 + $0x129] sm:$0xff] %vm251, %v4110
        %4143 = vst.msk [vmem:[%s250 + $0x139] sm:$0xff] %vm251, %v4111
        %4144 = vst.msk [vmem:[%s250 + $0x141] sm:$0xff] %vm251, %v4112
        %4145 = vst.msk [vmem:[%s250 + $0x151] sm:$0xff] %vm251, %v4113
        %4146 = vst.msk [vmem:[%s250 + $0x159] sm:$0xff] %vm251, %v4114
        %4147 = vst.msk [vmem:[%s250 + $0x169] sm:$0xff] %vm251, %v4115
        %4148 = vst.msk [vmem:[%s250 + $0x171] sm:$0xff] %vm251, %v4116
        %4149 = vst.msk [vmem:[%s250 - $0x1] sm:$0x2] %vm284, %v4085
        %4150 = vst.msk [vmem:[%s250 + $0x17] sm:$0x2] %vm284, %v4087
        %4151 = vst.msk [vmem:[%s250 + $0x2f] sm:$0x2] %vm284, %v4089
        %4152 = vst.msk [vmem:[%s250 + $0x47] sm:$0x2] %vm284, %v4091
        %4153 = vst.msk [vmem:[%s250 + $0x5f] sm:$0x2] %vm284, %v4093
        %4154 = vst.msk [vmem:[%s250 + $0x77] sm:$0x2] %vm284, %v4095
        %4155 = vst.msk [vmem:[%s250 + $0x8f] sm:$0x2] %vm284, %v4097
        %4156 = vst.msk [vmem:[%s250 + $0xa7] sm:$0x2] %vm284, %v4099
        %4157 = vst.msk [vmem:[%s250 + $0xbf] sm:$0x2] %vm284, %v4101
        %4158 = vst.msk [vmem:[%s250 + $0xd7] sm:$0x2] %vm284, %v4103
        %4159 = vst.msk [vmem:[%s250 + $0xef] sm:$0x2] %vm284, %v4105
        %4160 = vst.msk [vmem:[%s250 + $0x107] sm:$0x2] %vm284, %v4107
        %4161 = vst.msk [vmem:[%s250 + $0x11f] sm:$0x2] %vm284, %v4109
        %4162 = vst.msk [vmem:[%s250 + $0x137] sm:$0x2] %vm284, %v4111
        %4163 = vst.msk [vmem:[%s250 + $0x14f] sm:$0x2] %vm284, %v4113
        %4164 = vst.msk [vmem:[%s250 + $0x167] sm:$0x2] %vm284, %v4115
        %4165 = vst.msk [vmem:[%s250 + $0xb] sm:$0x40] %vm301, %v4086
        %4166 = vst.msk [vmem:[%s250 + $0x23] sm:$0x40] %vm301, %v4088
        %4167 = vst.msk [vmem:[%s250 + $0x3b] sm:$0x40] %vm301, %v4090
        %4168 = vst.msk [vmem:[%s250 + $0x53] sm:$0x40] %vm301, %v4092
        %4169 = vst.msk [vmem:[%s250 + $0x6b] sm:$0x40] %vm301, %v4094
        %4170 = vst.msk [vmem:[%s250 + $0x83] sm:$0x40] %vm301, %v4096
        %4171 = vst.msk [vmem:[%s250 + $0x9b] sm:$0x40] %vm301, %v4098
        %4172 = vst.msk [vmem:[%s250 + $0xb3] sm:$0x40] %vm301, %v4100
        %4173 = vst.msk [vmem:[%s250 + $0xcb] sm:$0x40] %vm301, %v4102
        %4174 = vst.msk [vmem:[%s250 + $0xe3] sm:$0x40] %vm301, %v4104
        %4175 = vst.msk [vmem:[%s250 + $0xfb] sm:$0x40] %vm301, %v4106
        %4176 = vst.msk [vmem:[%s250 + $0x113] sm:$0x40] %vm301, %v4108
        %4177 = vst.msk [vmem:[%s250 + $0x12b] sm:$0x40] %vm301, %v4110
        %4178 = vst.msk [vmem:[%s250 + $0x143] sm:$0x40] %vm301, %v4112
        %4179 = vst.msk [vmem:[%s250 + $0x15b] sm:$0x40] %vm301, %v4114
        %4180 = vst.msk [vmem:[%s250 + $0x173] sm:$0x40] %vm301, %v4116
        %v4181 = vld [vmem:[%s318] sm:$0xff]
        %v4182 = vld [vmem:[%s318 + $0x8] sm:$0xff]
        %v4183 = vld [vmem:[%s318 + $0x10] sm:$0x3]
        %4184 = vst.msk [vmem:[#allocation2] sm:$0xff] %vm251, %v4181
        %4185 = vst.msk [vmem:[#allocation2 + $0x8] sm:$0xff] %vm251, %v4182
        %4186 = vst.msk [vmem:[#allocation2 + $0x10] sm:$0x3] %vm324, %v4183
        %v4187 = vld [vmem:[%s326] sm:$0xff]
        %v4188 = vld [vmem:[%s326 + $0x8] sm:$0xff]
        %v4189 = vld [vmem:[%s326 + $0x10] sm:$0x3]
        %4190 = vst.msk [vmem:[%s330] sm:$0xff] %vm251, %v4187
        %4191 = vst.msk [vmem:[%s330 + $0x8] sm:$0xff] %vm251, %v4188
        %4192 = vst.msk [vmem:[%s330 + $0x10] sm:$0x3] %vm324, %v4189
        %v4193 = vld [vmem:[#allocation2] sm:$0xff]
        %v4194 = vld [vmem:[#allocation2 + $0x8] sm:$0xff]
        %v4195 = vld [vmem:[#allocation2 + $0x18] sm:$0xff]
        %v4196 = vld [vmem:[#allocation2 + $0x20] sm:$0xff]
        %v4197 = vld [vmem:[#allocation2 + $0x30] sm:$0xff]
        %v4198 = vld [vmem:[#allocation2 + $0x38] sm:$0xff]
        %v4199 = vld [vmem:[#allocation2 + $0x48] sm:$0xff]
        %v4200 = vld [vmem:[#allocation2 + $0x50] sm:$0xff]
        %v4201 = vld [vmem:[#allocation2 + $0x60] sm:$0xff]
        %v4202 = vld [vmem:[#allocation2 + $0x68] sm:$0xff]
        %v4203 = vld [vmem:[#allocation2 + $0x78] sm:$0xff]
        %v4204 = vld [vmem:[#allocation2 + $0x80] sm:$0xff]
        %v4205 = vld [vmem:[#allocation2 + $0x90] sm:$0xff]
        %v4206 = vld [vmem:[#allocation2 + $0x98] sm:$0xff]
        %v4207 = vld [vmem:[#allocation2 + $0xa8] sm:$0xff]
        %v4208 = vld [vmem:[#allocation2 + $0xb0] sm:$0xff]
        %v4209 = vld [vmem:[#allocation2 + $0xc0] sm:$0xff]
        %v4210 = vld [vmem:[#allocation2 + $0xc8] sm:$0xff]
        %v4211 = vld [vmem:[#allocation2 + $0xd8] sm:$0xff]
        %v4212 = vld [vmem:[#allocation2 + $0xe0] sm:$0xff]
        %v4213 = vld [vmem:[#allocation2 + $0xf0] sm:$0xff]
        %v4214 = vld [vmem:[#allocation2 + $0xf8] sm:$0xff]
        %v4215 = vld [vmem:[#allocation2 + $0x108] sm:$0xff]
        %v4216 = vld [vmem:[#allocation2 + $0x110] sm:$0xff]
        %v4217 = vld [vmem:[#allocation2 + $0x120] sm:$0xff]
        %v4218 = vld [vmem:[#allocation2 + $0x128] sm:$0xff]
        %v4219 = vld [vmem:[#allocation2 + $0x138] sm:$0xff]
        %v4220 = vld [vmem:[#allocation2 + $0x140] sm:$0xff]
        %v4221 = vld [vmem:[#allocation2 + $0x150] sm:$0xff]
        %v4222 = vld [vmem:[#allocation2 + $0x158] sm:$0xff]
        %v4223 = vld [vmem:[#allocation2 + $0x168] sm:$0xff]
        %v4224 = vld [vmem:[#allocation2 + $0x170] sm:$0xff]
        %v4225 = vld [vmem:[#allocation8] sm:$0xf]
        %v4226 = vld [vmem:[#allocation2 + $0x1] sm:$0xff]
        %v4227 = vld [vmem:[#allocation2 + $0x9] sm:$0xff]
        %v4228 = vld [vmem:[#allocation2 + $0x19] sm:$0xff]
        %v4229 = vld [vmem:[#allocation2 + $0x21] sm:$0xff]
        %v4230 = vld [vmem:[#allocation2 + $0x31] sm:$0xff]
        %v4231 = vld [vmem:[#allocation2 + $0x39] sm:$0xff]
        %v4232 = vld [vmem:[#allocation2 + $0x49] sm:$0xff]
        %v4233 = vld [vmem:[#allocation2 + $0x51] sm:$0xff]
        %v4234 = vld [vmem:[#allocation2 + $0x61] sm:$0xff]
        %v4235 = vld [vmem:[#allocation2 + $0x69] sm:$0xff]
        %v4236 = vld [vmem:[#allocation2 + $0x79] sm:$0xff]
        %v4237 = vld [vmem:[#allocation2 + $0x81] sm:$0xff]
        %v4238 = vld [vmem:[#allocation2 + $0x91] sm:$0xff]
        %v4239 = vld [vmem:[#allocation2 + $0x99] sm:$0xff]
        %v4240 = vld [vmem:[#allocation2 + $0xa9] sm:$0xff]
        %v4241 = vld [vmem:[#allocation2 + $0xb1] sm:$0xff]
        %v4242 = vld [vmem:[#allocation2 + $0xc1] sm:$0xff]
        %v4243 = vld [vmem:[#allocation2 + $0xc9] sm:$0xff]
        %v4244 = vld [vmem:[#allocation2 + $0xd9] sm:$0xff]
        %v4245 = vld [vmem:[#allocation2 + $0xe1] sm:$0xff]
        %v4246 = vld [vmem:[#allocation2 + $0xf1] sm:$0xff]
        %v4247 = vld [vmem:[#allocation2 + $0xf9] sm:$0xff]
        %v4248 = vld [vmem:[#allocation2 + $0x109] sm:$0xff]
        %v4249 = vld [vmem:[#allocation2 + $0x111] sm:$0xff]
        %v4250 = vld [vmem:[#allocation2 + $0x121] sm:$0xff]
        %v4251 = vld [vmem:[#allocation2 + $0x129] sm:$0xff]
        %v4252 = vld [vmem:[#allocation2 + $0x139] sm:$0xff]
        %v4253 = vld [vmem:[#allocation2 + $0x141] sm:$0xff]
        %v4254 = vld [vmem:[#allocation2 + $0x151] sm:$0xff]
        %v4255 = vld [vmem:[#allocation2 + $0x159] sm:$0xff]
        %v4256 = vld [vmem:[#allocation2 + $0x169] sm:$0xff]
        %v4257 = vld [vmem:[#allocation2 + $0x171] sm:$0xff]
        %s4258 = scalar_lea.vmem [#allocation8], 4
        %v4259 = vld [vmem:[%s4258] sm:$0xf]
        %v4261 = vsel %vm251, %v4226, 0
        %v4264 = vsel %vm251, %v4227, 0
        %v4267 = vsel %vm251, %v4228, 0
        %v4270 = vsel %vm251, %v4229, 0
        %v4273 = vsel %vm251, %v4230, 0
        %v4276 = vsel %vm251, %v4231, 0
        %v4279 = vsel %vm251, %v4232, 0
        %v4282 = vsel %vm251, %v4233, 0
        %v4285 = vsel %vm251, %v4234, 0
        %v4288 = vsel %vm251, %v4235, 0
        %v4291 = vsel %vm251, %v4236, 0
        %v4294 = vsel %vm251, %v4237, 0
        %v4297 = vsel %vm251, %v4238, 0
        %v4300 = vsel %vm251, %v4239, 0
        %v4303 = vsel %vm251, %v4240, 0
        %v4306 = vsel %vm251, %v4241, 0
        %v4309 = vsel %vm251, %v4242, 0
        %v4312 = vsel %vm251, %v4243, 0
        %v4315 = vsel %vm251, %v4244, 0
        %v4318 = vsel %vm251, %v4245, 0
        %v4321 = vsel %vm251, %v4246, 0
        %v4324 = vsel %vm251, %v4247, 0
        %v4327 = vsel %vm251, %v4248, 0
        %v4330 = vsel %vm251, %v4249, 0
        %v4333 = vsel %vm251, %v4250, 0
        %v4336 = vsel %vm251, %v4251, 0
        %v4339 = vsel %vm251, %v4252, 0
        %v4342 = vsel %vm251, %v4253, 0
        %v4345 = vsel %vm251, %v4254, 0
        %v4348 = vsel %vm251, %v4255, 0
        %v4351 = vsel %vm251, %v4256, 0
        %v4354 = vsel %vm251, %v4257, 0
        %v4357 = vsel %vm497, %v4259, 0
        %4359 = vmatprep.subr.mxu0 0.0
        %4360 = vmatpush1.msra.mxu0 %v4357
        %4361 = vmatprep.subr.mxu0 0.0
        %4362 = vmatpush1.msra.mxu0 0.0
        %4363 = vmatprep.subr.mxu0 0.0
        %4364 = vmatpush1.msra.mxu0 0.0
        %4365 = vmatprep.subr.mxu0 0.0
        %4366 = vmatpush1.msra.mxu0 0.0
        %4367 = vmatprep.subr.mxu0 0.0
        %4368 = vmatpush1.msra.mxu0 0.0
        %4369 = vmatprep.subr.mxu0 0.0
        %4370 = vmatpush1.msra.mxu0 0.0
        %4371 = vmatprep.subr.mxu0 0.0
        %4372 = vmatpush1.msra.mxu0 0.0
        %4373 = vmatprep.subr.mxu0 0.0
        %4374 = vmatpush1.msra.mxu0 0.0
        %4375 = vmatprep.subr.mxu0 0.0
        %4376 = vmatpush1.msra.mxu0 0.0
        %4377 = vmatprep.subr.mxu0 0.0
        %4378 = vmatpush1.msra.mxu0 0.0
        %4379 = vmatprep.subr.mxu0 0.0
        %4380 = vmatpush1.msra.mxu0 0.0
        %4381 = vmatprep.subr.mxu0 0.0
        %4382 = vmatpush1.msra.mxu0 0.0
        %4383 = vmatprep.subr.mxu0 0.0
        %4384 = vmatpush1.msra.mxu0 0.0
        %4385 = vmatprep.subr.mxu0 0.0
        %4386 = vmatpush1.msra.mxu0 0.0
        %4387 = vmatprep.subr.mxu0 0.0
        %4388 = vmatpush1.msra.mxu0 0.0
        %4389 = vmatprep.subr.mxu0 0.0
        %4390 = vmatpush1.msra.mxu0 0.0
        %4391 = vmatprep.subr.mxu0 0.0
        %4392 = vmatpush1.msra.mxu0 0.0
        %4393 = vmatprep.subr.mxu0 0.0
        %4394 = vmatpush1.msra.mxu0 0.0
        %4395 = vmatprep.subr.mxu0 0.0
        %4396 = vmatpush1.msra.mxu0 0.0
        %4397 = vmatprep.subr.mxu0 0.0
        %4398 = vmatpush1.msra.mxu0 0.0
        %4399 = vmatprep.subr.mxu0 0.0
        %4400 = vmatpush1.msra.mxu0 0.0
        %4401 = vmatprep.subr.mxu0 0.0
        %4402 = vmatpush1.msra.mxu0 0.0
        %4403 = vmatprep.subr.mxu0 0.0
        %4404 = vmatpush1.msra.mxu0 0.0
        %4405 = vmatprep.subr.mxu0 0.0
        %4406 = vmatpush1.msra.mxu0 0.0
        %4407 = vmatprep.subr.mxu0 0.0
        %4408 = vmatpush1.msra.mxu0 0.0
        %4409 = vmatprep.subr.mxu0 0.0
        %4410 = vmatpush1.msra.mxu0 0.0
        %4411 = vmatprep.subr.mxu0 0.0
        %4412 = vmatpush1.msra.mxu0 0.0
        %4413 = vmatprep.subr.mxu0 0.0
        %4414 = vmatpush1.msra.mxu0 0.0
        %4415 = vmatprep.subr.mxu0 0.0
        %4416 = vmatpush1.msra.mxu0 0.0
        %4417 = vmatprep.subr.mxu0 0.0
        %4418 = vmatpush1.msra.mxu0 0.0
        %4419 = vmatprep.subr.mxu0 0.0
        %4420 = vmatpush1.msra.mxu0 0.0
        %4421 = vmatprep.subr.mxu0 0.0
        %4422 = vmatpush1.msra.mxu0 0.0
        %4423 = vmatprep.mubr.f32.mxu0 0.0
        %4424 = vmatmul.mubr.f32.gmra.mrb[0].mxu0 %v4261
        %v4425 = vpop.f32.mrb[0].mxu0
        %v4426 = vadd.f32 0.0, %v4425
        %v4427 = vpop.f32.mrb[0].mxu0
        %4428 = vmatprep.mubr.f32.mxu0 0.0
        %4429 = vmatmul.mubr.f32.gmra.mrb[0].mxu0 %v4264
        %v4430 = vpop.f32.mrb[0].mxu0
        %v4431 = vadd.f32 0.0, %v4430
        %v4432 = vpop.f32.mrb[0].mxu0
        %4433 = vmatprep.mubr.f32.mxu0 0.0
        %4434 = vmatmul.mubr.f32.gmra.mrb[0].mxu0 %v4267
        %v4435 = vpop.f32.mrb[0].mxu0
        %v4436 = vadd.f32 0.0, %v4435
        %v4437 = vpop.f32.mrb[0].mxu0
        %4438 = vmatprep.mubr.f32.mxu0 0.0
        %4439 = vmatmul.mubr.f32.gmra.mrb[0].mxu0 %v4270
        %v4440 = vpop.f32.mrb[0].mxu0
        %v4441 = vadd.f32 0.0, %v4440
        %v4442 = vpop.f32.mrb[0].mxu0
        %4443 = vmatprep.mubr.f32.mxu0 0.0
        %4444 = vmatmul.mubr.f32.gmra.mrb[0].mxu0 %v4273
        %v4445 = vpop.f32.mrb[0].mxu0
        %v4446 = vadd.f32 0.0, %v4445
        %v4447 = vpop.f32.mrb[0].mxu0
        %4448 = vmatprep.mubr.f32.mxu0 0.0
        %4449 = vmatmul.mubr.f32.gmra.mrb[0].mxu0 %v4276
        %v4450 = vpop.f32.mrb[0].mxu0
        %v4451 = vadd.f32 0.0, %v4450
        %v4452 = vpop.f32.mrb[0].mxu0
        %4453 = vmatprep.mubr.f32.mxu0 0.0
        %4454 = vmatmul.mubr.f32.gmra.mrb[0].mxu0 %v4279
        %v4455 = vpop.f32.mrb[0].mxu0
        %v4456 = vadd.f32 0.0, %v4455
        %v4457 = vpop.f32.mrb[0].mxu0
        %4458 = vmatprep.mubr.f32.mxu0 0.0
        %4459 = vmatmul.mubr.f32.gmra.mrb[0].mxu0 %v4282
        %v4460 = vpop.f32.mrb[0].mxu0
        %v4461 = vadd.f32 0.0, %v4460
        %v4462 = vpop.f32.mrb[0].mxu0
        %4463 = vmatprep.mubr.f32.mxu0 0.0
        %4464 = vmatmul.mubr.f32.gmra.mrb[0].mxu0 %v4285
        %v4465 = vpop.f32.mrb[0].mxu0
        %v4466 = vadd.f32 0.0, %v4465
        %v4467 = vpop.f32.mrb[0].mxu0
        %4468 = vmatprep.mubr.f32.mxu0 0.0
        %4469 = vmatmul.mubr.f32.gmra.mrb[0].mxu0 %v4288
        %v4470 = vpop.f32.mrb[0].mxu0
        %v4471 = vadd.f32 0.0, %v4470
        %v4472 = vpop.f32.mrb[0].mxu0
        %4473 = vmatprep.mubr.f32.mxu0 0.0
        %4474 = vmatmul.mubr.f32.gmra.mrb[0].mxu0 %v4291
        %v4475 = vpop.f32.mrb[0].mxu0
        %v4476 = vadd.f32 0.0, %v4475
        %v4477 = vpop.f32.mrb[0].mxu0
        %4478 = vmatprep.mubr.f32.mxu0 0.0
        %4479 = vmatmul.mubr.f32.gmra.mrb[0].mxu0 %v4294
        %v4480 = vpop.f32.mrb[0].mxu0
        %v4481 = vadd.f32 0.0, %v4480
        %v4482 = vpop.f32.mrb[0].mxu0
        %4483 = vmatprep.mubr.f32.mxu0 0.0
        %4484 = vmatmul.mubr.f32.gmra.mrb[0].mxu0 %v4297
        %v4485 = vpop.f32.mrb[0].mxu0
        %v4486 = vadd.f32 0.0, %v4485
        %v4487 = vpop.f32.mrb[0].mxu0
        %4488 = vmatprep.mubr.f32.mxu0 0.0
        %4489 = vmatmul.mubr.f32.gmra.mrb[0].mxu0 %v4300
        %v4490 = vpop.f32.mrb[0].mxu0
        %v4491 = vadd.f32 0.0, %v4490
        %v4492 = vpop.f32.mrb[0].mxu0
        %4493 = vmatprep.mubr.f32.mxu0 0.0
        %4494 = vmatmul.mubr.f32.gmra.mrb[0].mxu0 %v4303
        %v4495 = vpop.f32.mrb[0].mxu0
        %v4496 = vadd.f32 0.0, %v4495
        %v4497 = vpop.f32.mrb[0].mxu0
        %4498 = vmatprep.mubr.f32.mxu0 0.0
        %4499 = vmatmul.mubr.f32.gmra.mrb[0].mxu0 %v4306
        %v4500 = vpop.f32.mrb[0].mxu0
        %v4501 = vadd.f32 0.0, %v4500
        %v4502 = vpop.f32.mrb[0].mxu0
        %4503 = vmatprep.mubr.f32.mxu0 0.0
        %4504 = vmatmul.mubr.f32.gmra.mrb[0].mxu0 %v4309
        %v4505 = vpop.f32.mrb[0].mxu0
        %v4506 = vadd.f32 0.0, %v4505
        %v4507 = vpop.f32.mrb[0].mxu0
        %4508 = vmatprep.mubr.f32.mxu0 0.0
        %4509 = vmatmul.mubr.f32.gmra.mrb[0].mxu0 %v4312
        %v4510 = vpop.f32.mrb[0].mxu0
        %v4511 = vadd.f32 0.0, %v4510
        %v4512 = vpop.f32.mrb[0].mxu0
        %4513 = vmatprep.mubr.f32.mxu0 0.0
        %4514 = vmatmul.mubr.f32.gmra.mrb[0].mxu0 %v4315
        %v4515 = vpop.f32.mrb[0].mxu0
        %v4516 = vadd.f32 0.0, %v4515
        %v4517 = vpop.f32.mrb[0].mxu0
        %4518 = vmatprep.mubr.f32.mxu0 0.0
        %4519 = vmatmul.mubr.f32.gmra.mrb[0].mxu0 %v4318
        %v4520 = vpop.f32.mrb[0].mxu0
        %v4521 = vadd.f32 0.0, %v4520
        %v4522 = vpop.f32.mrb[0].mxu0
        %4523 = vmatprep.mubr.f32.mxu0 0.0
        %4524 = vmatmul.mubr.f32.gmra.mrb[0].mxu0 %v4321
        %v4525 = vpop.f32.mrb[0].mxu0
        %v4526 = vadd.f32 0.0, %v4525
        %v4527 = vpop.f32.mrb[0].mxu0
        %4528 = vmatprep.mubr.f32.mxu0 0.0
        %4529 = vmatmul.mubr.f32.gmra.mrb[0].mxu0 %v4324
        %v4530 = vpop.f32.mrb[0].mxu0
        %v4531 = vadd.f32 0.0, %v4530
        %v4532 = vpop.f32.mrb[0].mxu0
        %4533 = vmatprep.mubr.f32.mxu0 0.0
        %4534 = vmatmul.mubr.f32.gmra.mrb[0].mxu0 %v4327
        %v4535 = vpop.f32.mrb[0].mxu0
        %v4536 = vadd.f32 0.0, %v4535
        %v4537 = vpop.f32.mrb[0].mxu0
        %4538 = vmatprep.mubr.f32.mxu0 0.0
        %4539 = vmatmul.mubr.f32.gmra.mrb[0].mxu0 %v4330
        %v4540 = vpop.f32.mrb[0].mxu0
        %v4541 = vadd.f32 0.0, %v4540
        %v4542 = vpop.f32.mrb[0].mxu0
        %4543 = vmatprep.mubr.f32.mxu0 0.0
        %4544 = vmatmul.mubr.f32.gmra.mrb[0].mxu0 %v4333
        %v4545 = vpop.f32.mrb[0].mxu0
        %v4546 = vadd.f32 0.0, %v4545
        %v4547 = vpop.f32.mrb[0].mxu0
        %4548 = vmatprep.mubr.f32.mxu0 0.0
        %4549 = vmatmul.mubr.f32.gmra.mrb[0].mxu0 %v4336
        %v4550 = vpop.f32.mrb[0].mxu0
        %v4551 = vadd.f32 0.0, %v4550
        %v4552 = vpop.f32.mrb[0].mxu0
        %4553 = vmatprep.mubr.f32.mxu0 0.0
        %4554 = vmatmul.mubr.f32.gmra.mrb[0].mxu0 %v4339
        %v4555 = vpop.f32.mrb[0].mxu0
        %v4556 = vadd.f32 0.0, %v4555
        %v4557 = vpop.f32.mrb[0].mxu0
        %4558 = vmatprep.mubr.f32.mxu0 0.0
        %4559 = vmatmul.mubr.f32.gmra.mrb[0].mxu0 %v4342
        %v4560 = vpop.f32.mrb[0].mxu0
        %v4561 = vadd.f32 0.0, %v4560
        %v4562 = vpop.f32.mrb[0].mxu0
        %4563 = vmatprep.mubr.f32.mxu0 0.0
        %4564 = vmatmul.mubr.f32.gmra.mrb[0].mxu0 %v4345
        %v4565 = vpop.f32.mrb[0].mxu0
        %v4566 = vadd.f32 0.0, %v4565
        %v4567 = vpop.f32.mrb[0].mxu0
        %4568 = vmatprep.mubr.f32.mxu0 0.0
        %4569 = vmatmul.mubr.f32.gmra.mrb[0].mxu0 %v4348
        %v4570 = vpop.f32.mrb[0].mxu0
        %v4571 = vadd.f32 0.0, %v4570
        %v4572 = vpop.f32.mrb[0].mxu0
        %4573 = vmatprep.mubr.f32.mxu0 0.0
        %4574 = vmatmul.mubr.f32.gmra.mrb[0].mxu0 %v4351
        %v4575 = vpop.f32.mrb[0].mxu0
        %v4576 = vadd.f32 0.0, %v4575
        %v4577 = vpop.f32.mrb[0].mxu0
        %4578 = vmatprep.mubr.f32.mxu0 0.0
        %4579 = vmatmul.mubr.f32.gmra.mrb[0].mxu0 %v4354
        %v4580 = vpop.f32.mrb[0].mxu0
        %v4581 = vadd.f32 0.0, %v4580
        %v4582 = vpop.f32.mrb[0].mxu0
        %4583 = vdwg.mxu0
        %v4585 = vsel %vm251, %v4193, 0
        %v4588 = vsel %vm251, %v4194, 0
        %v4591 = vsel %vm251, %v4195, 0
        %v4594 = vsel %vm251, %v4196, 0
        %v4597 = vsel %vm251, %v4197, 0
        %v4600 = vsel %vm251, %v4198, 0
        %v4603 = vsel %vm251, %v4199, 0
        %v4606 = vsel %vm251, %v4200, 0
        %v4609 = vsel %vm251, %v4201, 0
        %v4612 = vsel %vm251, %v4202, 0
        %v4615 = vsel %vm251, %v4203, 0
        %v4618 = vsel %vm251, %v4204, 0
        %v4621 = vsel %vm251, %v4205, 0
        %v4624 = vsel %vm251, %v4206, 0
        %v4627 = vsel %vm251, %v4207, 0
        %v4630 = vsel %vm251, %v4208, 0
        %v4633 = vsel %vm251, %v4209, 0
        %v4636 = vsel %vm251, %v4210, 0
        %v4639 = vsel %vm251, %v4211, 0
        %v4642 = vsel %vm251, %v4212, 0
        %v4645 = vsel %vm251, %v4213, 0
        %v4648 = vsel %vm251, %v4214, 0
        %v4651 = vsel %vm251, %v4215, 0
        %v4654 = vsel %vm251, %v4216, 0
        %v4657 = vsel %vm251, %v4217, 0
        %v4660 = vsel %vm251, %v4218, 0
        %v4663 = vsel %vm251, %v4219, 0
        %v4666 = vsel %vm251, %v4220, 0
        %v4669 = vsel %vm251, %v4221, 0
        %v4672 = vsel %vm251, %v4222, 0
        %v4675 = vsel %vm251, %v4223, 0
        %v4678 = vsel %vm251, %v4224, 0
        %v4681 = vsel %vm497, %v4225, 0
        %4683 = vmatprep.subr.mxu0 0.0
        %4684 = vmatpush1.msra.mxu0 %v4681
        %4685 = vmatprep.subr.mxu0 0.0
        %4686 = vmatpush1.msra.mxu0 0.0
        %4687 = vmatprep.subr.mxu0 0.0
        %4688 = vmatpush1.msra.mxu0 0.0
        %4689 = vmatprep.subr.mxu0 0.0
        %4690 = vmatpush1.msra.mxu0 0.0
        %4691 = vmatprep.subr.mxu0 0.0
        %4692 = vmatpush1.msra.mxu0 0.0
        %4693 = vmatprep.subr.mxu0 0.0
        %4694 = vmatpush1.msra.mxu0 0.0
        %4695 = vmatprep.subr.mxu0 0.0
        %4696 = vmatpush1.msra.mxu0 0.0
        %4697 = vmatprep.subr.mxu0 0.0
        %4698 = vmatpush1.msra.mxu0 0.0
        %4699 = vmatprep.subr.mxu0 0.0
        %4700 = vmatpush1.msra.mxu0 0.0
        %4701 = vmatprep.subr.mxu0 0.0
        %4702 = vmatpush1.msra.mxu0 0.0
        %4703 = vmatprep.subr.mxu0 0.0
        %4704 = vmatpush1.msra.mxu0 0.0
        %4705 = vmatprep.subr.mxu0 0.0
        %4706 = vmatpush1.msra.mxu0 0.0
        %4707 = vmatprep.subr.mxu0 0.0
        %4708 = vmatpush1.msra.mxu0 0.0
        %4709 = vmatprep.subr.mxu0 0.0
        %4710 = vmatpush1.msra.mxu0 0.0
        %4711 = vmatprep.subr.mxu0 0.0
        %4712 = vmatpush1.msra.mxu0 0.0
        %4713 = vmatprep.subr.mxu0 0.0
        %4714 = vmatpush1.msra.mxu0 0.0
        %4715 = vmatprep.subr.mxu0 0.0
        %4716 = vmatpush1.msra.mxu0 0.0
        %4717 = vmatprep.subr.mxu0 0.0
        %4718 = vmatpush1.msra.mxu0 0.0
        %4719 = vmatprep.subr.mxu0 0.0
        %4720 = vmatpush1.msra.mxu0 0.0
        %4721 = vmatprep.subr.mxu0 0.0
        %4722 = vmatpush1.msra.mxu0 0.0
        %4723 = vmatprep.subr.mxu0 0.0
        %4724 = vmatpush1.msra.mxu0 0.0
        %4725 = vmatprep.subr.mxu0 0.0
        %4726 = vmatpush1.msra.mxu0 0.0
        %4727 = vmatprep.subr.mxu0 0.0
        %4728 = vmatpush1.msra.mxu0 0.0
        %4729 = vmatprep.subr.mxu0 0.0
        %4730 = vmatpush1.msra.mxu0 0.0
        %4731 = vmatprep.subr.mxu0 0.0
        %4732 = vmatpush1.msra.mxu0 0.0
        %4733 = vmatprep.subr.mxu0 0.0
        %4734 = vmatpush1.msra.mxu0 0.0
        %4735 = vmatprep.subr.mxu0 0.0
        %4736 = vmatpush1.msra.mxu0 0.0
        %4737 = vmatprep.subr.mxu0 0.0
        %4738 = vmatpush1.msra.mxu0 0.0
        %4739 = vmatprep.subr.mxu0 0.0
        %4740 = vmatpush1.msra.mxu0 0.0
        %4741 = vmatprep.subr.mxu0 0.0
        %4742 = vmatpush1.msra.mxu0 0.0
        %4743 = vmatprep.subr.mxu0 0.0
        %4744 = vmatpush1.msra.mxu0 0.0
        %4745 = vmatprep.subr.mxu0 0.0
        %4746 = vmatpush1.msra.mxu0 0.0
        %4747 = vmatprep.mubr.f32.mxu0 0.0
        %4748 = vmatmul.mubr.f32.gmra.mrb[0].mxu0 %v4585
        %v4749 = vpop.f32.mrb[0].mxu0
        %v4750 = vadd.f32 %v4426, %v4749
        %v4751 = vpop.f32.mrb[0].mxu0
        %4752 = vmatprep.mubr.f32.mxu0 0.0
        %4753 = vmatmul.mubr.f32.gmra.mrb[0].mxu0 %v4588
        %v4754 = vpop.f32.mrb[0].mxu0
        %v4755 = vadd.f32 %v4431, %v4754
        %v4756 = vpop.f32.mrb[0].mxu0
        %4757 = vmatprep.mubr.f32.mxu0 0.0
        %4758 = vmatmul.mubr.f32.gmra.mrb[0].mxu0 %v4591
        %v4759 = vpop.f32.mrb[0].mxu0
        %v4760 = vadd.f32 %v4436, %v4759
        %v4761 = vpop.f32.mrb[0].mxu0
        %4762 = vmatprep.mubr.f32.mxu0 0.0
        %4763 = vmatmul.mubr.f32.gmra.mrb[0].mxu0 %v4594
        %v4764 = vpop.f32.mrb[0].mxu0
        %v4765 = vadd.f32 %v4441, %v4764
        %v4766 = vpop.f32.mrb[0].mxu0
        %4767 = vmatprep.mubr.f32.mxu0 0.0
        %4768 = vmatmul.mubr.f32.gmra.mrb[0].mxu0 %v4597
        %v4769 = vpop.f32.mrb[0].mxu0
        %v4770 = vadd.f32 %v4446, %v4769
        %v4771 = vpop.f32.mrb[0].mxu0
        %4772 = vmatprep.mubr.f32.mxu0 0.0
        %4773 = vmatmul.mubr.f32.gmra.mrb[0].mxu0 %v4600
        %v4774 = vpop.f32.mrb[0].mxu0
        %v4775 = vadd.f32 %v4451, %v4774
        %v4776 = vpop.f32.mrb[0].mxu0
        %4777 = vmatprep.mubr.f32.mxu0 0.0
        %4778 = vmatmul.mubr.f32.gmra.mrb[0].mxu0 %v4603
        %v4779 = vpop.f32.mrb[0].mxu0
        %v4780 = vadd.f32 %v4456, %v4779
        %v4781 = vpop.f32.mrb[0].mxu0
        %4782 = vmatprep.mubr.f32.mxu0 0.0
        %4783 = vmatmul.mubr.f32.gmra.mrb[0].mxu0 %v4606
        %v4784 = vpop.f32.mrb[0].mxu0
        %v4785 = vadd.f32 %v4461, %v4784
        %v4786 = vpop.f32.mrb[0].mxu0
        %4787 = vmatprep.mubr.f32.mxu0 0.0
        %4788 = vmatmul.mubr.f32.gmra.mrb[0].mxu0 %v4609
        %v4789 = vpop.f32.mrb[0].mxu0
        %v4790 = vadd.f32 %v4466, %v4789
        %v4791 = vpop.f32.mrb[0].mxu0
        %4792 = vmatprep.mubr.f32.mxu0 0.0
        %4793 = vmatmul.mubr.f32.gmra.mrb[0].mxu0 %v4612
        %v4794 = vpop.f32.mrb[0].mxu0
        %v4795 = vadd.f32 %v4471, %v4794
        %v4796 = vpop.f32.mrb[0].mxu0
        %4797 = vmatprep.mubr.f32.mxu0 0.0
        %4798 = vmatmul.mubr.f32.gmra.mrb[0].mxu0 %v4615
        %v4799 = vpop.f32.mrb[0].mxu0
        %v4800 = vadd.f32 %v4476, %v4799
        %v4801 = vpop.f32.mrb[0].mxu0
        %4802 = vmatprep.mubr.f32.mxu0 0.0
        %4803 = vmatmul.mubr.f32.gmra.mrb[0].mxu0 %v4618
        %v4804 = vpop.f32.mrb[0].mxu0
        %v4805 = vadd.f32 %v4481, %v4804
        %v4806 = vpop.f32.mrb[0].mxu0
        %4807 = vmatprep.mubr.f32.mxu0 0.0
        %4808 = vmatmul.mubr.f32.gmra.mrb[0].mxu0 %v4621
        %v4809 = vpop.f32.mrb[0].mxu0
        %v4810 = vadd.f32 %v4486, %v4809
        %v4811 = vpop.f32.mrb[0].mxu0
        %4812 = vmatprep.mubr.f32.mxu0 0.0
        %4813 = vmatmul.mubr.f32.gmra.mrb[0].mxu0 %v4624
        %v4814 = vpop.f32.mrb[0].mxu0
        %v4815 = vadd.f32 %v4491, %v4814
        %v4816 = vpop.f32.mrb[0].mxu0
        %4817 = vmatprep.mubr.f32.mxu0 0.0
        %4818 = vmatmul.mubr.f32.gmra.mrb[0].mxu0 %v4627
        %v4819 = vpop.f32.mrb[0].mxu0
        %v4820 = vadd.f32 %v4496, %v4819
        %v4821 = vpop.f32.mrb[0].mxu0
        %4822 = vmatprep.mubr.f32.mxu0 0.0
        %4823 = vmatmul.mubr.f32.gmra.mrb[0].mxu0 %v4630
        %v4824 = vpop.f32.mrb[0].mxu0
        %v4825 = vadd.f32 %v4501, %v4824
        %v4826 = vpop.f32.mrb[0].mxu0
        %4827 = vmatprep.mubr.f32.mxu0 0.0
        %4828 = vmatmul.mubr.f32.gmra.mrb[0].mxu0 %v4633
        %v4829 = vpop.f32.mrb[0].mxu0
        %v4830 = vadd.f32 %v4506, %v4829
        %v4831 = vpop.f32.mrb[0].mxu0
        %4832 = vmatprep.mubr.f32.mxu0 0.0
        %4833 = vmatmul.mubr.f32.gmra.mrb[0].mxu0 %v4636
        %v4834 = vpop.f32.mrb[0].mxu0
        %v4835 = vadd.f32 %v4511, %v4834
        %v4836 = vpop.f32.mrb[0].mxu0
        %4837 = vmatprep.mubr.f32.mxu0 0.0
        %4838 = vmatmul.mubr.f32.gmra.mrb[0].mxu0 %v4639
        %v4839 = vpop.f32.mrb[0].mxu0
        %v4840 = vadd.f32 %v4516, %v4839
        %v4841 = vpop.f32.mrb[0].mxu0
        %4842 = vmatprep.mubr.f32.mxu0 0.0
        %4843 = vmatmul.mubr.f32.gmra.mrb[0].mxu0 %v4642
        %v4844 = vpop.f32.mrb[0].mxu0
        %v4845 = vadd.f32 %v4521, %v4844
        %v4846 = vpop.f32.mrb[0].mxu0
        %4847 = vmatprep.mubr.f32.mxu0 0.0
        %4848 = vmatmul.mubr.f32.gmra.mrb[0].mxu0 %v4645
        %v4849 = vpop.f32.mrb[0].mxu0
        %v4850 = vadd.f32 %v4526, %v4849
        %v4851 = vpop.f32.mrb[0].mxu0
        %4852 = vmatprep.mubr.f32.mxu0 0.0
        %4853 = vmatmul.mubr.f32.gmra.mrb[0].mxu0 %v4648
        %v4854 = vpop.f32.mrb[0].mxu0
        %v4855 = vadd.f32 %v4531, %v4854
        %v4856 = vpop.f32.mrb[0].mxu0
        %4857 = vmatprep.mubr.f32.mxu0 0.0
        %4858 = vmatmul.mubr.f32.gmra.mrb[0].mxu0 %v4651
        %v4859 = vpop.f32.mrb[0].mxu0
        %v4860 = vadd.f32 %v4536, %v4859
        %v4861 = vpop.f32.mrb[0].mxu0
        %4862 = vmatprep.mubr.f32.mxu0 0.0
        %4863 = vmatmul.mubr.f32.gmra.mrb[0].mxu0 %v4654
        %v4864 = vpop.f32.mrb[0].mxu0
        %v4865 = vadd.f32 %v4541, %v4864
        %v4866 = vpop.f32.mrb[0].mxu0
        %4867 = vmatprep.mubr.f32.mxu0 0.0
        %4868 = vmatmul.mubr.f32.gmra.mrb[0].mxu0 %v4657
        %v4869 = vpop.f32.mrb[0].mxu0
        %v4870 = vadd.f32 %v4546, %v4869
        %v4871 = vpop.f32.mrb[0].mxu0
        %4872 = vmatprep.mubr.f32.mxu0 0.0
        %4873 = vmatmul.mubr.f32.gmra.mrb[0].mxu0 %v4660
        %v4874 = vpop.f32.mrb[0].mxu0
        %v4875 = vadd.f32 %v4551, %v4874
        %v4876 = vpop.f32.mrb[0].mxu0
        %4877 = vmatprep.mubr.f32.mxu0 0.0
        %4878 = vmatmul.mubr.f32.gmra.mrb[0].mxu0 %v4663
        %v4879 = vpop.f32.mrb[0].mxu0
        %v4880 = vadd.f32 %v4556, %v4879
        %v4881 = vpop.f32.mrb[0].mxu0
        %4882 = vmatprep.mubr.f32.mxu0 0.0
        %4883 = vmatmul.mubr.f32.gmra.mrb[0].mxu0 %v4666
        %v4884 = vpop.f32.mrb[0].mxu0
        %v4885 = vadd.f32 %v4561, %v4884
        %v4886 = vpop.f32.mrb[0].mxu0
        %4887 = vmatprep.mubr.f32.mxu0 0.0
        %4888 = vmatmul.mubr.f32.gmra.mrb[0].mxu0 %v4669
        %v4889 = vpop.f32.mrb[0].mxu0
        %v4890 = vadd.f32 %v4566, %v4889
        %v4891 = vpop.f32.mrb[0].mxu0
        %4892 = vmatprep.mubr.f32.mxu0 0.0
        %4893 = vmatmul.mubr.f32.gmra.mrb[0].mxu0 %v4672
        %v4894 = vpop.f32.mrb[0].mxu0
        %v4895 = vadd.f32 %v4571, %v4894
        %v4896 = vpop.f32.mrb[0].mxu0
        %4897 = vmatprep.mubr.f32.mxu0 0.0
        %4898 = vmatmul.mubr.f32.gmra.mrb[0].mxu0 %v4675
        %v4899 = vpop.f32.mrb[0].mxu0
        %v4900 = vadd.f32 %v4576, %v4899
        %v4901 = vpop.f32.mrb[0].mxu0
        %4902 = vmatprep.mubr.f32.mxu0 0.0
        %4903 = vmatmul.mubr.f32.gmra.mrb[0].mxu0 %v4678
        %v4904 = vpop.f32.mrb[0].mxu0
        %v4905 = vadd.f32 %v4581, %v4904
        %v4906 = vpop.f32.mrb[0].mxu0
        %4907 = vdwg.mxu0
        %v4908 = vld [vmem:[#allocation2 + $0x2] sm:$0xff]
        %v4909 = vld [vmem:[#allocation2 + $0xa] sm:$0xff]
        %v4910 = vld [vmem:[#allocation2 + $0x1a] sm:$0xff]
        %v4911 = vld [vmem:[#allocation2 + $0x22] sm:$0xff]
        %v4912 = vld [vmem:[#allocation2 + $0x32] sm:$0xff]
        %v4913 = vld [vmem:[#allocation2 + $0x3a] sm:$0xff]
        %v4914 = vld [vmem:[#allocation2 + $0x4a] sm:$0xff]
        %v4915 = vld [vmem:[#allocation2 + $0x52] sm:$0xff]
        %v4916 = vld [vmem:[#allocation2 + $0x62] sm:$0xff]
        %v4917 = vld [vmem:[#allocation2 + $0x6a] sm:$0xff]
        %v4918 = vld [vmem:[#allocation2 + $0x7a] sm:$0xff]
        %v4919 = vld [vmem:[#allocation2 + $0x82] sm:$0xff]
        %v4920 = vld [vmem:[#allocation2 + $0x92] sm:$0xff]
        %v4921 = vld [vmem:[#allocation2 + $0x9a] sm:$0xff]
        %v4922 = vld [vmem:[#allocation2 + $0xaa] sm:$0xff]
        %v4923 = vld [vmem:[#allocation2 + $0xb2] sm:$0xff]
        %v4924 = vld [vmem:[#allocation2 + $0xc2] sm:$0xff]
        %v4925 = vld [vmem:[#allocation2 + $0xca] sm:$0xff]
        %v4926 = vld [vmem:[#allocation2 + $0xda] sm:$0xff]
        %v4927 = vld [vmem:[#allocation2 + $0xe2] sm:$0xff]
        %v4928 = vld [vmem:[#allocation2 + $0xf2] sm:$0xff]
        %v4929 = vld [vmem:[#allocation2 + $0xfa] sm:$0xff]
        %v4930 = vld [vmem:[#allocation2 + $0x10a] sm:$0xff]
        %v4931 = vld [vmem:[#allocation2 + $0x112] sm:$0xff]
        %v4932 = vld [vmem:[#allocation2 + $0x122] sm:$0xff]
        %v4933 = vld [vmem:[#allocation2 + $0x12a] sm:$0xff]
        %v4934 = vld [vmem:[#allocation2 + $0x13a] sm:$0xff]
        %v4935 = vld [vmem:[#allocation2 + $0x142] sm:$0xff]
        %v4936 = vld [vmem:[#allocation2 + $0x152] sm:$0xff]
        %v4937 = vld [vmem:[#allocation2 + $0x15a] sm:$0xff]
        %v4938 = vld [vmem:[#allocation2 + $0x16a] sm:$0xff]
        %v4939 = vld [vmem:[#allocation2 + $0x172] sm:$0xff]
        %s4940 = scalar_lea.vmem [#allocation8], 8
        %v4941 = vld [vmem:[%s4940] sm:$0xf]
        %v4943 = vsel %vm251, %v4908, 0
        %v4946 = vsel %vm251, %v4909, 0
        %v4949 = vsel %vm251, %v4910, 0
        %v4952 = vsel %vm251, %v4911, 0
        %v4955 = vsel %vm251, %v4912, 0
        %v4958 = vsel %vm251, %v4913, 0
        %v4961 = vsel %vm251, %v4914, 0
        %v4964 = vsel %vm251, %v4915, 0
        %v4967 = vsel %vm251, %v4916, 0
        %v4970 = vsel %vm251, %v4917, 0
        %v4973 = vsel %vm251, %v4918, 0
        %v4976 = vsel %vm251, %v4919, 0
        %v4979 = vsel %vm251, %v4920, 0
        %v4982 = vsel %vm251, %v4921, 0
        %v4985 = vsel %vm251, %v4922, 0
        %v4988 = vsel %vm251, %v4923, 0
        %v4991 = vsel %vm251, %v4924, 0
        %v4994 = vsel %vm251, %v4925, 0
        %v4997 = vsel %vm251, %v4926, 0
        %v5000 = vsel %vm251, %v4927, 0
        %v5003 = vsel %vm251, %v4928, 0
        %v5006 = vsel %vm251, %v4929, 0
        %v5009 = vsel %vm251, %v4930, 0
        %v5012 = vsel %vm251, %v4931, 0
        %v5015 = vsel %vm251, %v4932, 0
        %v5018 = vsel %vm251, %v4933, 0
        %v5021 = vsel %vm251, %v4934, 0
        %v5024 = vsel %vm251, %v4935, 0
        %v5027 = vsel %vm251, %v4936, 0
        %v5030 = vsel %vm251, %v4937, 0
        %v5033 = vsel %vm251, %v4938, 0
        %v5036 = vsel %vm251, %v4939, 0
        %v5039 = vsel %vm497, %v4941, 0
        %5041 = vmatprep.subr.mxu0 0.0
        %5042 = vmatpush1.msra.mxu0 %v5039
        %5043 = vmatprep.subr.mxu0 0.0
        %5044 = vmatpush1.msra.mxu0 0.0
        %5045 = vmatprep.subr.mxu0 0.0
        %5046 = vmatpush1.msra.mxu0 0.0
        %5047 = vmatprep.subr.mxu0 0.0
        %5048 = vmatpush1.msra.mxu0 0.0
        %5049 = vmatprep.subr.mxu0 0.0
        %5050 = vmatpush1.msra.mxu0 0.0
        %5051 = vmatprep.subr.mxu0 0.0
        %5052 = vmatpush1.msra.mxu0 0.0
        %5053 = vmatprep.subr.mxu0 0.0
        %5054 = vmatpush1.msra.mxu0 0.0
        %5055 = vmatprep.subr.mxu0 0.0
        %5056 = vmatpush1.msra.mxu0 0.0
        %5057 = vmatprep.subr.mxu0 0.0
        %5058 = vmatpush1.msra.mxu0 0.0
        %5059 = vmatprep.subr.mxu0 0.0
        %5060 = vmatpush1.msra.mxu0 0.0
        %5061 = vmatprep.subr.mxu0 0.0
        %5062 = vmatpush1.msra.mxu0 0.0
        %5063 = vmatprep.subr.mxu0 0.0
        %5064 = vmatpush1.msra.mxu0 0.0
        %5065 = vmatprep.subr.mxu0 0.0
        %5066 = vmatpush1.msra.mxu0 0.0
        %5067 = vmatprep.subr.mxu0 0.0
        %5068 = vmatpush1.msra.mxu0 0.0
        %5069 = vmatprep.subr.mxu0 0.0
        %5070 = vmatpush1.msra.mxu0 0.0
        %5071 = vmatprep.subr.mxu0 0.0
        %5072 = vmatpush1.msra.mxu0 0.0
        %5073 = vmatprep.subr.mxu0 0.0
        %5074 = vmatpush1.msra.mxu0 0.0
        %5075 = vmatprep.subr.mxu0 0.0
        %5076 = vmatpush1.msra.mxu0 0.0
        %5077 = vmatprep.subr.mxu0 0.0
        %5078 = vmatpush1.msra.mxu0 0.0
        %5079 = vmatprep.subr.mxu0 0.0
        %5080 = vmatpush1.msra.mxu0 0.0
        %5081 = vmatprep.subr.mxu0 0.0
        %5082 = vmatpush1.msra.mxu0 0.0
        %5083 = vmatprep.subr.mxu0 0.0
        %5084 = vmatpush1.msra.mxu0 0.0
        %5085 = vmatprep.subr.mxu0 0.0
        %5086 = vmatpush1.msra.mxu0 0.0
        %5087 = vmatprep.subr.mxu0 0.0
        %5088 = vmatpush1.msra.mxu0 0.0
        %5089 = vmatprep.subr.mxu0 0.0
        %5090 = vmatpush1.msra.mxu0 0.0
        %5091 = vmatprep.subr.mxu0 0.0
        %5092 = vmatpush1.msra.mxu0 0.0
        %5093 = vmatprep.subr.mxu0 0.0
        %5094 = vmatpush1.msra.mxu0 0.0
        %5095 = vmatprep.subr.mxu0 0.0
        %5096 = vmatpush1.msra.mxu0 0.0
        %5097 = vmatprep.subr.mxu0 0.0
        %5098 = vmatpush1.msra.mxu0 0.0
        %5099 = vmatprep.subr.mxu0 0.0
        %5100 = vmatpush1.msra.mxu0 0.0
        %5101 = vmatprep.subr.mxu0 0.0
        %5102 = vmatpush1.msra.mxu0 0.0
        %5103 = vmatprep.subr.mxu0 0.0
        %5104 = vmatpush1.msra.mxu0 0.0
        %5105 = vmatprep.mubr.f32.mxu0 0.0
        %5106 = vmatmul.mubr.f32.gmra.mrb[0].mxu0 %v4943
        %v5107 = vpop.f32.mrb[0].mxu0
        %v5108 = vadd.f32 0.0, %v5107
        %v5109 = vpop.f32.mrb[0].mxu0
        %5110 = vmatprep.mubr.f32.mxu0 0.0
        %5111 = vmatmul.mubr.f32.gmra.mrb[0].mxu0 %v4946
        %v5112 = vpop.f32.mrb[0].mxu0
        %v5113 = vadd.f32 0.0, %v5112
        %v5114 = vpop.f32.mrb[0].mxu0
        %5115 = vmatprep.mubr.f32.mxu0 0.0
        %5116 = vmatmul.mubr.f32.gmra.mrb[0].mxu0 %v4949
        %v5117 = vpop.f32.mrb[0].mxu0
        %v5118 = vadd.f32 0.0, %v5117
        %v5119 = vpop.f32.mrb[0].mxu0
        %5120 = vmatprep.mubr.f32.mxu0 0.0
        %5121 = vmatmul.mubr.f32.gmra.mrb[0].mxu0 %v4952
        %v5122 = vpop.f32.mrb[0].mxu0
        %v5123 = vadd.f32 0.0, %v5122
        %v5124 = vpop.f32.mrb[0].mxu0
        %5125 = vmatprep.mubr.f32.mxu0 0.0
        %5126 = vmatmul.mubr.f32.gmra.mrb[0].mxu0 %v4955
        %v5127 = vpop.f32.mrb[0].mxu0
        %v5128 = vadd.f32 0.0, %v5127
        %v5129 = vpop.f32.mrb[0].mxu0
        %5130 = vmatprep.mubr.f32.mxu0 0.0
        %5131 = vmatmul.mubr.f32.gmra.mrb[0].mxu0 %v4958
        %v5132 = vpop.f32.mrb[0].mxu0
        %v5133 = vadd.f32 0.0, %v5132
        %v5134 = vpop.f32.mrb[0].mxu0
        %5135 = vmatprep.mubr.f32.mxu0 0.0
        %5136 = vmatmul.mubr.f32.gmra.mrb[0].mxu0 %v4961
        %v5137 = vpop.f32.mrb[0].mxu0
        %v5138 = vadd.f32 0.0, %v5137
        %v5139 = vpop.f32.mrb[0].mxu0
        %5140 = vmatprep.mubr.f32.mxu0 0.0
        %5141 = vmatmul.mubr.f32.gmra.mrb[0].mxu0 %v4964
        %v5142 = vpop.f32.mrb[0].mxu0
        %v5143 = vadd.f32 0.0, %v5142
        %v5144 = vpop.f32.mrb[0].mxu0
        %5145 = vmatprep.mubr.f32.mxu0 0.0
        %5146 = vmatmul.mubr.f32.gmra.mrb[0].mxu0 %v4967
        %v5147 = vpop.f32.mrb[0].mxu0
        %v5148 = vadd.f32 0.0, %v5147
        %v5149 = vpop.f32.mrb[0].mxu0
        %5150 = vmatprep.mubr.f32.mxu0 0.0
        %5151 = vmatmul.mubr.f32.gmra.mrb[0].mxu0 %v4970
        %v5152 = vpop.f32.mrb[0].mxu0
        %v5153 = vadd.f32 0.0, %v5152
        %v5154 = vpop.f32.mrb[0].mxu0
        %5155 = vmatprep.mubr.f32.mxu0 0.0
        %5156 = vmatmul.mubr.f32.gmra.mrb[0].mxu0 %v4973
        %v5157 = vpop.f32.mrb[0].mxu0
        %v5158 = vadd.f32 0.0, %v5157
        %v5159 = vpop.f32.mrb[0].mxu0
        %5160 = vmatprep.mubr.f32.mxu0 0.0
        %5161 = vmatmul.mubr.f32.gmra.mrb[0].mxu0 %v4976
        %v5162 = vpop.f32.mrb[0].mxu0
        %v5163 = vadd.f32 0.0, %v5162
        %v5164 = vpop.f32.mrb[0].mxu0
        %5165 = vmatprep.mubr.f32.mxu0 0.0
        %5166 = vmatmul.mubr.f32.gmra.mrb[0].mxu0 %v4979
        %v5167 = vpop.f32.mrb[0].mxu0
        %v5168 = vadd.f32 0.0, %v5167
        %v5169 = vpop.f32.mrb[0].mxu0
        %5170 = vmatprep.mubr.f32.mxu0 0.0
        %5171 = vmatmul.mubr.f32.gmra.mrb[0].mxu0 %v4982
        %v5172 = vpop.f32.mrb[0].mxu0
        %v5173 = vadd.f32 0.0, %v5172
        %v5174 = vpop.f32.mrb[0].mxu0
        %5175 = vmatprep.mubr.f32.mxu0 0.0
        %5176 = vmatmul.mubr.f32.gmra.mrb[0].mxu0 %v4985
        %v5177 = vpop.f32.mrb[0].mxu0
        %v5178 = vadd.f32 0.0, %v5177
        %v5179 = vpop.f32.mrb[0].mxu0
        %5180 = vmatprep.mubr.f32.mxu0 0.0
        %5181 = vmatmul.mubr.f32.gmra.mrb[0].mxu0 %v4988
        %v5182 = vpop.f32.mrb[0].mxu0
        %v5183 = vadd.f32 0.0, %v5182
        %v5184 = vpop.f32.mrb[0].mxu0
        %5185 = vmatprep.mubr.f32.mxu0 0.0
        %5186 = vmatmul.mubr.f32.gmra.mrb[0].mxu0 %v4991
        %v5187 = vpop.f32.mrb[0].mxu0
        %v5188 = vadd.f32 0.0, %v5187
        %v5189 = vpop.f32.mrb[0].mxu0
        %5190 = vmatprep.mubr.f32.mxu0 0.0
        %5191 = vmatmul.mubr.f32.gmra.mrb[0].mxu0 %v4994
        %v5192 = vpop.f32.mrb[0].mxu0
        %v5193 = vadd.f32 0.0, %v5192
        %v5194 = vpop.f32.mrb[0].mxu0
        %5195 = vmatprep.mubr.f32.mxu0 0.0
        %5196 = vmatmul.mubr.f32.gmra.mrb[0].mxu0 %v4997
        %v5197 = vpop.f32.mrb[0].mxu0
        %v5198 = vadd.f32 0.0, %v5197
        %v5199 = vpop.f32.mrb[0].mxu0
        %5200 = vmatprep.mubr.f32.mxu0 0.0
        %5201 = vmatmul.mubr.f32.gmra.mrb[0].mxu0 %v5000
        %v5202 = vpop.f32.mrb[0].mxu0
        %v5203 = vadd.f32 0.0, %v5202
        %v5204 = vpop.f32.mrb[0].mxu0
        %5205 = vmatprep.mubr.f32.mxu0 0.0
        %5206 = vmatmul.mubr.f32.gmra.mrb[0].mxu0 %v5003
        %v5207 = vpop.f32.mrb[0].mxu0
        %v5208 = vadd.f32 0.0, %v5207
        %v5209 = vpop.f32.mrb[0].mxu0
        %5210 = vmatprep.mubr.f32.mxu0 0.0
        %5211 = vmatmul.mubr.f32.gmra.mrb[0].mxu0 %v5006
        %v5212 = vpop.f32.mrb[0].mxu0
        %v5213 = vadd.f32 0.0, %v5212
        %v5214 = vpop.f32.mrb[0].mxu0
        %5215 = vmatprep.mubr.f32.mxu0 0.0
        %5216 = vmatmul.mubr.f32.gmra.mrb[0].mxu0 %v5009
        %v5217 = vpop.f32.mrb[0].mxu0
        %v5218 = vadd.f32 0.0, %v5217
        %v5219 = vpop.f32.mrb[0].mxu0
        %5220 = vmatprep.mubr.f32.mxu0 0.0
        %5221 = vmatmul.mubr.f32.gmra.mrb[0].mxu0 %v5012
        %v5222 = vpop.f32.mrb[0].mxu0
        %v5223 = vadd.f32 0.0, %v5222
        %v5224 = vpop.f32.mrb[0].mxu0
        %5225 = vmatprep.mubr.f32.mxu0 0.0
        %5226 = vmatmul.mubr.f32.gmra.mrb[0].mxu0 %v5015
        %v5227 = vpop.f32.mrb[0].mxu0
        %v5228 = vadd.f32 0.0, %v5227
        %v5229 = vpop.f32.mrb[0].mxu0
        %5230 = vmatprep.mubr.f32.mxu0 0.0
        %5231 = vmatmul.mubr.f32.gmra.mrb[0].mxu0 %v5018
        %v5232 = vpop.f32.mrb[0].mxu0
        %v5233 = vadd.f32 0.0, %v5232
        %v5234 = vpop.f32.mrb[0].mxu0
        %5235 = vmatprep.mubr.f32.mxu0 0.0
        %5236 = vmatmul.mubr.f32.gmra.mrb[0].mxu0 %v5021
        %v5237 = vpop.f32.mrb[0].mxu0
        %v5238 = vadd.f32 0.0, %v5237
        %v5239 = vpop.f32.mrb[0].mxu0
        %5240 = vmatprep.mubr.f32.mxu0 0.0
        %5241 = vmatmul.mubr.f32.gmra.mrb[0].mxu0 %v5024
        %v5242 = vpop.f32.mrb[0].mxu0
        %v5243 = vadd.f32 0.0, %v5242
        %v5244 = vpop.f32.mrb[0].mxu0
        %5245 = vmatprep.mubr.f32.mxu0 0.0
        %5246 = vmatmul.mubr.f32.gmra.mrb[0].mxu0 %v5027
        %v5247 = vpop.f32.mrb[0].mxu0
        %v5248 = vadd.f32 0.0, %v5247
        %v5249 = vpop.f32.mrb[0].mxu0
        %5250 = vmatprep.mubr.f32.mxu0 0.0
        %5251 = vmatmul.mubr.f32.gmra.mrb[0].mxu0 %v5030
        %v5252 = vpop.f32.mrb[0].mxu0
        %v5253 = vadd.f32 0.0, %v5252
        %v5254 = vpop.f32.mrb[0].mxu0
        %5255 = vmatprep.mubr.f32.mxu0 0.0
        %5256 = vmatmul.mubr.f32.gmra.mrb[0].mxu0 %v5033
        %v5257 = vpop.f32.mrb[0].mxu0
        %v5258 = vadd.f32 0.0, %v5257
        %v5259 = vpop.f32.mrb[0].mxu0
        %5260 = vmatprep.mubr.f32.mxu0 0.0
        %5261 = vmatmul.mubr.f32.gmra.mrb[0].mxu0 %v5036
        %v5262 = vpop.f32.mrb[0].mxu0
        %v5263 = vadd.f32 0.0, %v5262
        %v5264 = vpop.f32.mrb[0].mxu0
        %5265 = vdwg.mxu0
        %v5266 = vadd.f32 %v4750, %v5108
        %v5267 = vadd.f32 %v4755, %v5113
        %v5268 = vadd.f32 %v4760, %v5118
        %v5269 = vadd.f32 %v4765, %v5123
        %v5270 = vadd.f32 %v4770, %v5128
        %v5271 = vadd.f32 %v4775, %v5133
        %v5272 = vadd.f32 %v4780, %v5138
        %v5273 = vadd.f32 %v4785, %v5143
        %v5274 = vadd.f32 %v4790, %v5148
        %v5275 = vadd.f32 %v4795, %v5153
        %v5276 = vadd.f32 %v4800, %v5158
        %v5277 = vadd.f32 %v4805, %v5163
        %v5278 = vadd.f32 %v4810, %v5168
        %v5279 = vadd.f32 %v4815, %v5173
        %v5280 = vadd.f32 %v4820, %v5178
        %v5281 = vadd.f32 %v4825, %v5183
        %v5282 = vadd.f32 %v4830, %v5188
        %v5283 = vadd.f32 %v4835, %v5193
        %v5284 = vadd.f32 %v4840, %v5198
        %v5285 = vadd.f32 %v4845, %v5203
        %v5286 = vadd.f32 %v4850, %v5208
        %v5287 = vadd.f32 %v4855, %v5213
        %v5288 = vadd.f32 %v4860, %v5218
        %v5289 = vadd.f32 %v4865, %v5223
        %v5290 = vadd.f32 %v4870, %v5228
        %v5291 = vadd.f32 %v4875, %v5233
        %v5292 = vadd.f32 %v4880, %v5238
        %v5293 = vadd.f32 %v4885, %v5243
        %v5294 = vadd.f32 %v4890, %v5248
        %v5295 = vadd.f32 %v4895, %v5253
        %v5296 = vadd.f32 %v4900, %v5258
        %v5297 = vadd.f32 %v4905, %v5263
        %v5298 = vld [vmem:[%s250] sm:$0xff]
        %v5299 = vld [vmem:[%s250 + $0x8] sm:$0xff]
        %v5300 = vld [vmem:[%s250 + $0x18] sm:$0xff]
        %v5301 = vld [vmem:[%s250 + $0x20] sm:$0xff]
        %v5302 = vld [vmem:[%s250 + $0x30] sm:$0xff]
        %v5303 = vld [vmem:[%s250 + $0x38] sm:$0xff]
        %v5304 = vld [vmem:[%s250 + $0x48] sm:$0xff]
        %v5305 = vld [vmem:[%s250 + $0x50] sm:$0xff]
        %v5306 = vld [vmem:[%s250 + $0x60] sm:$0xff]
        %v5307 = vld [vmem:[%s250 + $0x68] sm:$0xff]
        %v5308 = vld [vmem:[%s250 + $0x78] sm:$0xff]
        %v5309 = vld [vmem:[%s250 + $0x80] sm:$0xff]
        %v5310 = vld [vmem:[%s250 + $0x90] sm:$0xff]
        %v5311 = vld [vmem:[%s250 + $0x98] sm:$0xff]
        %v5312 = vld [vmem:[%s250 + $0xa8] sm:$0xff]
        %v5313 = vld [vmem:[%s250 + $0xb0] sm:$0xff]
        %v5314 = vld [vmem:[%s250 + $0xc0] sm:$0xff]
        %v5315 = vld [vmem:[%s250 + $0xc8] sm:$0xff]
        %v5316 = vld [vmem:[%s250 + $0xd8] sm:$0xff]
        %v5317 = vld [vmem:[%s250 + $0xe0] sm:$0xff]
        %v5318 = vld [vmem:[%s250 + $0xf0] sm:$0xff]
        %v5319 = vld [vmem:[%s250 + $0xf8] sm:$0xff]
        %v5320 = vld [vmem:[%s250 + $0x108] sm:$0xff]
        %v5321 = vld [vmem:[%s250 + $0x110] sm:$0xff]
        %v5322 = vld [vmem:[%s250 + $0x120] sm:$0xff]
        %v5323 = vld [vmem:[%s250 + $0x128] sm:$0xff]
        %v5324 = vld [vmem:[%s250 + $0x138] sm:$0xff]
        %v5325 = vld [vmem:[%s250 + $0x140] sm:$0xff]
        %v5326 = vld [vmem:[%s250 + $0x150] sm:$0xff]
        %v5327 = vld [vmem:[%s250 + $0x158] sm:$0xff]
        %v5328 = vld [vmem:[%s250 + $0x168] sm:$0xff]
        %v5329 = vld [vmem:[%s250 + $0x170] sm:$0xff]
        %s5330 = scalar_lea.vmem [#allocation8], 12
        %v5331 = vld [vmem:[%s5330] sm:$0xf]
        %v5333 = vsel %vm251, %v5298, 0
        %v5336 = vsel %vm251, %v5299, 0
        %v5339 = vsel %vm251, %v5300, 0
        %v5342 = vsel %vm251, %v5301, 0
        %v5345 = vsel %vm251, %v5302, 0
        %v5348 = vsel %vm251, %v5303, 0
        %v5351 = vsel %vm251, %v5304, 0
        %v5354 = vsel %vm251, %v5305, 0
        %v5357 = vsel %vm251, %v5306, 0
        %v5360 = vsel %vm251, %v5307, 0
        %v5363 = vsel %vm251, %v5308, 0
        %v5366 = vsel %vm251, %v5309, 0
        %v5369 = vsel %vm251, %v5310, 0
        %v5372 = vsel %vm251, %v5311, 0
        %v5375 = vsel %vm251, %v5312, 0
        %v5378 = vsel %vm251, %v5313, 0
        %v5381 = vsel %vm251, %v5314, 0
        %v5384 = vsel %vm251, %v5315, 0
        %v5387 = vsel %vm251, %v5316, 0
        %v5390 = vsel %vm251, %v5317, 0
        %v5393 = vsel %vm251, %v5318, 0
        %v5396 = vsel %vm251, %v5319, 0
        %v5399 = vsel %vm251, %v5320, 0
        %v5402 = vsel %vm251, %v5321, 0
        %v5405 = vsel %vm251, %v5322, 0
        %v5408 = vsel %vm251, %v5323, 0
        %v5411 = vsel %vm251, %v5324, 0
        %v5414 = vsel %vm251, %v5325, 0
        %v5417 = vsel %vm251, %v5326, 0
        %v5420 = vsel %vm251, %v5327, 0
        %v5423 = vsel %vm251, %v5328, 0
        %v5426 = vsel %vm251, %v5329, 0
        %v5429 = vsel %vm497, %v5331, 0
        %5431 = vmatprep.subr.mxu0 0.0
        %5432 = vmatpush1.msra.mxu0 %v5429
        %5433 = vmatprep.subr.mxu0 0.0
        %5434 = vmatpush1.msra.mxu0 0.0
        %5435 = vmatprep.subr.mxu0 0.0
        %5436 = vmatpush1.msra.mxu0 0.0
        %5437 = vmatprep.subr.mxu0 0.0
        %5438 = vmatpush1.msra.mxu0 0.0
        %5439 = vmatprep.subr.mxu0 0.0
        %5440 = vmatpush1.msra.mxu0 0.0
        %5441 = vmatprep.subr.mxu0 0.0
        %5442 = vmatpush1.msra.mxu0 0.0
        %5443 = vmatprep.subr.mxu0 0.0
        %5444 = vmatpush1.msra.mxu0 0.0
        %5445 = vmatprep.subr.mxu0 0.0
        %5446 = vmatpush1.msra.mxu0 0.0
        %5447 = vmatprep.subr.mxu0 0.0
        %5448 = vmatpush1.msra.mxu0 0.0
        %5449 = vmatprep.subr.mxu0 0.0
        %5450 = vmatpush1.msra.mxu0 0.0
        %5451 = vmatprep.subr.mxu0 0.0
        %5452 = vmatpush1.msra.mxu0 0.0
        %5453 = vmatprep.subr.mxu0 0.0
        %5454 = vmatpush1.msra.mxu0 0.0
        %5455 = vmatprep.subr.mxu0 0.0
        %5456 = vmatpush1.msra.mxu0 0.0
        %5457 = vmatprep.subr.mxu0 0.0
        %5458 = vmatpush1.msra.mxu0 0.0
        %5459 = vmatprep.subr.mxu0 0.0
        %5460 = vmatpush1.msra.mxu0 0.0
        %5461 = vmatprep.subr.mxu0 0.0
        %5462 = vmatpush1.msra.mxu0 0.0
        %5463 = vmatprep.subr.mxu0 0.0
        %5464 = vmatpush1.msra.mxu0 0.0
        %5465 = vmatprep.subr.mxu0 0.0
        %5466 = vmatpush1.msra.mxu0 0.0
        %5467 = vmatprep.subr.mxu0 0.0
        %5468 = vmatpush1.msra.mxu0 0.0
        %5469 = vmatprep.subr.mxu0 0.0
        %5470 = vmatpush1.msra.mxu0 0.0
        %5471 = vmatprep.subr.mxu0 0.0
        %5472 = vmatpush1.msra.mxu0 0.0
        %5473 = vmatprep.subr.mxu0 0.0
        %5474 = vmatpush1.msra.mxu0 0.0
        %5475 = vmatprep.subr.mxu0 0.0
        %5476 = vmatpush1.msra.mxu0 0.0
        %5477 = vmatprep.subr.mxu0 0.0
        %5478 = vmatpush1.msra.mxu0 0.0
        %5479 = vmatprep.subr.mxu0 0.0
        %5480 = vmatpush1.msra.mxu0 0.0
        %5481 = vmatprep.subr.mxu0 0.0
        %5482 = vmatpush1.msra.mxu0 0.0
        %5483 = vmatprep.subr.mxu0 0.0
        %5484 = vmatpush1.msra.mxu0 0.0
        %5485 = vmatprep.subr.mxu0 0.0
        %5486 = vmatpush1.msra.mxu0 0.0
        %5487 = vmatprep.subr.mxu0 0.0
        %5488 = vmatpush1.msra.mxu0 0.0
        %5489 = vmatprep.subr.mxu0 0.0
        %5490 = vmatpush1.msra.mxu0 0.0
        %5491 = vmatprep.subr.mxu0 0.0
        %5492 = vmatpush1.msra.mxu0 0.0
        %5493 = vmatprep.subr.mxu0 0.0
        %5494 = vmatpush1.msra.mxu0 0.0
        %5495 = vmatprep.mubr.f32.mxu0 0.0
        %5496 = vmatmul.mubr.f32.gmra.mrb[0].mxu0 %v5333
        %v5497 = vpop.f32.mrb[0].mxu0
        %v5498 = vadd.f32 0.0, %v5497
        %v5499 = vpop.f32.mrb[0].mxu0
        %5500 = vmatprep.mubr.f32.mxu0 0.0
        %5501 = vmatmul.mubr.f32.gmra.mrb[0].mxu0 %v5336
        %v5502 = vpop.f32.mrb[0].mxu0
        %v5503 = vadd.f32 0.0, %v5502
        %v5504 = vpop.f32.mrb[0].mxu0
        %5505 = vmatprep.mubr.f32.mxu0 0.0
        %5506 = vmatmul.mubr.f32.gmra.mrb[0].mxu0 %v5339
        %v5507 = vpop.f32.mrb[0].mxu0
        %v5508 = vadd.f32 0.0, %v5507
        %v5509 = vpop.f32.mrb[0].mxu0
        %5510 = vmatprep.mubr.f32.mxu0 0.0
        %5511 = vmatmul.mubr.f32.gmra.mrb[0].mxu0 %v5342
        %v5512 = vpop.f32.mrb[0].mxu0
        %v5513 = vadd.f32 0.0, %v5512
        %v5514 = vpop.f32.mrb[0].mxu0
        %5515 = vmatprep.mubr.f32.mxu0 0.0
        %5516 = vmatmul.mubr.f32.gmra.mrb[0].mxu0 %v5345
        %v5517 = vpop.f32.mrb[0].mxu0
        %v5518 = vadd.f32 0.0, %v5517
        %v5519 = vpop.f32.mrb[0].mxu0
        %5520 = vmatprep.mubr.f32.mxu0 0.0
        %5521 = vmatmul.mubr.f32.gmra.mrb[0].mxu0 %v5348
        %v5522 = vpop.f32.mrb[0].mxu0
        %v5523 = vadd.f32 0.0, %v5522
        %v5524 = vpop.f32.mrb[0].mxu0
        %5525 = vmatprep.mubr.f32.mxu0 0.0
        %5526 = vmatmul.mubr.f32.gmra.mrb[0].mxu0 %v5351
        %v5527 = vpop.f32.mrb[0].mxu0
        %v5528 = vadd.f32 0.0, %v5527
        %v5529 = vpop.f32.mrb[0].mxu0
        %5530 = vmatprep.mubr.f32.mxu0 0.0
        %5531 = vmatmul.mubr.f32.gmra.mrb[0].mxu0 %v5354
        %v5532 = vpop.f32.mrb[0].mxu0
        %v5533 = vadd.f32 0.0, %v5532
        %v5534 = vpop.f32.mrb[0].mxu0
        %5535 = vmatprep.mubr.f32.mxu0 0.0
        %5536 = vmatmul.mubr.f32.gmra.mrb[0].mxu0 %v5357
        %v5537 = vpop.f32.mrb[0].mxu0
        %v5538 = vadd.f32 0.0, %v5537
        %v5539 = vpop.f32.mrb[0].mxu0
        %5540 = vmatprep.mubr.f32.mxu0 0.0
        %5541 = vmatmul.mubr.f32.gmra.mrb[0].mxu0 %v5360
        %v5542 = vpop.f32.mrb[0].mxu0
        %v5543 = vadd.f32 0.0, %v5542
        %v5544 = vpop.f32.mrb[0].mxu0
        %5545 = vmatprep.mubr.f32.mxu0 0.0
        %5546 = vmatmul.mubr.f32.gmra.mrb[0].mxu0 %v5363
        %v5547 = vpop.f32.mrb[0].mxu0
        %v5548 = vadd.f32 0.0, %v5547
        %v5549 = vpop.f32.mrb[0].mxu0
        %5550 = vmatprep.mubr.f32.mxu0 0.0
        %5551 = vmatmul.mubr.f32.gmra.mrb[0].mxu0 %v5366
        %v5552 = vpop.f32.mrb[0].mxu0
        %v5553 = vadd.f32 0.0, %v5552
        %v5554 = vpop.f32.mrb[0].mxu0
        %5555 = vmatprep.mubr.f32.mxu0 0.0
        %5556 = vmatmul.mubr.f32.gmra.mrb[0].mxu0 %v5369
        %v5557 = vpop.f32.mrb[0].mxu0
        %v5558 = vadd.f32 0.0, %v5557
        %v5559 = vpop.f32.mrb[0].mxu0
        %5560 = vmatprep.mubr.f32.mxu0 0.0
        %5561 = vmatmul.mubr.f32.gmra.mrb[0].mxu0 %v5372
        %v5562 = vpop.f32.mrb[0].mxu0
        %v5563 = vadd.f32 0.0, %v5562
        %v5564 = vpop.f32.mrb[0].mxu0
        %5565 = vmatprep.mubr.f32.mxu0 0.0
        %5566 = vmatmul.mubr.f32.gmra.mrb[0].mxu0 %v5375
        %v5567 = vpop.f32.mrb[0].mxu0
        %v5568 = vadd.f32 0.0, %v5567
        %v5569 = vpop.f32.mrb[0].mxu0
        %5570 = vmatprep.mubr.f32.mxu0 0.0
        %5571 = vmatmul.mubr.f32.gmra.mrb[0].mxu0 %v5378
        %v5572 = vpop.f32.mrb[0].mxu0
        %v5573 = vadd.f32 0.0, %v5572
        %v5574 = vpop.f32.mrb[0].mxu0
        %5575 = vmatprep.mubr.f32.mxu0 0.0
        %5576 = vmatmul.mubr.f32.gmra.mrb[0].mxu0 %v5381
        %v5577 = vpop.f32.mrb[0].mxu0
        %v5578 = vadd.f32 0.0, %v5577
        %v5579 = vpop.f32.mrb[0].mxu0
        %5580 = vmatprep.mubr.f32.mxu0 0.0
        %5581 = vmatmul.mubr.f32.gmra.mrb[0].mxu0 %v5384
        %v5582 = vpop.f32.mrb[0].mxu0
        %v5583 = vadd.f32 0.0, %v5582
        %v5584 = vpop.f32.mrb[0].mxu0
        %5585 = vmatprep.mubr.f32.mxu0 0.0
        %5586 = vmatmul.mubr.f32.gmra.mrb[0].mxu0 %v5387
        %v5587 = vpop.f32.mrb[0].mxu0
        %v5588 = vadd.f32 0.0, %v5587
        %v5589 = vpop.f32.mrb[0].mxu0
        %5590 = vmatprep.mubr.f32.mxu0 0.0
        %5591 = vmatmul.mubr.f32.gmra.mrb[0].mxu0 %v5390
        %v5592 = vpop.f32.mrb[0].mxu0
        %v5593 = vadd.f32 0.0, %v5592
        %v5594 = vpop.f32.mrb[0].mxu0
        %5595 = vmatprep.mubr.f32.mxu0 0.0
        %5596 = vmatmul.mubr.f32.gmra.mrb[0].mxu0 %v5393
        %v5597 = vpop.f32.mrb[0].mxu0
        %v5598 = vadd.f32 0.0, %v5597
        %v5599 = vpop.f32.mrb[0].mxu0
        %5600 = vmatprep.mubr.f32.mxu0 0.0
        %5601 = vmatmul.mubr.f32.gmra.mrb[0].mxu0 %v5396
        %v5602 = vpop.f32.mrb[0].mxu0
        %v5603 = vadd.f32 0.0, %v5602
        %v5604 = vpop.f32.mrb[0].mxu0
        %5605 = vmatprep.mubr.f32.mxu0 0.0
        %5606 = vmatmul.mubr.f32.gmra.mrb[0].mxu0 %v5399
        %v5607 = vpop.f32.mrb[0].mxu0
        %v5608 = vadd.f32 0.0, %v5607
        %v5609 = vpop.f32.mrb[0].mxu0
        %5610 = vmatprep.mubr.f32.mxu0 0.0
        %5611 = vmatmul.mubr.f32.gmra.mrb[0].mxu0 %v5402
        %v5612 = vpop.f32.mrb[0].mxu0
        %v5613 = vadd.f32 0.0, %v5612
        %v5614 = vpop.f32.mrb[0].mxu0
        %5615 = vmatprep.mubr.f32.mxu0 0.0
        %5616 = vmatmul.mubr.f32.gmra.mrb[0].mxu0 %v5405
        %v5617 = vpop.f32.mrb[0].mxu0
        %v5618 = vadd.f32 0.0, %v5617
        %v5619 = vpop.f32.mrb[0].mxu0
        %5620 = vmatprep.mubr.f32.mxu0 0.0
        %5621 = vmatmul.mubr.f32.gmra.mrb[0].mxu0 %v5408
        %v5622 = vpop.f32.mrb[0].mxu0
        %v5623 = vadd.f32 0.0, %v5622
        %v5624 = vpop.f32.mrb[0].mxu0
        %5625 = vmatprep.mubr.f32.mxu0 0.0
        %5626 = vmatmul.mubr.f32.gmra.mrb[0].mxu0 %v5411
        %v5627 = vpop.f32.mrb[0].mxu0
        %v5628 = vadd.f32 0.0, %v5627
        %v5629 = vpop.f32.mrb[0].mxu0
        %5630 = vmatprep.mubr.f32.mxu0 0.0
        %5631 = vmatmul.mubr.f32.gmra.mrb[0].mxu0 %v5414
        %v5632 = vpop.f32.mrb[0].mxu0
        %v5633 = vadd.f32 0.0, %v5632
        %v5634 = vpop.f32.mrb[0].mxu0
        %5635 = vmatprep.mubr.f32.mxu0 0.0
        %5636 = vmatmul.mubr.f32.gmra.mrb[0].mxu0 %v5417
        %v5637 = vpop.f32.mrb[0].mxu0
        %v5638 = vadd.f32 0.0, %v5637
        %v5639 = vpop.f32.mrb[0].mxu0
        %5640 = vmatprep.mubr.f32.mxu0 0.0
        %5641 = vmatmul.mubr.f32.gmra.mrb[0].mxu0 %v5420
        %v5642 = vpop.f32.mrb[0].mxu0
        %v5643 = vadd.f32 0.0, %v5642
        %v5644 = vpop.f32.mrb[0].mxu0
        %5645 = vmatprep.mubr.f32.mxu0 0.0
        %5646 = vmatmul.mubr.f32.gmra.mrb[0].mxu0 %v5423
        %v5647 = vpop.f32.mrb[0].mxu0
        %v5648 = vadd.f32 0.0, %v5647
        %v5649 = vpop.f32.mrb[0].mxu0
        %5650 = vmatprep.mubr.f32.mxu0 0.0
        %5651 = vmatmul.mubr.f32.gmra.mrb[0].mxu0 %v5426
        %v5652 = vpop.f32.mrb[0].mxu0
        %v5653 = vadd.f32 0.0, %v5652
        %v5654 = vpop.f32.mrb[0].mxu0
        %5655 = vdwg.mxu0
        %v5656 = vadd.f32 %v5266, %v5498
        %v5657 = vadd.f32 %v5267, %v5503
        %v5658 = vadd.f32 %v5268, %v5508
        %v5659 = vadd.f32 %v5269, %v5513
        %v5660 = vadd.f32 %v5270, %v5518
        %v5661 = vadd.f32 %v5271, %v5523
        %v5662 = vadd.f32 %v5272, %v5528
        %v5663 = vadd.f32 %v5273, %v5533
        %v5664 = vadd.f32 %v5274, %v5538
        %v5665 = vadd.f32 %v5275, %v5543
        %v5666 = vadd.f32 %v5276, %v5548
        %v5667 = vadd.f32 %v5277, %v5553
        %v5668 = vadd.f32 %v5278, %v5558
        %v5669 = vadd.f32 %v5279, %v5563
        %v5670 = vadd.f32 %v5280, %v5568
        %v5671 = vadd.f32 %v5281, %v5573
        %v5672 = vadd.f32 %v5282, %v5578
        %v5673 = vadd.f32 %v5283, %v5583
        %v5674 = vadd.f32 %v5284, %v5588
        %v5675 = vadd.f32 %v5285, %v5593
        %v5676 = vadd.f32 %v5286, %v5598
        %v5677 = vadd.f32 %v5287, %v5603
        %v5678 = vadd.f32 %v5288, %v5608
        %v5679 = vadd.f32 %v5289, %v5613
        %v5680 = vadd.f32 %v5290, %v5618
        %v5681 = vadd.f32 %v5291, %v5623
        %v5682 = vadd.f32 %v5292, %v5628
        %v5683 = vadd.f32 %v5293, %v5633
        %v5684 = vadd.f32 %v5294, %v5638
        %v5685 = vadd.f32 %v5295, %v5643
        %v5686 = vadd.f32 %v5296, %v5648
        %v5687 = vadd.f32 %v5297, %v5653
        %v5688 = vld [vmem:[%s250 + $0x1] sm:$0xff]
        %v5689 = vld [vmem:[%s250 + $0x9] sm:$0xff]
        %v5690 = vld [vmem:[%s250 + $0x19] sm:$0xff]
        %v5691 = vld [vmem:[%s250 + $0x21] sm:$0xff]
        %v5692 = vld [vmem:[%s250 + $0x31] sm:$0xff]
        %v5693 = vld [vmem:[%s250 + $0x39] sm:$0xff]
        %v5694 = vld [vmem:[%s250 + $0x49] sm:$0xff]
        %v5695 = vld [vmem:[%s250 + $0x51] sm:$0xff]
        %v5696 = vld [vmem:[%s250 + $0x61] sm:$0xff]
        %v5697 = vld [vmem:[%s250 + $0x69] sm:$0xff]
        %v5698 = vld [vmem:[%s250 + $0x79] sm:$0xff]
        %v5699 = vld [vmem:[%s250 + $0x81] sm:$0xff]
        %v5700 = vld [vmem:[%s250 + $0x91] sm:$0xff]
        %v5701 = vld [vmem:[%s250 + $0x99] sm:$0xff]
        %v5702 = vld [vmem:[%s250 + $0xa9] sm:$0xff]
        %v5703 = vld [vmem:[%s250 + $0xb1] sm:$0xff]
        %v5704 = vld [vmem:[%s250 + $0xc1] sm:$0xff]
        %v5705 = vld [vmem:[%s250 + $0xc9] sm:$0xff]
        %v5706 = vld [vmem:[%s250 + $0xd9] sm:$0xff]
        %v5707 = vld [vmem:[%s250 + $0xe1] sm:$0xff]
        %v5708 = vld [vmem:[%s250 + $0xf1] sm:$0xff]
        %v5709 = vld [vmem:[%s250 + $0xf9] sm:$0xff]
        %v5710 = vld [vmem:[%s250 + $0x109] sm:$0xff]
        %v5711 = vld [vmem:[%s250 + $0x111] sm:$0xff]
        %v5712 = vld [vmem:[%s250 + $0x121] sm:$0xff]
        %v5713 = vld [vmem:[%s250 + $0x129] sm:$0xff]
        %v5714 = vld [vmem:[%s250 + $0x139] sm:$0xff]
        %v5715 = vld [vmem:[%s250 + $0x141] sm:$0xff]
        %v5716 = vld [vmem:[%s250 + $0x151] sm:$0xff]
        %v5717 = vld [vmem:[%s250 + $0x159] sm:$0xff]
        %v5718 = vld [vmem:[%s250 + $0x169] sm:$0xff]
        %v5719 = vld [vmem:[%s250 + $0x171] sm:$0xff]
        %s5720 = scalar_lea.vmem [#allocation8], 16
        %v5721 = vld [vmem:[%s5720] sm:$0xf]
        %v5723 = vsel %vm251, %v5688, 0
        %v5726 = vsel %vm251, %v5689, 0
        %v5729 = vsel %vm251, %v5690, 0
        %v5732 = vsel %vm251, %v5691, 0
        %v5735 = vsel %vm251, %v5692, 0
        %v5738 = vsel %vm251, %v5693, 0
        %v5741 = vsel %vm251, %v5694, 0
        %v5744 = vsel %vm251, %v5695, 0
        %v5747 = vsel %vm251, %v5696, 0
        %v5750 = vsel %vm251, %v5697, 0
        %v5753 = vsel %vm251, %v5698, 0
        %v5756 = vsel %vm251, %v5699, 0
        %v5759 = vsel %vm251, %v5700, 0
        %v5762 = vsel %vm251, %v5701, 0
        %v5765 = vsel %vm251, %v5702, 0
        %v5768 = vsel %vm251, %v5703, 0
        %v5771 = vsel %vm251, %v5704, 0
        %v5774 = vsel %vm251, %v5705, 0
        %v5777 = vsel %vm251, %v5706, 0
        %v5780 = vsel %vm251, %v5707, 0
        %v5783 = vsel %vm251, %v5708, 0
        %v5786 = vsel %vm251, %v5709, 0
        %v5789 = vsel %vm251, %v5710, 0
        %v5792 = vsel %vm251, %v5711, 0
        %v5795 = vsel %vm251, %v5712, 0
        %v5798 = vsel %vm251, %v5713, 0
        %v5801 = vsel %vm251, %v5714, 0
        %v5804 = vsel %vm251, %v5715, 0
        %v5807 = vsel %vm251, %v5716, 0
        %v5810 = vsel %vm251, %v5717, 0
        %v5813 = vsel %vm251, %v5718, 0
        %v5816 = vsel %vm251, %v5719, 0
        %v5819 = vsel %vm497, %v5721, 0
        %5821 = vmatprep.subr.mxu0 0.0
        %5822 = vmatpush1.msra.mxu0 %v5819
        %5823 = vmatprep.subr.mxu0 0.0
        %5824 = vmatpush1.msra.mxu0 0.0
        %5825 = vmatprep.subr.mxu0 0.0
        %5826 = vmatpush1.msra.mxu0 0.0
        %5827 = vmatprep.subr.mxu0 0.0
        %5828 = vmatpush1.msra.mxu0 0.0
        %5829 = vmatprep.subr.mxu0 0.0
        %5830 = vmatpush1.msra.mxu0 0.0
        %5831 = vmatprep.subr.mxu0 0.0
        %5832 = vmatpush1.msra.mxu0 0.0
        %5833 = vmatprep.subr.mxu0 0.0
        %5834 = vmatpush1.msra.mxu0 0.0
        %5835 = vmatprep.subr.mxu0 0.0
        %5836 = vmatpush1.msra.mxu0 0.0
        %5837 = vmatprep.subr.mxu0 0.0
        %5838 = vmatpush1.msra.mxu0 0.0
        %5839 = vmatprep.subr.mxu0 0.0
        %5840 = vmatpush1.msra.mxu0 0.0
        %5841 = vmatprep.subr.mxu0 0.0
        %5842 = vmatpush1.msra.mxu0 0.0
        %5843 = vmatprep.subr.mxu0 0.0
        %5844 = vmatpush1.msra.mxu0 0.0
        %5845 = vmatprep.subr.mxu0 0.0
        %5846 = vmatpush1.msra.mxu0 0.0
        %5847 = vmatprep.subr.mxu0 0.0
        %5848 = vmatpush1.msra.mxu0 0.0
        %5849 = vmatprep.subr.mxu0 0.0
        %5850 = vmatpush1.msra.mxu0 0.0
        %5851 = vmatprep.subr.mxu0 0.0
        %5852 = vmatpush1.msra.mxu0 0.0
        %5853 = vmatprep.subr.mxu0 0.0
        %5854 = vmatpush1.msra.mxu0 0.0
        %5855 = vmatprep.subr.mxu0 0.0
        %5856 = vmatpush1.msra.mxu0 0.0
        %5857 = vmatprep.subr.mxu0 0.0
        %5858 = vmatpush1.msra.mxu0 0.0
        %5859 = vmatprep.subr.mxu0 0.0
        %5860 = vmatpush1.msra.mxu0 0.0
        %5861 = vmatprep.subr.mxu0 0.0
        %5862 = vmatpush1.msra.mxu0 0.0
        %5863 = vmatprep.subr.mxu0 0.0
        %5864 = vmatpush1.msra.mxu0 0.0
        %5865 = vmatprep.subr.mxu0 0.0
        %5866 = vmatpush1.msra.mxu0 0.0
        %5867 = vmatprep.subr.mxu0 0.0
        %5868 = vmatpush1.msra.mxu0 0.0
        %5869 = vmatprep.subr.mxu0 0.0
        %5870 = vmatpush1.msra.mxu0 0.0
        %5871 = vmatprep.subr.mxu0 0.0
        %5872 = vmatpush1.msra.mxu0 0.0
        %5873 = vmatprep.subr.mxu0 0.0
        %5874 = vmatpush1.msra.mxu0 0.0
        %5875 = vmatprep.subr.mxu0 0.0
        %5876 = vmatpush1.msra.mxu0 0.0
        %5877 = vmatprep.subr.mxu0 0.0
        %5878 = vmatpush1.msra.mxu0 0.0
        %5879 = vmatprep.subr.mxu0 0.0
        %5880 = vmatpush1.msra.mxu0 0.0
        %5881 = vmatprep.subr.mxu0 0.0
        %5882 = vmatpush1.msra.mxu0 0.0
        %5883 = vmatprep.subr.mxu0 0.0
        %5884 = vmatpush1.msra.mxu0 0.0
        %5885 = vmatprep.mubr.f32.mxu0 0.0
        %5886 = vmatmul.mubr.f32.gmra.mrb[0].mxu0 %v5723
        %v5887 = vpop.f32.mrb[0].mxu0
        %v5888 = vadd.f32 0.0, %v5887
        %v5889 = vpop.f32.mrb[0].mxu0
        %5890 = vmatprep.mubr.f32.mxu0 0.0
        %5891 = vmatmul.mubr.f32.gmra.mrb[0].mxu0 %v5726
        %v5892 = vpop.f32.mrb[0].mxu0
        %v5893 = vadd.f32 0.0, %v5892
        %v5894 = vpop.f32.mrb[0].mxu0
        %5895 = vmatprep.mubr.f32.mxu0 0.0
        %5896 = vmatmul.mubr.f32.gmra.mrb[0].mxu0 %v5729
        %v5897 = vpop.f32.mrb[0].mxu0
        %v5898 = vadd.f32 0.0, %v5897
        %v5899 = vpop.f32.mrb[0].mxu0
        %5900 = vmatprep.mubr.f32.mxu0 0.0
        %5901 = vmatmul.mubr.f32.gmra.mrb[0].mxu0 %v5732
        %v5902 = vpop.f32.mrb[0].mxu0
        %v5903 = vadd.f32 0.0, %v5902
        %v5904 = vpop.f32.mrb[0].mxu0
        %5905 = vmatprep.mubr.f32.mxu0 0.0
        %5906 = vmatmul.mubr.f32.gmra.mrb[0].mxu0 %v5735
        %v5907 = vpop.f32.mrb[0].mxu0
        %v5908 = vadd.f32 0.0, %v5907
        %v5909 = vpop.f32.mrb[0].mxu0
        %5910 = vmatprep.mubr.f32.mxu0 0.0
        %5911 = vmatmul.mubr.f32.gmra.mrb[0].mxu0 %v5738
        %v5912 = vpop.f32.mrb[0].mxu0
        %v5913 = vadd.f32 0.0, %v5912
        %v5914 = vpop.f32.mrb[0].mxu0
        %5915 = vmatprep.mubr.f32.mxu0 0.0
        %5916 = vmatmul.mubr.f32.gmra.mrb[0].mxu0 %v5741
        %v5917 = vpop.f32.mrb[0].mxu0
        %v5918 = vadd.f32 0.0, %v5917
        %v5919 = vpop.f32.mrb[0].mxu0
        %5920 = vmatprep.mubr.f32.mxu0 0.0
        %5921 = vmatmul.mubr.f32.gmra.mrb[0].mxu0 %v5744
        %v5922 = vpop.f32.mrb[0].mxu0
        %v5923 = vadd.f32 0.0, %v5922
        %v5924 = vpop.f32.mrb[0].mxu0
        %5925 = vmatprep.mubr.f32.mxu0 0.0
        %5926 = vmatmul.mubr.f32.gmra.mrb[0].mxu0 %v5747
        %v5927 = vpop.f32.mrb[0].mxu0
        %v5928 = vadd.f32 0.0, %v5927
        %v5929 = vpop.f32.mrb[0].mxu0
        %5930 = vmatprep.mubr.f32.mxu0 0.0
        %5931 = vmatmul.mubr.f32.gmra.mrb[0].mxu0 %v5750
        %v5932 = vpop.f32.mrb[0].mxu0
        %v5933 = vadd.f32 0.0, %v5932
        %v5934 = vpop.f32.mrb[0].mxu0
        %5935 = vmatprep.mubr.f32.mxu0 0.0
        %5936 = vmatmul.mubr.f32.gmra.mrb[0].mxu0 %v5753
        %v5937 = vpop.f32.mrb[0].mxu0
        %v5938 = vadd.f32 0.0, %v5937
        %v5939 = vpop.f32.mrb[0].mxu0
        %5940 = vmatprep.mubr.f32.mxu0 0.0
        %5941 = vmatmul.mubr.f32.gmra.mrb[0].mxu0 %v5756
        %v5942 = vpop.f32.mrb[0].mxu0
        %v5943 = vadd.f32 0.0, %v5942
        %v5944 = vpop.f32.mrb[0].mxu0
        %5945 = vmatprep.mubr.f32.mxu0 0.0
        %5946 = vmatmul.mubr.f32.gmra.mrb[0].mxu0 %v5759
        %v5947 = vpop.f32.mrb[0].mxu0
        %v5948 = vadd.f32 0.0, %v5947
        %v5949 = vpop.f32.mrb[0].mxu0
        %5950 = vmatprep.mubr.f32.mxu0 0.0
        %5951 = vmatmul.mubr.f32.gmra.mrb[0].mxu0 %v5762
        %v5952 = vpop.f32.mrb[0].mxu0
        %v5953 = vadd.f32 0.0, %v5952
        %v5954 = vpop.f32.mrb[0].mxu0
        %5955 = vmatprep.mubr.f32.mxu0 0.0
        %5956 = vmatmul.mubr.f32.gmra.mrb[0].mxu0 %v5765
        %v5957 = vpop.f32.mrb[0].mxu0
        %v5958 = vadd.f32 0.0, %v5957
        %v5959 = vpop.f32.mrb[0].mxu0
        %5960 = vmatprep.mubr.f32.mxu0 0.0
        %5961 = vmatmul.mubr.f32.gmra.mrb[0].mxu0 %v5768
        %v5962 = vpop.f32.mrb[0].mxu0
        %v5963 = vadd.f32 0.0, %v5962
        %v5964 = vpop.f32.mrb[0].mxu0
        %5965 = vmatprep.mubr.f32.mxu0 0.0
        %5966 = vmatmul.mubr.f32.gmra.mrb[0].mxu0 %v5771
        %v5967 = vpop.f32.mrb[0].mxu0
        %v5968 = vadd.f32 0.0, %v5967
        %v5969 = vpop.f32.mrb[0].mxu0
        %5970 = vmatprep.mubr.f32.mxu0 0.0
        %5971 = vmatmul.mubr.f32.gmra.mrb[0].mxu0 %v5774
        %v5972 = vpop.f32.mrb[0].mxu0
        %v5973 = vadd.f32 0.0, %v5972
        %v5974 = vpop.f32.mrb[0].mxu0
        %5975 = vmatprep.mubr.f32.mxu0 0.0
        %5976 = vmatmul.mubr.f32.gmra.mrb[0].mxu0 %v5777
        %v5977 = vpop.f32.mrb[0].mxu0
        %v5978 = vadd.f32 0.0, %v5977
        %v5979 = vpop.f32.mrb[0].mxu0
        %5980 = vmatprep.mubr.f32.mxu0 0.0
        %5981 = vmatmul.mubr.f32.gmra.mrb[0].mxu0 %v5780
        %v5982 = vpop.f32.mrb[0].mxu0
        %v5983 = vadd.f32 0.0, %v5982
        %v5984 = vpop.f32.mrb[0].mxu0
        %5985 = vmatprep.mubr.f32.mxu0 0.0
        %5986 = vmatmul.mubr.f32.gmra.mrb[0].mxu0 %v5783
        %v5987 = vpop.f32.mrb[0].mxu0
        %v5988 = vadd.f32 0.0, %v5987
        %v5989 = vpop.f32.mrb[0].mxu0
        %5990 = vmatprep.mubr.f32.mxu0 0.0
        %5991 = vmatmul.mubr.f32.gmra.mrb[0].mxu0 %v5786
        %v5992 = vpop.f32.mrb[0].mxu0
        %v5993 = vadd.f32 0.0, %v5992
        %v5994 = vpop.f32.mrb[0].mxu0
        %5995 = vmatprep.mubr.f32.mxu0 0.0
        %5996 = vmatmul.mubr.f32.gmra.mrb[0].mxu0 %v5789
        %v5997 = vpop.f32.mrb[0].mxu0
        %v5998 = vadd.f32 0.0, %v5997
        %v5999 = vpop.f32.mrb[0].mxu0
        %6000 = vmatprep.mubr.f32.mxu0 0.0
        %6001 = vmatmul.mubr.f32.gmra.mrb[0].mxu0 %v5792
        %v6002 = vpop.f32.mrb[0].mxu0
        %v6003 = vadd.f32 0.0, %v6002
        %v6004 = vpop.f32.mrb[0].mxu0
        %6005 = vmatprep.mubr.f32.mxu0 0.0
        %6006 = vmatmul.mubr.f32.gmra.mrb[0].mxu0 %v5795
        %v6007 = vpop.f32.mrb[0].mxu0
        %v6008 = vadd.f32 0.0, %v6007
        %v6009 = vpop.f32.mrb[0].mxu0
        %6010 = vmatprep.mubr.f32.mxu0 0.0
        %6011 = vmatmul.mubr.f32.gmra.mrb[0].mxu0 %v5798
        %v6012 = vpop.f32.mrb[0].mxu0
        %v6013 = vadd.f32 0.0, %v6012
        %v6014 = vpop.f32.mrb[0].mxu0
        %6015 = vmatprep.mubr.f32.mxu0 0.0
        %6016 = vmatmul.mubr.f32.gmra.mrb[0].mxu0 %v5801
        %v6017 = vpop.f32.mrb[0].mxu0
        %v6018 = vadd.f32 0.0, %v6017
        %v6019 = vpop.f32.mrb[0].mxu0
        %6020 = vmatprep.mubr.f32.mxu0 0.0
        %6021 = vmatmul.mubr.f32.gmra.mrb[0].mxu0 %v5804
        %v6022 = vpop.f32.mrb[0].mxu0
        %v6023 = vadd.f32 0.0, %v6022
        %v6024 = vpop.f32.mrb[0].mxu0
        %6025 = vmatprep.mubr.f32.mxu0 0.0
        %6026 = vmatmul.mubr.f32.gmra.mrb[0].mxu0 %v5807
        %v6027 = vpop.f32.mrb[0].mxu0
        %v6028 = vadd.f32 0.0, %v6027
        %v6029 = vpop.f32.mrb[0].mxu0
        %6030 = vmatprep.mubr.f32.mxu0 0.0
        %6031 = vmatmul.mubr.f32.gmra.mrb[0].mxu0 %v5810
        %v6032 = vpop.f32.mrb[0].mxu0
        %v6033 = vadd.f32 0.0, %v6032
        %v6034 = vpop.f32.mrb[0].mxu0
        %6035 = vmatprep.mubr.f32.mxu0 0.0
        %6036 = vmatmul.mubr.f32.gmra.mrb[0].mxu0 %v5813
        %v6037 = vpop.f32.mrb[0].mxu0
        %v6038 = vadd.f32 0.0, %v6037
        %v6039 = vpop.f32.mrb[0].mxu0
        %6040 = vmatprep.mubr.f32.mxu0 0.0
        %6041 = vmatmul.mubr.f32.gmra.mrb[0].mxu0 %v5816
        %v6042 = vpop.f32.mrb[0].mxu0
        %v6043 = vadd.f32 0.0, %v6042
        %v6044 = vpop.f32.mrb[0].mxu0
        %6045 = vdwg.mxu0
        %v6046 = vadd.f32 %v5656, %v5888
        %v6047 = vadd.f32 %v5657, %v5893
        %v6048 = vadd.f32 %v5658, %v5898
        %v6049 = vadd.f32 %v5659, %v5903
        %v6050 = vadd.f32 %v5660, %v5908
        %v6051 = vadd.f32 %v5661, %v5913
        %v6052 = vadd.f32 %v5662, %v5918
        %v6053 = vadd.f32 %v5663, %v5923
        %v6054 = vadd.f32 %v5664, %v5928
        %v6055 = vadd.f32 %v5665, %v5933
        %v6056 = vadd.f32 %v5666, %v5938
        %v6057 = vadd.f32 %v5667, %v5943
        %v6058 = vadd.f32 %v5668, %v5948
        %v6059 = vadd.f32 %v5669, %v5953
        %v6060 = vadd.f32 %v5670, %v5958
        %v6061 = vadd.f32 %v5671, %v5963
        %v6062 = vadd.f32 %v5672, %v5968
        %v6063 = vadd.f32 %v5673, %v5973
        %v6064 = vadd.f32 %v5674, %v5978
        %v6065 = vadd.f32 %v5675, %v5983
        %v6066 = vadd.f32 %v5676, %v5988
        %v6067 = vadd.f32 %v5677, %v5993
        %v6068 = vadd.f32 %v5678, %v5998
        %v6069 = vadd.f32 %v5679, %v6003
        %v6070 = vadd.f32 %v5680, %v6008
        %v6071 = vadd.f32 %v5681, %v6013
        %v6072 = vadd.f32 %v5682, %v6018
        %v6073 = vadd.f32 %v5683, %v6023
        %v6074 = vadd.f32 %v5684, %v6028
        %v6075 = vadd.f32 %v5685, %v6033
        %v6076 = vadd.f32 %v5686, %v6038
        %v6077 = vadd.f32 %v5687, %v6043
        %v6078 = vld [vmem:[%s250 + $0x2] sm:$0xff]
        %v6079 = vld [vmem:[%s250 + $0xa] sm:$0xff]
        %v6080 = vld [vmem:[%s250 + $0x1a] sm:$0xff]
        %v6081 = vld [vmem:[%s250 + $0x22] sm:$0xff]
        %v6082 = vld [vmem:[%s250 + $0x32] sm:$0xff]
        %v6083 = vld [vmem:[%s250 + $0x3a] sm:$0xff]
        %v6084 = vld [vmem:[%s250 + $0x4a] sm:$0xff]
        %v6085 = vld [vmem:[%s250 + $0x52] sm:$0xff]
        %v6086 = vld [vmem:[%s250 + $0x62] sm:$0xff]
        %v6087 = vld [vmem:[%s250 + $0x6a] sm:$0xff]
        %v6088 = vld [vmem:[%s250 + $0x7a] sm:$0xff]
        %v6089 = vld [vmem:[%s250 + $0x82] sm:$0xff]
        %v6090 = vld [vmem:[%s250 + $0x92] sm:$0xff]
        %v6091 = vld [vmem:[%s250 + $0x9a] sm:$0xff]
        %v6092 = vld [vmem:[%s250 + $0xaa] sm:$0xff]
        %v6093 = vld [vmem:[%s250 + $0xb2] sm:$0xff]
        %v6094 = vld [vmem:[%s250 + $0xc2] sm:$0xff]
        %v6095 = vld [vmem:[%s250 + $0xca] sm:$0xff]
        %v6096 = vld [vmem:[%s250 + $0xda] sm:$0xff]
        %v6097 = vld [vmem:[%s250 + $0xe2] sm:$0xff]
        %v6098 = vld [vmem:[%s250 + $0xf2] sm:$0xff]
        %v6099 = vld [vmem:[%s250 + $0xfa] sm:$0xff]
        %v6100 = vld [vmem:[%s250 + $0x10a] sm:$0xff]
        %v6101 = vld [vmem:[%s250 + $0x112] sm:$0xff]
        %v6102 = vld [vmem:[%s250 + $0x122] sm:$0xff]
        %v6103 = vld [vmem:[%s250 + $0x12a] sm:$0xff]
        %v6104 = vld [vmem:[%s250 + $0x13a] sm:$0xff]
        %v6105 = vld [vmem:[%s250 + $0x142] sm:$0xff]
        %v6106 = vld [vmem:[%s250 + $0x152] sm:$0xff]
        %v6107 = vld [vmem:[%s250 + $0x15a] sm:$0xff]
        %v6108 = vld [vmem:[%s250 + $0x16a] sm:$0xff]
        %v6109 = vld [vmem:[%s250 + $0x172] sm:$0xff]
        %s6110 = scalar_lea.vmem [#allocation8], 20
        %v6111 = vld [vmem:[%s6110] sm:$0xf]
        %v6113 = vsel %vm251, %v6078, 0
        %v6116 = vsel %vm251, %v6079, 0
        %v6119 = vsel %vm251, %v6080, 0
        %v6122 = vsel %vm251, %v6081, 0
        %v6125 = vsel %vm251, %v6082, 0
        %v6128 = vsel %vm251, %v6083, 0
        %v6131 = vsel %vm251, %v6084, 0
        %v6134 = vsel %vm251, %v6085, 0
        %v6137 = vsel %vm251, %v6086, 0
        %v6140 = vsel %vm251, %v6087, 0
        %v6143 = vsel %vm251, %v6088, 0
        %v6146 = vsel %vm251, %v6089, 0
        %v6149 = vsel %vm251, %v6090, 0
        %v6152 = vsel %vm251, %v6091, 0
        %v6155 = vsel %vm251, %v6092, 0
        %v6158 = vsel %vm251, %v6093, 0
        %v6161 = vsel %vm251, %v6094, 0
        %v6164 = vsel %vm251, %v6095, 0
        %v6167 = vsel %vm251, %v6096, 0
        %v6170 = vsel %vm251, %v6097, 0
        %v6173 = vsel %vm251, %v6098, 0
        %v6176 = vsel %vm251, %v6099, 0
        %v6179 = vsel %vm251, %v6100, 0
        %v6182 = vsel %vm251, %v6101, 0
        %v6185 = vsel %vm251, %v6102, 0
        %v6188 = vsel %vm251, %v6103, 0
        %v6191 = vsel %vm251, %v6104, 0
        %v6194 = vsel %vm251, %v6105, 0
        %v6197 = vsel %vm251, %v6106, 0
        %v6200 = vsel %vm251, %v6107, 0
        %v6203 = vsel %vm251, %v6108, 0
        %v6206 = vsel %vm251, %v6109, 0
        %v6209 = vsel %vm497, %v6111, 0
        %6211 = vmatprep.subr.mxu0 0.0
        %6212 = vmatpush1.msra.mxu0 %v6209
        %6213 = vmatprep.subr.mxu0 0.0
        %6214 = vmatpush1.msra.mxu0 0.0
        %6215 = vmatprep.subr.mxu0 0.0
        %6216 = vmatpush1.msra.mxu0 0.0
        %6217 = vmatprep.subr.mxu0 0.0
        %6218 = vmatpush1.msra.mxu0 0.0
        %6219 = vmatprep.subr.mxu0 0.0
        %6220 = vmatpush1.msra.mxu0 0.0
        %6221 = vmatprep.subr.mxu0 0.0
        %6222 = vmatpush1.msra.mxu0 0.0
        %6223 = vmatprep.subr.mxu0 0.0
        %6224 = vmatpush1.msra.mxu0 0.0
        %6225 = vmatprep.subr.mxu0 0.0
        %6226 = vmatpush1.msra.mxu0 0.0
        %6227 = vmatprep.subr.mxu0 0.0
        %6228 = vmatpush1.msra.mxu0 0.0
        %6229 = vmatprep.subr.mxu0 0.0
        %6230 = vmatpush1.msra.mxu0 0.0
        %6231 = vmatprep.subr.mxu0 0.0
        %6232 = vmatpush1.msra.mxu0 0.0
        %6233 = vmatprep.subr.mxu0 0.0
        %6234 = vmatpush1.msra.mxu0 0.0
        %6235 = vmatprep.subr.mxu0 0.0
        %6236 = vmatpush1.msra.mxu0 0.0
        %6237 = vmatprep.subr.mxu0 0.0
        %6238 = vmatpush1.msra.mxu0 0.0
        %6239 = vmatprep.subr.mxu0 0.0
        %6240 = vmatpush1.msra.mxu0 0.0
        %6241 = vmatprep.subr.mxu0 0.0
        %6242 = vmatpush1.msra.mxu0 0.0
        %6243 = vmatprep.subr.mxu0 0.0
        %6244 = vmatpush1.msra.mxu0 0.0
        %6245 = vmatprep.subr.mxu0 0.0
        %6246 = vmatpush1.msra.mxu0 0.0
        %6247 = vmatprep.subr.mxu0 0.0
        %6248 = vmatpush1.msra.mxu0 0.0
        %6249 = vmatprep.subr.mxu0 0.0
        %6250 = vmatpush1.msra.mxu0 0.0
        %6251 = vmatprep.subr.mxu0 0.0
        %6252 = vmatpush1.msra.mxu0 0.0
        %6253 = vmatprep.subr.mxu0 0.0
        %6254 = vmatpush1.msra.mxu0 0.0
        %6255 = vmatprep.subr.mxu0 0.0
        %6256 = vmatpush1.msra.mxu0 0.0
        %6257 = vmatprep.subr.mxu0 0.0
        %6258 = vmatpush1.msra.mxu0 0.0
        %6259 = vmatprep.subr.mxu0 0.0
        %6260 = vmatpush1.msra.mxu0 0.0
        %6261 = vmatprep.subr.mxu0 0.0
        %6262 = vmatpush1.msra.mxu0 0.0
        %6263 = vmatprep.subr.mxu0 0.0
        %6264 = vmatpush1.msra.mxu0 0.0
        %6265 = vmatprep.subr.mxu0 0.0
        %6266 = vmatpush1.msra.mxu0 0.0
        %6267 = vmatprep.subr.mxu0 0.0
        %6268 = vmatpush1.msra.mxu0 0.0
        %6269 = vmatprep.subr.mxu0 0.0
        %6270 = vmatpush1.msra.mxu0 0.0
        %6271 = vmatprep.subr.mxu0 0.0
        %6272 = vmatpush1.msra.mxu0 0.0
        %6273 = vmatprep.subr.mxu0 0.0
        %6274 = vmatpush1.msra.mxu0 0.0
        %6275 = vmatprep.mubr.f32.mxu0 0.0
        %6276 = vmatmul.mubr.f32.gmra.mrb[0].mxu0 %v6113
        %v6277 = vpop.f32.mrb[0].mxu0
        %v6278 = vadd.f32 0.0, %v6277
        %v6279 = vpop.f32.mrb[0].mxu0
        %6280 = vmatprep.mubr.f32.mxu0 0.0
        %6281 = vmatmul.mubr.f32.gmra.mrb[0].mxu0 %v6116
        %v6282 = vpop.f32.mrb[0].mxu0
        %v6283 = vadd.f32 0.0, %v6282
        %v6284 = vpop.f32.mrb[0].mxu0
        %6285 = vmatprep.mubr.f32.mxu0 0.0
        %6286 = vmatmul.mubr.f32.gmra.mrb[0].mxu0 %v6119
        %v6287 = vpop.f32.mrb[0].mxu0
        %v6288 = vadd.f32 0.0, %v6287
        %v6289 = vpop.f32.mrb[0].mxu0
        %6290 = vmatprep.mubr.f32.mxu0 0.0
        %6291 = vmatmul.mubr.f32.gmra.mrb[0].mxu0 %v6122
        %v6292 = vpop.f32.mrb[0].mxu0
        %v6293 = vadd.f32 0.0, %v6292
        %v6294 = vpop.f32.mrb[0].mxu0
        %6295 = vmatprep.mubr.f32.mxu0 0.0
        %6296 = vmatmul.mubr.f32.gmra.mrb[0].mxu0 %v6125
        %v6297 = vpop.f32.mrb[0].mxu0
        %v6298 = vadd.f32 0.0, %v6297
        %v6299 = vpop.f32.mrb[0].mxu0
        %6300 = vmatprep.mubr.f32.mxu0 0.0
        %6301 = vmatmul.mubr.f32.gmra.mrb[0].mxu0 %v6128
        %v6302 = vpop.f32.mrb[0].mxu0
        %v6303 = vadd.f32 0.0, %v6302
        %v6304 = vpop.f32.mrb[0].mxu0
        %6305 = vmatprep.mubr.f32.mxu0 0.0
        %6306 = vmatmul.mubr.f32.gmra.mrb[0].mxu0 %v6131
        %v6307 = vpop.f32.mrb[0].mxu0
        %v6308 = vadd.f32 0.0, %v6307
        %v6309 = vpop.f32.mrb[0].mxu0
        %6310 = vmatprep.mubr.f32.mxu0 0.0
        %6311 = vmatmul.mubr.f32.gmra.mrb[0].mxu0 %v6134
        %v6312 = vpop.f32.mrb[0].mxu0
        %v6313 = vadd.f32 0.0, %v6312
        %v6314 = vpop.f32.mrb[0].mxu0
        %6315 = vmatprep.mubr.f32.mxu0 0.0
        %6316 = vmatmul.mubr.f32.gmra.mrb[0].mxu0 %v6137
        %v6317 = vpop.f32.mrb[0].mxu0
        %v6318 = vadd.f32 0.0, %v6317
        %v6319 = vpop.f32.mrb[0].mxu0
        %6320 = vmatprep.mubr.f32.mxu0 0.0
        %6321 = vmatmul.mubr.f32.gmra.mrb[0].mxu0 %v6140
        %v6322 = vpop.f32.mrb[0].mxu0
        %v6323 = vadd.f32 0.0, %v6322
        %v6324 = vpop.f32.mrb[0].mxu0
        %6325 = vmatprep.mubr.f32.mxu0 0.0
        %6326 = vmatmul.mubr.f32.gmra.mrb[0].mxu0 %v6143
        %v6327 = vpop.f32.mrb[0].mxu0
        %v6328 = vadd.f32 0.0, %v6327
        %v6329 = vpop.f32.mrb[0].mxu0
        %6330 = vmatprep.mubr.f32.mxu0 0.0
        %6331 = vmatmul.mubr.f32.gmra.mrb[0].mxu0 %v6146
        %v6332 = vpop.f32.mrb[0].mxu0
        %v6333 = vadd.f32 0.0, %v6332
        %v6334 = vpop.f32.mrb[0].mxu0
        %6335 = vmatprep.mubr.f32.mxu0 0.0
        %6336 = vmatmul.mubr.f32.gmra.mrb[0].mxu0 %v6149
        %v6337 = vpop.f32.mrb[0].mxu0
        %v6338 = vadd.f32 0.0, %v6337
        %v6339 = vpop.f32.mrb[0].mxu0
        %6340 = vmatprep.mubr.f32.mxu0 0.0
        %6341 = vmatmul.mubr.f32.gmra.mrb[0].mxu0 %v6152
        %v6342 = vpop.f32.mrb[0].mxu0
        %v6343 = vadd.f32 0.0, %v6342
        %v6344 = vpop.f32.mrb[0].mxu0
        %6345 = vmatprep.mubr.f32.mxu0 0.0
        %6346 = vmatmul.mubr.f32.gmra.mrb[0].mxu0 %v6155
        %v6347 = vpop.f32.mrb[0].mxu0
        %v6348 = vadd.f32 0.0, %v6347
        %v6349 = vpop.f32.mrb[0].mxu0
        %6350 = vmatprep.mubr.f32.mxu0 0.0
        %6351 = vmatmul.mubr.f32.gmra.mrb[0].mxu0 %v6158
        %v6352 = vpop.f32.mrb[0].mxu0
        %v6353 = vadd.f32 0.0, %v6352
        %v6354 = vpop.f32.mrb[0].mxu0
        %6355 = vmatprep.mubr.f32.mxu0 0.0
        %6356 = vmatmul.mubr.f32.gmra.mrb[0].mxu0 %v6161
        %v6357 = vpop.f32.mrb[0].mxu0
        %v6358 = vadd.f32 0.0, %v6357
        %v6359 = vpop.f32.mrb[0].mxu0
        %6360 = vmatprep.mubr.f32.mxu0 0.0
        %6361 = vmatmul.mubr.f32.gmra.mrb[0].mxu0 %v6164
        %v6362 = vpop.f32.mrb[0].mxu0
        %v6363 = vadd.f32 0.0, %v6362
        %v6364 = vpop.f32.mrb[0].mxu0
        %6365 = vmatprep.mubr.f32.mxu0 0.0
        %6366 = vmatmul.mubr.f32.gmra.mrb[0].mxu0 %v6167
        %v6367 = vpop.f32.mrb[0].mxu0
        %v6368 = vadd.f32 0.0, %v6367
        %v6369 = vpop.f32.mrb[0].mxu0
        %6370 = vmatprep.mubr.f32.mxu0 0.0
        %6371 = vmatmul.mubr.f32.gmra.mrb[0].mxu0 %v6170
        %v6372 = vpop.f32.mrb[0].mxu0
        %v6373 = vadd.f32 0.0, %v6372
        %v6374 = vpop.f32.mrb[0].mxu0
        %6375 = vmatprep.mubr.f32.mxu0 0.0
        %6376 = vmatmul.mubr.f32.gmra.mrb[0].mxu0 %v6173
        %v6377 = vpop.f32.mrb[0].mxu0
        %v6378 = vadd.f32 0.0, %v6377
        %v6379 = vpop.f32.mrb[0].mxu0
        %6380 = vmatprep.mubr.f32.mxu0 0.0
        %6381 = vmatmul.mubr.f32.gmra.mrb[0].mxu0 %v6176
        %v6382 = vpop.f32.mrb[0].mxu0
        %v6383 = vadd.f32 0.0, %v6382
        %v6384 = vpop.f32.mrb[0].mxu0
        %6385 = vmatprep.mubr.f32.mxu0 0.0
        %6386 = vmatmul.mubr.f32.gmra.mrb[0].mxu0 %v6179
        %v6387 = vpop.f32.mrb[0].mxu0
        %v6388 = vadd.f32 0.0, %v6387
        %v6389 = vpop.f32.mrb[0].mxu0
        %6390 = vmatprep.mubr.f32.mxu0 0.0
        %6391 = vmatmul.mubr.f32.gmra.mrb[0].mxu0 %v6182
        %v6392 = vpop.f32.mrb[0].mxu0
        %v6393 = vadd.f32 0.0, %v6392
        %v6394 = vpop.f32.mrb[0].mxu0
        %6395 = vmatprep.mubr.f32.mxu0 0.0
        %6396 = vmatmul.mubr.f32.gmra.mrb[0].mxu0 %v6185
        %v6397 = vpop.f32.mrb[0].mxu0
        %v6398 = vadd.f32 0.0, %v6397
        %v6399 = vpop.f32.mrb[0].mxu0
        %6400 = vmatprep.mubr.f32.mxu0 0.0
        %6401 = vmatmul.mubr.f32.gmra.mrb[0].mxu0 %v6188
        %v6402 = vpop.f32.mrb[0].mxu0
        %v6403 = vadd.f32 0.0, %v6402
        %v6404 = vpop.f32.mrb[0].mxu0
        %6405 = vmatprep.mubr.f32.mxu0 0.0
        %6406 = vmatmul.mubr.f32.gmra.mrb[0].mxu0 %v6191
        %v6407 = vpop.f32.mrb[0].mxu0
        %v6408 = vadd.f32 0.0, %v6407
        %v6409 = vpop.f32.mrb[0].mxu0
        %6410 = vmatprep.mubr.f32.mxu0 0.0
        %6411 = vmatmul.mubr.f32.gmra.mrb[0].mxu0 %v6194
        %v6412 = vpop.f32.mrb[0].mxu0
        %v6413 = vadd.f32 0.0, %v6412
        %v6414 = vpop.f32.mrb[0].mxu0
        %6415 = vmatprep.mubr.f32.mxu0 0.0
        %6416 = vmatmul.mubr.f32.gmra.mrb[0].mxu0 %v6197
        %v6417 = vpop.f32.mrb[0].mxu0
        %v6418 = vadd.f32 0.0, %v6417
        %v6419 = vpop.f32.mrb[0].mxu0
        %6420 = vmatprep.mubr.f32.mxu0 0.0
        %6421 = vmatmul.mubr.f32.gmra.mrb[0].mxu0 %v6200
        %v6422 = vpop.f32.mrb[0].mxu0
        %v6423 = vadd.f32 0.0, %v6422
        %v6424 = vpop.f32.mrb[0].mxu0
        %6425 = vmatprep.mubr.f32.mxu0 0.0
        %6426 = vmatmul.mubr.f32.gmra.mrb[0].mxu0 %v6203
        %v6427 = vpop.f32.mrb[0].mxu0
        %v6428 = vadd.f32 0.0, %v6427
        %v6429 = vpop.f32.mrb[0].mxu0
        %6430 = vmatprep.mubr.f32.mxu0 0.0
        %6431 = vmatmul.mubr.f32.gmra.mrb[0].mxu0 %v6206
        %v6432 = vpop.f32.mrb[0].mxu0
        %v6433 = vadd.f32 0.0, %v6432
        %v6434 = vpop.f32.mrb[0].mxu0
        %6435 = vdwg.mxu0
        %v6436 = vadd.f32 %v6046, %v6278
        %v6437 = vadd.f32 %v6047, %v6283
        %v6438 = vadd.f32 %v6048, %v6288
        %v6439 = vadd.f32 %v6049, %v6293
        %v6440 = vadd.f32 %v6050, %v6298
        %v6441 = vadd.f32 %v6051, %v6303
        %v6442 = vadd.f32 %v6052, %v6308
        %v6443 = vadd.f32 %v6053, %v6313
        %v6444 = vadd.f32 %v6054, %v6318
        %v6445 = vadd.f32 %v6055, %v6323
        %v6446 = vadd.f32 %v6056, %v6328
        %v6447 = vadd.f32 %v6057, %v6333
        %v6448 = vadd.f32 %v6058, %v6338
        %v6449 = vadd.f32 %v6059, %v6343
        %v6450 = vadd.f32 %v6060, %v6348
        %v6451 = vadd.f32 %v6061, %v6353
        %v6452 = vadd.f32 %v6062, %v6358
        %v6453 = vadd.f32 %v6063, %v6363
        %v6454 = vadd.f32 %v6064, %v6368
        %v6455 = vadd.f32 %v6065, %v6373
        %v6456 = vadd.f32 %v6066, %v6378
        %v6457 = vadd.f32 %v6067, %v6383
        %v6458 = vadd.f32 %v6068, %v6388
        %v6459 = vadd.f32 %v6069, %v6393
        %v6460 = vadd.f32 %v6070, %v6398
        %v6461 = vadd.f32 %v6071, %v6403
        %v6462 = vadd.f32 %v6072, %v6408
        %v6463 = vadd.f32 %v6073, %v6413
        %v6464 = vadd.f32 %v6074, %v6418
        %v6465 = vadd.f32 %v6075, %v6423
        %v6466 = vadd.f32 %v6076, %v6428
        %v6467 = vadd.f32 %v6077, %v6433
        %v6468 = vld [vmem:[%s318] sm:$0xff]
        %v6469 = vld [vmem:[%s318 + $0x8] sm:$0xff]
        %v6470 = vld [vmem:[%s318 + $0x18] sm:$0xff]
        %v6471 = vld [vmem:[%s318 + $0x20] sm:$0xff]
        %v6472 = vld [vmem:[%s318 + $0x30] sm:$0xff]
        %v6473 = vld [vmem:[%s318 + $0x38] sm:$0xff]
        %v6474 = vld [vmem:[%s318 + $0x48] sm:$0xff]
        %v6475 = vld [vmem:[%s318 + $0x50] sm:$0xff]
        %v6476 = vld [vmem:[%s318 + $0x60] sm:$0xff]
        %v6477 = vld [vmem:[%s318 + $0x68] sm:$0xff]
        %v6478 = vld [vmem:[%s318 + $0x78] sm:$0xff]
        %v6479 = vld [vmem:[%s318 + $0x80] sm:$0xff]
        %v6480 = vld [vmem:[%s318 + $0x90] sm:$0xff]
        %v6481 = vld [vmem:[%s318 + $0x98] sm:$0xff]
        %v6482 = vld [vmem:[%s318 + $0xa8] sm:$0xff]
        %v6483 = vld [vmem:[%s318 + $0xb0] sm:$0xff]
        %v6484 = vld [vmem:[%s318 + $0xc0] sm:$0xff]
        %v6485 = vld [vmem:[%s318 + $0xc8] sm:$0xff]
        %v6486 = vld [vmem:[%s318 + $0xd8] sm:$0xff]
        %v6487 = vld [vmem:[%s318 + $0xe0] sm:$0xff]
        %v6488 = vld [vmem:[%s318 + $0xf0] sm:$0xff]
        %v6489 = vld [vmem:[%s318 + $0xf8] sm:$0xff]
        %v6490 = vld [vmem:[%s318 + $0x108] sm:$0xff]
        %v6491 = vld [vmem:[%s318 + $0x110] sm:$0xff]
        %v6492 = vld [vmem:[%s318 + $0x120] sm:$0xff]
        %v6493 = vld [vmem:[%s318 + $0x128] sm:$0xff]
        %v6494 = vld [vmem:[%s318 + $0x138] sm:$0xff]
        %v6495 = vld [vmem:[%s318 + $0x140] sm:$0xff]
        %v6496 = vld [vmem:[%s318 + $0x150] sm:$0xff]
        %v6497 = vld [vmem:[%s318 + $0x158] sm:$0xff]
        %v6498 = vld [vmem:[%s318 + $0x168] sm:$0xff]
        %v6499 = vld [vmem:[%s318 + $0x170] sm:$0xff]
        %s6500 = scalar_lea.vmem [#allocation8], 24
        %v6501 = vld [vmem:[%s6500] sm:$0xf]
        %v6503 = vsel %vm251, %v6468, 0
        %v6506 = vsel %vm251, %v6469, 0
        %v6509 = vsel %vm251, %v6470, 0
        %v6512 = vsel %vm251, %v6471, 0
        %v6515 = vsel %vm251, %v6472, 0
        %v6518 = vsel %vm251, %v6473, 0
        %v6521 = vsel %vm251, %v6474, 0
        %v6524 = vsel %vm251, %v6475, 0
        %v6527 = vsel %vm251, %v6476, 0
        %v6530 = vsel %vm251, %v6477, 0
        %v6533 = vsel %vm251, %v6478, 0
        %v6536 = vsel %vm251, %v6479, 0
        %v6539 = vsel %vm251, %v6480, 0
        %v6542 = vsel %vm251, %v6481, 0
        %v6545 = vsel %vm251, %v6482, 0
        %v6548 = vsel %vm251, %v6483, 0
        %v6551 = vsel %vm251, %v6484, 0
        %v6554 = vsel %vm251, %v6485, 0
        %v6557 = vsel %vm251, %v6486, 0
        %v6560 = vsel %vm251, %v6487, 0
        %v6563 = vsel %vm251, %v6488, 0
        %v6566 = vsel %vm251, %v6489, 0
        %v6569 = vsel %vm251, %v6490, 0
        %v6572 = vsel %vm251, %v6491, 0
        %v6575 = vsel %vm251, %v6492, 0
        %v6578 = vsel %vm251, %v6493, 0
        %v6581 = vsel %vm251, %v6494, 0
        %v6584 = vsel %vm251, %v6495, 0
        %v6587 = vsel %vm251, %v6496, 0
        %v6590 = vsel %vm251, %v6497, 0
        %v6593 = vsel %vm251, %v6498, 0
        %v6596 = vsel %vm251, %v6499, 0
        %v6599 = vsel %vm497, %v6501, 0
        %6601 = vmatprep.subr.mxu0 0.0
        %6602 = vmatpush1.msra.mxu0 %v6599
        %6603 = vmatprep.subr.mxu0 0.0
        %6604 = vmatpush1.msra.mxu0 0.0
        %6605 = vmatprep.subr.mxu0 0.0
        %6606 = vmatpush1.msra.mxu0 0.0
        %6607 = vmatprep.subr.mxu0 0.0
        %6608 = vmatpush1.msra.mxu0 0.0
        %6609 = vmatprep.subr.mxu0 0.0
        %6610 = vmatpush1.msra.mxu0 0.0
        %6611 = vmatprep.subr.mxu0 0.0
        %6612 = vmatpush1.msra.mxu0 0.0
        %6613 = vmatprep.subr.mxu0 0.0
        %6614 = vmatpush1.msra.mxu0 0.0
        %6615 = vmatprep.subr.mxu0 0.0
        %6616 = vmatpush1.msra.mxu0 0.0
        %6617 = vmatprep.subr.mxu0 0.0
        %6618 = vmatpush1.msra.mxu0 0.0
        %6619 = vmatprep.subr.mxu0 0.0
        %6620 = vmatpush1.msra.mxu0 0.0
        %6621 = vmatprep.subr.mxu0 0.0
        %6622 = vmatpush1.msra.mxu0 0.0
        %6623 = vmatprep.subr.mxu0 0.0
        %6624 = vmatpush1.msra.mxu0 0.0
        %6625 = vmatprep.subr.mxu0 0.0
        %6626 = vmatpush1.msra.mxu0 0.0
        %6627 = vmatprep.subr.mxu0 0.0
        %6628 = vmatpush1.msra.mxu0 0.0
        %6629 = vmatprep.subr.mxu0 0.0
        %6630 = vmatpush1.msra.mxu0 0.0
        %6631 = vmatprep.subr.mxu0 0.0
        %6632 = vmatpush1.msra.mxu0 0.0
        %6633 = vmatprep.subr.mxu0 0.0
        %6634 = vmatpush1.msra.mxu0 0.0
        %6635 = vmatprep.subr.mxu0 0.0
        %6636 = vmatpush1.msra.mxu0 0.0
        %6637 = vmatprep.subr.mxu0 0.0
        %6638 = vmatpush1.msra.mxu0 0.0
        %6639 = vmatprep.subr.mxu0 0.0
        %6640 = vmatpush1.msra.mxu0 0.0
        %6641 = vmatprep.subr.mxu0 0.0
        %6642 = vmatpush1.msra.mxu0 0.0
        %6643 = vmatprep.subr.mxu0 0.0
        %6644 = vmatpush1.msra.mxu0 0.0
        %6645 = vmatprep.subr.mxu0 0.0
        %6646 = vmatpush1.msra.mxu0 0.0
        %6647 = vmatprep.subr.mxu0 0.0
        %6648 = vmatpush1.msra.mxu0 0.0
        %6649 = vmatprep.subr.mxu0 0.0
        %6650 = vmatpush1.msra.mxu0 0.0
        %6651 = vmatprep.subr.mxu0 0.0
        %6652 = vmatpush1.msra.mxu0 0.0
        %6653 = vmatprep.subr.mxu0 0.0
        %6654 = vmatpush1.msra.mxu0 0.0
        %6655 = vmatprep.subr.mxu0 0.0
        %6656 = vmatpush1.msra.mxu0 0.0
        %6657 = vmatprep.subr.mxu0 0.0
        %6658 = vmatpush1.msra.mxu0 0.0
        %6659 = vmatprep.subr.mxu0 0.0
        %6660 = vmatpush1.msra.mxu0 0.0
        %6661 = vmatprep.subr.mxu0 0.0
        %6662 = vmatpush1.msra.mxu0 0.0
        %6663 = vmatprep.subr.mxu0 0.0
        %6664 = vmatpush1.msra.mxu0 0.0
        %6665 = vmatprep.mubr.f32.mxu0 0.0
        %6666 = vmatmul.mubr.f32.gmra.mrb[0].mxu0 %v6503
        %v6667 = vpop.f32.mrb[0].mxu0
        %v6668 = vadd.f32 0.0, %v6667
        %v6669 = vpop.f32.mrb[0].mxu0
        %6670 = vmatprep.mubr.f32.mxu0 0.0
        %6671 = vmatmul.mubr.f32.gmra.mrb[0].mxu0 %v6506
        %v6672 = vpop.f32.mrb[0].mxu0
        %v6673 = vadd.f32 0.0, %v6672
        %v6674 = vpop.f32.mrb[0].mxu0
        %6675 = vmatprep.mubr.f32.mxu0 0.0
        %6676 = vmatmul.mubr.f32.gmra.mrb[0].mxu0 %v6509
        %v6677 = vpop.f32.mrb[0].mxu0
        %v6678 = vadd.f32 0.0, %v6677
        %v6679 = vpop.f32.mrb[0].mxu0
        %6680 = vmatprep.mubr.f32.mxu0 0.0
        %6681 = vmatmul.mubr.f32.gmra.mrb[0].mxu0 %v6512
        %v6682 = vpop.f32.mrb[0].mxu0
        %v6683 = vadd.f32 0.0, %v6682
        %v6684 = vpop.f32.mrb[0].mxu0
        %6685 = vmatprep.mubr.f32.mxu0 0.0
        %6686 = vmatmul.mubr.f32.gmra.mrb[0].mxu0 %v6515
        %v6687 = vpop.f32.mrb[0].mxu0
        %v6688 = vadd.f32 0.0, %v6687
        %v6689 = vpop.f32.mrb[0].mxu0
        %6690 = vmatprep.mubr.f32.mxu0 0.0
        %6691 = vmatmul.mubr.f32.gmra.mrb[0].mxu0 %v6518
        %v6692 = vpop.f32.mrb[0].mxu0
        %v6693 = vadd.f32 0.0, %v6692
        %v6694 = vpop.f32.mrb[0].mxu0
        %6695 = vmatprep.mubr.f32.mxu0 0.0
        %6696 = vmatmul.mubr.f32.gmra.mrb[0].mxu0 %v6521
        %v6697 = vpop.f32.mrb[0].mxu0
        %v6698 = vadd.f32 0.0, %v6697
        %v6699 = vpop.f32.mrb[0].mxu0
        %6700 = vmatprep.mubr.f32.mxu0 0.0
        %6701 = vmatmul.mubr.f32.gmra.mrb[0].mxu0 %v6524
        %v6702 = vpop.f32.mrb[0].mxu0
        %v6703 = vadd.f32 0.0, %v6702
        %v6704 = vpop.f32.mrb[0].mxu0
        %6705 = vmatprep.mubr.f32.mxu0 0.0
        %6706 = vmatmul.mubr.f32.gmra.mrb[0].mxu0 %v6527
        %v6707 = vpop.f32.mrb[0].mxu0
        %v6708 = vadd.f32 0.0, %v6707
        %v6709 = vpop.f32.mrb[0].mxu0
        %6710 = vmatprep.mubr.f32.mxu0 0.0
        %6711 = vmatmul.mubr.f32.gmra.mrb[0].mxu0 %v6530
        %v6712 = vpop.f32.mrb[0].mxu0
        %v6713 = vadd.f32 0.0, %v6712
        %v6714 = vpop.f32.mrb[0].mxu0
        %6715 = vmatprep.mubr.f32.mxu0 0.0
        %6716 = vmatmul.mubr.f32.gmra.mrb[0].mxu0 %v6533
        %v6717 = vpop.f32.mrb[0].mxu0
        %v6718 = vadd.f32 0.0, %v6717
        %v6719 = vpop.f32.mrb[0].mxu0
        %6720 = vmatprep.mubr.f32.mxu0 0.0
        %6721 = vmatmul.mubr.f32.gmra.mrb[0].mxu0 %v6536
        %v6722 = vpop.f32.mrb[0].mxu0
        %v6723 = vadd.f32 0.0, %v6722
        %v6724 = vpop.f32.mrb[0].mxu0
        %6725 = vmatprep.mubr.f32.mxu0 0.0
        %6726 = vmatmul.mubr.f32.gmra.mrb[0].mxu0 %v6539
        %v6727 = vpop.f32.mrb[0].mxu0
        %v6728 = vadd.f32 0.0, %v6727
        %v6729 = vpop.f32.mrb[0].mxu0
        %6730 = vmatprep.mubr.f32.mxu0 0.0
        %6731 = vmatmul.mubr.f32.gmra.mrb[0].mxu0 %v6542
        %v6732 = vpop.f32.mrb[0].mxu0
        %v6733 = vadd.f32 0.0, %v6732
        %v6734 = vpop.f32.mrb[0].mxu0
        %6735 = vmatprep.mubr.f32.mxu0 0.0
        %6736 = vmatmul.mubr.f32.gmra.mrb[0].mxu0 %v6545
        %v6737 = vpop.f32.mrb[0].mxu0
        %v6738 = vadd.f32 0.0, %v6737
        %v6739 = vpop.f32.mrb[0].mxu0
        %6740 = vmatprep.mubr.f32.mxu0 0.0
        %6741 = vmatmul.mubr.f32.gmra.mrb[0].mxu0 %v6548
        %v6742 = vpop.f32.mrb[0].mxu0
        %v6743 = vadd.f32 0.0, %v6742
        %v6744 = vpop.f32.mrb[0].mxu0
        %6745 = vmatprep.mubr.f32.mxu0 0.0
        %6746 = vmatmul.mubr.f32.gmra.mrb[0].mxu0 %v6551
        %v6747 = vpop.f32.mrb[0].mxu0
        %v6748 = vadd.f32 0.0, %v6747
        %v6749 = vpop.f32.mrb[0].mxu0
        %6750 = vmatprep.mubr.f32.mxu0 0.0
        %6751 = vmatmul.mubr.f32.gmra.mrb[0].mxu0 %v6554
        %v6752 = vpop.f32.mrb[0].mxu0
        %v6753 = vadd.f32 0.0, %v6752
        %v6754 = vpop.f32.mrb[0].mxu0
        %6755 = vmatprep.mubr.f32.mxu0 0.0
        %6756 = vmatmul.mubr.f32.gmra.mrb[0].mxu0 %v6557
        %v6757 = vpop.f32.mrb[0].mxu0
        %v6758 = vadd.f32 0.0, %v6757
        %v6759 = vpop.f32.mrb[0].mxu0
        %6760 = vmatprep.mubr.f32.mxu0 0.0
        %6761 = vmatmul.mubr.f32.gmra.mrb[0].mxu0 %v6560
        %v6762 = vpop.f32.mrb[0].mxu0
        %v6763 = vadd.f32 0.0, %v6762
        %v6764 = vpop.f32.mrb[0].mxu0
        %6765 = vmatprep.mubr.f32.mxu0 0.0
        %6766 = vmatmul.mubr.f32.gmra.mrb[0].mxu0 %v6563
        %v6767 = vpop.f32.mrb[0].mxu0
        %v6768 = vadd.f32 0.0, %v6767
        %v6769 = vpop.f32.mrb[0].mxu0
        %6770 = vmatprep.mubr.f32.mxu0 0.0
        %6771 = vmatmul.mubr.f32.gmra.mrb[0].mxu0 %v6566
        %v6772 = vpop.f32.mrb[0].mxu0
        %v6773 = vadd.f32 0.0, %v6772
        %v6774 = vpop.f32.mrb[0].mxu0
        %6775 = vmatprep.mubr.f32.mxu0 0.0
        %6776 = vmatmul.mubr.f32.gmra.mrb[0].mxu0 %v6569
        %v6777 = vpop.f32.mrb[0].mxu0
        %v6778 = vadd.f32 0.0, %v6777
        %v6779 = vpop.f32.mrb[0].mxu0
        %6780 = vmatprep.mubr.f32.mxu0 0.0
        %6781 = vmatmul.mubr.f32.gmra.mrb[0].mxu0 %v6572
        %v6782 = vpop.f32.mrb[0].mxu0
        %v6783 = vadd.f32 0.0, %v6782
        %v6784 = vpop.f32.mrb[0].mxu0
        %6785 = vmatprep.mubr.f32.mxu0 0.0
        %6786 = vmatmul.mubr.f32.gmra.mrb[0].mxu0 %v6575
        %v6787 = vpop.f32.mrb[0].mxu0
        %v6788 = vadd.f32 0.0, %v6787
        %v6789 = vpop.f32.mrb[0].mxu0
        %6790 = vmatprep.mubr.f32.mxu0 0.0
        %6791 = vmatmul.mubr.f32.gmra.mrb[0].mxu0 %v6578
        %v6792 = vpop.f32.mrb[0].mxu0
        %v6793 = vadd.f32 0.0, %v6792
        %v6794 = vpop.f32.mrb[0].mxu0
        %6795 = vmatprep.mubr.f32.mxu0 0.0
        %6796 = vmatmul.mubr.f32.gmra.mrb[0].mxu0 %v6581
        %v6797 = vpop.f32.mrb[0].mxu0
        %v6798 = vadd.f32 0.0, %v6797
        %v6799 = vpop.f32.mrb[0].mxu0
        %6800 = vmatprep.mubr.f32.mxu0 0.0
        %6801 = vmatmul.mubr.f32.gmra.mrb[0].mxu0 %v6584
        %v6802 = vpop.f32.mrb[0].mxu0
        %v6803 = vadd.f32 0.0, %v6802
        %v6804 = vpop.f32.mrb[0].mxu0
        %6805 = vmatprep.mubr.f32.mxu0 0.0
        %6806 = vmatmul.mubr.f32.gmra.mrb[0].mxu0 %v6587
        %v6807 = vpop.f32.mrb[0].mxu0
        %v6808 = vadd.f32 0.0, %v6807
        %v6809 = vpop.f32.mrb[0].mxu0
        %6810 = vmatprep.mubr.f32.mxu0 0.0
        %6811 = vmatmul.mubr.f32.gmra.mrb[0].mxu0 %v6590
        %v6812 = vpop.f32.mrb[0].mxu0
        %v6813 = vadd.f32 0.0, %v6812
        %v6814 = vpop.f32.mrb[0].mxu0
        %6815 = vmatprep.mubr.f32.mxu0 0.0
        %6816 = vmatmul.mubr.f32.gmra.mrb[0].mxu0 %v6593
        %v6817 = vpop.f32.mrb[0].mxu0
        %v6818 = vadd.f32 0.0, %v6817
        %v6819 = vpop.f32.mrb[0].mxu0
        %6820 = vmatprep.mubr.f32.mxu0 0.0
        %6821 = vmatmul.mubr.f32.gmra.mrb[0].mxu0 %v6596
        %v6822 = vpop.f32.mrb[0].mxu0
        %v6823 = vadd.f32 0.0, %v6822
        %v6824 = vpop.f32.mrb[0].mxu0
        %6825 = vdwg.mxu0
        %v6826 = vadd.f32 %v6436, %v6668
        %v6827 = vadd.f32 %v6437, %v6673
        %v6828 = vadd.f32 %v6438, %v6678
        %v6829 = vadd.f32 %v6439, %v6683
        %v6830 = vadd.f32 %v6440, %v6688
        %v6831 = vadd.f32 %v6441, %v6693
        %v6832 = vadd.f32 %v6442, %v6698
        %v6833 = vadd.f32 %v6443, %v6703
        %v6834 = vadd.f32 %v6444, %v6708
        %v6835 = vadd.f32 %v6445, %v6713
        %v6836 = vadd.f32 %v6446, %v6718
        %v6837 = vadd.f32 %v6447, %v6723
        %v6838 = vadd.f32 %v6448, %v6728
        %v6839 = vadd.f32 %v6449, %v6733
        %v6840 = vadd.f32 %v6450, %v6738
        %v6841 = vadd.f32 %v6451, %v6743
        %v6842 = vadd.f32 %v6452, %v6748
        %v6843 = vadd.f32 %v6453, %v6753
        %v6844 = vadd.f32 %v6454, %v6758
        %v6845 = vadd.f32 %v6455, %v6763
        %v6846 = vadd.f32 %v6456, %v6768
        %v6847 = vadd.f32 %v6457, %v6773
        %v6848 = vadd.f32 %v6458, %v6778
        %v6849 = vadd.f32 %v6459, %v6783
        %v6850 = vadd.f32 %v6460, %v6788
        %v6851 = vadd.f32 %v6461, %v6793
        %v6852 = vadd.f32 %v6462, %v6798
        %v6853 = vadd.f32 %v6463, %v6803
        %v6854 = vadd.f32 %v6464, %v6808
        %v6855 = vadd.f32 %v6465, %v6813
        %v6856 = vadd.f32 %v6466, %v6818
        %v6857 = vadd.f32 %v6467, %v6823
        %v6858 = vld [vmem:[%s318 + $0x1] sm:$0xff]
        %v6859 = vld [vmem:[%s318 + $0x9] sm:$0xff]
        %v6860 = vld [vmem:[%s318 + $0x19] sm:$0xff]
        %v6861 = vld [vmem:[%s318 + $0x21] sm:$0xff]
        %v6862 = vld [vmem:[%s318 + $0x31] sm:$0xff]
        %v6863 = vld [vmem:[%s318 + $0x39] sm:$0xff]
        %v6864 = vld [vmem:[%s318 + $0x49] sm:$0xff]
        %v6865 = vld [vmem:[%s318 + $0x51] sm:$0xff]
        %v6866 = vld [vmem:[%s318 + $0x61] sm:$0xff]
        %v6867 = vld [vmem:[%s318 + $0x69] sm:$0xff]
        %v6868 = vld [vmem:[%s318 + $0x79] sm:$0xff]
        %v6869 = vld [vmem:[%s318 + $0x81] sm:$0xff]
        %v6870 = vld [vmem:[%s318 + $0x91] sm:$0xff]
        %v6871 = vld [vmem:[%s318 + $0x99] sm:$0xff]
        %v6872 = vld [vmem:[%s318 + $0xa9] sm:$0xff]
        %v6873 = vld [vmem:[%s318 + $0xb1] sm:$0xff]
        %v6874 = vld [vmem:[%s318 + $0xc1] sm:$0xff]
        %v6875 = vld [vmem:[%s318 + $0xc9] sm:$0xff]
        %v6876 = vld [vmem:[%s318 + $0xd9] sm:$0xff]
        %v6877 = vld [vmem:[%s318 + $0xe1] sm:$0xff]
        %v6878 = vld [vmem:[%s318 + $0xf1] sm:$0xff]
        %v6879 = vld [vmem:[%s318 + $0xf9] sm:$0xff]
        %v6880 = vld [vmem:[%s318 + $0x109] sm:$0xff]
        %v6881 = vld [vmem:[%s318 + $0x111] sm:$0xff]
        %v6882 = vld [vmem:[%s318 + $0x121] sm:$0xff]
        %v6883 = vld [vmem:[%s318 + $0x129] sm:$0xff]
        %v6884 = vld [vmem:[%s318 + $0x139] sm:$0xff]
        %v6885 = vld [vmem:[%s318 + $0x141] sm:$0xff]
        %v6886 = vld [vmem:[%s318 + $0x151] sm:$0xff]
        %v6887 = vld [vmem:[%s318 + $0x159] sm:$0xff]
        %v6888 = vld [vmem:[%s318 + $0x169] sm:$0xff]
        %v6889 = vld [vmem:[%s318 + $0x171] sm:$0xff]
        %s6890 = scalar_lea.vmem [#allocation8], 28
        %v6891 = vld [vmem:[%s6890] sm:$0xf]
        %v6893 = vsel %vm251, %v6858, 0
        %v6896 = vsel %vm251, %v6859, 0
        %v6899 = vsel %vm251, %v6860, 0
        %v6902 = vsel %vm251, %v6861, 0
        %v6905 = vsel %vm251, %v6862, 0
        %v6908 = vsel %vm251, %v6863, 0
        %v6911 = vsel %vm251, %v6864, 0
        %v6914 = vsel %vm251, %v6865, 0
        %v6917 = vsel %vm251, %v6866, 0
        %v6920 = vsel %vm251, %v6867, 0
        %v6923 = vsel %vm251, %v6868, 0
        %v6926 = vsel %vm251, %v6869, 0
        %v6929 = vsel %vm251, %v6870, 0
        %v6932 = vsel %vm251, %v6871, 0
        %v6935 = vsel %vm251, %v6872, 0
        %v6938 = vsel %vm251, %v6873, 0
        %v6941 = vsel %vm251, %v6874, 0
        %v6944 = vsel %vm251, %v6875, 0
        %v6947 = vsel %vm251, %v6876, 0
        %v6950 = vsel %vm251, %v6877, 0
        %v6953 = vsel %vm251, %v6878, 0
        %v6956 = vsel %vm251, %v6879, 0
        %v6959 = vsel %vm251, %v6880, 0
        %v6962 = vsel %vm251, %v6881, 0
        %v6965 = vsel %vm251, %v6882, 0
        %v6968 = vsel %vm251, %v6883, 0
        %v6971 = vsel %vm251, %v6884, 0
        %v6974 = vsel %vm251, %v6885, 0
        %v6977 = vsel %vm251, %v6886, 0
        %v6980 = vsel %vm251, %v6887, 0
        %v6983 = vsel %vm251, %v6888, 0
        %v6986 = vsel %vm251, %v6889, 0
        %v6989 = vsel %vm497, %v6891, 0
        %6991 = vmatprep.subr.mxu0 0.0
        %6992 = vmatpush1.msra.mxu0 %v6989
        %6993 = vmatprep.subr.mxu0 0.0
        %6994 = vmatpush1.msra.mxu0 0.0
        %6995 = vmatprep.subr.mxu0 0.0
        %6996 = vmatpush1.msra.mxu0 0.0
        %6997 = vmatprep.subr.mxu0 0.0
        %6998 = vmatpush1.msra.mxu0 0.0
        %6999 = vmatprep.subr.mxu0 0.0
        %7000 = vmatpush1.msra.mxu0 0.0
        %7001 = vmatprep.subr.mxu0 0.0
        %7002 = vmatpush1.msra.mxu0 0.0
        %7003 = vmatprep.subr.mxu0 0.0
        %7004 = vmatpush1.msra.mxu0 0.0
        %7005 = vmatprep.subr.mxu0 0.0
        %7006 = vmatpush1.msra.mxu0 0.0
        %7007 = vmatprep.subr.mxu0 0.0
        %7008 = vmatpush1.msra.mxu0 0.0
        %7009 = vmatprep.subr.mxu0 0.0
        %7010 = vmatpush1.msra.mxu0 0.0
        %7011 = vmatprep.subr.mxu0 0.0
        %7012 = vmatpush1.msra.mxu0 0.0
        %7013 = vmatprep.subr.mxu0 0.0
        %7014 = vmatpush1.msra.mxu0 0.0
        %7015 = vmatprep.subr.mxu0 0.0
        %7016 = vmatpush1.msra.mxu0 0.0
        %7017 = vmatprep.subr.mxu0 0.0
        %7018 = vmatpush1.msra.mxu0 0.0
        %7019 = vmatprep.subr.mxu0 0.0
        %7020 = vmatpush1.msra.mxu0 0.0
        %7021 = vmatprep.subr.mxu0 0.0
        %7022 = vmatpush1.msra.mxu0 0.0
        %7023 = vmatprep.subr.mxu0 0.0
        %7024 = vmatpush1.msra.mxu0 0.0
        %7025 = vmatprep.subr.mxu0 0.0
        %7026 = vmatpush1.msra.mxu0 0.0
        %7027 = vmatprep.subr.mxu0 0.0
        %7028 = vmatpush1.msra.mxu0 0.0
        %7029 = vmatprep.subr.mxu0 0.0
        %7030 = vmatpush1.msra.mxu0 0.0
        %7031 = vmatprep.subr.mxu0 0.0
        %7032 = vmatpush1.msra.mxu0 0.0
        %7033 = vmatprep.subr.mxu0 0.0
        %7034 = vmatpush1.msra.mxu0 0.0
        %7035 = vmatprep.subr.mxu0 0.0
        %7036 = vmatpush1.msra.mxu0 0.0
        %7037 = vmatprep.subr.mxu0 0.0
        %7038 = vmatpush1.msra.mxu0 0.0
        %7039 = vmatprep.subr.mxu0 0.0
        %7040 = vmatpush1.msra.mxu0 0.0
        %7041 = vmatprep.subr.mxu0 0.0
        %7042 = vmatpush1.msra.mxu0 0.0
        %7043 = vmatprep.subr.mxu0 0.0
        %7044 = vmatpush1.msra.mxu0 0.0
        %7045 = vmatprep.subr.mxu0 0.0
        %7046 = vmatpush1.msra.mxu0 0.0
        %7047 = vmatprep.subr.mxu0 0.0
        %7048 = vmatpush1.msra.mxu0 0.0
        %7049 = vmatprep.subr.mxu0 0.0
        %7050 = vmatpush1.msra.mxu0 0.0
        %7051 = vmatprep.subr.mxu0 0.0
        %7052 = vmatpush1.msra.mxu0 0.0
        %7053 = vmatprep.subr.mxu0 0.0
        %7054 = vmatpush1.msra.mxu0 0.0
        %7055 = vmatprep.mubr.f32.mxu0 0.0
        %7056 = vmatmul.mubr.f32.gmra.mrb[0].mxu0 %v6893
        %v7057 = vpop.f32.mrb[0].mxu0
        %v7058 = vadd.f32 0.0, %v7057
        %v7059 = vpop.f32.mrb[0].mxu0
        %7060 = vmatprep.mubr.f32.mxu0 0.0
        %7061 = vmatmul.mubr.f32.gmra.mrb[0].mxu0 %v6896
        %v7062 = vpop.f32.mrb[0].mxu0
        %v7063 = vadd.f32 0.0, %v7062
        %v7064 = vpop.f32.mrb[0].mxu0
        %7065 = vmatprep.mubr.f32.mxu0 0.0
        %7066 = vmatmul.mubr.f32.gmra.mrb[0].mxu0 %v6899
        %v7067 = vpop.f32.mrb[0].mxu0
        %v7068 = vadd.f32 0.0, %v7067
        %v7069 = vpop.f32.mrb[0].mxu0
        %7070 = vmatprep.mubr.f32.mxu0 0.0
        %7071 = vmatmul.mubr.f32.gmra.mrb[0].mxu0 %v6902
        %v7072 = vpop.f32.mrb[0].mxu0
        %v7073 = vadd.f32 0.0, %v7072
        %v7074 = vpop.f32.mrb[0].mxu0
        %7075 = vmatprep.mubr.f32.mxu0 0.0
        %7076 = vmatmul.mubr.f32.gmra.mrb[0].mxu0 %v6905
        %v7077 = vpop.f32.mrb[0].mxu0
        %v7078 = vadd.f32 0.0, %v7077
        %v7079 = vpop.f32.mrb[0].mxu0
        %7080 = vmatprep.mubr.f32.mxu0 0.0
        %7081 = vmatmul.mubr.f32.gmra.mrb[0].mxu0 %v6908
        %v7082 = vpop.f32.mrb[0].mxu0
        %v7083 = vadd.f32 0.0, %v7082
        %v7084 = vpop.f32.mrb[0].mxu0
        %7085 = vmatprep.mubr.f32.mxu0 0.0
        %7086 = vmatmul.mubr.f32.gmra.mrb[0].mxu0 %v6911
        %v7087 = vpop.f32.mrb[0].mxu0
        %v7088 = vadd.f32 0.0, %v7087
        %v7089 = vpop.f32.mrb[0].mxu0
        %7090 = vmatprep.mubr.f32.mxu0 0.0
        %7091 = vmatmul.mubr.f32.gmra.mrb[0].mxu0 %v6914
        %v7092 = vpop.f32.mrb[0].mxu0
        %v7093 = vadd.f32 0.0, %v7092
        %v7094 = vpop.f32.mrb[0].mxu0
        %7095 = vmatprep.mubr.f32.mxu0 0.0
        %7096 = vmatmul.mubr.f32.gmra.mrb[0].mxu0 %v6917
        %v7097 = vpop.f32.mrb[0].mxu0
        %v7098 = vadd.f32 0.0, %v7097
        %v7099 = vpop.f32.mrb[0].mxu0
        %7100 = vmatprep.mubr.f32.mxu0 0.0
        %7101 = vmatmul.mubr.f32.gmra.mrb[0].mxu0 %v6920
        %v7102 = vpop.f32.mrb[0].mxu0
        %v7103 = vadd.f32 0.0, %v7102
        %v7104 = vpop.f32.mrb[0].mxu0
        %7105 = vmatprep.mubr.f32.mxu0 0.0
        %7106 = vmatmul.mubr.f32.gmra.mrb[0].mxu0 %v6923
        %v7107 = vpop.f32.mrb[0].mxu0
        %v7108 = vadd.f32 0.0, %v7107
        %v7109 = vpop.f32.mrb[0].mxu0
        %7110 = vmatprep.mubr.f32.mxu0 0.0
        %7111 = vmatmul.mubr.f32.gmra.mrb[0].mxu0 %v6926
        %v7112 = vpop.f32.mrb[0].mxu0
        %v7113 = vadd.f32 0.0, %v7112
        %v7114 = vpop.f32.mrb[0].mxu0
        %7115 = vmatprep.mubr.f32.mxu0 0.0
        %7116 = vmatmul.mubr.f32.gmra.mrb[0].mxu0 %v6929
        %v7117 = vpop.f32.mrb[0].mxu0
        %v7118 = vadd.f32 0.0, %v7117
        %v7119 = vpop.f32.mrb[0].mxu0
        %7120 = vmatprep.mubr.f32.mxu0 0.0
        %7121 = vmatmul.mubr.f32.gmra.mrb[0].mxu0 %v6932
        %v7122 = vpop.f32.mrb[0].mxu0
        %v7123 = vadd.f32 0.0, %v7122
        %v7124 = vpop.f32.mrb[0].mxu0
        %7125 = vmatprep.mubr.f32.mxu0 0.0
        %7126 = vmatmul.mubr.f32.gmra.mrb[0].mxu0 %v6935
        %v7127 = vpop.f32.mrb[0].mxu0
        %v7128 = vadd.f32 0.0, %v7127
        %v7129 = vpop.f32.mrb[0].mxu0
        %7130 = vmatprep.mubr.f32.mxu0 0.0
        %7131 = vmatmul.mubr.f32.gmra.mrb[0].mxu0 %v6938
        %v7132 = vpop.f32.mrb[0].mxu0
        %v7133 = vadd.f32 0.0, %v7132
        %v7134 = vpop.f32.mrb[0].mxu0
        %7135 = vmatprep.mubr.f32.mxu0 0.0
        %7136 = vmatmul.mubr.f32.gmra.mrb[0].mxu0 %v6941
        %v7137 = vpop.f32.mrb[0].mxu0
        %v7138 = vadd.f32 0.0, %v7137
        %v7139 = vpop.f32.mrb[0].mxu0
        %7140 = vmatprep.mubr.f32.mxu0 0.0
        %7141 = vmatmul.mubr.f32.gmra.mrb[0].mxu0 %v6944
        %v7142 = vpop.f32.mrb[0].mxu0
        %v7143 = vadd.f32 0.0, %v7142
        %v7144 = vpop.f32.mrb[0].mxu0
        %7145 = vmatprep.mubr.f32.mxu0 0.0
        %7146 = vmatmul.mubr.f32.gmra.mrb[0].mxu0 %v6947
        %v7147 = vpop.f32.mrb[0].mxu0
        %v7148 = vadd.f32 0.0, %v7147
        %v7149 = vpop.f32.mrb[0].mxu0
        %7150 = vmatprep.mubr.f32.mxu0 0.0
        %7151 = vmatmul.mubr.f32.gmra.mrb[0].mxu0 %v6950
        %v7152 = vpop.f32.mrb[0].mxu0
        %v7153 = vadd.f32 0.0, %v7152
        %v7154 = vpop.f32.mrb[0].mxu0
        %7155 = vmatprep.mubr.f32.mxu0 0.0
        %7156 = vmatmul.mubr.f32.gmra.mrb[0].mxu0 %v6953
        %v7157 = vpop.f32.mrb[0].mxu0
        %v7158 = vadd.f32 0.0, %v7157
        %v7159 = vpop.f32.mrb[0].mxu0
        %7160 = vmatprep.mubr.f32.mxu0 0.0
        %7161 = vmatmul.mubr.f32.gmra.mrb[0].mxu0 %v6956
        %v7162 = vpop.f32.mrb[0].mxu0
        %v7163 = vadd.f32 0.0, %v7162
        %v7164 = vpop.f32.mrb[0].mxu0
        %7165 = vmatprep.mubr.f32.mxu0 0.0
        %7166 = vmatmul.mubr.f32.gmra.mrb[0].mxu0 %v6959
        %v7167 = vpop.f32.mrb[0].mxu0
        %v7168 = vadd.f32 0.0, %v7167
        %v7169 = vpop.f32.mrb[0].mxu0
        %7170 = vmatprep.mubr.f32.mxu0 0.0
        %7171 = vmatmul.mubr.f32.gmra.mrb[0].mxu0 %v6962
        %v7172 = vpop.f32.mrb[0].mxu0
        %v7173 = vadd.f32 0.0, %v7172
        %v7174 = vpop.f32.mrb[0].mxu0
        %7175 = vmatprep.mubr.f32.mxu0 0.0
        %7176 = vmatmul.mubr.f32.gmra.mrb[0].mxu0 %v6965
        %v7177 = vpop.f32.mrb[0].mxu0
        %v7178 = vadd.f32 0.0, %v7177
        %v7179 = vpop.f32.mrb[0].mxu0
        %7180 = vmatprep.mubr.f32.mxu0 0.0
        %7181 = vmatmul.mubr.f32.gmra.mrb[0].mxu0 %v6968
        %v7182 = vpop.f32.mrb[0].mxu0
        %v7183 = vadd.f32 0.0, %v7182
        %v7184 = vpop.f32.mrb[0].mxu0
        %7185 = vmatprep.mubr.f32.mxu0 0.0
        %7186 = vmatmul.mubr.f32.gmra.mrb[0].mxu0 %v6971
        %v7187 = vpop.f32.mrb[0].mxu0
        %v7188 = vadd.f32 0.0, %v7187
        %v7189 = vpop.f32.mrb[0].mxu0
        %7190 = vmatprep.mubr.f32.mxu0 0.0
        %7191 = vmatmul.mubr.f32.gmra.mrb[0].mxu0 %v6974
        %v7192 = vpop.f32.mrb[0].mxu0
        %v7193 = vadd.f32 0.0, %v7192
        %v7194 = vpop.f32.mrb[0].mxu0
        %7195 = vmatprep.mubr.f32.mxu0 0.0
        %7196 = vmatmul.mubr.f32.gmra.mrb[0].mxu0 %v6977
        %v7197 = vpop.f32.mrb[0].mxu0
        %v7198 = vadd.f32 0.0, %v7197
        %v7199 = vpop.f32.mrb[0].mxu0
        %7200 = vmatprep.mubr.f32.mxu0 0.0
        %7201 = vmatmul.mubr.f32.gmra.mrb[0].mxu0 %v6980
        %v7202 = vpop.f32.mrb[0].mxu0
        %v7203 = vadd.f32 0.0, %v7202
        %v7204 = vpop.f32.mrb[0].mxu0
        %7205 = vmatprep.mubr.f32.mxu0 0.0
        %7206 = vmatmul.mubr.f32.gmra.mrb[0].mxu0 %v6983
        %v7207 = vpop.f32.mrb[0].mxu0
        %v7208 = vadd.f32 0.0, %v7207
        %v7209 = vpop.f32.mrb[0].mxu0
        %7210 = vmatprep.mubr.f32.mxu0 0.0
        %7211 = vmatmul.mubr.f32.gmra.mrb[0].mxu0 %v6986
        %v7212 = vpop.f32.mrb[0].mxu0
        %v7213 = vadd.f32 0.0, %v7212
        %v7214 = vpop.f32.mrb[0].mxu0
        %7215 = vdwg.mxu0
        %v7216 = vadd.f32 %v6826, %v7058
        %v7217 = vadd.f32 %v6827, %v7063
        %v7218 = vadd.f32 %v6828, %v7068
        %v7219 = vadd.f32 %v6829, %v7073
        %v7220 = vadd.f32 %v6830, %v7078
        %v7221 = vadd.f32 %v6831, %v7083
        %v7222 = vadd.f32 %v6832, %v7088
        %v7223 = vadd.f32 %v6833, %v7093
        %v7224 = vadd.f32 %v6834, %v7098
        %v7225 = vadd.f32 %v6835, %v7103
        %v7226 = vadd.f32 %v6836, %v7108
        %v7227 = vadd.f32 %v6837, %v7113
        %v7228 = vadd.f32 %v6838, %v7118
        %v7229 = vadd.f32 %v6839, %v7123
        %v7230 = vadd.f32 %v6840, %v7128
        %v7231 = vadd.f32 %v6841, %v7133
        %v7232 = vadd.f32 %v6842, %v7138
        %v7233 = vadd.f32 %v6843, %v7143
        %v7234 = vadd.f32 %v6844, %v7148
        %v7235 = vadd.f32 %v6845, %v7153
        %v7236 = vadd.f32 %v6846, %v7158
        %v7237 = vadd.f32 %v6847, %v7163
        %v7238 = vadd.f32 %v6848, %v7168
        %v7239 = vadd.f32 %v6849, %v7173
        %v7240 = vadd.f32 %v6850, %v7178
        %v7241 = vadd.f32 %v6851, %v7183
        %v7242 = vadd.f32 %v6852, %v7188
        %v7243 = vadd.f32 %v6853, %v7193
        %v7244 = vadd.f32 %v6854, %v7198
        %v7245 = vadd.f32 %v6855, %v7203
        %v7246 = vadd.f32 %v6856, %v7208
        %v7247 = vadd.f32 %v6857, %v7213
        %v7248 = vld [vmem:[%s318 + $0x2] sm:$0xff]
        %v7249 = vld [vmem:[%s318 + $0xa] sm:$0xff]
        %v7250 = vld [vmem:[%s318 + $0x1a] sm:$0xff]
        %v7251 = vld [vmem:[%s318 + $0x22] sm:$0xff]
        %v7252 = vld [vmem:[%s318 + $0x32] sm:$0xff]
        %v7253 = vld [vmem:[%s318 + $0x3a] sm:$0xff]
        %v7254 = vld [vmem:[%s318 + $0x4a] sm:$0xff]
        %v7255 = vld [vmem:[%s318 + $0x52] sm:$0xff]
        %v7256 = vld [vmem:[%s318 + $0x62] sm:$0xff]
        %v7257 = vld [vmem:[%s318 + $0x6a] sm:$0xff]
        %v7258 = vld [vmem:[%s318 + $0x7a] sm:$0xff]
        %v7259 = vld [vmem:[%s318 + $0x82] sm:$0xff]
        %v7260 = vld [vmem:[%s318 + $0x92] sm:$0xff]
        %v7261 = vld [vmem:[%s318 + $0x9a] sm:$0xff]
        %v7262 = vld [vmem:[%s318 + $0xaa] sm:$0xff]
        %v7263 = vld [vmem:[%s318 + $0xb2] sm:$0xff]
        %v7264 = vld [vmem:[%s318 + $0xc2] sm:$0xff]
        %v7265 = vld [vmem:[%s318 + $0xca] sm:$0xff]
        %v7266 = vld [vmem:[%s318 + $0xda] sm:$0xff]
        %v7267 = vld [vmem:[%s318 + $0xe2] sm:$0xff]
        %v7268 = vld [vmem:[%s318 + $0xf2] sm:$0xff]
        %v7269 = vld [vmem:[%s318 + $0xfa] sm:$0xff]
        %v7270 = vld [vmem:[%s318 + $0x10a] sm:$0xff]
        %v7271 = vld [vmem:[%s318 + $0x112] sm:$0xff]
        %v7272 = vld [vmem:[%s318 + $0x122] sm:$0xff]
        %v7273 = vld [vmem:[%s318 + $0x12a] sm:$0xff]
        %v7274 = vld [vmem:[%s318 + $0x13a] sm:$0xff]
        %v7275 = vld [vmem:[%s318 + $0x142] sm:$0xff]
        %v7276 = vld [vmem:[%s318 + $0x152] sm:$0xff]
        %v7277 = vld [vmem:[%s318 + $0x15a] sm:$0xff]
        %v7278 = vld [vmem:[%s318 + $0x16a] sm:$0xff]
        %v7279 = vld [vmem:[%s318 + $0x172] sm:$0xff]
        %s7280 = scalar_lea.vmem [#allocation8], 32
        %v7281 = vld [vmem:[%s7280] sm:$0xf]
        %v7283 = vsel %vm251, %v7248, 0
        %v7286 = vsel %vm251, %v7249, 0
        %v7289 = vsel %vm251, %v7250, 0
        %v7292 = vsel %vm251, %v7251, 0
        %v7295 = vsel %vm251, %v7252, 0
        %v7298 = vsel %vm251, %v7253, 0
        %v7301 = vsel %vm251, %v7254, 0
        %v7304 = vsel %vm251, %v7255, 0
        %v7307 = vsel %vm251, %v7256, 0
        %v7310 = vsel %vm251, %v7257, 0
        %v7313 = vsel %vm251, %v7258, 0
        %v7316 = vsel %vm251, %v7259, 0
        %v7319 = vsel %vm251, %v7260, 0
        %v7322 = vsel %vm251, %v7261, 0
        %v7325 = vsel %vm251, %v7262, 0
        %v7328 = vsel %vm251, %v7263, 0
        %v7331 = vsel %vm251, %v7264, 0
        %v7334 = vsel %vm251, %v7265, 0
        %v7337 = vsel %vm251, %v7266, 0
        %v7340 = vsel %vm251, %v7267, 0
        %v7343 = vsel %vm251, %v7268, 0
        %v7346 = vsel %vm251, %v7269, 0
        %v7349 = vsel %vm251, %v7270, 0
        %v7352 = vsel %vm251, %v7271, 0
        %v7355 = vsel %vm251, %v7272, 0
        %v7358 = vsel %vm251, %v7273, 0
        %v7361 = vsel %vm251, %v7274, 0
        %v7364 = vsel %vm251, %v7275, 0
        %v7367 = vsel %vm251, %v7276, 0
        %v7370 = vsel %vm251, %v7277, 0
        %v7373 = vsel %vm251, %v7278, 0
        %v7376 = vsel %vm251, %v7279, 0
        %v7379 = vsel %vm497, %v7281, 0
        %7381 = vmatprep.subr.mxu0 0.0
        %7382 = vmatpush1.msra.mxu0 %v7379
        %7383 = vmatprep.subr.mxu0 0.0
        %7384 = vmatpush1.msra.mxu0 0.0
        %7385 = vmatprep.subr.mxu0 0.0
        %7386 = vmatpush1.msra.mxu0 0.0
        %7387 = vmatprep.subr.mxu0 0.0
        %7388 = vmatpush1.msra.mxu0 0.0
        %7389 = vmatprep.subr.mxu0 0.0
        %7390 = vmatpush1.msra.mxu0 0.0
        %7391 = vmatprep.subr.mxu0 0.0
        %7392 = vmatpush1.msra.mxu0 0.0
        %7393 = vmatprep.subr.mxu0 0.0
        %7394 = vmatpush1.msra.mxu0 0.0
        %7395 = vmatprep.subr.mxu0 0.0
        %7396 = vmatpush1.msra.mxu0 0.0
        %7397 = vmatprep.subr.mxu0 0.0
        %7398 = vmatpush1.msra.mxu0 0.0
        %7399 = vmatprep.subr.mxu0 0.0
        %7400 = vmatpush1.msra.mxu0 0.0
        %7401 = vmatprep.subr.mxu0 0.0
        %7402 = vmatpush1.msra.mxu0 0.0
        %7403 = vmatprep.subr.mxu0 0.0
        %7404 = vmatpush1.msra.mxu0 0.0
        %7405 = vmatprep.subr.mxu0 0.0
        %7406 = vmatpush1.msra.mxu0 0.0
        %7407 = vmatprep.subr.mxu0 0.0
        %7408 = vmatpush1.msra.mxu0 0.0
        %7409 = vmatprep.subr.mxu0 0.0
        %7410 = vmatpush1.msra.mxu0 0.0
        %7411 = vmatprep.subr.mxu0 0.0
        %7412 = vmatpush1.msra.mxu0 0.0
        %7413 = vmatprep.subr.mxu0 0.0
        %7414 = vmatpush1.msra.mxu0 0.0
        %7415 = vmatprep.subr.mxu0 0.0
        %7416 = vmatpush1.msra.mxu0 0.0
        %7417 = vmatprep.subr.mxu0 0.0
        %7418 = vmatpush1.msra.mxu0 0.0
        %7419 = vmatprep.subr.mxu0 0.0
        %7420 = vmatpush1.msra.mxu0 0.0
        %7421 = vmatprep.subr.mxu0 0.0
        %7422 = vmatpush1.msra.mxu0 0.0
        %7423 = vmatprep.subr.mxu0 0.0
        %7424 = vmatpush1.msra.mxu0 0.0
        %7425 = vmatprep.subr.mxu0 0.0
        %7426 = vmatpush1.msra.mxu0 0.0
        %7427 = vmatprep.subr.mxu0 0.0
        %7428 = vmatpush1.msra.mxu0 0.0
        %7429 = vmatprep.subr.mxu0 0.0
        %7430 = vmatpush1.msra.mxu0 0.0
        %7431 = vmatprep.subr.mxu0 0.0
        %7432 = vmatpush1.msra.mxu0 0.0
        %7433 = vmatprep.subr.mxu0 0.0
        %7434 = vmatpush1.msra.mxu0 0.0
        %7435 = vmatprep.subr.mxu0 0.0
        %7436 = vmatpush1.msra.mxu0 0.0
        %7437 = vmatprep.subr.mxu0 0.0
        %7438 = vmatpush1.msra.mxu0 0.0
        %7439 = vmatprep.subr.mxu0 0.0
        %7440 = vmatpush1.msra.mxu0 0.0
        %7441 = vmatprep.subr.mxu0 0.0
        %7442 = vmatpush1.msra.mxu0 0.0
        %7443 = vmatprep.subr.mxu0 0.0
        %7444 = vmatpush1.msra.mxu0 0.0
        %7445 = vmatprep.mubr.f32.mxu0 0.0
        %7446 = vmatmul.mubr.f32.gmra.mrb[0].mxu0 %v7283
        %v7447 = vpop.f32.mrb[0].mxu0
        %v7448 = vadd.f32 0.0, %v7447
        %v7449 = vpop.f32.mrb[0].mxu0
        %7450 = vmatprep.mubr.f32.mxu0 0.0
        %7451 = vmatmul.mubr.f32.gmra.mrb[0].mxu0 %v7286
        %v7452 = vpop.f32.mrb[0].mxu0
        %v7453 = vadd.f32 0.0, %v7452
        %v7454 = vpop.f32.mrb[0].mxu0
        %7455 = vmatprep.mubr.f32.mxu0 0.0
        %7456 = vmatmul.mubr.f32.gmra.mrb[0].mxu0 %v7289
        %v7457 = vpop.f32.mrb[0].mxu0
        %v7458 = vadd.f32 0.0, %v7457
        %v7459 = vpop.f32.mrb[0].mxu0
        %7460 = vmatprep.mubr.f32.mxu0 0.0
        %7461 = vmatmul.mubr.f32.gmra.mrb[0].mxu0 %v7292
        %v7462 = vpop.f32.mrb[0].mxu0
        %v7463 = vadd.f32 0.0, %v7462
        %v7464 = vpop.f32.mrb[0].mxu0
        %7465 = vmatprep.mubr.f32.mxu0 0.0
        %7466 = vmatmul.mubr.f32.gmra.mrb[0].mxu0 %v7295
        %v7467 = vpop.f32.mrb[0].mxu0
        %v7468 = vadd.f32 0.0, %v7467
        %v7469 = vpop.f32.mrb[0].mxu0
        %7470 = vmatprep.mubr.f32.mxu0 0.0
        %7471 = vmatmul.mubr.f32.gmra.mrb[0].mxu0 %v7298
        %v7472 = vpop.f32.mrb[0].mxu0
        %v7473 = vadd.f32 0.0, %v7472
        %v7474 = vpop.f32.mrb[0].mxu0
        %7475 = vmatprep.mubr.f32.mxu0 0.0
        %7476 = vmatmul.mubr.f32.gmra.mrb[0].mxu0 %v7301
        %v7477 = vpop.f32.mrb[0].mxu0
        %v7478 = vadd.f32 0.0, %v7477
        %v7479 = vpop.f32.mrb[0].mxu0
        %7480 = vmatprep.mubr.f32.mxu0 0.0
        %7481 = vmatmul.mubr.f32.gmra.mrb[0].mxu0 %v7304
        %v7482 = vpop.f32.mrb[0].mxu0
        %v7483 = vadd.f32 0.0, %v7482
        %v7484 = vpop.f32.mrb[0].mxu0
        %7485 = vmatprep.mubr.f32.mxu0 0.0
        %7486 = vmatmul.mubr.f32.gmra.mrb[0].mxu0 %v7307
        %v7487 = vpop.f32.mrb[0].mxu0
        %v7488 = vadd.f32 0.0, %v7487
        %v7489 = vpop.f32.mrb[0].mxu0
        %7490 = vmatprep.mubr.f32.mxu0 0.0
        %7491 = vmatmul.mubr.f32.gmra.mrb[0].mxu0 %v7310
        %v7492 = vpop.f32.mrb[0].mxu0
        %v7493 = vadd.f32 0.0, %v7492
        %v7494 = vpop.f32.mrb[0].mxu0
        %7495 = vmatprep.mubr.f32.mxu0 0.0
        %7496 = vmatmul.mubr.f32.gmra.mrb[0].mxu0 %v7313
        %v7497 = vpop.f32.mrb[0].mxu0
        %v7498 = vadd.f32 0.0, %v7497
        %v7499 = vpop.f32.mrb[0].mxu0
        %7500 = vmatprep.mubr.f32.mxu0 0.0
        %7501 = vmatmul.mubr.f32.gmra.mrb[0].mxu0 %v7316
        %v7502 = vpop.f32.mrb[0].mxu0
        %v7503 = vadd.f32 0.0, %v7502
        %v7504 = vpop.f32.mrb[0].mxu0
        %7505 = vmatprep.mubr.f32.mxu0 0.0
        %7506 = vmatmul.mubr.f32.gmra.mrb[0].mxu0 %v7319
        %v7507 = vpop.f32.mrb[0].mxu0
        %v7508 = vadd.f32 0.0, %v7507
        %v7509 = vpop.f32.mrb[0].mxu0
        %7510 = vmatprep.mubr.f32.mxu0 0.0
        %7511 = vmatmul.mubr.f32.gmra.mrb[0].mxu0 %v7322
        %v7512 = vpop.f32.mrb[0].mxu0
        %v7513 = vadd.f32 0.0, %v7512
        %v7514 = vpop.f32.mrb[0].mxu0
        %7515 = vmatprep.mubr.f32.mxu0 0.0
        %7516 = vmatmul.mubr.f32.gmra.mrb[0].mxu0 %v7325
        %v7517 = vpop.f32.mrb[0].mxu0
        %v7518 = vadd.f32 0.0, %v7517
        %v7519 = vpop.f32.mrb[0].mxu0
        %7520 = vmatprep.mubr.f32.mxu0 0.0
        %7521 = vmatmul.mubr.f32.gmra.mrb[0].mxu0 %v7328
        %v7522 = vpop.f32.mrb[0].mxu0
        %v7523 = vadd.f32 0.0, %v7522
        %v7524 = vpop.f32.mrb[0].mxu0
        %7525 = vmatprep.mubr.f32.mxu0 0.0
        %7526 = vmatmul.mubr.f32.gmra.mrb[0].mxu0 %v7331
        %v7527 = vpop.f32.mrb[0].mxu0
        %v7528 = vadd.f32 0.0, %v7527
        %v7529 = vpop.f32.mrb[0].mxu0
        %7530 = vmatprep.mubr.f32.mxu0 0.0
        %7531 = vmatmul.mubr.f32.gmra.mrb[0].mxu0 %v7334
        %v7532 = vpop.f32.mrb[0].mxu0
        %v7533 = vadd.f32 0.0, %v7532
        %v7534 = vpop.f32.mrb[0].mxu0
        %7535 = vmatprep.mubr.f32.mxu0 0.0
        %7536 = vmatmul.mubr.f32.gmra.mrb[0].mxu0 %v7337
        %v7537 = vpop.f32.mrb[0].mxu0
        %v7538 = vadd.f32 0.0, %v7537
        %v7539 = vpop.f32.mrb[0].mxu0
        %7540 = vmatprep.mubr.f32.mxu0 0.0
        %7541 = vmatmul.mubr.f32.gmra.mrb[0].mxu0 %v7340
        %v7542 = vpop.f32.mrb[0].mxu0
        %v7543 = vadd.f32 0.0, %v7542
        %v7544 = vpop.f32.mrb[0].mxu0
        %7545 = vmatprep.mubr.f32.mxu0 0.0
        %7546 = vmatmul.mubr.f32.gmra.mrb[0].mxu0 %v7343
        %v7547 = vpop.f32.mrb[0].mxu0
        %v7548 = vadd.f32 0.0, %v7547
        %v7549 = vpop.f32.mrb[0].mxu0
        %7550 = vmatprep.mubr.f32.mxu0 0.0
        %7551 = vmatmul.mubr.f32.gmra.mrb[0].mxu0 %v7346
        %v7552 = vpop.f32.mrb[0].mxu0
        %v7553 = vadd.f32 0.0, %v7552
        %v7554 = vpop.f32.mrb[0].mxu0
        %7555 = vmatprep.mubr.f32.mxu0 0.0
        %7556 = vmatmul.mubr.f32.gmra.mrb[0].mxu0 %v7349
        %v7557 = vpop.f32.mrb[0].mxu0
        %v7558 = vadd.f32 0.0, %v7557
        %v7559 = vpop.f32.mrb[0].mxu0
        %7560 = vmatprep.mubr.f32.mxu0 0.0
        %7561 = vmatmul.mubr.f32.gmra.mrb[0].mxu0 %v7352
        %v7562 = vpop.f32.mrb[0].mxu0
        %v7563 = vadd.f32 0.0, %v7562
        %v7564 = vpop.f32.mrb[0].mxu0
        %7565 = vmatprep.mubr.f32.mxu0 0.0
        %7566 = vmatmul.mubr.f32.gmra.mrb[0].mxu0 %v7355
        %v7567 = vpop.f32.mrb[0].mxu0
        %v7568 = vadd.f32 0.0, %v7567
        %v7569 = vpop.f32.mrb[0].mxu0
        %7570 = vmatprep.mubr.f32.mxu0 0.0
        %7571 = vmatmul.mubr.f32.gmra.mrb[0].mxu0 %v7358
        %v7572 = vpop.f32.mrb[0].mxu0
        %v7573 = vadd.f32 0.0, %v7572
        %v7574 = vpop.f32.mrb[0].mxu0
        %7575 = vmatprep.mubr.f32.mxu0 0.0
        %7576 = vmatmul.mubr.f32.gmra.mrb[0].mxu0 %v7361
        %v7577 = vpop.f32.mrb[0].mxu0
        %v7578 = vadd.f32 0.0, %v7577
        %v7579 = vpop.f32.mrb[0].mxu0
        %7580 = vmatprep.mubr.f32.mxu0 0.0
        %7581 = vmatmul.mubr.f32.gmra.mrb[0].mxu0 %v7364
        %v7582 = vpop.f32.mrb[0].mxu0
        %v7583 = vadd.f32 0.0, %v7582
        %v7584 = vpop.f32.mrb[0].mxu0
        %7585 = vmatprep.mubr.f32.mxu0 0.0
        %7586 = vmatmul.mubr.f32.gmra.mrb[0].mxu0 %v7367
        %v7587 = vpop.f32.mrb[0].mxu0
        %v7588 = vadd.f32 0.0, %v7587
        %v7589 = vpop.f32.mrb[0].mxu0
        %7590 = vmatprep.mubr.f32.mxu0 0.0
        %7591 = vmatmul.mubr.f32.gmra.mrb[0].mxu0 %v7370
        %v7592 = vpop.f32.mrb[0].mxu0
        %v7593 = vadd.f32 0.0, %v7592
        %v7594 = vpop.f32.mrb[0].mxu0
        %7595 = vmatprep.mubr.f32.mxu0 0.0
        %7596 = vmatmul.mubr.f32.gmra.mrb[0].mxu0 %v7373
        %v7597 = vpop.f32.mrb[0].mxu0
        %v7598 = vadd.f32 0.0, %v7597
        %v7599 = vpop.f32.mrb[0].mxu0
        %7600 = vmatprep.mubr.f32.mxu0 0.0
        %7601 = vmatmul.mubr.f32.gmra.mrb[0].mxu0 %v7376
        %v7602 = vpop.f32.mrb[0].mxu0
        %v7603 = vadd.f32 0.0, %v7602
        %v7604 = vpop.f32.mrb[0].mxu0
        %7605 = vdwg.mxu0
        %v7606 = vadd.f32 %v7216, %v7448
        %v7607 = vadd.f32 %v7217, %v7453
        %v7608 = vadd.f32 %v7218, %v7458
        %v7609 = vadd.f32 %v7219, %v7463
        %v7610 = vadd.f32 %v7220, %v7468
        %v7611 = vadd.f32 %v7221, %v7473
        %v7612 = vadd.f32 %v7222, %v7478
        %v7613 = vadd.f32 %v7223, %v7483
        %v7614 = vadd.f32 %v7224, %v7488
        %v7615 = vadd.f32 %v7225, %v7493
        %v7616 = vadd.f32 %v7226, %v7498
        %v7617 = vadd.f32 %v7227, %v7503
        %v7618 = vadd.f32 %v7228, %v7508
        %v7619 = vadd.f32 %v7229, %v7513
        %v7620 = vadd.f32 %v7230, %v7518
        %v7621 = vadd.f32 %v7231, %v7523
        %v7622 = vadd.f32 %v7232, %v7528
        %v7623 = vadd.f32 %v7233, %v7533
        %v7624 = vadd.f32 %v7234, %v7538
        %v7625 = vadd.f32 %v7235, %v7543
        %v7626 = vadd.f32 %v7236, %v7548
        %v7627 = vadd.f32 %v7237, %v7553
        %v7628 = vadd.f32 %v7238, %v7558
        %v7629 = vadd.f32 %v7239, %v7563
        %v7630 = vadd.f32 %v7240, %v7568
        %v7631 = vadd.f32 %v7241, %v7573
        %v7632 = vadd.f32 %v7242, %v7578
        %v7633 = vadd.f32 %v7243, %v7583
        %v7634 = vadd.f32 %v7244, %v7588
        %v7635 = vadd.f32 %v7245, %v7593
        %v7636 = vadd.f32 %v7246, %v7598
        %v7637 = vadd.f32 %v7247, %v7603
        %v7638 = vsel %vm251, %v7606, 0.0
        %v7639 = vsel %vm251, %v7607, 0.0
        %v7640 = vadd.f32 %v7638, %v7639
        %v7641 = vsel %vm251, %v7608, 0.0
        %v7642 = vadd.f32 %v7640, %v7641
        %v7643 = vsel %vm251, %v7609, 0.0
        %v7644 = vadd.f32 %v7642, %v7643
        %v7645 = vsel %vm251, %v7610, 0.0
        %v7646 = vadd.f32 %v7644, %v7645
        %v7647 = vsel %vm251, %v7611, 0.0
        %v7648 = vadd.f32 %v7646, %v7647
        %v7649 = vsel %vm251, %v7612, 0.0
        %v7650 = vadd.f32 %v7648, %v7649
        %v7651 = vsel %vm251, %v7613, 0.0
        %v7652 = vadd.f32 %v7650, %v7651
        %v7653 = vsel %vm251, %v7614, 0.0
        %v7654 = vadd.f32 %v7652, %v7653
        %v7655 = vsel %vm251, %v7615, 0.0
        %v7656 = vadd.f32 %v7654, %v7655
        %v7657 = vsel %vm251, %v7616, 0.0
        %v7658 = vadd.f32 %v7656, %v7657
        %v7659 = vsel %vm251, %v7617, 0.0
        %v7660 = vadd.f32 %v7658, %v7659
        %v7661 = vsel %vm251, %v7618, 0.0
        %v7662 = vadd.f32 %v7660, %v7661
        %v7663 = vsel %vm251, %v7619, 0.0
        %v7664 = vadd.f32 %v7662, %v7663
        %v7665 = vsel %vm251, %v7620, 0.0
        %v7666 = vadd.f32 %v7664, %v7665
        %v7667 = vsel %vm251, %v7621, 0.0
        %v7668 = vadd.f32 %v7666, %v7667
        %v7669 = vsel %vm251, %v7622, 0.0
        %v7670 = vadd.f32 %v7668, %v7669
        %v7671 = vsel %vm251, %v7623, 0.0
        %v7672 = vadd.f32 %v7670, %v7671
        %v7673 = vsel %vm251, %v7624, 0.0
        %v7674 = vadd.f32 %v7672, %v7673
        %v7675 = vsel %vm251, %v7625, 0.0
        %v7676 = vadd.f32 %v7674, %v7675
        %v7677 = vsel %vm251, %v7626, 0.0
        %v7678 = vadd.f32 %v7676, %v7677
        %v7679 = vsel %vm251, %v7627, 0.0
        %v7680 = vadd.f32 %v7678, %v7679
        %v7681 = vsel %vm251, %v7628, 0.0
        %v7682 = vadd.f32 %v7680, %v7681
        %v7683 = vsel %vm251, %v7629, 0.0
        %v7684 = vadd.f32 %v7682, %v7683
        %v7685 = vsel %vm251, %v7630, 0.0
        %v7686 = vadd.f32 %v7684, %v7685
        %v7687 = vsel %vm251, %v7631, 0.0
        %v7688 = vadd.f32 %v7686, %v7687
        %v7689 = vsel %vm251, %v7632, 0.0
        %v7690 = vadd.f32 %v7688, %v7689
        %v7691 = vsel %vm251, %v7633, 0.0
        %v7692 = vadd.f32 %v7690, %v7691
        %v7693 = vsel %vm251, %v7634, 0.0
        %v7694 = vadd.f32 %v7692, %v7693
        %v7695 = vsel %vm251, %v7635, 0.0
        %v7696 = vadd.f32 %v7694, %v7695
        %v7697 = vsel %vm251, %v7636, 0.0
        %v7698 = vadd.f32 %v7696, %v7697
        %v7699 = vsel %vm251, %v7637, 0.0
        %v7700 = vadd.f32 %v7698, %v7699
        %v7701 = vrot.slane %v7700, 4
        %v7702 = vadd.f32 %v7700, %v7701
        %v7703 = vrot.slane %v7702, 2
        %v7704 = vadd.f32 %v7702, %v7703
        %v7705 = vrot.slane %v7704, 1
        %v7706 = vadd.f32 %v7704, %v7705
        %v7707 = vmul.f32 %v7706, 0.00390625
        %v7708 = vmul.f32 %v7606, %v7606
        %v7709 = vmul.f32 %v7607, %v7607
        %v7710 = vmul.f32 %v7608, %v7608
        %v7711 = vmul.f32 %v7609, %v7609
        %v7712 = vmul.f32 %v7610, %v7610
        %v7713 = vmul.f32 %v7611, %v7611
        %v7714 = vmul.f32 %v7612, %v7612
        %v7715 = vmul.f32 %v7613, %v7613
        %v7716 = vmul.f32 %v7614, %v7614
        %v7717 = vmul.f32 %v7615, %v7615
        %v7718 = vmul.f32 %v7616, %v7616
        %v7719 = vmul.f32 %v7617, %v7617
        %v7720 = vmul.f32 %v7618, %v7618
        %v7721 = vmul.f32 %v7619, %v7619
        %v7722 = vmul.f32 %v7620, %v7620
        %v7723 = vmul.f32 %v7621, %v7621
        %v7724 = vmul.f32 %v7622, %v7622
        %v7725 = vmul.f32 %v7623, %v7623
        %v7726 = vmul.f32 %v7624, %v7624
        %v7727 = vmul.f32 %v7625, %v7625
        %v7728 = vmul.f32 %v7626, %v7626
        %v7729 = vmul.f32 %v7627, %v7627
        %v7730 = vmul.f32 %v7628, %v7628
        %v7731 = vmul.f32 %v7629, %v7629
        %v7732 = vmul.f32 %v7630, %v7630
        %v7733 = vmul.f32 %v7631, %v7631
        %v7734 = vmul.f32 %v7632, %v7632
        %v7735 = vmul.f32 %v7633, %v7633
        %v7736 = vmul.f32 %v7634, %v7634
        %v7737 = vmul.f32 %v7635, %v7635
        %v7738 = vmul.f32 %v7636, %v7636
        %v7739 = vmul.f32 %v7637, %v7637
        %v7740 = vsel %vm251, %v7708, 0.0
        %v7741 = vsel %vm251, %v7709, 0.0
        %v7742 = vadd.f32 %v7740, %v7741
        %v7743 = vsel %vm251, %v7710, 0.0
        %v7744 = vadd.f32 %v7742, %v7743
        %v7745 = vsel %vm251, %v7711, 0.0
        %v7746 = vadd.f32 %v7744, %v7745
        %v7747 = vsel %vm251, %v7712, 0.0
        %v7748 = vadd.f32 %v7746, %v7747
        %v7749 = vsel %vm251, %v7713, 0.0
        %v7750 = vadd.f32 %v7748, %v7749
        %v7751 = vsel %vm251, %v7714, 0.0
        %v7752 = vadd.f32 %v7750, %v7751
        %v7753 = vsel %vm251, %v7715, 0.0
        %v7754 = vadd.f32 %v7752, %v7753
        %v7755 = vsel %vm251, %v7716, 0.0
        %v7756 = vadd.f32 %v7754, %v7755
        %v7757 = vsel %vm251, %v7717, 0.0
        %v7758 = vadd.f32 %v7756, %v7757
        %v7759 = vsel %vm251, %v7718, 0.0
        %v7760 = vadd.f32 %v7758, %v7759
        %v7761 = vsel %vm251, %v7719, 0.0
        %v7762 = vadd.f32 %v7760, %v7761
        %v7763 = vsel %vm251, %v7720, 0.0
        %v7764 = vadd.f32 %v7762, %v7763
        %v7765 = vsel %vm251, %v7721, 0.0
        %v7766 = vadd.f32 %v7764, %v7765
        %v7767 = vsel %vm251, %v7722, 0.0
        %v7768 = vadd.f32 %v7766, %v7767
        %v7769 = vsel %vm251, %v7723, 0.0
        %v7770 = vadd.f32 %v7768, %v7769
        %v7771 = vsel %vm251, %v7724, 0.0
        %v7772 = vadd.f32 %v7770, %v7771
        %v7773 = vsel %vm251, %v7725, 0.0
        %v7774 = vadd.f32 %v7772, %v7773
        %v7775 = vsel %vm251, %v7726, 0.0
        %v7776 = vadd.f32 %v7774, %v7775
        %v7777 = vsel %vm251, %v7727, 0.0
        %v7778 = vadd.f32 %v7776, %v7777
        %v7779 = vsel %vm251, %v7728, 0.0
        %v7780 = vadd.f32 %v7778, %v7779
        %v7781 = vsel %vm251, %v7729, 0.0
        %v7782 = vadd.f32 %v7780, %v7781
        %v7783 = vsel %vm251, %v7730, 0.0
        %v7784 = vadd.f32 %v7782, %v7783
        %v7785 = vsel %vm251, %v7731, 0.0
        %v7786 = vadd.f32 %v7784, %v7785
        %v7787 = vsel %vm251, %v7732, 0.0
        %v7788 = vadd.f32 %v7786, %v7787
        %v7789 = vsel %vm251, %v7733, 0.0
        %v7790 = vadd.f32 %v7788, %v7789
        %v7791 = vsel %vm251, %v7734, 0.0
        %v7792 = vadd.f32 %v7790, %v7791
        %v7793 = vsel %vm251, %v7735, 0.0
        %v7794 = vadd.f32 %v7792, %v7793
        %v7795 = vsel %vm251, %v7736, 0.0
        %v7796 = vadd.f32 %v7794, %v7795
        %v7797 = vsel %vm251, %v7737, 0.0
        %v7798 = vadd.f32 %v7796, %v7797
        %v7799 = vsel %vm251, %v7738, 0.0
        %v7800 = vadd.f32 %v7798, %v7799
        %v7801 = vsel %vm251, %v7739, 0.0
        %v7802 = vadd.f32 %v7800, %v7801
        %v7803 = vrot.slane %v7802, 4
        %v7804 = vadd.f32 %v7802, %v7803
        %v7805 = vrot.slane %v7804, 2
        %v7806 = vadd.f32 %v7804, %v7805
        %v7807 = vrot.slane %v7806, 1
        %v7808 = vadd.f32 %v7806, %v7807
        %v7809 = vmul.f32 %v7808, 0.00390625
        %v7810 = vmul.f32 %v7707, %v7707
        %v7811 = vsub.f32 %v7809, %v7810
        %v7812 = vmax.f32 %v7811, 0.0
        %v7813 = vsub.f32 %v7606, %v7707
        %v7814 = vsub.f32 %v7607, %v7707
        %v7815 = vsub.f32 %v7608, %v7707
        %v7816 = vsub.f32 %v7609, %v7707
        %v7817 = vsub.f32 %v7610, %v7707
        %v7818 = vsub.f32 %v7611, %v7707
        %v7819 = vsub.f32 %v7612, %v7707
        %v7820 = vsub.f32 %v7613, %v7707
        %v7821 = vsub.f32 %v7614, %v7707
        %v7822 = vsub.f32 %v7615, %v7707
        %v7823 = vsub.f32 %v7616, %v7707
        %v7824 = vsub.f32 %v7617, %v7707
        %v7825 = vsub.f32 %v7618, %v7707
        %v7826 = vsub.f32 %v7619, %v7707
        %v7827 = vsub.f32 %v7620, %v7707
        %v7828 = vsub.f32 %v7621, %v7707
        %v7829 = vsub.f32 %v7622, %v7707
        %v7830 = vsub.f32 %v7623, %v7707
        %v7831 = vsub.f32 %v7624, %v7707
        %v7832 = vsub.f32 %v7625, %v7707
        %v7833 = vsub.f32 %v7626, %v7707
        %v7834 = vsub.f32 %v7627, %v7707
        %v7835 = vsub.f32 %v7628, %v7707
        %v7836 = vsub.f32 %v7629, %v7707
        %v7837 = vsub.f32 %v7630, %v7707
        %v7838 = vsub.f32 %v7631, %v7707
        %v7839 = vsub.f32 %v7632, %v7707
        %v7840 = vsub.f32 %v7633, %v7707
        %v7841 = vsub.f32 %v7634, %v7707
        %v7842 = vsub.f32 %v7635, %v7707
        %v7843 = vsub.f32 %v7636, %v7707
        %v7844 = vsub.f32 %v7637, %v7707
        %v7845 = vadd.f32 %v7812, 1e-05
        %v7846 = vrsqrt.pop %v7845
        %v7847 = vmul.f32 %v7813, %v7846
        %v7848 = vmul.f32 %v7814, %v7846
        %v7849 = vmul.f32 %v7815, %v7846
        %v7850 = vmul.f32 %v7816, %v7846
        %v7851 = vmul.f32 %v7817, %v7846
        %v7852 = vmul.f32 %v7818, %v7846
        %v7853 = vmul.f32 %v7819, %v7846
        %v7854 = vmul.f32 %v7820, %v7846
        %v7855 = vmul.f32 %v7821, %v7846
        %v7856 = vmul.f32 %v7822, %v7846
        %v7857 = vmul.f32 %v7823, %v7846
        %v7858 = vmul.f32 %v7824, %v7846
        %v7859 = vmul.f32 %v7825, %v7846
        %v7860 = vmul.f32 %v7826, %v7846
        %v7861 = vmul.f32 %v7827, %v7846
        %v7862 = vmul.f32 %v7828, %v7846
        %v7863 = vmul.f32 %v7829, %v7846
        %v7864 = vmul.f32 %v7830, %v7846
        %v7865 = vmul.f32 %v7831, %v7846
        %v7866 = vmul.f32 %v7832, %v7846
        %v7867 = vmul.f32 %v7833, %v7846
        %v7868 = vmul.f32 %v7834, %v7846
        %v7869 = vmul.f32 %v7835, %v7846
        %v7870 = vmul.f32 %v7836, %v7846
        %v7871 = vmul.f32 %v7837, %v7846
        %v7872 = vmul.f32 %v7838, %v7846
        %v7873 = vmul.f32 %v7839, %v7846
        %v7874 = vmul.f32 %v7840, %v7846
        %v7875 = vmul.f32 %v7841, %v7846
        %v7876 = vmul.f32 %v7842, %v7846
        %v7877 = vmul.f32 %v7843, %v7846
        %v7878 = vmul.f32 %v7844, %v7846
        %vm7879 = vcmp.ge.f32.partialorder %v7847, 0.0
        %vm7880 = vcmp.ge.f32.partialorder %v7848, 0.0
        %vm7881 = vcmp.ge.f32.partialorder %v7849, 0.0
        %vm7882 = vcmp.ge.f32.partialorder %v7850, 0.0
        %vm7883 = vcmp.ge.f32.partialorder %v7851, 0.0
        %vm7884 = vcmp.ge.f32.partialorder %v7852, 0.0
        %vm7885 = vcmp.ge.f32.partialorder %v7853, 0.0
        %vm7886 = vcmp.ge.f32.partialorder %v7854, 0.0
        %vm7887 = vcmp.ge.f32.partialorder %v7855, 0.0
        %vm7888 = vcmp.ge.f32.partialorder %v7856, 0.0
        %vm7889 = vcmp.ge.f32.partialorder %v7857, 0.0
        %vm7890 = vcmp.ge.f32.partialorder %v7858, 0.0
        %vm7891 = vcmp.ge.f32.partialorder %v7859, 0.0
        %vm7892 = vcmp.ge.f32.partialorder %v7860, 0.0
        %vm7893 = vcmp.ge.f32.partialorder %v7861, 0.0
        %vm7894 = vcmp.ge.f32.partialorder %v7862, 0.0
        %vm7895 = vcmp.ge.f32.partialorder %v7863, 0.0
        %vm7896 = vcmp.ge.f32.partialorder %v7864, 0.0
        %vm7897 = vcmp.ge.f32.partialorder %v7865, 0.0
        %vm7898 = vcmp.ge.f32.partialorder %v7866, 0.0
        %vm7899 = vcmp.ge.f32.partialorder %v7867, 0.0
        %vm7900 = vcmp.ge.f32.partialorder %v7868, 0.0
        %vm7901 = vcmp.ge.f32.partialorder %v7869, 0.0
        %vm7902 = vcmp.ge.f32.partialorder %v7870, 0.0
        %vm7903 = vcmp.ge.f32.partialorder %v7871, 0.0
        %vm7904 = vcmp.ge.f32.partialorder %v7872, 0.0
        %vm7905 = vcmp.ge.f32.partialorder %v7873, 0.0
        %vm7906 = vcmp.ge.f32.partialorder %v7874, 0.0
        %vm7907 = vcmp.ge.f32.partialorder %v7875, 0.0
        %vm7908 = vcmp.ge.f32.partialorder %v7876, 0.0
        %vm7909 = vcmp.ge.f32.partialorder %v7877, 0.0
        %vm7910 = vcmp.ge.f32.partialorder %v7878, 0.0
        %v7911 = vmul.f32 %v7847, 0.2
        %v7912 = vmul.f32 %v7848, 0.2
        %v7913 = vmul.f32 %v7849, 0.2
        %v7914 = vmul.f32 %v7850, 0.2
        %v7915 = vmul.f32 %v7851, 0.2
        %v7916 = vmul.f32 %v7852, 0.2
        %v7917 = vmul.f32 %v7853, 0.2
        %v7918 = vmul.f32 %v7854, 0.2
        %v7919 = vmul.f32 %v7855, 0.2
        %v7920 = vmul.f32 %v7856, 0.2
        %v7921 = vmul.f32 %v7857, 0.2
        %v7922 = vmul.f32 %v7858, 0.2
        %v7923 = vmul.f32 %v7859, 0.2
        %v7924 = vmul.f32 %v7860, 0.2
        %v7925 = vmul.f32 %v7861, 0.2
        %v7926 = vmul.f32 %v7862, 0.2
        %v7927 = vmul.f32 %v7863, 0.2
        %v7928 = vmul.f32 %v7864, 0.2
        %v7929 = vmul.f32 %v7865, 0.2
        %v7930 = vmul.f32 %v7866, 0.2
        %v7931 = vmul.f32 %v7867, 0.2
        %v7932 = vmul.f32 %v7868, 0.2
        %v7933 = vmul.f32 %v7869, 0.2
        %v7934 = vmul.f32 %v7870, 0.2
        %v7935 = vmul.f32 %v7871, 0.2
        %v7936 = vmul.f32 %v7872, 0.2
        %v7937 = vmul.f32 %v7873, 0.2
        %v7938 = vmul.f32 %v7874, 0.2
        %v7939 = vmul.f32 %v7875, 0.2
        %v7940 = vmul.f32 %v7876, 0.2
        %v7941 = vmul.f32 %v7877, 0.2
        %v7942 = vmul.f32 %v7878, 0.2
        %v7943 = vsel %vm7879, %v7847, %v7911
        %v7944 = vsel %vm7880, %v7848, %v7912
        %v7945 = vsel %vm7881, %v7849, %v7913
        %v7946 = vsel %vm7882, %v7850, %v7914
        %v7947 = vsel %vm7883, %v7851, %v7915
        %v7948 = vsel %vm7884, %v7852, %v7916
        %v7949 = vsel %vm7885, %v7853, %v7917
        %v7950 = vsel %vm7886, %v7854, %v7918
        %v7951 = vsel %vm7887, %v7855, %v7919
        %v7952 = vsel %vm7888, %v7856, %v7920
        %v7953 = vsel %vm7889, %v7857, %v7921
        %v7954 = vsel %vm7890, %v7858, %v7922
        %v7955 = vsel %vm7891, %v7859, %v7923
        %v7956 = vsel %vm7892, %v7860, %v7924
        %v7957 = vsel %vm7893, %v7861, %v7925
        %v7958 = vsel %vm7894, %v7862, %v7926
        %v7959 = vsel %vm7895, %v7863, %v7927
        %v7960 = vsel %vm7896, %v7864, %v7928
        %v7961 = vsel %vm7897, %v7865, %v7929
        %v7962 = vsel %vm7898, %v7866, %v7930
        %v7963 = vsel %vm7899, %v7867, %v7931
        %v7964 = vsel %vm7900, %v7868, %v7932
        %v7965 = vsel %vm7901, %v7869, %v7933
        %v7966 = vsel %vm7902, %v7870, %v7934
        %v7967 = vsel %vm7903, %v7871, %v7935
        %v7968 = vsel %vm7904, %v7872, %v7936
        %v7969 = vsel %vm7905, %v7873, %v7937
        %v7970 = vsel %vm7906, %v7874, %v7938
        %v7971 = vsel %vm7907, %v7875, %v7939
        %v7972 = vsel %vm7908, %v7876, %v7940
        %v7973 = vsel %vm7909, %v7877, %v7941
        %v7974 = vsel %vm7910, %v7878, %v7942
        %v7975 = vld [vmem:[%s187] sm:$0xff]
        %v7976 = vld [vmem:[%s187 + $0x8] sm:$0xff]
        %v7977 = vld [vmem:[%s187 + $0x10] sm:$0xff]
        %v7978 = vld [vmem:[%s187 + $0x18] sm:$0xff]
        %v7979 = vld [vmem:[%s187 + $0x20] sm:$0xff]
        %v7980 = vld [vmem:[%s187 + $0x28] sm:$0xff]
        %v7981 = vld [vmem:[%s187 + $0x30] sm:$0xff]
        %v7982 = vld [vmem:[%s187 + $0x38] sm:$0xff]
        %v7983 = vld [vmem:[%s187 + $0x40] sm:$0xff]
        %v7984 = vld [vmem:[%s187 + $0x48] sm:$0xff]
        %v7985 = vld [vmem:[%s187 + $0x50] sm:$0xff]
        %v7986 = vld [vmem:[%s187 + $0x58] sm:$0xff]
        %v7987 = vld [vmem:[%s187 + $0x60] sm:$0xff]
        %v7988 = vld [vmem:[%s187 + $0x68] sm:$0xff]
        %v7989 = vld [vmem:[%s187 + $0x70] sm:$0xff]
        %v7990 = vld [vmem:[%s187 + $0x78] sm:$0xff]
        %v7991 = vld [vmem:[%s187 + $0x80] sm:$0xff]
        %v7992 = vld [vmem:[%s187 + $0x88] sm:$0xff]
        %v7993 = vld [vmem:[%s187 + $0x90] sm:$0xff]
        %v7994 = vld [vmem:[%s187 + $0x98] sm:$0xff]
        %v7995 = vld [vmem:[%s187 + $0xa0] sm:$0xff]
        %v7996 = vld [vmem:[%s187 + $0xa8] sm:$0xff]
        %v7997 = vld [vmem:[%s187 + $0xb0] sm:$0xff]
        %v7998 = vld [vmem:[%s187 + $0xb8] sm:$0xff]
        %v7999 = vld [vmem:[%s187 + $0xc0] sm:$0xff]
        %v8000 = vld [vmem:[%s187 + $0xc8] sm:$0xff]
        %v8001 = vld [vmem:[%s187 + $0xd0] sm:$0xff]
        %v8002 = vld [vmem:[%s187 + $0xd8] sm:$0xff]
        %v8003 = vld [vmem:[%s187 + $0xe0] sm:$0xff]
        %v8004 = vld [vmem:[%s187 + $0xe8] sm:$0xff]
        %v8005 = vld [vmem:[%s187 + $0xf0] sm:$0xff]
        %v8006 = vld [vmem:[%s187 + $0xf8] sm:$0xff]
        %v8007 = vadd.f32 %v7943, %v7975
        %v8008 = vadd.f32 %v7944, %v7976
        %v8009 = vadd.f32 %v7945, %v7977
        %v8010 = vadd.f32 %v7946, %v7978
        %v8011 = vadd.f32 %v7947, %v7979
        %v8012 = vadd.f32 %v7948, %v7980
        %v8013 = vadd.f32 %v7949, %v7981
        %v8014 = vadd.f32 %v7950, %v7982
        %v8015 = vadd.f32 %v7951, %v7983
        %v8016 = vadd.f32 %v7952, %v7984
        %v8017 = vadd.f32 %v7953, %v7985
        %v8018 = vadd.f32 %v7954, %v7986
        %v8019 = vadd.f32 %v7955, %v7987
        %v8020 = vadd.f32 %v7956, %v7988
        %v8021 = vadd.f32 %v7957, %v7989
        %v8022 = vadd.f32 %v7958, %v7990
        %v8023 = vadd.f32 %v7959, %v7991
        %v8024 = vadd.f32 %v7960, %v7992
        %v8025 = vadd.f32 %v7961, %v7993
        %v8026 = vadd.f32 %v7962, %v7994
        %v8027 = vadd.f32 %v7963, %v7995
        %v8028 = vadd.f32 %v7964, %v7996
        %v8029 = vadd.f32 %v7965, %v7997
        %v8030 = vadd.f32 %v7966, %v7998
        %v8031 = vadd.f32 %v7967, %v7999
        %v8032 = vadd.f32 %v7968, %v8000
        %v8033 = vadd.f32 %v7969, %v8001
        %v8034 = vadd.f32 %v7970, %v8002
        %v8035 = vadd.f32 %v7971, %v8003
        %v8036 = vadd.f32 %v7972, %v8004
        %v8037 = vadd.f32 %v7973, %v8005
        %v8038 = vadd.f32 %v7974, %v8006
        %8039 = vst.msk [vmem:[%s217] sm:$0xff] %vm251, %v8007
        %8040 = vst.msk [vmem:[%s217 + $0x8] sm:$0xff] %vm251, %v8008
        %8041 = vst.msk [vmem:[%s217 + $0x10] sm:$0xff] %vm251, %v8009
        %8042 = vst.msk [vmem:[%s217 + $0x18] sm:$0xff] %vm251, %v8010
        %8043 = vst.msk [vmem:[%s217 + $0x20] sm:$0xff] %vm251, %v8011
        %8044 = vst.msk [vmem:[%s217 + $0x28] sm:$0xff] %vm251, %v8012
        %8045 = vst.msk [vmem:[%s217 + $0x30] sm:$0xff] %vm251, %v8013
        %8046 = vst.msk [vmem:[%s217 + $0x38] sm:$0xff] %vm251, %v8014
        %8047 = vst.msk [vmem:[%s217 + $0x40] sm:$0xff] %vm251, %v8015
        %8048 = vst.msk [vmem:[%s217 + $0x48] sm:$0xff] %vm251, %v8016
        %8049 = vst.msk [vmem:[%s217 + $0x50] sm:$0xff] %vm251, %v8017
        %8050 = vst.msk [vmem:[%s217 + $0x58] sm:$0xff] %vm251, %v8018
        %8051 = vst.msk [vmem:[%s217 + $0x60] sm:$0xff] %vm251, %v8019
        %8052 = vst.msk [vmem:[%s217 + $0x68] sm:$0xff] %vm251, %v8020
        %8053 = vst.msk [vmem:[%s217 + $0x70] sm:$0xff] %vm251, %v8021
        %8054 = vst.msk [vmem:[%s217 + $0x78] sm:$0xff] %vm251, %v8022
        %8055 = vst.msk [vmem:[%s217 + $0x80] sm:$0xff] %vm251, %v8023
        %8056 = vst.msk [vmem:[%s217 + $0x88] sm:$0xff] %vm251, %v8024
        %8057 = vst.msk [vmem:[%s217 + $0x90] sm:$0xff] %vm251, %v8025
        %8058 = vst.msk [vmem:[%s217 + $0x98] sm:$0xff] %vm251, %v8026
        %8059 = vst.msk [vmem:[%s217 + $0xa0] sm:$0xff] %vm251, %v8027
        %8060 = vst.msk [vmem:[%s217 + $0xa8] sm:$0xff] %vm251, %v8028
        %8061 = vst.msk [vmem:[%s217 + $0xb0] sm:$0xff] %vm251, %v8029
        %8062 = vst.msk [vmem:[%s217 + $0xb8] sm:$0xff] %vm251, %v8030
        %8063 = vst.msk [vmem:[%s217 + $0xc0] sm:$0xff] %vm251, %v8031
        %8064 = vst.msk [vmem:[%s217 + $0xc8] sm:$0xff] %vm251, %v8032
        %8065 = vst.msk [vmem:[%s217 + $0xd0] sm:$0xff] %vm251, %v8033
        %8066 = vst.msk [vmem:[%s217 + $0xd8] sm:$0xff] %vm251, %v8034
        %8067 = vst.msk [vmem:[%s217 + $0xe0] sm:$0xff] %vm251, %v8035
        %8068 = vst.msk [vmem:[%s217 + $0xe8] sm:$0xff] %vm251, %v8036
        %8069 = vst.msk [vmem:[%s217 + $0xf0] sm:$0xff] %vm251, %v8037
        %8070 = vst.msk [vmem:[%s217 + $0xf8] sm:$0xff] %vm251, %v8038
        %s8071 = sand.u32 %s97, 1
        %s8072 = scalar_lea.sflag [#allocation5], %s8071
        %s8073 = sand.u32 %s97, 1
        %s8074 = smul.addr %s8073, 256
        %s8075 = scalar_lea.vmem [#allocation9], %s8074
        // Predicated region
        $region45: #{tpu_custom_call.1} parent=31 // pred_check
          %p8076 = pneg %p107
        $region46: #{tpu_custom_call.1} parent=31 // pred_check_branch
          %8078 = sbr.rel (%p8076) target = $region48
        $region47: #{tpu_custom_call.1} parent=31 // pred_region
          %s8080 = ssub.s32 4096, 4096
          %8081 = vsyncadd %s8072, %s8080
          %s8082 = smul.addr %s21, 32
          %s8083 = smul.addr %s8082, 128
          %s8084 = scalar_lea.hbm %s3, %s8083
          %s8085 = sshll.u32 %s8075, 4
          %s8086 = int_to_ptr.vmem [resolvable:$true] %s8085
          %8091 = dma.vmem_to_hbm [thread:$0]  %s8086, 4096, %s8084, %s8072, 128, 128, 8
        $region48: #{tpu_custom_call.1} parent=31 // pred_fallthru
          _
      $region32: #{tpu_custom_call.1} parent=5 // pred_fallthru
        _
      %p8092 = scmp.le.s32.totalorder 2, %s16
      // Predicated region
      $region49: #{tpu_custom_call.1} parent=5 // pred_check
        %p8093 = pneg %p8092
      $region50: #{tpu_custom_call.1} parent=5 // pred_check_branch
        %8095 = sbr.rel (%p8093) target = $region52
      $region51: #{tpu_custom_call.1} parent=5 // pred_region
        %s8096 = ssub.s32 %s16, 2
        // Predicated region
        $region53: #{tpu_custom_call.1} parent=51 // pred_check
          %p8097 = pneg %p113
        $region54: #{tpu_custom_call.1} parent=51 // pred_check_branch
          %8099 = sbr.rel (%p8097) target = $region56
        $region55: #{tpu_custom_call.1} parent=51 // pred_region
          %s8100 = sand.u32 %s98, 1
          %s8101 = scalar_lea.sflag [#allocation5], %s8100
          %s8102 = sand.u32 %s98, 1
          %s8103 = smul.addr %s8102, 256
          %s8104 = scalar_lea.vmem [#allocation9], %s8103
          %8105 = dma.done %s8101, 4096
        $region56: #{tpu_custom_call.1} parent=51 // pred_fallthru
          _
      $region52: #{tpu_custom_call.1} parent=5 // pred_fallthru
        _
    $region6: #{tpu_custom_call.1} parent=1 // loop_footer
      %s20 = sadd.s32 1, %s16
    $region7: #{tpu_custom_call.1} parent=1 // loop_footer_branch
      %15 = sbr.rel target = $region3
    $region8: #{tpu_custom_call.1} parent=1 // loop_exit
      _
    %8106 = vsyncpa [#allocation4], 1
    %s8107 = scalar_lea.sflag [#allocation4], 1
    %8108 = vsyncpa %s8107, 1
    %8109 = vsyncpa [#allocation7], 1
    %8110 = vsyncpa [#allocation5], 1
    %s8111 = scalar_lea.sflag [#allocation5], 1
    %8112 = vsyncpa %s8111, 1

</llo_original>
